<compile_context>
chip_gen: v7x
topology: tpu7x:2x2x1
jax: 0.10.0
libtpu: 0.0.40
codegen_flags: <defaults>
</compile_context>

<pallas_src>
import numpy as np

import jax
import jax.numpy as jnp
from jax import lax
from jax.experimental import pallas as pl
from jax.experimental.pallas import tpu as pltpu


# ---------------------------------------------------------------------------
# Fused forward kernel.
#   inputs  : pb    (Cin*27*N, 27*LP)  patch slab, lanes = (conv2 tap block, position)
#             w1bd  (C1*N, Cin*27*N)   conv1 weight, batch-folded block-diagonal
#             b1b   (C1*N, 1)
#             w2bd  (27, C2*N, C1*N)   conv2 weight per conv2 tap, batch-folded
#             b2b   (C2*N, 1)
#             wencp (C2, LP, E)        encoder FC weight split per channel, zero-padded
#             benc  (1, E)
#             wd1   (E, MID)   bf16    decoder weights (f32 accumulation)
#             bd1   (1, MID)   f32
#             wd2   (MID, OUT) bf16
#             bd2   (1, OUT)   f32
#   outputs : emb (N, E) pre-ReLU embedding ; out (N, OUT) decoder logits
#   scratch : h2s (C2*N, LP) conv2 activations (VMEM)
# ---------------------------------------------------------------------------
def _f3fn_fused_kernel(pb_ref, w1_ref, b1_ref, w2_ref, b2_ref,
                       wenc_ref, benc_ref, wd1_ref, bd1_ref, wd2_ref, bd2_ref,
                       emb_ref, out_ref, h2s_ref):
    koff = w2_ref.shape[0]          # number of conv2 taps (27)
    c2n = w2_ref.shape[1]           # C2 * N
    c2 = wenc_ref.shape[0]          # conv2 output channels
    nb = c2n // c2                  # batch size
    lp = wenc_ref.shape[1]          # lane-padded positions per tap block (128)
    e_dim = wenc_ref.shape[2]

    # ---- encoder convs: conv1 + ReLU + conv2 fused over the 27 conv2 taps ----------
    w1 = w1_ref[...]
    b1 = b1_ref[...]
    acc2 = jnp.zeros((c2n, lp), jnp.float32)
    for o2 in range(koff):                                            # static unrolled loop
        blk = pb_ref[:, o2 * lp:(o2 + 1) * lp]                        # (Cin*27*N, LP) aligned
        h1 = jnp.dot(w1, blk, preferred_element_type=jnp.float32) + b1
        h1 = jnp.maximum(h1, 0.0)                                     # conv1 + ReLU
        acc2 = acc2 + jnp.dot(w2_ref[o2], h1,
                              preferred_element_type=jnp.float32)     # conv2 partial sum
    h2s_ref[...] = jnp.maximum(acc2 + b2_ref[...], 0.0)               # conv2 + ReLU

    # ---- encoder FC: the flatten is absorbed into a per-channel weight split -------
    emb = jnp.broadcast_to(benc_ref[...], (nb, e_dim)).astype(jnp.float32)
    for c in range(c2):                                               # 16 small matmuls
        emb = emb + jnp.dot(h2s_ref[c * nb:(c + 1) * nb, :], wenc_ref[c],
                            preferred_element_type=jnp.float32)
    emb_ref[...] = emb.astype(emb_ref.dtype)                          # pre-ReLU embedding

    # ---- decoder MLP: F.relu(embedding) -> Linear -> ReLU -> Linear -----------------
    e_act = jnp.maximum(emb, 0.0).astype(wd1_ref.dtype)               # bf16 for the MXU
    z = jnp.dot(e_act, wd1_ref[...], preferred_element_type=jnp.float32) + bd1_ref[...]
    z = jnp.maximum(z, 0.0).astype(wd2_ref.dtype)
    out = jnp.dot(z, wd2_ref[...], preferred_element_type=jnp.float32) + bd2_ref[...]
    out_ref[...] = out.astype(out_ref.dtype)


def _whole_block(shape):
    """Whole-array BlockSpec for a (1,)-grid pallas_call."""
    zeros = (0,) * len(shape)
    return pl.BlockSpec(shape, lambda i, _z=zeros: _z)


def f3fn_3d_forward(packed, x):
    """embedding, logits = F3FN_3d(x);  x is NCDHW float32."""
    n, cin, d, h, w = x.shape
    ek = packed["ek"]                            # (Cin*27*27, Cin, 5, 5, 5) selection kernel
    koff = packed["w2bd"].shape[0]               # 27
    ksz = (ek.shape[2] + 1) // 2                 # 3
    d2, h2, w2 = d - 2 * (ksz - 1), h - 2 * (ksz - 1), w - 2 * (ksz - 1)
    p_out = d2 * h2 * w2
    c2, lp, e_dim = packed["wencp"].shape
    out_dim = packed["bd2"].shape[1]
    assert ek.shape[0] == cin * koff * koff and p_out <= lp
    assert packed["w1bd"].shape[1] == cin * koff * n, "packed params built for another shape"

    # One real XLA conv with a constant 0/1 kernel does the im2col for BOTH convs at once:
    # feature (c, o1, o2) at output position p equals x[n, c, pos(p) + tap(o1) + tap(o2)].
    pat = lax.conv_general_dilated(
        x, ek, window_strides=(1, 1, 1), padding="VALID",
        dimension_numbers=("NCDHW", "OIDHW", "NCDHW"))     # (N, Cin*27*27, D2, H2, W2)
    pat = pat.reshape(n, cin, koff, koff, p_out)           # (n, c, o1, o2, p)
    pat = jnp.transpose(pat, (1, 2, 0, 3, 4))              # (c, o1, n, o2, p)
    pat = pat.reshape(cin * koff * n, koff, p_out)
    pat = jnp.pad(pat, ((0, 0), (0, 0), (0, lp - p_out)))  # pad positions to 128 lanes
    pb = pat.reshape(cin * koff * n, koff * lp)            # lane-dense, 128-aligned blocks

    args = (pb, packed["w1bd"], packed["b1b"], packed["w2bd"], packed["b2b"],
            packed["wencp"], packed["benc"], packed["wd1"], packed["bd1"],
            packed["wd2"], packed["bd2"])

    emb, out = pl.pallas_call(
        _f3fn_fused_kernel,
        out_shape=(jax.ShapeDtypeStruct((n, e_dim), jnp.float32),
                   jax.ShapeDtypeStruct((n, out_dim), jnp.float32)),
        grid=(1,),
        in_specs=[_whole_block(a.shape) for a in args],
        out_specs=(_whole_block((n, e_dim)), _whole_block((n, out_dim))),
        scratch_shapes=[pltpu.VMEM((c2 * n, lp), jnp.float32)],
        compiler_params=pltpu.CompilerParams(dimension_semantics=("arbitrary",)),
    )(*args)
    return emb, out


# ---------------------------------------------------------------------------
# Parameter init (PyTorch-style uniform) + one-time repack into kernel layouts.
# ---------------------------------------------------------------------------
def _init_conv3d(key, cin, cout, ksz):
    k1, k2 = jax.random.split(key)
    bound = 1.0 / float(cin * ksz ** 3) ** 0.5
    wgt = jax.random.uniform(k1, (cout, cin, ksz, ksz, ksz), jnp.float32, -bound, bound)
    b = jax.random.uniform(k2, (cout,), jnp.float32, -bound, bound)
    return wgt, b


def _init_linear(key, fan_in, fan_out):
    k1, k2 = jax.random.split(key)
    bound = 1.0 / float(fan_in) ** 0.5
    wgt = jax.random.uniform(k1, (fan_in, fan_out), jnp.float32, -bound, bound)
    b = jax.random.uniform(k2, (fan_out,), jnp.float32, -bound, bound)
    return wgt, b


def init_f3fn_params(key, input_shape, out_embedding=10, dec_out=128, mid_channels=4096):
    """Natural (PyTorch-layout) parameters of the (guessed) encoder/decoder."""
    _, cin, d, h, w = input_shape
    k1, k2, k3, k4, k5 = jax.random.split(key, 5)
    c1_out, c2_out, ksz = 8, 16, 3
    conv1 = _init_conv3d(k1, cin, c1_out, ksz)
    conv2 = _init_conv3d(k2, c1_out, c2_out, ksz)
    d2, h2, w2 = d - 2 * (ksz - 1), h - 2 * (ksz - 1), w - 2 * (ksz - 1)
    flat = c2_out * d2 * h2 * w2
    enc_fc = _init_linear(k3, flat, out_embedding)
    dec_fc1 = _init_linear(k4, out_embedding, mid_channels)
    dec_fc2 = _init_linear(k5, mid_channels, dec_out)
    return dict(conv1=conv1, conv2=conv2, enc_fc=enc_fc,
                dec_fc1=dec_fc1, dec_fc2=dec_fc2)


def pack_f3fn_params(params, input_shape):
    """One-time repack of the natural params into the fused-kernel layouts."""
    n, cin, d, h, w = input_shape
    w1 = np.asarray(params["conv1"][0], np.float32)
    b1 = np.asarray(params["conv1"][1], np.float32)
    w2 = np.asarray(params["conv2"][0], np.float32)
    b2 = np.asarray(params["conv2"][1], np.float32)
    wenc = np.asarray(params["enc_fc"][0], np.float32)
    benc = np.asarray(params["enc_fc"][1], np.float32)
    wd1 = np.asarray(params["dec_fc1"][0], np.float32)
    bd1 = np.asarray(params["dec_fc1"][1], np.float32)
    wd2 = np.asarray(params["dec_fc2"][0], np.float32)
    bd2 = np.asarray(params["dec_fc2"][1], np.float32)

    c1, c2, ksz = w1.shape[0], w2.shape[0], w1.shape[2]
    koff = ksz ** 3
    d2, h2, w2d = d - 2 * (ksz - 1), h - 2 * (ksz - 1), w - 2 * (ksz - 1)
    p_out = d2 * h2 * w2d
    lp = ((p_out + 127) // 128) * 128
    e_dim = wenc.shape[1]
    eye_n = np.eye(n, dtype=np.float32)

    # conv weights folded with the (tiny) batch into block-diagonal matmul operands
    w1bd = np.kron(w1.reshape(c1, cin * koff), eye_n)                   # (C1*N, Cin*27*N)
    w2r = np.transpose(w2.reshape(c2, c1, koff), (2, 0, 1))             # (27, C2, C1)
    w2bd = np.einsum("ocd,nm->ocndm", w2r, eye_n).reshape(koff, c2 * n, c1 * n)
    b1b = np.repeat(b1, n).reshape(c1 * n, 1)
    b2b = np.repeat(b2, n).reshape(c2 * n, 1)

    # encoder FC weight split per conv2 channel; zero rows for the lane padding
    wencp = np.zeros((c2, lp, e_dim), np.float32)
    wencp[:, :p_out, :] = wenc.reshape(c2, p_out, e_dim)

    # constant 0/1 selection kernel: one XLA conv extracts the composed conv2-of-conv1
    # patches, i.e. feature (c, o1, o2) = x[c, out_pos + tap(o1) + tap(o2)].
    r = 2 * ksz - 1
    taps = np.arange(koff)
    ti, tj, tk = taps // (ksz * ksz), (taps // ksz) % ksz, taps % ksz
    ek = np.zeros((cin * koff * koff, cin, r, r, r), np.float32)
    for c in range(cin):
        for a in range(koff):
            for b in range(koff):
                ek[(c * koff + a) * koff + b, c,
                   ti[a] + ti[b], tj[a] + tj[b], tk[a] + tk[b]] = 1.0

    return dict(
        ek=jnp.asarray(ek),
        w1bd=jnp.asarray(w1bd), b1b=jnp.asarray(b1b),
        w2bd=jnp.asarray(w2bd), b2b=jnp.asarray(b2b),
        wencp=jnp.asarray(wencp), benc=jnp.asarray(benc.reshape(1, e_dim)),
        wd1=jnp.asarray(wd1, jnp.bfloat16), bd1=jnp.asarray(bd1.reshape(1, -1)),
        wd2=jnp.asarray(wd2, jnp.bfloat16), bd2=jnp.asarray(bd2.reshape(1, -1)),
    )


# ---------------------------------------------------------------------------
# Pure-JAX (non-Pallas) reference of the same module, for validation only.
# ---------------------------------------------------------------------------
def f3fn_3d_reference(params, x):
    w1, b1 = params["conv1"]
    w2, b2 = params["conv2"]
    wenc, benc = params["enc_fc"]
    wd1, bd1 = params["dec_fc1"]
    wd2, bd2 = params["dec_fc2"]
    dn = ("NCDHW", "OIDHW", "NCDHW")
    hh = lax.conv_general_dilated(x, w1, (1, 1, 1), "VALID", dimension_numbers=dn)
    hh = jax.nn.relu(hh + b1.reshape(1, -1, 1, 1, 1))
    hh = lax.conv_general_dilated(hh, w2, (1, 1, 1), "VALID", dimension_numbers=dn)
    hh = jax.nn.relu(hh + b2.reshape(1, -1, 1, 1, 1))
    emb = hh.reshape(hh.shape[0], -1) @ wenc + benc
    z = jax.nn.relu(jax.nn.relu(emb) @ wd1 + bd1)
    out = z @ wd2 + bd2
    return emb, out


if __name__ == "__main__":
    key = jax.random.PRNGKey(0)
    k_param, k_data = jax.random.split(key)

    # Small hyperspectral-style input: (batch=2, channel=1, bands=8, 9x9 patch)
    x = jax.random.normal(k_data, (2, 1, 8, 9, 9), dtype=jnp.float32)

    params = init_f3fn_params(k_param, x.shape, out_embedding=10,
                              dec_out=128, mid_channels=4096)
    packed = pack_f3fn_params(params, x.shape)

    embedding, out = jax.jit(f3fn_3d_forward)(packed, x)
    jax.block_until_ready((embedding, out))

    assert embedding.shape == (2, 10), embedding.shape
    assert out.shape == (2, 128), out.shape
    assert bool(jnp.all(jnp.isfinite(embedding))) and bool(jnp.all(jnp.isfinite(out)))

    # cross-check the fused kernel against a plain-JAX reference (loose tol: bf16 decoder
    # weights + TPU default matmul precision on the reference side)
    ref_emb, ref_out = jax.jit(f3fn_3d_reference)(params, x)
    err_e = float(jnp.max(jnp.abs(embedding - ref_emb)))
    err_o = float(jnp.max(jnp.abs(out - ref_out)))
    assert err_e < 3e-2 and err_o < 3e-2, (err_e, err_o)

    print("KERNEL_OK")
</pallas_src>

<mosaic_0001>
module attributes {stable_mosaic.version = 11 : i64} {
  func.func @_f3fn_fused_kernel(%arg0: i32, %arg1: memref<54x3456xf32, #tpu.memory_space<vmem>>, %arg2: memref<16x54xf32, #tpu.memory_space<vmem>>, %arg3: memref<16x1xf32, #tpu.memory_space<vmem>>, %arg4: memref<27x32x16xf32, #tpu.memory_space<vmem>>, %arg5: memref<32x1xf32, #tpu.memory_space<vmem>>, %arg6: memref<16x128x10xf32, #tpu.memory_space<vmem>>, %arg7: memref<1x10xf32, #tpu.memory_space<vmem>>, %arg8: memref<10x4096xbf16, #tpu.memory_space<vmem>>, %arg9: memref<1x4096xf32, #tpu.memory_space<vmem>>, %arg10: memref<4096x128xbf16, #tpu.memory_space<vmem>>, %arg11: memref<1x128xf32, #tpu.memory_space<vmem>>, %arg12: memref<2x10xf32, #tpu.memory_space<vmem>>, %arg13: memref<2x128xf32, #tpu.memory_space<vmem>>, %arg14: memref<32x128xf32, #tpu.memory_space<vmem>>) attributes {dimension_semantics = [#tpu.dimension_semantics<arbitrary>], iteration_bounds = array<i64: 1>, scalar_prefetch = 0 : i64, scratch_operands = 1 : i64, tpu.core_type = #tpu.core_type<tc>, window_params = [{pipeline_mode = #tpu.pipeline_mode<synchronous>, transform_indices = @transform_0, window_bounds = array<i64: 54, 3456>}, {pipeline_mode = #tpu.pipeline_mode<synchronous>, transform_indices = @transform_1, window_bounds = array<i64: 16, 54>}, {pipeline_mode = #tpu.pipeline_mode<synchronous>, transform_indices = @transform_2, window_bounds = array<i64: 16, 1>}, {pipeline_mode = #tpu.pipeline_mode<synchronous>, transform_indices = @transform_3, window_bounds = array<i64: 27, 32, 16>}, {pipeline_mode = #tpu.pipeline_mode<synchronous>, transform_indices = @transform_4, window_bounds = array<i64: 32, 1>}, {pipeline_mode = #tpu.pipeline_mode<synchronous>, transform_indices = @transform_5, window_bounds = array<i64: 16, 128, 10>}, {pipeline_mode = #tpu.pipeline_mode<synchronous>, transform_indices = @transform_6, window_bounds = array<i64: 1, 10>}, {pipeline_mode = #tpu.pipeline_mode<synchronous>, transform_indices = @transform_7, window_bounds = array<i64: 10, 4096>}, {pipeline_mode = #tpu.pipeline_mode<synchronous>, transform_indices = @transform_8, window_bounds = array<i64: 1, 4096>}, {pipeline_mode = #tpu.pipeline_mode<synchronous>, transform_indices = @transform_9, window_bounds = array<i64: 4096, 128>}, {pipeline_mode = #tpu.pipeline_mode<synchronous>, transform_indices = @transform_10, window_bounds = array<i64: 1, 128>}, {pipeline_mode = #tpu.pipeline_mode<synchronous>, transform_indices = @transform_11, window_bounds = array<i64: 2, 10>}, {pipeline_mode = #tpu.pipeline_mode<synchronous>, transform_indices = @transform_12, window_bounds = array<i64: 2, 128>}]} {
    %c0 = arith.constant 0 : index
    %c0_0 = arith.constant 0 : index
    %0 = vector.load %arg2[%c0, %c0_0] : memref<16x54xf32, #tpu.memory_space<vmem>>, vector<16x54xf32>
    %c0_1 = arith.constant 0 : index
    %c0_2 = arith.constant 0 : index
    %1 = vector.load %arg3[%c0_1, %c0_2] : memref<16x1xf32, #tpu.memory_space<vmem>>, vector<16x1xf32>
    %cst = arith.constant 0.000000e+00 : f32
    %2 = vector.broadcast %cst : f32 to vector<32x128xf32>
    %c0_3 = arith.constant 0 : index
    %c0_4 = arith.constant 0 : index
    %3 = vector.load %arg1[%c0_3, %c0_4] : memref<54x3456xf32, #tpu.memory_space<vmem>>, vector<54x128xf32>
    %cst_5 = arith.constant dense<0.000000e+00> : vector<16x128xf32>
    %4 = tpu.matmul %0, %3, %cst_5 {dimension_numbers = #tpu.dot_dimension_numbers<[1], [0], [0], [1], [0, 0, 1, 1], [], []>} : vector<16x54xf32>, vector<54x128xf32>, vector<16x128xf32> -> vector<16x128xf32>
    %5 = vector.broadcast %1 : vector<16x1xf32> to vector<16x128xf32>
    %6 = arith.addf %4, %5 : vector<16x128xf32>
    %cst_6 = arith.constant 0.000000e+00 : f32
    %7 = vector.broadcast %cst_6 : f32 to vector<16x128xf32>
    %8 = arith.maximumf %6, %7 : vector<16x128xf32>
    %c0_7 = arith.constant 0 : index
    %c0_8 = arith.constant 0 : index
    %c0_9 = arith.constant 0 : index
    %9 = vector.load %arg4[%c0_7, %c0_8, %c0_9] : memref<27x32x16xf32, #tpu.memory_space<vmem>>, vector<1x32x16xf32>
    %10 = vector.shape_cast %9 : vector<1x32x16xf32> to vector<32x16xf32>
    %cst_10 = arith.constant dense<0.000000e+00> : vector<32x128xf32>
    %11 = tpu.matmul %10, %8, %cst_10 {dimension_numbers = #tpu.dot_dimension_numbers<[1], [0], [0], [1], [0, 0, 1, 1], [], []>} : vector<32x16xf32>, vector<16x128xf32>, vector<32x128xf32> -> vector<32x128xf32>
    %12 = arith.addf %2, %11 : vector<32x128xf32>
    %c0_11 = arith.constant 0 : index
    %c128 = arith.constant 128 : index
    %13 = vector.load %arg1[%c0_11, %c128] : memref<54x3456xf32, #tpu.memory_space<vmem>>, vector<54x128xf32>
    %cst_12 = arith.constant dense<0.000000e+00> : vector<16x128xf32>
    %14 = tpu.matmul %0, %13, %cst_12 {dimension_numbers = #tpu.dot_dimension_numbers<[1], [0], [0], [1], [0, 0, 1, 1], [], []>} : vector<16x54xf32>, vector<54x128xf32>, vector<16x128xf32> -> vector<16x128xf32>
    %15 = vector.broadcast %1 : vector<16x1xf32> to vector<16x128xf32>
    %16 = arith.addf %14, %15 : vector<16x128xf32>
    %cst_13 = arith.constant 0.000000e+00 : f32
    %17 = vector.broadcast %cst_13 : f32 to vector<16x128xf32>
    %18 = arith.maximumf %16, %17 : vector<16x128xf32>
    %c1 = arith.constant 1 : index
    %c0_14 = arith.constant 0 : index
    %c0_15 = arith.constant 0 : index
    %19 = vector.load %arg4[%c1, %c0_14, %c0_15] : memref<27x32x16xf32, #tpu.memory_space<vmem>>, vector<1x32x16xf32>
    %20 = vector.shape_cast %19 : vector<1x32x16xf32> to vector<32x16xf32>
    %cst_16 = arith.constant dense<0.000000e+00> : vector<32x128xf32>
    %21 = tpu.matmul %20, %18, %cst_16 {dimension_numbers = #tpu.dot_dimension_numbers<[1], [0], [0], [1], [0, 0, 1, 1], [], []>} : vector<32x16xf32>, vector<16x128xf32>, vector<32x128xf32> -> vector<32x128xf32>
    %22 = arith.addf %12, %21 : vector<32x128xf32>
    %c0_17 = arith.constant 0 : index
    %c256 = arith.constant 256 : index
    %23 = vector.load %arg1[%c0_17, %c256] : memref<54x3456xf32, #tpu.memory_space<vmem>>, vector<54x128xf32>
    %cst_18 = arith.constant dense<0.000000e+00> : vector<16x128xf32>
    %24 = tpu.matmul %0, %23, %cst_18 {dimension_numbers = #tpu.dot_dimension_numbers<[1], [0], [0], [1], [0, 0, 1, 1], [], []>} : vector<16x54xf32>, vector<54x128xf32>, vector<16x128xf32> -> vector<16x128xf32>
    %25 = vector.broadcast %1 : vector<16x1xf32> to vector<16x128xf32>
    %26 = arith.addf %24, %25 : vector<16x128xf32>
    %cst_19 = arith.constant 0.000000e+00 : f32
    %27 = vector.broadcast %cst_19 : f32 to vector<16x128xf32>
    %28 = arith.maximumf %26, %27 : vector<16x128xf32>
    %c2 = arith.constant 2 : index
    %c0_20 = arith.constant 0 : index
    %c0_21 = arith.constant 0 : index
    %29 = vector.load %arg4[%c2, %c0_20, %c0_21] : memref<27x32x16xf32, #tpu.memory_space<vmem>>, vector<1x32x16xf32>
    %30 = vector.shape_cast %29 : vector<1x32x16xf32> to vector<32x16xf32>
    %cst_22 = arith.constant dense<0.000000e+00> : vector<32x128xf32>
    %31 = tpu.matmul %30, %28, %cst_22 {dimension_numbers = #tpu.dot_dimension_numbers<[1], [0], [0], [1], [0, 0, 1, 1], [], []>} : vector<32x16xf32>, vector<16x128xf32>, vector<32x128xf32> -> vector<32x128xf32>
    %32 = arith.addf %22, %31 : vector<32x128xf32>
    %c0_23 = arith.constant 0 : index
    %c384 = arith.constant 384 : index
    %33 = vector.load %arg1[%c0_23, %c384] : memref<54x3456xf32, #tpu.memory_space<vmem>>, vector<54x128xf32>
    %cst_24 = arith.constant dense<0.000000e+00> : vector<16x128xf32>
    %34 = tpu.matmul %0, %33, %cst_24 {dimension_numbers = #tpu.dot_dimension_numbers<[1], [0], [0], [1], [0, 0, 1, 1], [], []>} : vector<16x54xf32>, vector<54x128xf32>, vector<16x128xf32> -> vector<16x128xf32>
    %35 = vector.broadcast %1 : vector<16x1xf32> to vector<16x128xf32>
    %36 = arith.addf %34, %35 : vector<16x128xf32>
    %cst_25 = arith.constant 0.000000e+00 : f32
    %37 = vector.broadcast %cst_25 : f32 to vector<16x128xf32>
    %38 = arith.maximumf %36, %37 : vector<16x128xf32>
    %c3 = arith.constant 3 : index
    %c0_26 = arith.constant 0 : index
    %c0_27 = arith.constant 0 : index
    %39 = vector.load %arg4[%c3, %c0_26, %c0_27] : memref<27x32x16xf32, #tpu.memory_space<vmem>>, vector<1x32x16xf32>
    %40 = vector.shape_cast %39 : vector<1x32x16xf32> to vector<32x16xf32>
    %cst_28 = arith.constant dense<0.000000e+00> : vector<32x128xf32>
    %41 = tpu.matmul %40, %38, %cst_28 {dimension_numbers = #tpu.dot_dimension_numbers<[1], [0], [0], [1], [0, 0, 1, 1], [], []>} : vector<32x16xf32>, vector<16x128xf32>, vector<32x128xf32> -> vector<32x128xf32>
    %42 = arith.addf %32, %41 : vector<32x128xf32>
    %c0_29 = arith.constant 0 : index
    %c512 = arith.constant 512 : index
    %43 = vector.load %arg1[%c0_29, %c512] : memref<54x3456xf32, #tpu.memory_space<vmem>>, vector<54x128xf32>
    %cst_30 = arith.constant dense<0.000000e+00> : vector<16x128xf32>
    %44 = tpu.matmul %0, %43, %cst_30 {dimension_numbers = #tpu.dot_dimension_numbers<[1], [0], [0], [1], [0, 0, 1, 1], [], []>} : vector<16x54xf32>, vector<54x128xf32>, vector<16x128xf32> -> vector<16x128xf32>
    %45 = vector.broadcast %1 : vector<16x1xf32> to vector<16x128xf32>
    %46 = arith.addf %44, %45 : vector<16x128xf32>
    %cst_31 = arith.constant 0.000000e+00 : f32
    %47 = vector.broadcast %cst_31 : f32 to vector<16x128xf32>
    %48 = arith.maximumf %46, %47 : vector<16x128xf32>
    %c4 = arith.constant 4 : index
    %c0_32 = arith.constant 0 : index
    %c0_33 = arith.constant 0 : index
    %49 = vector.load %arg4[%c4, %c0_32, %c0_33] : memref<27x32x16xf32, #tpu.memory_space<vmem>>, vector<1x32x16xf32>
    %50 = vector.shape_cast %49 : vector<1x32x16xf32> to vector<32x16xf32>
    %cst_34 = arith.constant dense<0.000000e+00> : vector<32x128xf32>
    %51 = tpu.matmul %50, %48, %cst_34 {dimension_numbers = #tpu.dot_dimension_numbers<[1], [0], [0], [1], [0, 0, 1, 1], [], []>} : vector<32x16xf32>, vector<16x128xf32>, vector<32x128xf32> -> vector<32x128xf32>
    %52 = arith.addf %42, %51 : vector<32x128xf32>
    %c0_35 = arith.constant 0 : index
    %c640 = arith.constant 640 : index
    %53 = vector.load %arg1[%c0_35, %c640] : memref<54x3456xf32, #tpu.memory_space<vmem>>, vector<54x128xf32>
    %cst_36 = arith.constant dense<0.000000e+00> : vector<16x128xf32>
    %54 = tpu.matmul %0, %53, %cst_36 {dimension_numbers = #tpu.dot_dimension_numbers<[1], [0], [0], [1], [0, 0, 1, 1], [], []>} : vector<16x54xf32>, vector<54x128xf32>, vector<16x128xf32> -> vector<16x128xf32>
    %55 = vector.broadcast %1 : vector<16x1xf32> to vector<16x128xf32>
    %56 = arith.addf %54, %55 : vector<16x128xf32>
    %cst_37 = arith.constant 0.000000e+00 : f32
    %57 = vector.broadcast %cst_37 : f32 to vector<16x128xf32>
    %58 = arith.maximumf %56, %57 : vector<16x128xf32>
    %c5 = arith.constant 5 : index
    %c0_38 = arith.constant 0 : index
    %c0_39 = arith.constant 0 : index
    %59 = vector.load %arg4[%c5, %c0_38, %c0_39] : memref<27x32x16xf32, #tpu.memory_space<vmem>>, vector<1x32x16xf32>
    %60 = vector.shape_cast %59 : vector<1x32x16xf32> to vector<32x16xf32>
    %cst_40 = arith.constant dense<0.000000e+00> : vector<32x128xf32>
    %61 = tpu.matmul %60, %58, %cst_40 {dimension_numbers = #tpu.dot_dimension_numbers<[1], [0], [0], [1], [0, 0, 1, 1], [], []>} : vector<32x16xf32>, vector<16x128xf32>, vector<32x128xf32> -> vector<32x128xf32>
    %62 = arith.addf %52, %61 : vector<32x128xf32>
    %c0_41 = arith.constant 0 : index
    %c768 = arith.constant 768 : index
    %63 = vector.load %arg1[%c0_41, %c768] : memref<54x3456xf32, #tpu.memory_space<vmem>>, vector<54x128xf32>
    %cst_42 = arith.constant dense<0.000000e+00> : vector<16x128xf32>
    %64 = tpu.matmul %0, %63, %cst_42 {dimension_numbers = #tpu.dot_dimension_numbers<[1], [0], [0], [1], [0, 0, 1, 1], [], []>} : vector<16x54xf32>, vector<54x128xf32>, vector<16x128xf32> -> vector<16x128xf32>
    %65 = vector.broadcast %1 : vector<16x1xf32> to vector<16x128xf32>
    %66 = arith.addf %64, %65 : vector<16x128xf32>
    %cst_43 = arith.constant 0.000000e+00 : f32
    %67 = vector.broadcast %cst_43 : f32 to vector<16x128xf32>
    %68 = arith.maximumf %66, %67 : vector<16x128xf32>
    %c6 = arith.constant 6 : index
    %c0_44 = arith.constant 0 : index
    %c0_45 = arith.constant 0 : index
    %69 = vector.load %arg4[%c6, %c0_44, %c0_45] : memref<27x32x16xf32, #tpu.memory_space<vmem>>, vector<1x32x16xf32>
    %70 = vector.shape_cast %69 : vector<1x32x16xf32> to vector<32x16xf32>
    %cst_46 = arith.constant dense<0.000000e+00> : vector<32x128xf32>
    %71 = tpu.matmul %70, %68, %cst_46 {dimension_numbers = #tpu.dot_dimension_numbers<[1], [0], [0], [1], [0, 0, 1, 1], [], []>} : vector<32x16xf32>, vector<16x128xf32>, vector<32x128xf32> -> vector<32x128xf32>
    %72 = arith.addf %62, %71 : vector<32x128xf32>
    %c0_47 = arith.constant 0 : index
    %c896 = arith.constant 896 : index
    %73 = vector.load %arg1[%c0_47, %c896] : memref<54x3456xf32, #tpu.memory_space<vmem>>, vector<54x128xf32>
    %cst_48 = arith.constant dense<0.000000e+00> : vector<16x128xf32>
    %74 = tpu.matmul %0, %73, %cst_48 {dimension_numbers = #tpu.dot_dimension_numbers<[1], [0], [0], [1], [0, 0, 1, 1], [], []>} : vector<16x54xf32>, vector<54x128xf32>, vector<16x128xf32> -> vector<16x128xf32>
    %75 = vector.broadcast %1 : vector<16x1xf32> to vector<16x128xf32>
    %76 = arith.addf %74, %75 : vector<16x128xf32>
    %cst_49 = arith.constant 0.000000e+00 : f32
    %77 = vector.broadcast %cst_49 : f32 to vector<16x128xf32>
    %78 = arith.maximumf %76, %77 : vector<16x128xf32>
    %c7 = arith.constant 7 : index
    %c0_50 = arith.constant 0 : index
    %c0_51 = arith.constant 0 : index
    %79 = vector.load %arg4[%c7, %c0_50, %c0_51] : memref<27x32x16xf32, #tpu.memory_space<vmem>>, vector<1x32x16xf32>
    %80 = vector.shape_cast %79 : vector<1x32x16xf32> to vector<32x16xf32>
    %cst_52 = arith.constant dense<0.000000e+00> : vector<32x128xf32>
    %81 = tpu.matmul %80, %78, %cst_52 {dimension_numbers = #tpu.dot_dimension_numbers<[1], [0], [0], [1], [0, 0, 1, 1], [], []>} : vector<32x16xf32>, vector<16x128xf32>, vector<32x128xf32> -> vector<32x128xf32>
    %82 = arith.addf %72, %81 : vector<32x128xf32>
    %c0_53 = arith.constant 0 : index
    %c1024 = arith.constant 1024 : index
    %83 = vector.load %arg1[%c0_53, %c1024] : memref<54x3456xf32, #tpu.memory_space<vmem>>, vector<54x128xf32>
    %cst_54 = arith.constant dense<0.000000e+00> : vector<16x128xf32>
    %84 = tpu.matmul %0, %83, %cst_54 {dimension_numbers = #tpu.dot_dimension_numbers<[1], [0], [0], [1], [0, 0, 1, 1], [], []>} : vector<16x54xf32>, vector<54x128xf32>, vector<16x128xf32> -> vector<16x128xf32>
    %85 = vector.broadcast %1 : vector<16x1xf32> to vector<16x128xf32>
    %86 = arith.addf %84, %85 : vector<16x128xf32>
    %cst_55 = arith.constant 0.000000e+00 : f32
    %87 = vector.broadcast %cst_55 : f32 to vector<16x128xf32>
    %88 = arith.maximumf %86, %87 : vector<16x128xf32>
    %c8 = arith.constant 8 : index
    %c0_56 = arith.constant 0 : index
    %c0_57 = arith.constant 0 : index
    %89 = vector.load %arg4[%c8, %c0_56, %c0_57] : memref<27x32x16xf32, #tpu.memory_space<vmem>>, vector<1x32x16xf32>
    %90 = vector.shape_cast %89 : vector<1x32x16xf32> to vector<32x16xf32>
    %cst_58 = arith.constant dense<0.000000e+00> : vector<32x128xf32>
    %91 = tpu.matmul %90, %88, %cst_58 {dimension_numbers = #tpu.dot_dimension_numbers<[1], [0], [0], [1], [0, 0, 1, 1], [], []>} : vector<32x16xf32>, vector<16x128xf32>, vector<32x128xf32> -> vector<32x128xf32>
    %92 = arith.addf %82, %91 : vector<32x128xf32>
    %c0_59 = arith.constant 0 : index
    %c1152 = arith.constant 1152 : index
    %93 = vector.load %arg1[%c0_59, %c1152] : memref<54x3456xf32, #tpu.memory_space<vmem>>, vector<54x128xf32>
    %cst_60 = arith.constant dense<0.000000e+00> : vector<16x128xf32>
    %94 = tpu.matmul %0, %93, %cst_60 {dimension_numbers = #tpu.dot_dimension_numbers<[1], [0], [0], [1], [0, 0, 1, 1], [], []>} : vector<16x54xf32>, vector<54x128xf32>, vector<16x128xf32> -> vector<16x128xf32>
    %95 = vector.broadcast %1 : vector<16x1xf32> to vector<16x128xf32>
    %96 = arith.addf %94, %95 : vector<16x128xf32>
    %cst_61 = arith.constant 0.000000e+00 : f32
    %97 = vector.broadcast %cst_61 : f32 to vector<16x128xf32>
    %98 = arith.maximumf %96, %97 : vector<16x128xf32>
    %c9 = arith.constant 9 : index
    %c0_62 = arith.constant 0 : index
    %c0_63 = arith.constant 0 : index
    %99 = vector.load %arg4[%c9, %c0_62, %c0_63] : memref<27x32x16xf32, #tpu.memory_space<vmem>>, vector<1x32x16xf32>
    %100 = vector.shape_cast %99 : vector<1x32x16xf32> to vector<32x16xf32>
    %cst_64 = arith.constant dense<0.000000e+00> : vector<32x128xf32>
    %101 = tpu.matmul %100, %98, %cst_64 {dimension_numbers = #tpu.dot_dimension_numbers<[1], [0], [0], [1], [0, 0, 1, 1], [], []>} : vector<32x16xf32>, vector<16x128xf32>, vector<32x128xf32> -> vector<32x128xf32>
    %102 = arith.addf %92, %101 : vector<32x128xf32>
    %c0_65 = arith.constant 0 : index
    %c1280 = arith.constant 1280 : index
    %103 = vector.load %arg1[%c0_65, %c1280] : memref<54x3456xf32, #tpu.memory_space<vmem>>, vector<54x128xf32>
    %cst_66 = arith.constant dense<0.000000e+00> : vector<16x128xf32>
    %104 = tpu.matmul %0, %103, %cst_66 {dimension_numbers = #tpu.dot_dimension_numbers<[1], [0], [0], [1], [0, 0, 1, 1], [], []>} : vector<16x54xf32>, vector<54x128xf32>, vector<16x128xf32> -> vector<16x128xf32>
    %105 = vector.broadcast %1 : vector<16x1xf32> to vector<16x128xf32>
    %106 = arith.addf %104, %105 : vector<16x128xf32>
    %cst_67 = arith.constant 0.000000e+00 : f32
    %107 = vector.broadcast %cst_67 : f32 to vector<16x128xf32>
    %108 = arith.maximumf %106, %107 : vector<16x128xf32>
    %c10 = arith.constant 10 : index
    %c0_68 = arith.constant 0 : index
    %c0_69 = arith.constant 0 : index
    %109 = vector.load %arg4[%c10, %c0_68, %c0_69] : memref<27x32x16xf32, #tpu.memory_space<vmem>>, vector<1x32x16xf32>
    %110 = vector.shape_cast %109 : vector<1x32x16xf32> to vector<32x16xf32>
    %cst_70 = arith.constant dense<0.000000e+00> : vector<32x128xf32>
    %111 = tpu.matmul %110, %108, %cst_70 {dimension_numbers = #tpu.dot_dimension_numbers<[1], [0], [0], [1], [0, 0, 1, 1], [], []>} : vector<32x16xf32>, vector<16x128xf32>, vector<32x128xf32> -> vector<32x128xf32>
    %112 = arith.addf %102, %111 : vector<32x128xf32>
    %c0_71 = arith.constant 0 : index
    %c1408 = arith.constant 1408 : index
    %113 = vector.load %arg1[%c0_71, %c1408] : memref<54x3456xf32, #tpu.memory_space<vmem>>, vector<54x128xf32>
    %cst_72 = arith.constant dense<0.000000e+00> : vector<16x128xf32>
    %114 = tpu.matmul %0, %113, %cst_72 {dimension_numbers = #tpu.dot_dimension_numbers<[1], [0], [0], [1], [0, 0, 1, 1], [], []>} : vector<16x54xf32>, vector<54x128xf32>, vector<16x128xf32> -> vector<16x128xf32>
    %115 = vector.broadcast %1 : vector<16x1xf32> to vector<16x128xf32>
    %116 = arith.addf %114, %115 : vector<16x128xf32>
    %cst_73 = arith.constant 0.000000e+00 : f32
    %117 = vector.broadcast %cst_73 : f32 to vector<16x128xf32>
    %118 = arith.maximumf %116, %117 : vector<16x128xf32>
    %c11 = arith.constant 11 : index
    %c0_74 = arith.constant 0 : index
    %c0_75 = arith.constant 0 : index
    %119 = vector.load %arg4[%c11, %c0_74, %c0_75] : memref<27x32x16xf32, #tpu.memory_space<vmem>>, vector<1x32x16xf32>
    %120 = vector.shape_cast %119 : vector<1x32x16xf32> to vector<32x16xf32>
    %cst_76 = arith.constant dense<0.000000e+00> : vector<32x128xf32>
    %121 = tpu.matmul %120, %118, %cst_76 {dimension_numbers = #tpu.dot_dimension_numbers<[1], [0], [0], [1], [0, 0, 1, 1], [], []>} : vector<32x16xf32>, vector<16x128xf32>, vector<32x128xf32> -> vector<32x128xf32>
    %122 = arith.addf %112, %121 : vector<32x128xf32>
    %c0_77 = arith.constant 0 : index
    %c1536 = arith.constant 1536 : index
    %123 = vector.load %arg1[%c0_77, %c1536] : memref<54x3456xf32, #tpu.memory_space<vmem>>, vector<54x128xf32>
    %cst_78 = arith.constant dense<0.000000e+00> : vector<16x128xf32>
    %124 = tpu.matmul %0, %123, %cst_78 {dimension_numbers = #tpu.dot_dimension_numbers<[1], [0], [0], [1], [0, 0, 1, 1], [], []>} : vector<16x54xf32>, vector<54x128xf32>, vector<16x128xf32> -> vector<16x128xf32>
    %125 = vector.broadcast %1 : vector<16x1xf32> to vector<16x128xf32>
    %126 = arith.addf %124, %125 : vector<16x128xf32>
    %cst_79 = arith.constant 0.000000e+00 : f32
    %127 = vector.broadcast %cst_79 : f32 to vector<16x128xf32>
    %128 = arith.maximumf %126, %127 : vector<16x128xf32>
    %c12 = arith.constant 12 : index
    %c0_80 = arith.constant 0 : index
    %c0_81 = arith.constant 0 : index
    %129 = vector.load %arg4[%c12, %c0_80, %c0_81] : memref<27x32x16xf32, #tpu.memory_space<vmem>>, vector<1x32x16xf32>
    %130 = vector.shape_cast %129 : vector<1x32x16xf32> to vector<32x16xf32>
    %cst_82 = arith.constant dense<0.000000e+00> : vector<32x128xf32>
    %131 = tpu.matmul %130, %128, %cst_82 {dimension_numbers = #tpu.dot_dimension_numbers<[1], [0], [0], [1], [0, 0, 1, 1], [], []>} : vector<32x16xf32>, vector<16x128xf32>, vector<32x128xf32> -> vector<32x128xf32>
    %132 = arith.addf %122, %131 : vector<32x128xf32>
    %c0_83 = arith.constant 0 : index
    %c1664 = arith.constant 1664 : index
    %133 = vector.load %arg1[%c0_83, %c1664] : memref<54x3456xf32, #tpu.memory_space<vmem>>, vector<54x128xf32>
    %cst_84 = arith.constant dense<0.000000e+00> : vector<16x128xf32>
    %134 = tpu.matmul %0, %133, %cst_84 {dimension_numbers = #tpu.dot_dimension_numbers<[1], [0], [0], [1], [0, 0, 1, 1], [], []>} : vector<16x54xf32>, vector<54x128xf32>, vector<16x128xf32> -> vector<16x128xf32>
    %135 = vector.broadcast %1 : vector<16x1xf32> to vector<16x128xf32>
    %136 = arith.addf %134, %135 : vector<16x128xf32>
    %cst_85 = arith.constant 0.000000e+00 : f32
    %137 = vector.broadcast %cst_85 : f32 to vector<16x128xf32>
    %138 = arith.maximumf %136, %137 : vector<16x128xf32>
    %c13 = arith.constant 13 : index
    %c0_86 = arith.constant 0 : index
    %c0_87 = arith.constant 0 : index
    %139 = vector.load %arg4[%c13, %c0_86, %c0_87] : memref<27x32x16xf32, #tpu.memory_space<vmem>>, vector<1x32x16xf32>
    %140 = vector.shape_cast %139 : vector<1x32x16xf32> to vector<32x16xf32>
    %cst_88 = arith.constant dense<0.000000e+00> : vector<32x128xf32>
    %141 = tpu.matmul %140, %138, %cst_88 {dimension_numbers = #tpu.dot_dimension_numbers<[1], [0], [0], [1], [0, 0, 1, 1], [], []>} : vector<32x16xf32>, vector<16x128xf32>, vector<32x128xf32> -> vector<32x128xf32>
    %142 = arith.addf %132, %141 : vector<32x128xf32>
    %c0_89 = arith.constant 0 : index
    %c1792 = arith.constant 1792 : index
    %143 = vector.load %arg1[%c0_89, %c1792] : memref<54x3456xf32, #tpu.memory_space<vmem>>, vector<54x128xf32>
    %cst_90 = arith.constant dense<0.000000e+00> : vector<16x128xf32>
    %144 = tpu.matmul %0, %143, %cst_90 {dimension_numbers = #tpu.dot_dimension_numbers<[1], [0], [0], [1], [0, 0, 1, 1], [], []>} : vector<16x54xf32>, vector<54x128xf32>, vector<16x128xf32> -> vector<16x128xf32>
    %145 = vector.broadcast %1 : vector<16x1xf32> to vector<16x128xf32>
    %146 = arith.addf %144, %145 : vector<16x128xf32>
    %cst_91 = arith.constant 0.000000e+00 : f32
    %147 = vector.broadcast %cst_91 : f32 to vector<16x128xf32>
    %148 = arith.maximumf %146, %147 : vector<16x128xf32>
    %c14 = arith.constant 14 : index
    %c0_92 = arith.constant 0 : index
    %c0_93 = arith.constant 0 : index
    %149 = vector.load %arg4[%c14, %c0_92, %c0_93] : memref<27x32x16xf32, #tpu.memory_space<vmem>>, vector<1x32x16xf32>
    %150 = vector.shape_cast %149 : vector<1x32x16xf32> to vector<32x16xf32>
    %cst_94 = arith.constant dense<0.000000e+00> : vector<32x128xf32>
    %151 = tpu.matmul %150, %148, %cst_94 {dimension_numbers = #tpu.dot_dimension_numbers<[1], [0], [0], [1], [0, 0, 1, 1], [], []>} : vector<32x16xf32>, vector<16x128xf32>, vector<32x128xf32> -> vector<32x128xf32>
    %152 = arith.addf %142, %151 : vector<32x128xf32>
    %c0_95 = arith.constant 0 : index
    %c1920 = arith.constant 1920 : index
    %153 = vector.load %arg1[%c0_95, %c1920] : memref<54x3456xf32, #tpu.memory_space<vmem>>, vector<54x128xf32>
    %cst_96 = arith.constant dense<0.000000e+00> : vector<16x128xf32>
    %154 = tpu.matmul %0, %153, %cst_96 {dimension_numbers = #tpu.dot_dimension_numbers<[1], [0], [0], [1], [0, 0, 1, 1], [], []>} : vector<16x54xf32>, vector<54x128xf32>, vector<16x128xf32> -> vector<16x128xf32>
    %155 = vector.broadcast %1 : vector<16x1xf32> to vector<16x128xf32>
    %156 = arith.addf %154, %155 : vector<16x128xf32>
    %cst_97 = arith.constant 0.000000e+00 : f32
    %157 = vector.broadcast %cst_97 : f32 to vector<16x128xf32>
    %158 = arith.maximumf %156, %157 : vector<16x128xf32>
    %c15 = arith.constant 15 : index
    %c0_98 = arith.constant 0 : index
    %c0_99 = arith.constant 0 : index
    %159 = vector.load %arg4[%c15, %c0_98, %c0_99] : memref<27x32x16xf32, #tpu.memory_space<vmem>>, vector<1x32x16xf32>
    %160 = vector.shape_cast %159 : vector<1x32x16xf32> to vector<32x16xf32>
    %cst_100 = arith.constant dense<0.000000e+00> : vector<32x128xf32>
    %161 = tpu.matmul %160, %158, %cst_100 {dimension_numbers = #tpu.dot_dimension_numbers<[1], [0], [0], [1], [0, 0, 1, 1], [], []>} : vector<32x16xf32>, vector<16x128xf32>, vector<32x128xf32> -> vector<32x128xf32>
    %162 = arith.addf %152, %161 : vector<32x128xf32>
    %c0_101 = arith.constant 0 : index
    %c2048 = arith.constant 2048 : index
    %163 = vector.load %arg1[%c0_101, %c2048] : memref<54x3456xf32, #tpu.memory_space<vmem>>, vector<54x128xf32>
    %cst_102 = arith.constant dense<0.000000e+00> : vector<16x128xf32>
    %164 = tpu.matmul %0, %163, %cst_102 {dimension_numbers = #tpu.dot_dimension_numbers<[1], [0], [0], [1], [0, 0, 1, 1], [], []>} : vector<16x54xf32>, vector<54x128xf32>, vector<16x128xf32> -> vector<16x128xf32>
    %165 = vector.broadcast %1 : vector<16x1xf32> to vector<16x128xf32>
    %166 = arith.addf %164, %165 : vector<16x128xf32>
    %cst_103 = arith.constant 0.000000e+00 : f32
    %167 = vector.broadcast %cst_103 : f32 to vector<16x128xf32>
    %168 = arith.maximumf %166, %167 : vector<16x128xf32>
    %c16 = arith.constant 16 : index
    %c0_104 = arith.constant 0 : index
    %c0_105 = arith.constant 0 : index
    %169 = vector.load %arg4[%c16, %c0_104, %c0_105] : memref<27x32x16xf32, #tpu.memory_space<vmem>>, vector<1x32x16xf32>
    %170 = vector.shape_cast %169 : vector<1x32x16xf32> to vector<32x16xf32>
    %cst_106 = arith.constant dense<0.000000e+00> : vector<32x128xf32>
    %171 = tpu.matmul %170, %168, %cst_106 {dimension_numbers = #tpu.dot_dimension_numbers<[1], [0], [0], [1], [0, 0, 1, 1], [], []>} : vector<32x16xf32>, vector<16x128xf32>, vector<32x128xf32> -> vector<32x128xf32>
    %172 = arith.addf %162, %171 : vector<32x128xf32>
    %c0_107 = arith.constant 0 : index
    %c2176 = arith.constant 2176 : index
    %173 = vector.load %arg1[%c0_107, %c2176] : memref<54x3456xf32, #tpu.memory_space<vmem>>, vector<54x128xf32>
    %cst_108 = arith.constant dense<0.000000e+00> : vector<16x128xf32>
    %174 = tpu.matmul %0, %173, %cst_108 {dimension_numbers = #tpu.dot_dimension_numbers<[1], [0], [0], [1], [0, 0, 1, 1], [], []>} : vector<16x54xf32>, vector<54x128xf32>, vector<16x128xf32> -> vector<16x128xf32>
    %175 = vector.broadcast %1 : vector<16x1xf32> to vector<16x128xf32>
    %176 = arith.addf %174, %175 : vector<16x128xf32>
    %cst_109 = arith.constant 0.000000e+00 : f32
    %177 = vector.broadcast %cst_109 : f32 to vector<16x128xf32>
    %178 = arith.maximumf %176, %177 : vector<16x128xf32>
    %c17 = arith.constant 17 : index
    %c0_110 = arith.constant 0 : index
    %c0_111 = arith.constant 0 : index
    %179 = vector.load %arg4[%c17, %c0_110, %c0_111] : memref<27x32x16xf32, #tpu.memory_space<vmem>>, vector<1x32x16xf32>
    %180 = vector.shape_cast %179 : vector<1x32x16xf32> to vector<32x16xf32>
    %cst_112 = arith.constant dense<0.000000e+00> : vector<32x128xf32>
    %181 = tpu.matmul %180, %178, %cst_112 {dimension_numbers = #tpu.dot_dimension_numbers<[1], [0], [0], [1], [0, 0, 1, 1], [], []>} : vector<32x16xf32>, vector<16x128xf32>, vector<32x128xf32> -> vector<32x128xf32>
    %182 = arith.addf %172, %181 : vector<32x128xf32>
    %c0_113 = arith.constant 0 : index
    %c2304 = arith.constant 2304 : index
    %183 = vector.load %arg1[%c0_113, %c2304] : memref<54x3456xf32, #tpu.memory_space<vmem>>, vector<54x128xf32>
    %cst_114 = arith.constant dense<0.000000e+00> : vector<16x128xf32>
    %184 = tpu.matmul %0, %183, %cst_114 {dimension_numbers = #tpu.dot_dimension_numbers<[1], [0], [0], [1], [0, 0, 1, 1], [], []>} : vector<16x54xf32>, vector<54x128xf32>, vector<16x128xf32> -> vector<16x128xf32>
    %185 = vector.broadcast %1 : vector<16x1xf32> to vector<16x128xf32>
    %186 = arith.addf %184, %185 : vector<16x128xf32>
    %cst_115 = arith.constant 0.000000e+00 : f32
    %187 = vector.broadcast %cst_115 : f32 to vector<16x128xf32>
    %188 = arith.maximumf %186, %187 : vector<16x128xf32>
    %c18 = arith.constant 18 : index
    %c0_116 = arith.constant 0 : index
    %c0_117 = arith.constant 0 : index
    %189 = vector.load %arg4[%c18, %c0_116, %c0_117] : memref<27x32x16xf32, #tpu.memory_space<vmem>>, vector<1x32x16xf32>
    %190 = vector.shape_cast %189 : vector<1x32x16xf32> to vector<32x16xf32>
    %cst_118 = arith.constant dense<0.000000e+00> : vector<32x128xf32>
    %191 = tpu.matmul %190, %188, %cst_118 {dimension_numbers = #tpu.dot_dimension_numbers<[1], [0], [0], [1], [0, 0, 1, 1], [], []>} : vector<32x16xf32>, vector<16x128xf32>, vector<32x128xf32> -> vector<32x128xf32>
    %192 = arith.addf %182, %191 : vector<32x128xf32>
    %c0_119 = arith.constant 0 : index
    %c2432 = arith.constant 2432 : index
    %193 = vector.load %arg1[%c0_119, %c2432] : memref<54x3456xf32, #tpu.memory_space<vmem>>, vector<54x128xf32>
    %cst_120 = arith.constant dense<0.000000e+00> : vector<16x128xf32>
    %194 = tpu.matmul %0, %193, %cst_120 {dimension_numbers = #tpu.dot_dimension_numbers<[1], [0], [0], [1], [0, 0, 1, 1], [], []>} : vector<16x54xf32>, vector<54x128xf32>, vector<16x128xf32> -> vector<16x128xf32>
    %195 = vector.broadcast %1 : vector<16x1xf32> to vector<16x128xf32>
    %196 = arith.addf %194, %195 : vector<16x128xf32>
    %cst_121 = arith.constant 0.000000e+00 : f32
    %197 = vector.broadcast %cst_121 : f32 to vector<16x128xf32>
    %198 = arith.maximumf %196, %197 : vector<16x128xf32>
    %c19 = arith.constant 19 : index
    %c0_122 = arith.constant 0 : index
    %c0_123 = arith.constant 0 : index
    %199 = vector.load %arg4[%c19, %c0_122, %c0_123] : memref<27x32x16xf32, #tpu.memory_space<vmem>>, vector<1x32x16xf32>
    %200 = vector.shape_cast %199 : vector<1x32x16xf32> to vector<32x16xf32>
    %cst_124 = arith.constant dense<0.000000e+00> : vector<32x128xf32>
    %201 = tpu.matmul %200, %198, %cst_124 {dimension_numbers = #tpu.dot_dimension_numbers<[1], [0], [0], [1], [0, 0, 1, 1], [], []>} : vector<32x16xf32>, vector<16x128xf32>, vector<32x128xf32> -> vector<32x128xf32>
    %202 = arith.addf %192, %201 : vector<32x128xf32>
    %c0_125 = arith.constant 0 : index
    %c2560 = arith.constant 2560 : index
    %203 = vector.load %arg1[%c0_125, %c2560] : memref<54x3456xf32, #tpu.memory_space<vmem>>, vector<54x128xf32>
    %cst_126 = arith.constant dense<0.000000e+00> : vector<16x128xf32>
    %204 = tpu.matmul %0, %203, %cst_126 {dimension_numbers = #tpu.dot_dimension_numbers<[1], [0], [0], [1], [0, 0, 1, 1], [], []>} : vector<16x54xf32>, vector<54x128xf32>, vector<16x128xf32> -> vector<16x128xf32>
    %205 = vector.broadcast %1 : vector<16x1xf32> to vector<16x128xf32>
    %206 = arith.addf %204, %205 : vector<16x128xf32>
    %cst_127 = arith.constant 0.000000e+00 : f32
    %207 = vector.broadcast %cst_127 : f32 to vector<16x128xf32>
    %208 = arith.maximumf %206, %207 : vector<16x128xf32>
    %c20 = arith.constant 20 : index
    %c0_128 = arith.constant 0 : index
    %c0_129 = arith.constant 0 : index
    %209 = vector.load %arg4[%c20, %c0_128, %c0_129] : memref<27x32x16xf32, #tpu.memory_space<vmem>>, vector<1x32x16xf32>
    %210 = vector.shape_cast %209 : vector<1x32x16xf32> to vector<32x16xf32>
    %cst_130 = arith.constant dense<0.000000e+00> : vector<32x128xf32>
    %211 = tpu.matmul %210, %208, %cst_130 {dimension_numbers = #tpu.dot_dimension_numbers<[1], [0], [0], [1], [0, 0, 1, 1], [], []>} : vector<32x16xf32>, vector<16x128xf32>, vector<32x128xf32> -> vector<32x128xf32>
    %212 = arith.addf %202, %211 : vector<32x128xf32>
    %c0_131 = arith.constant 0 : index
    %c2688 = arith.constant 2688 : index
    %213 = vector.load %arg1[%c0_131, %c2688] : memref<54x3456xf32, #tpu.memory_space<vmem>>, vector<54x128xf32>
    %cst_132 = arith.constant dense<0.000000e+00> : vector<16x128xf32>
    %214 = tpu.matmul %0, %213, %cst_132 {dimension_numbers = #tpu.dot_dimension_numbers<[1], [0], [0], [1], [0, 0, 1, 1], [], []>} : vector<16x54xf32>, vector<54x128xf32>, vector<16x128xf32> -> vector<16x128xf32>
    %215 = vector.broadcast %1 : vector<16x1xf32> to vector<16x128xf32>
    %216 = arith.addf %214, %215 : vector<16x128xf32>
    %cst_133 = arith.constant 0.000000e+00 : f32
    %217 = vector.broadcast %cst_133 : f32 to vector<16x128xf32>
    %218 = arith.maximumf %216, %217 : vector<16x128xf32>
    %c21 = arith.constant 21 : index
    %c0_134 = arith.constant 0 : index
    %c0_135 = arith.constant 0 : index
    %219 = vector.load %arg4[%c21, %c0_134, %c0_135] : memref<27x32x16xf32, #tpu.memory_space<vmem>>, vector<1x32x16xf32>
    %220 = vector.shape_cast %219 : vector<1x32x16xf32> to vector<32x16xf32>
    %cst_136 = arith.constant dense<0.000000e+00> : vector<32x128xf32>
    %221 = tpu.matmul %220, %218, %cst_136 {dimension_numbers = #tpu.dot_dimension_numbers<[1], [0], [0], [1], [0, 0, 1, 1], [], []>} : vector<32x16xf32>, vector<16x128xf32>, vector<32x128xf32> -> vector<32x128xf32>
    %222 = arith.addf %212, %221 : vector<32x128xf32>
    %c0_137 = arith.constant 0 : index
    %c2816 = arith.constant 2816 : index
    %223 = vector.load %arg1[%c0_137, %c2816] : memref<54x3456xf32, #tpu.memory_space<vmem>>, vector<54x128xf32>
    %cst_138 = arith.constant dense<0.000000e+00> : vector<16x128xf32>
    %224 = tpu.matmul %0, %223, %cst_138 {dimension_numbers = #tpu.dot_dimension_numbers<[1], [0], [0], [1], [0, 0, 1, 1], [], []>} : vector<16x54xf32>, vector<54x128xf32>, vector<16x128xf32> -> vector<16x128xf32>
    %225 = vector.broadcast %1 : vector<16x1xf32> to vector<16x128xf32>
    %226 = arith.addf %224, %225 : vector<16x128xf32>
    %cst_139 = arith.constant 0.000000e+00 : f32
    %227 = vector.broadcast %cst_139 : f32 to vector<16x128xf32>
    %228 = arith.maximumf %226, %227 : vector<16x128xf32>
    %c22 = arith.constant 22 : index
    %c0_140 = arith.constant 0 : index
    %c0_141 = arith.constant 0 : index
    %229 = vector.load %arg4[%c22, %c0_140, %c0_141] : memref<27x32x16xf32, #tpu.memory_space<vmem>>, vector<1x32x16xf32>
    %230 = vector.shape_cast %229 : vector<1x32x16xf32> to vector<32x16xf32>
    %cst_142 = arith.constant dense<0.000000e+00> : vector<32x128xf32>
    %231 = tpu.matmul %230, %228, %cst_142 {dimension_numbers = #tpu.dot_dimension_numbers<[1], [0], [0], [1], [0, 0, 1, 1], [], []>} : vector<32x16xf32>, vector<16x128xf32>, vector<32x128xf32> -> vector<32x128xf32>
    %232 = arith.addf %222, %231 : vector<32x128xf32>
    %c0_143 = arith.constant 0 : index
    %c2944 = arith.constant 2944 : index
    %233 = vector.load %arg1[%c0_143, %c2944] : memref<54x3456xf32, #tpu.memory_space<vmem>>, vector<54x128xf32>
    %cst_144 = arith.constant dense<0.000000e+00> : vector<16x128xf32>
    %234 = tpu.matmul %0, %233, %cst_144 {dimension_numbers = #tpu.dot_dimension_numbers<[1], [0], [0], [1], [0, 0, 1, 1], [], []>} : vector<16x54xf32>, vector<54x128xf32>, vector<16x128xf32> -> vector<16x128xf32>
    %235 = vector.broadcast %1 : vector<16x1xf32> to vector<16x128xf32>
    %236 = arith.addf %234, %235 : vector<16x128xf32>
    %cst_145 = arith.constant 0.000000e+00 : f32
    %237 = vector.broadcast %cst_145 : f32 to vector<16x128xf32>
    %238 = arith.maximumf %236, %237 : vector<16x128xf32>
    %c23 = arith.constant 23 : index
    %c0_146 = arith.constant 0 : index
    %c0_147 = arith.constant 0 : index
    %239 = vector.load %arg4[%c23, %c0_146, %c0_147] : memref<27x32x16xf32, #tpu.memory_space<vmem>>, vector<1x32x16xf32>
    %240 = vector.shape_cast %239 : vector<1x32x16xf32> to vector<32x16xf32>
    %cst_148 = arith.constant dense<0.000000e+00> : vector<32x128xf32>
    %241 = tpu.matmul %240, %238, %cst_148 {dimension_numbers = #tpu.dot_dimension_numbers<[1], [0], [0], [1], [0, 0, 1, 1], [], []>} : vector<32x16xf32>, vector<16x128xf32>, vector<32x128xf32> -> vector<32x128xf32>
    %242 = arith.addf %232, %241 : vector<32x128xf32>
    %c0_149 = arith.constant 0 : index
    %c3072 = arith.constant 3072 : index
    %243 = vector.load %arg1[%c0_149, %c3072] : memref<54x3456xf32, #tpu.memory_space<vmem>>, vector<54x128xf32>
    %cst_150 = arith.constant dense<0.000000e+00> : vector<16x128xf32>
    %244 = tpu.matmul %0, %243, %cst_150 {dimension_numbers = #tpu.dot_dimension_numbers<[1], [0], [0], [1], [0, 0, 1, 1], [], []>} : vector<16x54xf32>, vector<54x128xf32>, vector<16x128xf32> -> vector<16x128xf32>
    %245 = vector.broadcast %1 : vector<16x1xf32> to vector<16x128xf32>
    %246 = arith.addf %244, %245 : vector<16x128xf32>
    %cst_151 = arith.constant 0.000000e+00 : f32
    %247 = vector.broadcast %cst_151 : f32 to vector<16x128xf32>
    %248 = arith.maximumf %246, %247 : vector<16x128xf32>
    %c24 = arith.constant 24 : index
    %c0_152 = arith.constant 0 : index
    %c0_153 = arith.constant 0 : index
    %249 = vector.load %arg4[%c24, %c0_152, %c0_153] : memref<27x32x16xf32, #tpu.memory_space<vmem>>, vector<1x32x16xf32>
    %250 = vector.shape_cast %249 : vector<1x32x16xf32> to vector<32x16xf32>
    %cst_154 = arith.constant dense<0.000000e+00> : vector<32x128xf32>
    %251 = tpu.matmul %250, %248, %cst_154 {dimension_numbers = #tpu.dot_dimension_numbers<[1], [0], [0], [1], [0, 0, 1, 1], [], []>} : vector<32x16xf32>, vector<16x128xf32>, vector<32x128xf32> -> vector<32x128xf32>
    %252 = arith.addf %242, %251 : vector<32x128xf32>
    %c0_155 = arith.constant 0 : index
    %c3200 = arith.constant 3200 : index
    %253 = vector.load %arg1[%c0_155, %c3200] : memref<54x3456xf32, #tpu.memory_space<vmem>>, vector<54x128xf32>
    %cst_156 = arith.constant dense<0.000000e+00> : vector<16x128xf32>
    %254 = tpu.matmul %0, %253, %cst_156 {dimension_numbers = #tpu.dot_dimension_numbers<[1], [0], [0], [1], [0, 0, 1, 1], [], []>} : vector<16x54xf32>, vector<54x128xf32>, vector<16x128xf32> -> vector<16x128xf32>
    %255 = vector.broadcast %1 : vector<16x1xf32> to vector<16x128xf32>
    %256 = arith.addf %254, %255 : vector<16x128xf32>
    %cst_157 = arith.constant 0.000000e+00 : f32
    %257 = vector.broadcast %cst_157 : f32 to vector<16x128xf32>
    %258 = arith.maximumf %256, %257 : vector<16x128xf32>
    %c25 = arith.constant 25 : index
    %c0_158 = arith.constant 0 : index
    %c0_159 = arith.constant 0 : index
    %259 = vector.load %arg4[%c25, %c0_158, %c0_159] : memref<27x32x16xf32, #tpu.memory_space<vmem>>, vector<1x32x16xf32>
    %260 = vector.shape_cast %259 : vector<1x32x16xf32> to vector<32x16xf32>
    %cst_160 = arith.constant dense<0.000000e+00> : vector<32x128xf32>
    %261 = tpu.matmul %260, %258, %cst_160 {dimension_numbers = #tpu.dot_dimension_numbers<[1], [0], [0], [1], [0, 0, 1, 1], [], []>} : vector<32x16xf32>, vector<16x128xf32>, vector<32x128xf32> -> vector<32x128xf32>
    %262 = arith.addf %252, %261 : vector<32x128xf32>
    %c0_161 = arith.constant 0 : index
    %c3328 = arith.constant 3328 : index
    %263 = vector.load %arg1[%c0_161, %c3328] : memref<54x3456xf32, #tpu.memory_space<vmem>>, vector<54x128xf32>
    %cst_162 = arith.constant dense<0.000000e+00> : vector<16x128xf32>
    %264 = tpu.matmul %0, %263, %cst_162 {dimension_numbers = #tpu.dot_dimension_numbers<[1], [0], [0], [1], [0, 0, 1, 1], [], []>} : vector<16x54xf32>, vector<54x128xf32>, vector<16x128xf32> -> vector<16x128xf32>
    %265 = vector.broadcast %1 : vector<16x1xf32> to vector<16x128xf32>
    %266 = arith.addf %264, %265 : vector<16x128xf32>
    %cst_163 = arith.constant 0.000000e+00 : f32
    %267 = vector.broadcast %cst_163 : f32 to vector<16x128xf32>
    %268 = arith.maximumf %266, %267 : vector<16x128xf32>
    %c26 = arith.constant 26 : index
    %c0_164 = arith.constant 0 : index
    %c0_165 = arith.constant 0 : index
    %269 = vector.load %arg4[%c26, %c0_164, %c0_165] : memref<27x32x16xf32, #tpu.memory_space<vmem>>, vector<1x32x16xf32>
    %270 = vector.shape_cast %269 : vector<1x32x16xf32> to vector<32x16xf32>
    %cst_166 = arith.constant dense<0.000000e+00> : vector<32x128xf32>
    %271 = tpu.matmul %270, %268, %cst_166 {dimension_numbers = #tpu.dot_dimension_numbers<[1], [0], [0], [1], [0, 0, 1, 1], [], []>} : vector<32x16xf32>, vector<16x128xf32>, vector<32x128xf32> -> vector<32x128xf32>
    %272 = arith.addf %262, %271 : vector<32x128xf32>
    %c0_167 = arith.constant 0 : index
    %c0_168 = arith.constant 0 : index
    %273 = vector.load %arg5[%c0_167, %c0_168] : memref<32x1xf32, #tpu.memory_space<vmem>>, vector<32x1xf32>
    %274 = vector.broadcast %273 : vector<32x1xf32> to vector<32x128xf32>
    %275 = arith.addf %272, %274 : vector<32x128xf32>
    %cst_169 = arith.constant 0.000000e+00 : f32
    %276 = vector.broadcast %cst_169 : f32 to vector<32x128xf32>
    %277 = arith.maximumf %275, %276 : vector<32x128xf32>
    %c0_170 = arith.constant 0 : index
    %c0_171 = arith.constant 0 : index
    %278 = vector.load %arg14[%c0_170, %c0_171] : memref<32x128xf32, #tpu.memory_space<vmem>>, vector<32x128xf32>
    tpu.vector_store %arg14[%c0_170, %c0_171], %277 {strides = array<i32>} : memref<32x128xf32, #tpu.memory_space<vmem>>, vector<32x128xf32>,
    %c0_172 = arith.constant 0 : index
    %c0_173 = arith.constant 0 : index
    %279 = vector.load %arg7[%c0_172, %c0_173] : memref<1x10xf32, #tpu.memory_space<vmem>>, vector<1x10xf32>
    %280 = vector.shape_cast %279 : vector<1x10xf32> to vector<1x10xf32>
    %281 = vector.broadcast %280 : vector<1x10xf32> to vector<2x10xf32>
    %c0_174 = arith.constant 0 : index
    %c0_175 = arith.constant 0 : index
    %282 = vector.load %arg14[%c0_174, %c0_175] : memref<32x128xf32, #tpu.memory_space<vmem>>, vector<2x128xf32>
    %c0_176 = arith.constant 0 : index
    %c0_177 = arith.constant 0 : index
    %c0_178 = arith.constant 0 : index
    %283 = vector.load %arg6[%c0_176, %c0_177, %c0_178] : memref<16x128x10xf32, #tpu.memory_space<vmem>>, vector<1x128x10xf32>
    %284 = vector.shape_cast %283 : vector<1x128x10xf32> to vector<128x10xf32>
    %cst_179 = arith.constant dense<0.000000e+00> : vector<2x10xf32>
    %285 = tpu.matmul %282, %284, %cst_179 {dimension_numbers = #tpu.dot_dimension_numbers<[1], [0], [0], [1], [0, 0, 1, 1], [], []>} : vector<2x128xf32>, vector<128x10xf32>, vector<2x10xf32> -> vector<2x10xf32>
    %286 = arith.addf %281, %285 : vector<2x10xf32>
    %c2_180 = arith.constant 2 : index
    %c0_181 = arith.constant 0 : index
    %287 = vector.load %arg14[%c2_180, %c0_181] : memref<32x128xf32, #tpu.memory_space<vmem>>, vector<2x128xf32>
    %c1_182 = arith.constant 1 : index
    %c0_183 = arith.constant 0 : index
    %c0_184 = arith.constant 0 : index
    %288 = vector.load %arg6[%c1_182, %c0_183, %c0_184] : memref<16x128x10xf32, #tpu.memory_space<vmem>>, vector<1x128x10xf32>
    %289 = vector.shape_cast %288 : vector<1x128x10xf32> to vector<128x10xf32>
    %cst_185 = arith.constant dense<0.000000e+00> : vector<2x10xf32>
    %290 = tpu.matmul %287, %289, %cst_185 {dimension_numbers = #tpu.dot_dimension_numbers<[1], [0], [0], [1], [0, 0, 1, 1], [], []>} : vector<2x128xf32>, vector<128x10xf32>, vector<2x10xf32> -> vector<2x10xf32>
    %291 = arith.addf %286, %290 : vector<2x10xf32>
    %c4_186 = arith.constant 4 : index
    %c0_187 = arith.constant 0 : index
    %292 = vector.load %arg14[%c4_186, %c0_187] : memref<32x128xf32, #tpu.memory_space<vmem>>, vector<2x128xf32>
    %c2_188 = arith.constant 2 : index
    %c0_189 = arith.constant 0 : index
    %c0_190 = arith.constant 0 : index
    %293 = vector.load %arg6[%c2_188, %c0_189, %c0_190] : memref<16x128x10xf32, #tpu.memory_space<vmem>>, vector<1x128x10xf32>
    %294 = vector.shape_cast %293 : vector<1x128x10xf32> to vector<128x10xf32>
    %cst_191 = arith.constant dense<0.000000e+00> : vector<2x10xf32>
    %295 = tpu.matmul %292, %294, %cst_191 {dimension_numbers = #tpu.dot_dimension_numbers<[1], [0], [0], [1], [0, 0, 1, 1], [], []>} : vector<2x128xf32>, vector<128x10xf32>, vector<2x10xf32> -> vector<2x10xf32>
    %296 = arith.addf %291, %295 : vector<2x10xf32>
    %c6_192 = arith.constant 6 : index
    %c0_193 = arith.constant 0 : index
    %297 = vector.load %arg14[%c6_192, %c0_193] : memref<32x128xf32, #tpu.memory_space<vmem>>, vector<2x128xf32>
    %c3_194 = arith.constant 3 : index
    %c0_195 = arith.constant 0 : index
    %c0_196 = arith.constant 0 : index
    %298 = vector.load %arg6[%c3_194, %c0_195, %c0_196] : memref<16x128x10xf32, #tpu.memory_space<vmem>>, vector<1x128x10xf32>
    %299 = vector.shape_cast %298 : vector<1x128x10xf32> to vector<128x10xf32>
    %cst_197 = arith.constant dense<0.000000e+00> : vector<2x10xf32>
    %300 = tpu.matmul %297, %299, %cst_197 {dimension_numbers = #tpu.dot_dimension_numbers<[1], [0], [0], [1], [0, 0, 1, 1], [], []>} : vector<2x128xf32>, vector<128x10xf32>, vector<2x10xf32> -> vector<2x10xf32>
    %301 = arith.addf %296, %300 : vector<2x10xf32>
    %c8_198 = arith.constant 8 : index
    %c0_199 = arith.constant 0 : index
    %302 = vector.load %arg14[%c8_198, %c0_199] : memref<32x128xf32, #tpu.memory_space<vmem>>, vector<2x128xf32>
    %c4_200 = arith.constant 4 : index
    %c0_201 = arith.constant 0 : index
    %c0_202 = arith.constant 0 : index
    %303 = vector.load %arg6[%c4_200, %c0_201, %c0_202] : memref<16x128x10xf32, #tpu.memory_space<vmem>>, vector<1x128x10xf32>
    %304 = vector.shape_cast %303 : vector<1x128x10xf32> to vector<128x10xf32>
    %cst_203 = arith.constant dense<0.000000e+00> : vector<2x10xf32>
    %305 = tpu.matmul %302, %304, %cst_203 {dimension_numbers = #tpu.dot_dimension_numbers<[1], [0], [0], [1], [0, 0, 1, 1], [], []>} : vector<2x128xf32>, vector<128x10xf32>, vector<2x10xf32> -> vector<2x10xf32>
    %306 = arith.addf %301, %305 : vector<2x10xf32>
    %c10_204 = arith.constant 10 : index
    %c0_205 = arith.constant 0 : index
    %307 = vector.load %arg14[%c10_204, %c0_205] : memref<32x128xf32, #tpu.memory_space<vmem>>, vector<2x128xf32>
    %c5_206 = arith.constant 5 : index
    %c0_207 = arith.constant 0 : index
    %c0_208 = arith.constant 0 : index
    %308 = vector.load %arg6[%c5_206, %c0_207, %c0_208] : memref<16x128x10xf32, #tpu.memory_space<vmem>>, vector<1x128x10xf32>
    %309 = vector.shape_cast %308 : vector<1x128x10xf32> to vector<128x10xf32>
    %cst_209 = arith.constant dense<0.000000e+00> : vector<2x10xf32>
    %310 = tpu.matmul %307, %309, %cst_209 {dimension_numbers = #tpu.dot_dimension_numbers<[1], [0], [0], [1], [0, 0, 1, 1], [], []>} : vector<2x128xf32>, vector<128x10xf32>, vector<2x10xf32> -> vector<2x10xf32>
    %311 = arith.addf %306, %310 : vector<2x10xf32>
    %c12_210 = arith.constant 12 : index
    %c0_211 = arith.constant 0 : index
    %312 = vector.load %arg14[%c12_210, %c0_211] : memref<32x128xf32, #tpu.memory_space<vmem>>, vector<2x128xf32>
    %c6_212 = arith.constant 6 : index
    %c0_213 = arith.constant 0 : index
    %c0_214 = arith.constant 0 : index
    %313 = vector.load %arg6[%c6_212, %c0_213, %c0_214] : memref<16x128x10xf32, #tpu.memory_space<vmem>>, vector<1x128x10xf32>
    %314 = vector.shape_cast %313 : vector<1x128x10xf32> to vector<128x10xf32>
    %cst_215 = arith.constant dense<0.000000e+00> : vector<2x10xf32>
    %315 = tpu.matmul %312, %314, %cst_215 {dimension_numbers = #tpu.dot_dimension_numbers<[1], [0], [0], [1], [0, 0, 1, 1], [], []>} : vector<2x128xf32>, vector<128x10xf32>, vector<2x10xf32> -> vector<2x10xf32>
    %316 = arith.addf %311, %315 : vector<2x10xf32>
    %c14_216 = arith.constant 14 : index
    %c0_217 = arith.constant 0 : index
    %317 = vector.load %arg14[%c14_216, %c0_217] : memref<32x128xf32, #tpu.memory_space<vmem>>, vector<2x128xf32>
    %c7_218 = arith.constant 7 : index
    %c0_219 = arith.constant 0 : index
    %c0_220 = arith.constant 0 : index
    %318 = vector.load %arg6[%c7_218, %c0_219, %c0_220] : memref<16x128x10xf32, #tpu.memory_space<vmem>>, vector<1x128x10xf32>
    %319 = vector.shape_cast %318 : vector<1x128x10xf32> to vector<128x10xf32>
    %cst_221 = arith.constant dense<0.000000e+00> : vector<2x10xf32>
    %320 = tpu.matmul %317, %319, %cst_221 {dimension_numbers = #tpu.dot_dimension_numbers<[1], [0], [0], [1], [0, 0, 1, 1], [], []>} : vector<2x128xf32>, vector<128x10xf32>, vector<2x10xf32> -> vector<2x10xf32>
    %321 = arith.addf %316, %320 : vector<2x10xf32>
    %c16_222 = arith.constant 16 : index
    %c0_223 = arith.constant 0 : index
    %322 = vector.load %arg14[%c16_222, %c0_223] : memref<32x128xf32, #tpu.memory_space<vmem>>, vector<2x128xf32>
    %c8_224 = arith.constant 8 : index
    %c0_225 = arith.constant 0 : index
    %c0_226 = arith.constant 0 : index
    %323 = vector.load %arg6[%c8_224, %c0_225, %c0_226] : memref<16x128x10xf32, #tpu.memory_space<vmem>>, vector<1x128x10xf32>
    %324 = vector.shape_cast %323 : vector<1x128x10xf32> to vector<128x10xf32>
    %cst_227 = arith.constant dense<0.000000e+00> : vector<2x10xf32>
    %325 = tpu.matmul %322, %324, %cst_227 {dimension_numbers = #tpu.dot_dimension_numbers<[1], [0], [0], [1], [0, 0, 1, 1], [], []>} : vector<2x128xf32>, vector<128x10xf32>, vector<2x10xf32> -> vector<2x10xf32>
    %326 = arith.addf %321, %325 : vector<2x10xf32>
    %c18_228 = arith.constant 18 : index
    %c0_229 = arith.constant 0 : index
    %327 = vector.load %arg14[%c18_228, %c0_229] : memref<32x128xf32, #tpu.memory_space<vmem>>, vector<2x128xf32>
    %c9_230 = arith.constant 9 : index
    %c0_231 = arith.constant 0 : index
    %c0_232 = arith.constant 0 : index
    %328 = vector.load %arg6[%c9_230, %c0_231, %c0_232] : memref<16x128x10xf32, #tpu.memory_space<vmem>>, vector<1x128x10xf32>
    %329 = vector.shape_cast %328 : vector<1x128x10xf32> to vector<128x10xf32>
    %cst_233 = arith.constant dense<0.000000e+00> : vector<2x10xf32>
    %330 = tpu.matmul %327, %329, %cst_233 {dimension_numbers = #tpu.dot_dimension_numbers<[1], [0], [0], [1], [0, 0, 1, 1], [], []>} : vector<2x128xf32>, vector<128x10xf32>, vector<2x10xf32> -> vector<2x10xf32>
    %331 = arith.addf %326, %330 : vector<2x10xf32>
    %c20_234 = arith.constant 20 : index
    %c0_235 = arith.constant 0 : index
    %332 = vector.load %arg14[%c20_234, %c0_235] : memref<32x128xf32, #tpu.memory_space<vmem>>, vector<2x128xf32>
    %c10_236 = arith.constant 10 : index
    %c0_237 = arith.constant 0 : index
    %c0_238 = arith.constant 0 : index
    %333 = vector.load %arg6[%c10_236, %c0_237, %c0_238] : memref<16x128x10xf32, #tpu.memory_space<vmem>>, vector<1x128x10xf32>
    %334 = vector.shape_cast %333 : vector<1x128x10xf32> to vector<128x10xf32>
    %cst_239 = arith.constant dense<0.000000e+00> : vector<2x10xf32>
    %335 = tpu.matmul %332, %334, %cst_239 {dimension_numbers = #tpu.dot_dimension_numbers<[1], [0], [0], [1], [0, 0, 1, 1], [], []>} : vector<2x128xf32>, vector<128x10xf32>, vector<2x10xf32> -> vector<2x10xf32>
    %336 = arith.addf %331, %335 : vector<2x10xf32>
    %c22_240 = arith.constant 22 : index
    %c0_241 = arith.constant 0 : index
    %337 = vector.load %arg14[%c22_240, %c0_241] : memref<32x128xf32, #tpu.memory_space<vmem>>, vector<2x128xf32>
    %c11_242 = arith.constant 11 : index
    %c0_243 = arith.constant 0 : index
    %c0_244 = arith.constant 0 : index
    %338 = vector.load %arg6[%c11_242, %c0_243, %c0_244] : memref<16x128x10xf32, #tpu.memory_space<vmem>>, vector<1x128x10xf32>
    %339 = vector.shape_cast %338 : vector<1x128x10xf32> to vector<128x10xf32>
    %cst_245 = arith.constant dense<0.000000e+00> : vector<2x10xf32>
    %340 = tpu.matmul %337, %339, %cst_245 {dimension_numbers = #tpu.dot_dimension_numbers<[1], [0], [0], [1], [0, 0, 1, 1], [], []>} : vector<2x128xf32>, vector<128x10xf32>, vector<2x10xf32> -> vector<2x10xf32>
    %341 = arith.addf %336, %340 : vector<2x10xf32>
    %c24_246 = arith.constant 24 : index
    %c0_247 = arith.constant 0 : index
    %342 = vector.load %arg14[%c24_246, %c0_247] : memref<32x128xf32, #tpu.memory_space<vmem>>, vector<2x128xf32>
    %c12_248 = arith.constant 12 : index
    %c0_249 = arith.constant 0 : index
    %c0_250 = arith.constant 0 : index
    %343 = vector.load %arg6[%c12_248, %c0_249, %c0_250] : memref<16x128x10xf32, #tpu.memory_space<vmem>>, vector<1x128x10xf32>
    %344 = vector.shape_cast %343 : vector<1x128x10xf32> to vector<128x10xf32>
    %cst_251 = arith.constant dense<0.000000e+00> : vector<2x10xf32>
    %345 = tpu.matmul %342, %344, %cst_251 {dimension_numbers = #tpu.dot_dimension_numbers<[1], [0], [0], [1], [0, 0, 1, 1], [], []>} : vector<2x128xf32>, vector<128x10xf32>, vector<2x10xf32> -> vector<2x10xf32>
    %346 = arith.addf %341, %345 : vector<2x10xf32>
    %c26_252 = arith.constant 26 : index
    %c0_253 = arith.constant 0 : index
    %347 = vector.load %arg14[%c26_252, %c0_253] : memref<32x128xf32, #tpu.memory_space<vmem>>, vector<2x128xf32>
    %c13_254 = arith.constant 13 : index
    %c0_255 = arith.constant 0 : index
    %c0_256 = arith.constant 0 : index
    %348 = vector.load %arg6[%c13_254, %c0_255, %c0_256] : memref<16x128x10xf32, #tpu.memory_space<vmem>>, vector<1x128x10xf32>
    %349 = vector.shape_cast %348 : vector<1x128x10xf32> to vector<128x10xf32>
    %cst_257 = arith.constant dense<0.000000e+00> : vector<2x10xf32>
    %350 = tpu.matmul %347, %349, %cst_257 {dimension_numbers = #tpu.dot_dimension_numbers<[1], [0], [0], [1], [0, 0, 1, 1], [], []>} : vector<2x128xf32>, vector<128x10xf32>, vector<2x10xf32> -> vector<2x10xf32>
    %351 = arith.addf %346, %350 : vector<2x10xf32>
    %c28 = arith.constant 28 : index
    %c0_258 = arith.constant 0 : index
    %352 = vector.load %arg14[%c28, %c0_258] : memref<32x128xf32, #tpu.memory_space<vmem>>, vector<2x128xf32>
    %c14_259 = arith.constant 14 : index
    %c0_260 = arith.constant 0 : index
    %c0_261 = arith.constant 0 : index
    %353 = vector.load %arg6[%c14_259, %c0_260, %c0_261] : memref<16x128x10xf32, #tpu.memory_space<vmem>>, vector<1x128x10xf32>
    %354 = vector.shape_cast %353 : vector<1x128x10xf32> to vector<128x10xf32>
    %cst_262 = arith.constant dense<0.000000e+00> : vector<2x10xf32>
    %355 = tpu.matmul %352, %354, %cst_262 {dimension_numbers = #tpu.dot_dimension_numbers<[1], [0], [0], [1], [0, 0, 1, 1], [], []>} : vector<2x128xf32>, vector<128x10xf32>, vector<2x10xf32> -> vector<2x10xf32>
    %356 = arith.addf %351, %355 : vector<2x10xf32>
    %c30 = arith.constant 30 : index
    %c0_263 = arith.constant 0 : index
    %357 = vector.load %arg14[%c30, %c0_263] : memref<32x128xf32, #tpu.memory_space<vmem>>, vector<2x128xf32>
    %c15_264 = arith.constant 15 : index
    %c0_265 = arith.constant 0 : index
    %c0_266 = arith.constant 0 : index
    %358 = vector.load %arg6[%c15_264, %c0_265, %c0_266] : memref<16x128x10xf32, #tpu.memory_space<vmem>>, vector<1x128x10xf32>
    %359 = vector.shape_cast %358 : vector<1x128x10xf32> to vector<128x10xf32>
    %cst_267 = arith.constant dense<0.000000e+00> : vector<2x10xf32>
    %360 = tpu.matmul %357, %359, %cst_267 {dimension_numbers = #tpu.dot_dimension_numbers<[1], [0], [0], [1], [0, 0, 1, 1], [], []>} : vector<2x128xf32>, vector<128x10xf32>, vector<2x10xf32> -> vector<2x10xf32>
    %361 = arith.addf %356, %360 : vector<2x10xf32>
    %c0_268 = arith.constant 0 : index
    %c0_269 = arith.constant 0 : index
    %362 = vector.load %arg12[%c0_268, %c0_269] : memref<2x10xf32, #tpu.memory_space<vmem>>, vector<2x10xf32>
    tpu.vector_store %arg12[%c0_268, %c0_269], %361 {strides = array<i32>} : memref<2x10xf32, #tpu.memory_space<vmem>>, vector<2x10xf32>,
    %cst_270 = arith.constant 0.000000e+00 : f32
    %363 = vector.broadcast %cst_270 : f32 to vector<2x10xf32>
    %364 = arith.maximumf %361, %363 : vector<2x10xf32>
    %365 = arith.truncf %364 : vector<2x10xf32> to vector<2x10xbf16>
    %c0_271 = arith.constant 0 : index
    %c0_272 = arith.constant 0 : index
    %366 = vector.load %arg8[%c0_271, %c0_272] : memref<10x4096xbf16, #tpu.memory_space<vmem>>, vector<10x4096xbf16>
    %cst_273 = arith.constant dense<0.000000e+00> : vector<2x4096xf32>
    %367 = tpu.matmul %365, %366, %cst_273 {dimension_numbers = #tpu.dot_dimension_numbers<[1], [0], [0], [1], [0, 0, 1, 1], [], []>} : vector<2x10xbf16>, vector<10x4096xbf16>, vector<2x4096xf32> -> vector<2x4096xf32>
    %c0_274 = arith.constant 0 : index
    %c0_275 = arith.constant 0 : index
    %368 = vector.load %arg9[%c0_274, %c0_275] : memref<1x4096xf32, #tpu.memory_space<vmem>>, vector<1x4096xf32>
    %369 = vector.broadcast %368 : vector<1x4096xf32> to vector<2x4096xf32>
    %370 = arith.addf %367, %369 : vector<2x4096xf32>
    %cst_276 = arith.constant 0.000000e+00 : f32
    %371 = vector.broadcast %cst_276 : f32 to vector<2x4096xf32>
    %372 = arith.maximumf %370, %371 : vector<2x4096xf32>
    %373 = arith.truncf %372 : vector<2x4096xf32> to vector<2x4096xbf16>
    %c0_277 = arith.constant 0 : index
    %c0_278 = arith.constant 0 : index
    %374 = vector.load %arg10[%c0_277, %c0_278] : memref<4096x128xbf16, #tpu.memory_space<vmem>>, vector<4096x128xbf16>
    %cst_279 = arith.constant dense<0.000000e+00> : vector<2x128xf32>
    %375 = tpu.matmul %373, %374, %cst_279 {dimension_numbers = #tpu.dot_dimension_numbers<[1], [0], [0], [1], [0, 0, 1, 1], [], []>} : vector<2x4096xbf16>, vector<4096x128xbf16>, vector<2x128xf32> -> vector<2x128xf32>
    %c0_280 = arith.constant 0 : index
    %c0_281 = arith.constant 0 : index
    %376 = vector.load %arg11[%c0_280, %c0_281] : memref<1x128xf32, #tpu.memory_space<vmem>>, vector<1x128xf32>
    %377 = vector.broadcast %376 : vector<1x128xf32> to vector<2x128xf32>
    %378 = arith.addf %375, %377 : vector<2x128xf32>
    %c0_282 = arith.constant 0 : index
    %c0_283 = arith.constant 0 : index
    %379 = vector.load %arg13[%c0_282, %c0_283] : memref<2x128xf32, #tpu.memory_space<vmem>>, vector<2x128xf32>
    tpu.vector_store %arg13[%c0_282, %c0_283], %378 {strides = array<i32>} : memref<2x128xf32, #tpu.memory_space<vmem>>, vector<2x128xf32>,
    return
  }
  func.func @transform_0(%arg0: i32) -> (i32, i32) {
    %c0_i32 = arith.constant 0 : i32
    %c0_i32_0 = arith.constant 0 : i32
    %c0_i32_1 = arith.constant 0 : i32
    return %c0_i32, %c0_i32_0 : i32, i32
  }
  func.func @transform_1(%arg0: i32) -> (i32, i32) {
    %c0_i32 = arith.constant 0 : i32
    %c0_i32_0 = arith.constant 0 : i32
    %c0_i32_1 = arith.constant 0 : i32
    return %c0_i32, %c0_i32_0 : i32, i32
  }
  func.func @transform_2(%arg0: i32) -> (i32, i32) {
    %c0_i32 = arith.constant 0 : i32
    %c0_i32_0 = arith.constant 0 : i32
    %c0_i32_1 = arith.constant 0 : i32
    return %c0_i32, %c0_i32_0 : i32, i32
  }
  func.func @transform_3(%arg0: i32) -> (i32, i32, i32) {
    %c0_i32 = arith.constant 0 : i32
    %c0_i32_0 = arith.constant 0 : i32
    %c0_i32_1 = arith.constant 0 : i32
    %c0_i32_2 = arith.constant 0 : i32
    return %c0_i32, %c0_i32_0, %c0_i32_1 : i32, i32, i32
  }
  func.func @transform_4(%arg0: i32) -> (i32, i32) {
    %c0_i32 = arith.constant 0 : i32
    %c0_i32_0 = arith.constant 0 : i32
    %c0_i32_1 = arith.constant 0 : i32
    return %c0_i32, %c0_i32_0 : i32, i32
  }
  func.func @transform_5(%arg0: i32) -> (i32, i32, i32) {
    %c0_i32 = arith.constant 0 : i32
    %c0_i32_0 = arith.constant 0 : i32
    %c0_i32_1 = arith.constant 0 : i32
    %c0_i32_2 = arith.constant 0 : i32
    return %c0_i32, %c0_i32_0, %c0_i32_1 : i32, i32, i32
  }
  func.func @transform_6(%arg0: i32) -> (i32, i32) {
    %c0_i32 = arith.constant 0 : i32
    %c0_i32_0 = arith.constant 0 : i32
    %c0_i32_1 = arith.constant 0 : i32
    return %c0_i32, %c0_i32_0 : i32, i32
  }
  func.func @transform_7(%arg0: i32) -> (i32, i32) {
    %c0_i32 = arith.constant 0 : i32
    %c0_i32_0 = arith.constant 0 : i32
    %c0_i32_1 = arith.constant 0 : i32
    return %c0_i32, %c0_i32_0 : i32, i32
  }
  func.func @transform_8(%arg0: i32) -> (i32, i32) {
    %c0_i32 = arith.constant 0 : i32
    %c0_i32_0 = arith.constant 0 : i32
    %c0_i32_1 = arith.constant 0 : i32
    return %c0_i32, %c0_i32_0 : i32, i32
  }
  func.func @transform_9(%arg0: i32) -> (i32, i32) {
    %c0_i32 = arith.constant 0 : i32
    %c0_i32_0 = arith.constant 0 : i32
    %c0_i32_1 = arith.constant 0 : i32
    return %c0_i32, %c0_i32_0 : i32, i32
  }
  func.func @transform_10(%arg0: i32) -> (i32, i32) {
    %c0_i32 = arith.constant 0 : i32
    %c0_i32_0 = arith.constant 0 : i32
    %c0_i32_1 = arith.constant 0 : i32
    return %c0_i32, %c0_i32_0 : i32, i32
  }
  func.func @transform_11(%arg0: i32) -> (i32, i32) {
    %c0_i32 = arith.constant 0 : i32
    %c0_i32_0 = arith.constant 0 : i32
    %c0_i32_1 = arith.constant 0 : i32
    return %c0_i32, %c0_i32_0 : i32, i32
  }
  func.func @transform_12(%arg0: i32) -> (i32, i32) {
    %c0_i32 = arith.constant 0 : i32
    %c0_i32_0 = arith.constant 0 : i32
    %c0_i32_1 = arith.constant 0 : i32
    return %c0_i32, %c0_i32_0 : i32, i32
  }
}

</mosaic_0001>

<llo_original>
// kernel: f3fn_3d_forward.1
$region0: #{f3fn_3d_forward.1}
  #allocation0 [shape = 'u32[]', space=smem, size = 0x4, offset = 0x4, fixed_abs, tag = 'smem constant byte address 0x4 - core index']
  #allocation1 [shape = 'u32[144,128]{1,0:T(1,128)}', space=vmem, size = 0x12000, scoped, tag = 'internal scratch']
  #allocation2 [shape = 'f32[32,128]{1,0:T(8,128)}', space=vmem, size = 0x4000, scoped, tag = 'scratch operand']
  %s0 = inlined_call_operand.vmem [shape: f32[54,3456], index: 0, kind: input, shape index: {}]
  %s1 = inlined_call_operand.vmem [shape: f32[16,54], index: 1, kind: input, shape index: {}]
  %s2 = inlined_call_operand.vmem [shape: f32[16,1], index: 2, kind: input, shape index: {}]
  %s3 = inlined_call_operand.vmem [shape: f32[27,32,16], index: 3, kind: input, shape index: {}]
  %s4 = inlined_call_operand.vmem [shape: f32[32,1], index: 4, kind: input, shape index: {}]
  %s5 = inlined_call_operand.vmem [shape: f32[16,128,10], index: 5, kind: input, shape index: {}]
  %s6 = inlined_call_operand.vmem [shape: f32[1,10], index: 6, kind: input, shape index: {}]
  %s7 = inlined_call_operand.vmem [shape: bf16[10,4096], index: 7, kind: input, shape index: {}]
  %s8 = inlined_call_operand.vmem [shape: f32[1,4096], index: 8, kind: input, shape index: {}]
  %s9 = inlined_call_operand.vmem [shape: bf16[4096,128], index: 9, kind: input, shape index: {}]
  %s10 = inlined_call_operand.vmem [shape: f32[1,128], index: 10, kind: input, shape index: {}]
  %s11 = inlined_call_operand.hbm [shape: f32[2,10], index: 11, kind: output, shape index: {0}]
  %s12 = inlined_call_operand.hbm [shape: f32[2,128], index: 12, kind: output, shape index: {1}]
  %13 = xla_tuple %s11, %s12
  %s14 = sld [smem:[#allocation0]]
  $region62: #{f3fn_3d_forward.1} parent=0
    _
  %s16 = ssub.s32 1, %s14
  %s17 = scalar_select 0, %s16, %s14
  $region1: #{f3fn_3d_forward.1} parent=0
    #allocation3 [shape = 'u8[1024]{0}', space=vmem, size = 0x400, scoped, tag = 'output window, operand 0, single buffered']
    #allocation4 [shape = 's32[1]{0}', space=sflag, size = 0x4, scoped, tag = 'scoped memory for f3fn_3d_forward.1']
    #allocation5 [shape = 'u8[1024]{0}', space=vmem, size = 0x400, scoped, tag = 'output window, operand 1, single buffered']
    #allocation6 [shape = 's32[1]{0}', space=sflag, size = 0x4, scoped, tag = 'scoped memory for f3fn_3d_forward.1']
    %18 = vsyncpa [#allocation4], 0
    %19 = vsyncpa [#allocation6], 0
    // Predicated region
    $region2: #{f3fn_3d_forward.1} parent=1 // pred_check
      _
    $region3: #{f3fn_3d_forward.1} parent=1 // pred_check_branch
      %21 = sbr.rel (0) target = $region5
    $region4: #{f3fn_3d_forward.1} parent=1 // pred_region
      _
    $region5: #{f3fn_3d_forward.1} parent=1 // pred_fallthru
      _
    // Predicated region
    $region6: #{f3fn_3d_forward.1} parent=1 // pred_check
      _
    $region7: #{f3fn_3d_forward.1} parent=1 // pred_check_branch
      %23 = sbr.rel (0) target = $region9
    $region8: #{f3fn_3d_forward.1} parent=1 // pred_region
      _
    $region9: #{f3fn_3d_forward.1} parent=1 // pred_fallthru
      _
    // Predicated region
    $region10: #{f3fn_3d_forward.1} parent=1 // pred_check
      _
    $region11: #{f3fn_3d_forward.1} parent=1 // pred_check_branch
      %25 = sbr.rel (0) target = $region13
    $region12: #{f3fn_3d_forward.1} parent=1 // pred_region
      _
    $region13: #{f3fn_3d_forward.1} parent=1 // pred_fallthru
      _
    // Predicated region
    $region14: #{f3fn_3d_forward.1} parent=1 // pred_check
      _
    $region15: #{f3fn_3d_forward.1} parent=1 // pred_check_branch
      %27 = sbr.rel (0) target = $region17
    $region16: #{f3fn_3d_forward.1} parent=1 // pred_region
      _
    $region17: #{f3fn_3d_forward.1} parent=1 // pred_fallthru
      _
    // Predicated region
    $region18: #{f3fn_3d_forward.1} parent=1 // pred_check
      _
    $region19: #{f3fn_3d_forward.1} parent=1 // pred_check_branch
      %29 = sbr.rel (0) target = $region21
    $region20: #{f3fn_3d_forward.1} parent=1 // pred_region
      _
    $region21: #{f3fn_3d_forward.1} parent=1 // pred_fallthru
      _
    // Predicated region
    $region22: #{f3fn_3d_forward.1} parent=1 // pred_check
      _
    $region23: #{f3fn_3d_forward.1} parent=1 // pred_check_branch
      %31 = sbr.rel (0) target = $region25
    $region24: #{f3fn_3d_forward.1} parent=1 // pred_region
      _
    $region25: #{f3fn_3d_forward.1} parent=1 // pred_fallthru
      _
    // Predicated region
    $region26: #{f3fn_3d_forward.1} parent=1 // pred_check
      _
    $region27: #{f3fn_3d_forward.1} parent=1 // pred_check_branch
      %33 = sbr.rel (0) target = $region29
    $region28: #{f3fn_3d_forward.1} parent=1 // pred_region
      _
    $region29: #{f3fn_3d_forward.1} parent=1 // pred_fallthru
      _
    // Predicated region
    $region30: #{f3fn_3d_forward.1} parent=1 // pred_check
      _
    $region31: #{f3fn_3d_forward.1} parent=1 // pred_check_branch
      %35 = sbr.rel (0) target = $region33
    $region32: #{f3fn_3d_forward.1} parent=1 // pred_region
      _
    $region33: #{f3fn_3d_forward.1} parent=1 // pred_fallthru
      _
    // Predicated region
    $region34: #{f3fn_3d_forward.1} parent=1 // pred_check
      _
    $region35: #{f3fn_3d_forward.1} parent=1 // pred_check_branch
      %37 = sbr.rel (0) target = $region37
    $region36: #{f3fn_3d_forward.1} parent=1 // pred_region
      _
    $region37: #{f3fn_3d_forward.1} parent=1 // pred_fallthru
      _
    // Predicated region
    $region38: #{f3fn_3d_forward.1} parent=1 // pred_check
      _
    $region39: #{f3fn_3d_forward.1} parent=1 // pred_check_branch
      %39 = sbr.rel (0) target = $region41
    $region40: #{f3fn_3d_forward.1} parent=1 // pred_region
      _
    $region41: #{f3fn_3d_forward.1} parent=1 // pred_fallthru
      _
    // Predicated region
    $region42: #{f3fn_3d_forward.1} parent=1 // pred_check
      _
    $region43: #{f3fn_3d_forward.1} parent=1 // pred_check_branch
      %41 = sbr.rel (0) target = $region45
    $region44: #{f3fn_3d_forward.1} parent=1 // pred_region
      _
    $region45: #{f3fn_3d_forward.1} parent=1 // pred_fallthru
      _
    %v43 = vld [vmem:[%s1] sm:$0xff]
    %v44 = vld [vmem:[%s1 + $0x8] sm:$0xff]
    %v45 = vld [vmem:[%s2] sm:$0xff]
    %v46 = vld [vmem:[%s2 + $0x8] sm:$0xff]
    %v47 = vld [vmem:[%s0] sm:$0xff]
    %v48 = vld [vmem:[%s0 + $0xd8] sm:$0xff]
    %v49 = vld [vmem:[%s0 + $0x1b0] sm:$0xff]
    %v50 = vld [vmem:[%s0 + $0x288] sm:$0xff]
    %v51 = vld [vmem:[%s0 + $0x360] sm:$0xff]
    %v52 = vld [vmem:[%s0 + $0x438] sm:$0xff]
    %v53 = vld [vmem:[%s0 + $0x510] sm:$0x3f]
    %55 = vset.pattern.permute.xlu0 0
    %56 = vperm.xlu0 %55, %v45
    %v57 = vpop.permute.xlu0 %56
    %60 = vset.pattern.permute.xlu0 0
    %61 = vperm.xlu0 %60, %v46
    %v62 = vpop.permute.xlu0 %61
    %vm64 = vcmask 441344
    %v66 = vsel %vm64, %v43, 0
    %v69 = vsel %vm64, %v44, 0
    %vm71 = vcmask 1045504
    %v73 = vsel %vm71, %v53, 0
    %75 = vmatprep.subr.mxu0 0.0
    %76 = vmatpush1.msra.mxu0 %v47
    %77 = vmatprep.subr.mxu0 0.0
    %78 = vmatpush1.msra.mxu0 %v48
    %79 = vmatprep.subr.mxu0 0.0
    %80 = vmatpush1.msra.mxu0 %v49
    %81 = vmatprep.subr.mxu0 0.0
    %82 = vmatpush1.msra.mxu0 %v50
    %83 = vmatprep.subr.mxu0 0.0
    %84 = vmatpush1.msra.mxu0 %v51
    %85 = vmatprep.subr.mxu0 0.0
    %86 = vmatpush1.msra.mxu0 %v52
    %87 = vmatprep.subr.mxu0 0.0
    %88 = vmatpush1.msra.mxu0 %v73
    %89 = vmatprep.subr.mxu0 0.0
    %90 = vmatpush1.msra.mxu0 0.0
    %91 = vmatprep.subr.mxu0 0.0
    %92 = vmatpush1.msra.mxu0 0.0
    %93 = vmatprep.subr.mxu0 0.0
    %94 = vmatpush1.msra.mxu0 0.0
    %95 = vmatprep.subr.mxu0 0.0
    %96 = vmatpush1.msra.mxu0 0.0
    %97 = vmatprep.subr.mxu0 0.0
    %98 = vmatpush1.msra.mxu0 0.0
    %99 = vmatprep.subr.mxu0 0.0
    %100 = vmatpush1.msra.mxu0 0.0
    %101 = vmatprep.subr.mxu0 0.0
    %102 = vmatpush1.msra.mxu0 0.0
    %103 = vmatprep.subr.mxu0 0.0
    %104 = vmatpush1.msra.mxu0 0.0
    %105 = vmatprep.subr.mxu0 0.0
    %106 = vmatpush1.msra.mxu0 0.0
    %107 = vmatprep.subr.mxu0 0.0
    %108 = vmatpush1.msra.mxu0 0.0
    %109 = vmatprep.subr.mxu0 0.0
    %110 = vmatpush1.msra.mxu0 0.0
    %111 = vmatprep.subr.mxu0 0.0
    %112 = vmatpush1.msra.mxu0 0.0
    %113 = vmatprep.subr.mxu0 0.0
    %114 = vmatpush1.msra.mxu0 0.0
    %115 = vmatprep.subr.mxu0 0.0
    %116 = vmatpush1.msra.mxu0 0.0
    %117 = vmatprep.subr.mxu0 0.0
    %118 = vmatpush1.msra.mxu0 0.0
    %119 = vmatprep.subr.mxu0 0.0
    %120 = vmatpush1.msra.mxu0 0.0
    %121 = vmatprep.subr.mxu0 0.0
    %122 = vmatpush1.msra.mxu0 0.0
    %123 = vmatprep.subr.mxu0 0.0
    %124 = vmatpush1.msra.mxu0 0.0
    %125 = vmatprep.subr.mxu0 0.0
    %126 = vmatpush1.msra.mxu0 0.0
    %127 = vmatprep.subr.mxu0 0.0
    %128 = vmatpush1.msra.mxu0 0.0
    %129 = vmatprep.subr.mxu0 0.0
    %130 = vmatpush1.msra.mxu0 0.0
    %131 = vmatprep.subr.mxu0 0.0
    %132 = vmatpush1.msra.mxu0 0.0
    %133 = vmatprep.subr.mxu0 0.0
    %134 = vmatpush1.msra.mxu0 0.0
    %135 = vmatprep.subr.mxu0 0.0
    %136 = vmatpush1.msra.mxu0 0.0
    %137 = vmatprep.subr.mxu0 0.0
    %138 = vmatpush1.msra.mxu0 0.0
    %139 = vmatprep.mubr.f32.mxu0 0.0
    %140 = vmatmul.mubr.f32.gmra.mrb[0].mxu0 %v66
    %v141 = vpop.f32.mrb[0].mxu0
    %v142 = vadd.f32 %v57, %v141
    %v143 = vpop.f32.mrb[0].mxu0
    %144 = vmatprep.mubr.f32.mxu0 0.0
    %145 = vmatmul.mubr.f32.gmra.mrb[0].mxu0 %v69
    %v146 = vpop.f32.mrb[0].mxu0
    %v147 = vadd.f32 %v62, %v146
    %v148 = vpop.f32.mrb[0].mxu0
    %149 = vdwg.mxu0
    %v150 = vmax.f32 %v142, 0.0
    %v151 = vmax.f32 %v147, 0.0
    %v152 = vld [vmem:[%s3] sm:$0xff]
    %v153 = vld [vmem:[%s3 + $0x8] sm:$0xff]
    %v154 = vld [vmem:[%s3 + $0x10] sm:$0xff]
    %v155 = vld [vmem:[%s3 + $0x18] sm:$0xff]
    %v156 = vld [vmem:[%s0 + $0x8] sm:$0xff]
    %v157 = vld [vmem:[%s0 + $0xe0] sm:$0xff]
    %v158 = vld [vmem:[%s0 + $0x1b8] sm:$0xff]
    %v159 = vld [vmem:[%s0 + $0x290] sm:$0xff]
    %v160 = vld [vmem:[%s0 + $0x368] sm:$0xff]
    %v161 = vld [vmem:[%s0 + $0x440] sm:$0xff]
    %v162 = vld [vmem:[%s0 + $0x518] sm:$0x3f]
    %v164 = vsel %vm71, %v162, 0
    %166 = vmatprep.subr.mxu0 0.0
    %167 = vmatpush1.msra.mxu0 %v156
    %168 = vmatprep.subr.mxu0 0.0
    %169 = vmatpush1.msra.mxu0 %v157
    %170 = vmatprep.subr.mxu0 0.0
    %171 = vmatpush1.msra.mxu0 %v158
    %172 = vmatprep.subr.mxu0 0.0
    %173 = vmatpush1.msra.mxu0 %v159
    %174 = vmatprep.subr.mxu0 0.0
    %175 = vmatpush1.msra.mxu0 %v160
    %176 = vmatprep.subr.mxu0 0.0
    %177 = vmatpush1.msra.mxu0 %v161
    %178 = vmatprep.subr.mxu0 0.0
    %179 = vmatpush1.msra.mxu0 %v164
    %180 = vmatprep.subr.mxu0 0.0
    %181 = vmatpush1.msra.mxu0 0.0
    %182 = vmatprep.subr.mxu0 0.0
    %183 = vmatpush1.msra.mxu0 0.0
    %184 = vmatprep.subr.mxu0 0.0
    %185 = vmatpush1.msra.mxu0 0.0
    %186 = vmatprep.subr.mxu0 0.0
    %187 = vmatpush1.msra.mxu0 0.0
    %188 = vmatprep.subr.mxu0 0.0
    %189 = vmatpush1.msra.mxu0 0.0
    %190 = vmatprep.subr.mxu0 0.0
    %191 = vmatpush1.msra.mxu0 0.0
    %192 = vmatprep.subr.mxu0 0.0
    %193 = vmatpush1.msra.mxu0 0.0
    %194 = vmatprep.subr.mxu0 0.0
    %195 = vmatpush1.msra.mxu0 0.0
    %196 = vmatprep.subr.mxu0 0.0
    %197 = vmatpush1.msra.mxu0 0.0
    %198 = vmatprep.subr.mxu0 0.0
    %199 = vmatpush1.msra.mxu0 0.0
    %200 = vmatprep.subr.mxu0 0.0
    %201 = vmatpush1.msra.mxu0 0.0
    %202 = vmatprep.subr.mxu0 0.0
    %203 = vmatpush1.msra.mxu0 0.0
    %204 = vmatprep.subr.mxu0 0.0
    %205 = vmatpush1.msra.mxu0 0.0
    %206 = vmatprep.subr.mxu0 0.0
    %207 = vmatpush1.msra.mxu0 0.0
    %208 = vmatprep.subr.mxu0 0.0
    %209 = vmatpush1.msra.mxu0 0.0
    %210 = vmatprep.subr.mxu0 0.0
    %211 = vmatpush1.msra.mxu0 0.0
    %212 = vmatprep.subr.mxu0 0.0
    %213 = vmatpush1.msra.mxu0 0.0
    %214 = vmatprep.subr.mxu0 0.0
    %215 = vmatpush1.msra.mxu0 0.0
    %216 = vmatprep.subr.mxu0 0.0
    %217 = vmatpush1.msra.mxu0 0.0
    %218 = vmatprep.subr.mxu0 0.0
    %219 = vmatpush1.msra.mxu0 0.0
    %220 = vmatprep.subr.mxu0 0.0
    %221 = vmatpush1.msra.mxu0 0.0
    %222 = vmatprep.subr.mxu0 0.0
    %223 = vmatpush1.msra.mxu0 0.0
    %224 = vmatprep.subr.mxu0 0.0
    %225 = vmatpush1.msra.mxu0 0.0
    %226 = vmatprep.subr.mxu0 0.0
    %227 = vmatpush1.msra.mxu0 0.0
    %228 = vmatprep.subr.mxu0 0.0
    %229 = vmatpush1.msra.mxu0 0.0
    %230 = vmatprep.mubr.f32.mxu0 0.0
    %231 = vmatmul.mubr.f32.gmra.mrb[0].mxu0 %v66
    %v232 = vpop.f32.mrb[0].mxu0
    %v233 = vadd.f32 %v57, %v232
    %v234 = vpop.f32.mrb[0].mxu0
    %235 = vmatprep.mubr.f32.mxu0 0.0
    %236 = vmatmul.mubr.f32.gmra.mrb[0].mxu0 %v69
    %v237 = vpop.f32.mrb[0].mxu0
    %v238 = vadd.f32 %v62, %v237
    %v239 = vpop.f32.mrb[0].mxu0
    %240 = vdwg.mxu0
    %v241 = vmax.f32 %v233, 0.0
    %v242 = vmax.f32 %v238, 0.0
    %s243 = scalar_lea.vmem %s3, 32
    %v244 = vld [vmem:[%s243] sm:$0xff]
    %v245 = vld [vmem:[%s243 + $0x8] sm:$0xff]
    %v246 = vld [vmem:[%s243 + $0x10] sm:$0xff]
    %v247 = vld [vmem:[%s243 + $0x18] sm:$0xff]
    %vm248 = vcmask 130048
    %v250 = vsel %vm248, %v244, 0
    %v253 = vsel %vm248, %v245, 0
    %v256 = vsel %vm248, %v246, 0
    %v259 = vsel %vm248, %v247, 0
    %261 = vmatprep.subr.mxu0 0.0
    %262 = vmatpush1.msra.mxu0 %v241
    %263 = vmatprep.subr.mxu0 0.0
    %264 = vmatpush1.msra.mxu0 %v242
    %265 = vmatprep.subr.mxu0 0.0
    %266 = vmatpush1.msra.mxu0 0.0
    %267 = vmatprep.subr.mxu0 0.0
    %268 = vmatpush1.msra.mxu0 0.0
    %269 = vmatprep.subr.mxu0 0.0
    %270 = vmatpush1.msra.mxu0 0.0
    %271 = vmatprep.subr.mxu0 0.0
    %272 = vmatpush1.msra.mxu0 0.0
    %273 = vmatprep.subr.mxu0 0.0
    %274 = vmatpush1.msra.mxu0 0.0
    %275 = vmatprep.subr.mxu0 0.0
    %276 = vmatpush1.msra.mxu0 0.0
    %277 = vmatprep.subr.mxu0 0.0
    %278 = vmatpush1.msra.mxu0 0.0
    %279 = vmatprep.subr.mxu0 0.0
    %280 = vmatpush1.msra.mxu0 0.0
    %281 = vmatprep.subr.mxu0 0.0
    %282 = vmatpush1.msra.mxu0 0.0
    %283 = vmatprep.subr.mxu0 0.0
    %284 = vmatpush1.msra.mxu0 0.0
    %285 = vmatprep.subr.mxu0 0.0
    %286 = vmatpush1.msra.mxu0 0.0
    %287 = vmatprep.subr.mxu0 0.0
    %288 = vmatpush1.msra.mxu0 0.0
    %289 = vmatprep.subr.mxu0 0.0
    %290 = vmatpush1.msra.mxu0 0.0
    %291 = vmatprep.subr.mxu0 0.0
    %292 = vmatpush1.msra.mxu0 0.0
    %293 = vmatprep.subr.mxu0 0.0
    %294 = vmatpush1.msra.mxu0 0.0
    %295 = vmatprep.subr.mxu0 0.0
    %296 = vmatpush1.msra.mxu0 0.0
    %297 = vmatprep.subr.mxu0 0.0
    %298 = vmatpush1.msra.mxu0 0.0
    %299 = vmatprep.subr.mxu0 0.0
    %300 = vmatpush1.msra.mxu0 0.0
    %301 = vmatprep.subr.mxu0 0.0
    %302 = vmatpush1.msra.mxu0 0.0
    %303 = vmatprep.subr.mxu0 0.0
    %304 = vmatpush1.msra.mxu0 0.0
    %305 = vmatprep.subr.mxu0 0.0
    %306 = vmatpush1.msra.mxu0 0.0
    %307 = vmatprep.subr.mxu0 0.0
    %308 = vmatpush1.msra.mxu0 0.0
    %309 = vmatprep.subr.mxu0 0.0
    %310 = vmatpush1.msra.mxu0 0.0
    %311 = vmatprep.subr.mxu0 0.0
    %312 = vmatpush1.msra.mxu0 0.0
    %313 = vmatprep.subr.mxu0 0.0
    %314 = vmatpush1.msra.mxu0 0.0
    %315 = vmatprep.subr.mxu0 0.0
    %316 = vmatpush1.msra.mxu0 0.0
    %317 = vmatprep.subr.mxu0 0.0
    %318 = vmatpush1.msra.mxu0 0.0
    %319 = vmatprep.subr.mxu0 0.0
    %320 = vmatpush1.msra.mxu0 0.0
    %321 = vmatprep.subr.mxu0 0.0
    %322 = vmatpush1.msra.mxu0 0.0
    %323 = vmatprep.subr.mxu0 0.0
    %324 = vmatpush1.msra.mxu0 0.0
    %325 = vmatprep.mubr.f32.mxu0 0.0
    %326 = vmatmul.mubr.f32.gmra.mrb[0].mxu0 %v250
    %v327 = vpop.f32.mrb[0].mxu0
    %v328 = vadd.f32 0.0, %v327
    %v329 = vpop.f32.mrb[0].mxu0
    %330 = vmatprep.mubr.f32.mxu0 0.0
    %331 = vmatmul.mubr.f32.gmra.mrb[0].mxu0 %v253
    %v332 = vpop.f32.mrb[0].mxu0
    %v333 = vadd.f32 0.0, %v332
    %v334 = vpop.f32.mrb[0].mxu0
    %335 = vmatprep.mubr.f32.mxu0 0.0
    %336 = vmatmul.mubr.f32.gmra.mrb[0].mxu0 %v256
    %v337 = vpop.f32.mrb[0].mxu0
    %v338 = vadd.f32 0.0, %v337
    %v339 = vpop.f32.mrb[0].mxu0
    %340 = vmatprep.mubr.f32.mxu0 0.0
    %341 = vmatmul.mubr.f32.gmra.mrb[0].mxu0 %v259
    %v342 = vpop.f32.mrb[0].mxu0
    %v343 = vadd.f32 0.0, %v342
    %v344 = vpop.f32.mrb[0].mxu0
    %345 = vdwg.mxu0
    %v347 = vsel %vm248, %v152, 0
    %v350 = vsel %vm248, %v153, 0
    %v353 = vsel %vm248, %v154, 0
    %v356 = vsel %vm248, %v155, 0
    %358 = vmatprep.subr.mxu0 0.0
    %359 = vmatpush1.msra.mxu0 %v150
    %360 = vmatprep.subr.mxu0 0.0
    %361 = vmatpush1.msra.mxu0 %v151
    %362 = vmatprep.subr.mxu0 0.0
    %363 = vmatpush1.msra.mxu0 0.0
    %364 = vmatprep.subr.mxu0 0.0
    %365 = vmatpush1.msra.mxu0 0.0
    %366 = vmatprep.subr.mxu0 0.0
    %367 = vmatpush1.msra.mxu0 0.0
    %368 = vmatprep.subr.mxu0 0.0
    %369 = vmatpush1.msra.mxu0 0.0
    %370 = vmatprep.subr.mxu0 0.0
    %371 = vmatpush1.msra.mxu0 0.0
    %372 = vmatprep.subr.mxu0 0.0
    %373 = vmatpush1.msra.mxu0 0.0
    %374 = vmatprep.subr.mxu0 0.0
    %375 = vmatpush1.msra.mxu0 0.0
    %376 = vmatprep.subr.mxu0 0.0
    %377 = vmatpush1.msra.mxu0 0.0
    %378 = vmatprep.subr.mxu0 0.0
    %379 = vmatpush1.msra.mxu0 0.0
    %380 = vmatprep.subr.mxu0 0.0
    %381 = vmatpush1.msra.mxu0 0.0
    %382 = vmatprep.subr.mxu0 0.0
    %383 = vmatpush1.msra.mxu0 0.0
    %384 = vmatprep.subr.mxu0 0.0
    %385 = vmatpush1.msra.mxu0 0.0
    %386 = vmatprep.subr.mxu0 0.0
    %387 = vmatpush1.msra.mxu0 0.0
    %388 = vmatprep.subr.mxu0 0.0
    %389 = vmatpush1.msra.mxu0 0.0
    %390 = vmatprep.subr.mxu0 0.0
    %391 = vmatpush1.msra.mxu0 0.0
    %392 = vmatprep.subr.mxu0 0.0
    %393 = vmatpush1.msra.mxu0 0.0
    %394 = vmatprep.subr.mxu0 0.0
    %395 = vmatpush1.msra.mxu0 0.0
    %396 = vmatprep.subr.mxu0 0.0
    %397 = vmatpush1.msra.mxu0 0.0
    %398 = vmatprep.subr.mxu0 0.0
    %399 = vmatpush1.msra.mxu0 0.0
    %400 = vmatprep.subr.mxu0 0.0
    %401 = vmatpush1.msra.mxu0 0.0
    %402 = vmatprep.subr.mxu0 0.0
    %403 = vmatpush1.msra.mxu0 0.0
    %404 = vmatprep.subr.mxu0 0.0
    %405 = vmatpush1.msra.mxu0 0.0
    %406 = vmatprep.subr.mxu0 0.0
    %407 = vmatpush1.msra.mxu0 0.0
    %408 = vmatprep.subr.mxu0 0.0
    %409 = vmatpush1.msra.mxu0 0.0
    %410 = vmatprep.subr.mxu0 0.0
    %411 = vmatpush1.msra.mxu0 0.0
    %412 = vmatprep.subr.mxu0 0.0
    %413 = vmatpush1.msra.mxu0 0.0
    %414 = vmatprep.subr.mxu0 0.0
    %415 = vmatpush1.msra.mxu0 0.0
    %416 = vmatprep.subr.mxu0 0.0
    %417 = vmatpush1.msra.mxu0 0.0
    %418 = vmatprep.subr.mxu0 0.0
    %419 = vmatpush1.msra.mxu0 0.0
    %420 = vmatprep.subr.mxu0 0.0
    %421 = vmatpush1.msra.mxu0 0.0
    %422 = vmatprep.mubr.f32.mxu0 0.0
    %423 = vmatmul.mubr.f32.gmra.mrb[0].mxu0 %v347
    %v424 = vpop.f32.mrb[0].mxu0
    %v425 = vadd.f32 %v328, %v424
    %v426 = vpop.f32.mrb[0].mxu0
    %427 = vmatprep.mubr.f32.mxu0 0.0
    %428 = vmatmul.mubr.f32.gmra.mrb[0].mxu0 %v350
    %v429 = vpop.f32.mrb[0].mxu0
    %v430 = vadd.f32 %v333, %v429
    %v431 = vpop.f32.mrb[0].mxu0
    %432 = vmatprep.mubr.f32.mxu0 0.0
    %433 = vmatmul.mubr.f32.gmra.mrb[0].mxu0 %v353
    %v434 = vpop.f32.mrb[0].mxu0
    %v435 = vadd.f32 %v338, %v434
    %v436 = vpop.f32.mrb[0].mxu0
    %437 = vmatprep.mubr.f32.mxu0 0.0
    %438 = vmatmul.mubr.f32.gmra.mrb[0].mxu0 %v356
    %v439 = vpop.f32.mrb[0].mxu0
    %v440 = vadd.f32 %v343, %v439
    %v441 = vpop.f32.mrb[0].mxu0
    %442 = vdwg.mxu0
    %v443 = vld [vmem:[%s0 + $0x10] sm:$0xff]
    %v444 = vld [vmem:[%s0 + $0xe8] sm:$0xff]
    %v445 = vld [vmem:[%s0 + $0x1c0] sm:$0xff]
    %v446 = vld [vmem:[%s0 + $0x298] sm:$0xff]
    %v447 = vld [vmem:[%s0 + $0x370] sm:$0xff]
    %v448 = vld [vmem:[%s0 + $0x448] sm:$0xff]
    %v449 = vld [vmem:[%s0 + $0x520] sm:$0x3f]
    %v451 = vsel %vm71, %v449, 0
    %453 = vmatprep.subr.mxu0 0.0
    %454 = vmatpush1.msra.mxu0 %v443
    %455 = vmatprep.subr.mxu0 0.0
    %456 = vmatpush1.msra.mxu0 %v444
    %457 = vmatprep.subr.mxu0 0.0
    %458 = vmatpush1.msra.mxu0 %v445
    %459 = vmatprep.subr.mxu0 0.0
    %460 = vmatpush1.msra.mxu0 %v446
    %461 = vmatprep.subr.mxu0 0.0
    %462 = vmatpush1.msra.mxu0 %v447
    %463 = vmatprep.subr.mxu0 0.0
    %464 = vmatpush1.msra.mxu0 %v448
    %465 = vmatprep.subr.mxu0 0.0
    %466 = vmatpush1.msra.mxu0 %v451
    %467 = vmatprep.subr.mxu0 0.0
    %468 = vmatpush1.msra.mxu0 0.0
    %469 = vmatprep.subr.mxu0 0.0
    %470 = vmatpush1.msra.mxu0 0.0
    %471 = vmatprep.subr.mxu0 0.0
    %472 = vmatpush1.msra.mxu0 0.0
    %473 = vmatprep.subr.mxu0 0.0
    %474 = vmatpush1.msra.mxu0 0.0
    %475 = vmatprep.subr.mxu0 0.0
    %476 = vmatpush1.msra.mxu0 0.0
    %477 = vmatprep.subr.mxu0 0.0
    %478 = vmatpush1.msra.mxu0 0.0
    %479 = vmatprep.subr.mxu0 0.0
    %480 = vmatpush1.msra.mxu0 0.0
    %481 = vmatprep.subr.mxu0 0.0
    %482 = vmatpush1.msra.mxu0 0.0
    %483 = vmatprep.subr.mxu0 0.0
    %484 = vmatpush1.msra.mxu0 0.0
    %485 = vmatprep.subr.mxu0 0.0
    %486 = vmatpush1.msra.mxu0 0.0
    %487 = vmatprep.subr.mxu0 0.0
    %488 = vmatpush1.msra.mxu0 0.0
    %489 = vmatprep.subr.mxu0 0.0
    %490 = vmatpush1.msra.mxu0 0.0
    %491 = vmatprep.subr.mxu0 0.0
    %492 = vmatpush1.msra.mxu0 0.0
    %493 = vmatprep.subr.mxu0 0.0
    %494 = vmatpush1.msra.mxu0 0.0
    %495 = vmatprep.subr.mxu0 0.0
    %496 = vmatpush1.msra.mxu0 0.0
    %497 = vmatprep.subr.mxu0 0.0
    %498 = vmatpush1.msra.mxu0 0.0
    %499 = vmatprep.subr.mxu0 0.0
    %500 = vmatpush1.msra.mxu0 0.0
    %501 = vmatprep.subr.mxu0 0.0
    %502 = vmatpush1.msra.mxu0 0.0
    %503 = vmatprep.subr.mxu0 0.0
    %504 = vmatpush1.msra.mxu0 0.0
    %505 = vmatprep.subr.mxu0 0.0
    %506 = vmatpush1.msra.mxu0 0.0
    %507 = vmatprep.subr.mxu0 0.0
    %508 = vmatpush1.msra.mxu0 0.0
    %509 = vmatprep.subr.mxu0 0.0
    %510 = vmatpush1.msra.mxu0 0.0
    %511 = vmatprep.subr.mxu0 0.0
    %512 = vmatpush1.msra.mxu0 0.0
    %513 = vmatprep.subr.mxu0 0.0
    %514 = vmatpush1.msra.mxu0 0.0
    %515 = vmatprep.subr.mxu0 0.0
    %516 = vmatpush1.msra.mxu0 0.0
    %517 = vmatprep.mubr.f32.mxu0 0.0
    %518 = vmatmul.mubr.f32.gmra.mrb[0].mxu0 %v66
    %v519 = vpop.f32.mrb[0].mxu0
    %v520 = vadd.f32 %v57, %v519
    %v521 = vpop.f32.mrb[0].mxu0
    %522 = vmatprep.mubr.f32.mxu0 0.0
    %523 = vmatmul.mubr.f32.gmra.mrb[0].mxu0 %v69
    %v524 = vpop.f32.mrb[0].mxu0
    %v525 = vadd.f32 %v62, %v524
    %v526 = vpop.f32.mrb[0].mxu0
    %527 = vdwg.mxu0
    %v528 = vmax.f32 %v520, 0.0
    %v529 = vmax.f32 %v525, 0.0
    %s530 = scalar_lea.vmem %s3, 64
    %v531 = vld [vmem:[%s530] sm:$0xff]
    %v532 = vld [vmem:[%s530 + $0x8] sm:$0xff]
    %v533 = vld [vmem:[%s530 + $0x10] sm:$0xff]
    %v534 = vld [vmem:[%s530 + $0x18] sm:$0xff]
    %v536 = vsel %vm248, %v531, 0
    %v539 = vsel %vm248, %v532, 0
    %v542 = vsel %vm248, %v533, 0
    %v545 = vsel %vm248, %v534, 0
    %547 = vmatprep.subr.mxu0 0.0
    %548 = vmatpush1.msra.mxu0 %v528
    %549 = vmatprep.subr.mxu0 0.0
    %550 = vmatpush1.msra.mxu0 %v529
    %551 = vmatprep.subr.mxu0 0.0
    %552 = vmatpush1.msra.mxu0 0.0
    %553 = vmatprep.subr.mxu0 0.0
    %554 = vmatpush1.msra.mxu0 0.0
    %555 = vmatprep.subr.mxu0 0.0
    %556 = vmatpush1.msra.mxu0 0.0
    %557 = vmatprep.subr.mxu0 0.0
    %558 = vmatpush1.msra.mxu0 0.0
    %559 = vmatprep.subr.mxu0 0.0
    %560 = vmatpush1.msra.mxu0 0.0
    %561 = vmatprep.subr.mxu0 0.0
    %562 = vmatpush1.msra.mxu0 0.0
    %563 = vmatprep.subr.mxu0 0.0
    %564 = vmatpush1.msra.mxu0 0.0
    %565 = vmatprep.subr.mxu0 0.0
    %566 = vmatpush1.msra.mxu0 0.0
    %567 = vmatprep.subr.mxu0 0.0
    %568 = vmatpush1.msra.mxu0 0.0
    %569 = vmatprep.subr.mxu0 0.0
    %570 = vmatpush1.msra.mxu0 0.0
    %571 = vmatprep.subr.mxu0 0.0
    %572 = vmatpush1.msra.mxu0 0.0
    %573 = vmatprep.subr.mxu0 0.0
    %574 = vmatpush1.msra.mxu0 0.0
    %575 = vmatprep.subr.mxu0 0.0
    %576 = vmatpush1.msra.mxu0 0.0
    %577 = vmatprep.subr.mxu0 0.0
    %578 = vmatpush1.msra.mxu0 0.0
    %579 = vmatprep.subr.mxu0 0.0
    %580 = vmatpush1.msra.mxu0 0.0
    %581 = vmatprep.subr.mxu0 0.0
    %582 = vmatpush1.msra.mxu0 0.0
    %583 = vmatprep.subr.mxu0 0.0
    %584 = vmatpush1.msra.mxu0 0.0
    %585 = vmatprep.subr.mxu0 0.0
    %586 = vmatpush1.msra.mxu0 0.0
    %587 = vmatprep.subr.mxu0 0.0
    %588 = vmatpush1.msra.mxu0 0.0
    %589 = vmatprep.subr.mxu0 0.0
    %590 = vmatpush1.msra.mxu0 0.0
    %591 = vmatprep.subr.mxu0 0.0
    %592 = vmatpush1.msra.mxu0 0.0
    %593 = vmatprep.subr.mxu0 0.0
    %594 = vmatpush1.msra.mxu0 0.0
    %595 = vmatprep.subr.mxu0 0.0
    %596 = vmatpush1.msra.mxu0 0.0
    %597 = vmatprep.subr.mxu0 0.0
    %598 = vmatpush1.msra.mxu0 0.0
    %599 = vmatprep.subr.mxu0 0.0
    %600 = vmatpush1.msra.mxu0 0.0
    %601 = vmatprep.subr.mxu0 0.0
    %602 = vmatpush1.msra.mxu0 0.0
    %603 = vmatprep.subr.mxu0 0.0
    %604 = vmatpush1.msra.mxu0 0.0
    %605 = vmatprep.subr.mxu0 0.0
    %606 = vmatpush1.msra.mxu0 0.0
    %607 = vmatprep.subr.mxu0 0.0
    %608 = vmatpush1.msra.mxu0 0.0
    %609 = vmatprep.subr.mxu0 0.0
    %610 = vmatpush1.msra.mxu0 0.0
    %611 = vmatprep.mubr.f32.mxu0 0.0
    %612 = vmatmul.mubr.f32.gmra.mrb[0].mxu0 %v536
    %v613 = vpop.f32.mrb[0].mxu0
    %v614 = vadd.f32 0.0, %v613
    %v615 = vpop.f32.mrb[0].mxu0
    %616 = vmatprep.mubr.f32.mxu0 0.0
    %617 = vmatmul.mubr.f32.gmra.mrb[0].mxu0 %v539
    %v618 = vpop.f32.mrb[0].mxu0
    %v619 = vadd.f32 0.0, %v618
    %v620 = vpop.f32.mrb[0].mxu0
    %621 = vmatprep.mubr.f32.mxu0 0.0
    %622 = vmatmul.mubr.f32.gmra.mrb[0].mxu0 %v542
    %v623 = vpop.f32.mrb[0].mxu0
    %v624 = vadd.f32 0.0, %v623
    %v625 = vpop.f32.mrb[0].mxu0
    %626 = vmatprep.mubr.f32.mxu0 0.0
    %627 = vmatmul.mubr.f32.gmra.mrb[0].mxu0 %v545
    %v628 = vpop.f32.mrb[0].mxu0
    %v629 = vadd.f32 0.0, %v628
    %v630 = vpop.f32.mrb[0].mxu0
    %631 = vdwg.mxu0
    %v632 = vadd.f32 %v425, %v614
    %v633 = vadd.f32 %v430, %v619
    %v634 = vadd.f32 %v435, %v624
    %v635 = vadd.f32 %v440, %v629
    %v636 = vld [vmem:[%s0 + $0x18] sm:$0xff]
    %v637 = vld [vmem:[%s0 + $0xf0] sm:$0xff]
    %v638 = vld [vmem:[%s0 + $0x1c8] sm:$0xff]
    %v639 = vld [vmem:[%s0 + $0x2a0] sm:$0xff]
    %v640 = vld [vmem:[%s0 + $0x378] sm:$0xff]
    %v641 = vld [vmem:[%s0 + $0x450] sm:$0xff]
    %v642 = vld [vmem:[%s0 + $0x528] sm:$0x3f]
    %v644 = vsel %vm71, %v642, 0
    %646 = vmatprep.subr.mxu0 0.0
    %647 = vmatpush1.msra.mxu0 %v636
    %648 = vmatprep.subr.mxu0 0.0
    %649 = vmatpush1.msra.mxu0 %v637
    %650 = vmatprep.subr.mxu0 0.0
    %651 = vmatpush1.msra.mxu0 %v638
    %652 = vmatprep.subr.mxu0 0.0
    %653 = vmatpush1.msra.mxu0 %v639
    %654 = vmatprep.subr.mxu0 0.0
    %655 = vmatpush1.msra.mxu0 %v640
    %656 = vmatprep.subr.mxu0 0.0
    %657 = vmatpush1.msra.mxu0 %v641
    %658 = vmatprep.subr.mxu0 0.0
    %659 = vmatpush1.msra.mxu0 %v644
    %660 = vmatprep.subr.mxu0 0.0
    %661 = vmatpush1.msra.mxu0 0.0
    %662 = vmatprep.subr.mxu0 0.0
    %663 = vmatpush1.msra.mxu0 0.0
    %664 = vmatprep.subr.mxu0 0.0
    %665 = vmatpush1.msra.mxu0 0.0
    %666 = vmatprep.subr.mxu0 0.0
    %667 = vmatpush1.msra.mxu0 0.0
    %668 = vmatprep.subr.mxu0 0.0
    %669 = vmatpush1.msra.mxu0 0.0
    %670 = vmatprep.subr.mxu0 0.0
    %671 = vmatpush1.msra.mxu0 0.0
    %672 = vmatprep.subr.mxu0 0.0
    %673 = vmatpush1.msra.mxu0 0.0
    %674 = vmatprep.subr.mxu0 0.0
    %675 = vmatpush1.msra.mxu0 0.0
    %676 = vmatprep.subr.mxu0 0.0
    %677 = vmatpush1.msra.mxu0 0.0
    %678 = vmatprep.subr.mxu0 0.0
    %679 = vmatpush1.msra.mxu0 0.0
    %680 = vmatprep.subr.mxu0 0.0
    %681 = vmatpush1.msra.mxu0 0.0
    %682 = vmatprep.subr.mxu0 0.0
    %683 = vmatpush1.msra.mxu0 0.0
    %684 = vmatprep.subr.mxu0 0.0
    %685 = vmatpush1.msra.mxu0 0.0
    %686 = vmatprep.subr.mxu0 0.0
    %687 = vmatpush1.msra.mxu0 0.0
    %688 = vmatprep.subr.mxu0 0.0
    %689 = vmatpush1.msra.mxu0 0.0
    %690 = vmatprep.subr.mxu0 0.0
    %691 = vmatpush1.msra.mxu0 0.0
    %692 = vmatprep.subr.mxu0 0.0
    %693 = vmatpush1.msra.mxu0 0.0
    %694 = vmatprep.subr.mxu0 0.0
    %695 = vmatpush1.msra.mxu0 0.0
    %696 = vmatprep.subr.mxu0 0.0
    %697 = vmatpush1.msra.mxu0 0.0
    %698 = vmatprep.subr.mxu0 0.0
    %699 = vmatpush1.msra.mxu0 0.0
    %700 = vmatprep.subr.mxu0 0.0
    %701 = vmatpush1.msra.mxu0 0.0
    %702 = vmatprep.subr.mxu0 0.0
    %703 = vmatpush1.msra.mxu0 0.0
    %704 = vmatprep.subr.mxu0 0.0
    %705 = vmatpush1.msra.mxu0 0.0
    %706 = vmatprep.subr.mxu0 0.0
    %707 = vmatpush1.msra.mxu0 0.0
    %708 = vmatprep.subr.mxu0 0.0
    %709 = vmatpush1.msra.mxu0 0.0
    %710 = vmatprep.mubr.f32.mxu0 0.0
    %711 = vmatmul.mubr.f32.gmra.mrb[0].mxu0 %v66
    %v712 = vpop.f32.mrb[0].mxu0
    %v713 = vadd.f32 %v57, %v712
    %v714 = vpop.f32.mrb[0].mxu0
    %715 = vmatprep.mubr.f32.mxu0 0.0
    %716 = vmatmul.mubr.f32.gmra.mrb[0].mxu0 %v69
    %v717 = vpop.f32.mrb[0].mxu0
    %v718 = vadd.f32 %v62, %v717
    %v719 = vpop.f32.mrb[0].mxu0
    %720 = vdwg.mxu0
    %v721 = vmax.f32 %v713, 0.0
    %v722 = vmax.f32 %v718, 0.0
    %s723 = scalar_lea.vmem %s3, 96
    %v724 = vld [vmem:[%s723] sm:$0xff]
    %v725 = vld [vmem:[%s723 + $0x8] sm:$0xff]
    %v726 = vld [vmem:[%s723 + $0x10] sm:$0xff]
    %v727 = vld [vmem:[%s723 + $0x18] sm:$0xff]
    %v729 = vsel %vm248, %v724, 0
    %v732 = vsel %vm248, %v725, 0
    %v735 = vsel %vm248, %v726, 0
    %v738 = vsel %vm248, %v727, 0
    %740 = vmatprep.subr.mxu0 0.0
    %741 = vmatpush1.msra.mxu0 %v721
    %742 = vmatprep.subr.mxu0 0.0
    %743 = vmatpush1.msra.mxu0 %v722
    %744 = vmatprep.subr.mxu0 0.0
    %745 = vmatpush1.msra.mxu0 0.0
    %746 = vmatprep.subr.mxu0 0.0
    %747 = vmatpush1.msra.mxu0 0.0
    %748 = vmatprep.subr.mxu0 0.0
    %749 = vmatpush1.msra.mxu0 0.0
    %750 = vmatprep.subr.mxu0 0.0
    %751 = vmatpush1.msra.mxu0 0.0
    %752 = vmatprep.subr.mxu0 0.0
    %753 = vmatpush1.msra.mxu0 0.0
    %754 = vmatprep.subr.mxu0 0.0
    %755 = vmatpush1.msra.mxu0 0.0
    %756 = vmatprep.subr.mxu0 0.0
    %757 = vmatpush1.msra.mxu0 0.0
    %758 = vmatprep.subr.mxu0 0.0
    %759 = vmatpush1.msra.mxu0 0.0
    %760 = vmatprep.subr.mxu0 0.0
    %761 = vmatpush1.msra.mxu0 0.0
    %762 = vmatprep.subr.mxu0 0.0
    %763 = vmatpush1.msra.mxu0 0.0
    %764 = vmatprep.subr.mxu0 0.0
    %765 = vmatpush1.msra.mxu0 0.0
    %766 = vmatprep.subr.mxu0 0.0
    %767 = vmatpush1.msra.mxu0 0.0
    %768 = vmatprep.subr.mxu0 0.0
    %769 = vmatpush1.msra.mxu0 0.0
    %770 = vmatprep.subr.mxu0 0.0
    %771 = vmatpush1.msra.mxu0 0.0
    %772 = vmatprep.subr.mxu0 0.0
    %773 = vmatpush1.msra.mxu0 0.0
    %774 = vmatprep.subr.mxu0 0.0
    %775 = vmatpush1.msra.mxu0 0.0
    %776 = vmatprep.subr.mxu0 0.0
    %777 = vmatpush1.msra.mxu0 0.0
    %778 = vmatprep.subr.mxu0 0.0
    %779 = vmatpush1.msra.mxu0 0.0
    %780 = vmatprep.subr.mxu0 0.0
    %781 = vmatpush1.msra.mxu0 0.0
    %782 = vmatprep.subr.mxu0 0.0
    %783 = vmatpush1.msra.mxu0 0.0
    %784 = vmatprep.subr.mxu0 0.0
    %785 = vmatpush1.msra.mxu0 0.0
    %786 = vmatprep.subr.mxu0 0.0
    %787 = vmatpush1.msra.mxu0 0.0
    %788 = vmatprep.subr.mxu0 0.0
    %789 = vmatpush1.msra.mxu0 0.0
    %790 = vmatprep.subr.mxu0 0.0
    %791 = vmatpush1.msra.mxu0 0.0
    %792 = vmatprep.subr.mxu0 0.0
    %793 = vmatpush1.msra.mxu0 0.0
    %794 = vmatprep.subr.mxu0 0.0
    %795 = vmatpush1.msra.mxu0 0.0
    %796 = vmatprep.subr.mxu0 0.0
    %797 = vmatpush1.msra.mxu0 0.0
    %798 = vmatprep.subr.mxu0 0.0
    %799 = vmatpush1.msra.mxu0 0.0
    %800 = vmatprep.subr.mxu0 0.0
    %801 = vmatpush1.msra.mxu0 0.0
    %802 = vmatprep.subr.mxu0 0.0
    %803 = vmatpush1.msra.mxu0 0.0
    %804 = vmatprep.mubr.f32.mxu0 0.0
    %805 = vmatmul.mubr.f32.gmra.mrb[0].mxu0 %v729
    %v806 = vpop.f32.mrb[0].mxu0
    %v807 = vadd.f32 0.0, %v806
    %v808 = vpop.f32.mrb[0].mxu0
    %809 = vmatprep.mubr.f32.mxu0 0.0
    %810 = vmatmul.mubr.f32.gmra.mrb[0].mxu0 %v732
    %v811 = vpop.f32.mrb[0].mxu0
    %v812 = vadd.f32 0.0, %v811
    %v813 = vpop.f32.mrb[0].mxu0
    %814 = vmatprep.mubr.f32.mxu0 0.0
    %815 = vmatmul.mubr.f32.gmra.mrb[0].mxu0 %v735
    %v816 = vpop.f32.mrb[0].mxu0
    %v817 = vadd.f32 0.0, %v816
    %v818 = vpop.f32.mrb[0].mxu0
    %819 = vmatprep.mubr.f32.mxu0 0.0
    %820 = vmatmul.mubr.f32.gmra.mrb[0].mxu0 %v738
    %v821 = vpop.f32.mrb[0].mxu0
    %v822 = vadd.f32 0.0, %v821
    %v823 = vpop.f32.mrb[0].mxu0
    %824 = vdwg.mxu0
    %v825 = vadd.f32 %v632, %v807
    %v826 = vadd.f32 %v633, %v812
    %v827 = vadd.f32 %v634, %v817
    %v828 = vadd.f32 %v635, %v822
    %v829 = vld [vmem:[%s0 + $0x20] sm:$0xff]
    %v830 = vld [vmem:[%s0 + $0xf8] sm:$0xff]
    %v831 = vld [vmem:[%s0 + $0x1d0] sm:$0xff]
    %v832 = vld [vmem:[%s0 + $0x2a8] sm:$0xff]
    %v833 = vld [vmem:[%s0 + $0x380] sm:$0xff]
    %v834 = vld [vmem:[%s0 + $0x458] sm:$0xff]
    %v835 = vld [vmem:[%s0 + $0x530] sm:$0x3f]
    %v837 = vsel %vm71, %v835, 0
    %839 = vmatprep.subr.mxu0 0.0
    %840 = vmatpush1.msra.mxu0 %v829
    %841 = vmatprep.subr.mxu0 0.0
    %842 = vmatpush1.msra.mxu0 %v830
    %843 = vmatprep.subr.mxu0 0.0
    %844 = vmatpush1.msra.mxu0 %v831
    %845 = vmatprep.subr.mxu0 0.0
    %846 = vmatpush1.msra.mxu0 %v832
    %847 = vmatprep.subr.mxu0 0.0
    %848 = vmatpush1.msra.mxu0 %v833
    %849 = vmatprep.subr.mxu0 0.0
    %850 = vmatpush1.msra.mxu0 %v834
    %851 = vmatprep.subr.mxu0 0.0
    %852 = vmatpush1.msra.mxu0 %v837
    %853 = vmatprep.subr.mxu0 0.0
    %854 = vmatpush1.msra.mxu0 0.0
    %855 = vmatprep.subr.mxu0 0.0
    %856 = vmatpush1.msra.mxu0 0.0
    %857 = vmatprep.subr.mxu0 0.0
    %858 = vmatpush1.msra.mxu0 0.0
    %859 = vmatprep.subr.mxu0 0.0
    %860 = vmatpush1.msra.mxu0 0.0
    %861 = vmatprep.subr.mxu0 0.0
    %862 = vmatpush1.msra.mxu0 0.0
    %863 = vmatprep.subr.mxu0 0.0
    %864 = vmatpush1.msra.mxu0 0.0
    %865 = vmatprep.subr.mxu0 0.0
    %866 = vmatpush1.msra.mxu0 0.0
    %867 = vmatprep.subr.mxu0 0.0
    %868 = vmatpush1.msra.mxu0 0.0
    %869 = vmatprep.subr.mxu0 0.0
    %870 = vmatpush1.msra.mxu0 0.0
    %871 = vmatprep.subr.mxu0 0.0
    %872 = vmatpush1.msra.mxu0 0.0
    %873 = vmatprep.subr.mxu0 0.0
    %874 = vmatpush1.msra.mxu0 0.0
    %875 = vmatprep.subr.mxu0 0.0
    %876 = vmatpush1.msra.mxu0 0.0
    %877 = vmatprep.subr.mxu0 0.0
    %878 = vmatpush1.msra.mxu0 0.0
    %879 = vmatprep.subr.mxu0 0.0
    %880 = vmatpush1.msra.mxu0 0.0
    %881 = vmatprep.subr.mxu0 0.0
    %882 = vmatpush1.msra.mxu0 0.0
    %883 = vmatprep.subr.mxu0 0.0
    %884 = vmatpush1.msra.mxu0 0.0
    %885 = vmatprep.subr.mxu0 0.0
    %886 = vmatpush1.msra.mxu0 0.0
    %887 = vmatprep.subr.mxu0 0.0
    %888 = vmatpush1.msra.mxu0 0.0
    %889 = vmatprep.subr.mxu0 0.0
    %890 = vmatpush1.msra.mxu0 0.0
    %891 = vmatprep.subr.mxu0 0.0
    %892 = vmatpush1.msra.mxu0 0.0
    %893 = vmatprep.subr.mxu0 0.0
    %894 = vmatpush1.msra.mxu0 0.0
    %895 = vmatprep.subr.mxu0 0.0
    %896 = vmatpush1.msra.mxu0 0.0
    %897 = vmatprep.subr.mxu0 0.0
    %898 = vmatpush1.msra.mxu0 0.0
    %899 = vmatprep.subr.mxu0 0.0
    %900 = vmatpush1.msra.mxu0 0.0
    %901 = vmatprep.subr.mxu0 0.0
    %902 = vmatpush1.msra.mxu0 0.0
    %903 = vmatprep.mubr.f32.mxu0 0.0
    %904 = vmatmul.mubr.f32.gmra.mrb[0].mxu0 %v66
    %v905 = vpop.f32.mrb[0].mxu0
    %v906 = vadd.f32 %v57, %v905
    %v907 = vpop.f32.mrb[0].mxu0
    %908 = vmatprep.mubr.f32.mxu0 0.0
    %909 = vmatmul.mubr.f32.gmra.mrb[0].mxu0 %v69
    %v910 = vpop.f32.mrb[0].mxu0
    %v911 = vadd.f32 %v62, %v910
    %v912 = vpop.f32.mrb[0].mxu0
    %913 = vdwg.mxu0
    %v914 = vmax.f32 %v906, 0.0
    %v915 = vmax.f32 %v911, 0.0
    %s916 = scalar_lea.vmem %s3, 128
    %v917 = vld [vmem:[%s916] sm:$0xff]
    %v918 = vld [vmem:[%s916 + $0x8] sm:$0xff]
    %v919 = vld [vmem:[%s916 + $0x10] sm:$0xff]
    %v920 = vld [vmem:[%s916 + $0x18] sm:$0xff]
    %v922 = vsel %vm248, %v917, 0
    %v925 = vsel %vm248, %v918, 0
    %v928 = vsel %vm248, %v919, 0
    %v931 = vsel %vm248, %v920, 0
    %933 = vmatprep.subr.mxu0 0.0
    %934 = vmatpush1.msra.mxu0 %v914
    %935 = vmatprep.subr.mxu0 0.0
    %936 = vmatpush1.msra.mxu0 %v915
    %937 = vmatprep.subr.mxu0 0.0
    %938 = vmatpush1.msra.mxu0 0.0
    %939 = vmatprep.subr.mxu0 0.0
    %940 = vmatpush1.msra.mxu0 0.0
    %941 = vmatprep.subr.mxu0 0.0
    %942 = vmatpush1.msra.mxu0 0.0
    %943 = vmatprep.subr.mxu0 0.0
    %944 = vmatpush1.msra.mxu0 0.0
    %945 = vmatprep.subr.mxu0 0.0
    %946 = vmatpush1.msra.mxu0 0.0
    %947 = vmatprep.subr.mxu0 0.0
    %948 = vmatpush1.msra.mxu0 0.0
    %949 = vmatprep.subr.mxu0 0.0
    %950 = vmatpush1.msra.mxu0 0.0
    %951 = vmatprep.subr.mxu0 0.0
    %952 = vmatpush1.msra.mxu0 0.0
    %953 = vmatprep.subr.mxu0 0.0
    %954 = vmatpush1.msra.mxu0 0.0
    %955 = vmatprep.subr.mxu0 0.0
    %956 = vmatpush1.msra.mxu0 0.0
    %957 = vmatprep.subr.mxu0 0.0
    %958 = vmatpush1.msra.mxu0 0.0
    %959 = vmatprep.subr.mxu0 0.0
    %960 = vmatpush1.msra.mxu0 0.0
    %961 = vmatprep.subr.mxu0 0.0
    %962 = vmatpush1.msra.mxu0 0.0
    %963 = vmatprep.subr.mxu0 0.0
    %964 = vmatpush1.msra.mxu0 0.0
    %965 = vmatprep.subr.mxu0 0.0
    %966 = vmatpush1.msra.mxu0 0.0
    %967 = vmatprep.subr.mxu0 0.0
    %968 = vmatpush1.msra.mxu0 0.0
    %969 = vmatprep.subr.mxu0 0.0
    %970 = vmatpush1.msra.mxu0 0.0
    %971 = vmatprep.subr.mxu0 0.0
    %972 = vmatpush1.msra.mxu0 0.0
    %973 = vmatprep.subr.mxu0 0.0
    %974 = vmatpush1.msra.mxu0 0.0
    %975 = vmatprep.subr.mxu0 0.0
    %976 = vmatpush1.msra.mxu0 0.0
    %977 = vmatprep.subr.mxu0 0.0
    %978 = vmatpush1.msra.mxu0 0.0
    %979 = vmatprep.subr.mxu0 0.0
    %980 = vmatpush1.msra.mxu0 0.0
    %981 = vmatprep.subr.mxu0 0.0
    %982 = vmatpush1.msra.mxu0 0.0
    %983 = vmatprep.subr.mxu0 0.0
    %984 = vmatpush1.msra.mxu0 0.0
    %985 = vmatprep.subr.mxu0 0.0
    %986 = vmatpush1.msra.mxu0 0.0
    %987 = vmatprep.subr.mxu0 0.0
    %988 = vmatpush1.msra.mxu0 0.0
    %989 = vmatprep.subr.mxu0 0.0
    %990 = vmatpush1.msra.mxu0 0.0
    %991 = vmatprep.subr.mxu0 0.0
    %992 = vmatpush1.msra.mxu0 0.0
    %993 = vmatprep.subr.mxu0 0.0
    %994 = vmatpush1.msra.mxu0 0.0
    %995 = vmatprep.subr.mxu0 0.0
    %996 = vmatpush1.msra.mxu0 0.0
    %997 = vmatprep.mubr.f32.mxu0 0.0
    %998 = vmatmul.mubr.f32.gmra.mrb[0].mxu0 %v922
    %v999 = vpop.f32.mrb[0].mxu0
    %v1000 = vadd.f32 0.0, %v999
    %v1001 = vpop.f32.mrb[0].mxu0
    %1002 = vmatprep.mubr.f32.mxu0 0.0
    %1003 = vmatmul.mubr.f32.gmra.mrb[0].mxu0 %v925
    %v1004 = vpop.f32.mrb[0].mxu0
    %v1005 = vadd.f32 0.0, %v1004
    %v1006 = vpop.f32.mrb[0].mxu0
    %1007 = vmatprep.mubr.f32.mxu0 0.0
    %1008 = vmatmul.mubr.f32.gmra.mrb[0].mxu0 %v928
    %v1009 = vpop.f32.mrb[0].mxu0
    %v1010 = vadd.f32 0.0, %v1009
    %v1011 = vpop.f32.mrb[0].mxu0
    %1012 = vmatprep.mubr.f32.mxu0 0.0
    %1013 = vmatmul.mubr.f32.gmra.mrb[0].mxu0 %v931
    %v1014 = vpop.f32.mrb[0].mxu0
    %v1015 = vadd.f32 0.0, %v1014
    %v1016 = vpop.f32.mrb[0].mxu0
    %1017 = vdwg.mxu0
    %v1018 = vadd.f32 %v825, %v1000
    %v1019 = vadd.f32 %v826, %v1005
    %v1020 = vadd.f32 %v827, %v1010
    %v1021 = vadd.f32 %v828, %v1015
    %v1022 = vld [vmem:[%s0 + $0x28] sm:$0xff]
    %v1023 = vld [vmem:[%s0 + $0x100] sm:$0xff]
    %v1024 = vld [vmem:[%s0 + $0x1d8] sm:$0xff]
    %v1025 = vld [vmem:[%s0 + $0x2b0] sm:$0xff]
    %v1026 = vld [vmem:[%s0 + $0x388] sm:$0xff]
    %v1027 = vld [vmem:[%s0 + $0x460] sm:$0xff]
    %v1028 = vld [vmem:[%s0 + $0x538] sm:$0x3f]
    %v1030 = vsel %vm71, %v1028, 0
    %1032 = vmatprep.subr.mxu0 0.0
    %1033 = vmatpush1.msra.mxu0 %v1022
    %1034 = vmatprep.subr.mxu0 0.0
    %1035 = vmatpush1.msra.mxu0 %v1023
    %1036 = vmatprep.subr.mxu0 0.0
    %1037 = vmatpush1.msra.mxu0 %v1024
    %1038 = vmatprep.subr.mxu0 0.0
    %1039 = vmatpush1.msra.mxu0 %v1025
    %1040 = vmatprep.subr.mxu0 0.0
    %1041 = vmatpush1.msra.mxu0 %v1026
    %1042 = vmatprep.subr.mxu0 0.0
    %1043 = vmatpush1.msra.mxu0 %v1027
    %1044 = vmatprep.subr.mxu0 0.0
    %1045 = vmatpush1.msra.mxu0 %v1030
    %1046 = vmatprep.subr.mxu0 0.0
    %1047 = vmatpush1.msra.mxu0 0.0
    %1048 = vmatprep.subr.mxu0 0.0
    %1049 = vmatpush1.msra.mxu0 0.0
    %1050 = vmatprep.subr.mxu0 0.0
    %1051 = vmatpush1.msra.mxu0 0.0
    %1052 = vmatprep.subr.mxu0 0.0
    %1053 = vmatpush1.msra.mxu0 0.0
    %1054 = vmatprep.subr.mxu0 0.0
    %1055 = vmatpush1.msra.mxu0 0.0
    %1056 = vmatprep.subr.mxu0 0.0
    %1057 = vmatpush1.msra.mxu0 0.0
    %1058 = vmatprep.subr.mxu0 0.0
    %1059 = vmatpush1.msra.mxu0 0.0
    %1060 = vmatprep.subr.mxu0 0.0
    %1061 = vmatpush1.msra.mxu0 0.0
    %1062 = vmatprep.subr.mxu0 0.0
    %1063 = vmatpush1.msra.mxu0 0.0
    %1064 = vmatprep.subr.mxu0 0.0
    %1065 = vmatpush1.msra.mxu0 0.0
    %1066 = vmatprep.subr.mxu0 0.0
    %1067 = vmatpush1.msra.mxu0 0.0
    %1068 = vmatprep.subr.mxu0 0.0
    %1069 = vmatpush1.msra.mxu0 0.0
    %1070 = vmatprep.subr.mxu0 0.0
    %1071 = vmatpush1.msra.mxu0 0.0
    %1072 = vmatprep.subr.mxu0 0.0
    %1073 = vmatpush1.msra.mxu0 0.0
    %1074 = vmatprep.subr.mxu0 0.0
    %1075 = vmatpush1.msra.mxu0 0.0
    %1076 = vmatprep.subr.mxu0 0.0
    %1077 = vmatpush1.msra.mxu0 0.0
    %1078 = vmatprep.subr.mxu0 0.0
    %1079 = vmatpush1.msra.mxu0 0.0
    %1080 = vmatprep.subr.mxu0 0.0
    %1081 = vmatpush1.msra.mxu0 0.0
    %1082 = vmatprep.subr.mxu0 0.0
    %1083 = vmatpush1.msra.mxu0 0.0
    %1084 = vmatprep.subr.mxu0 0.0
    %1085 = vmatpush1.msra.mxu0 0.0
    %1086 = vmatprep.subr.mxu0 0.0
    %1087 = vmatpush1.msra.mxu0 0.0
    %1088 = vmatprep.subr.mxu0 0.0
    %1089 = vmatpush1.msra.mxu0 0.0
    %1090 = vmatprep.subr.mxu0 0.0
    %1091 = vmatpush1.msra.mxu0 0.0
    %1092 = vmatprep.subr.mxu0 0.0
    %1093 = vmatpush1.msra.mxu0 0.0
    %1094 = vmatprep.subr.mxu0 0.0
    %1095 = vmatpush1.msra.mxu0 0.0
    %1096 = vmatprep.mubr.f32.mxu0 0.0
    %1097 = vmatmul.mubr.f32.gmra.mrb[0].mxu0 %v66
    %v1098 = vpop.f32.mrb[0].mxu0
    %v1099 = vadd.f32 %v57, %v1098
    %v1100 = vpop.f32.mrb[0].mxu0
    %1101 = vmatprep.mubr.f32.mxu0 0.0
    %1102 = vmatmul.mubr.f32.gmra.mrb[0].mxu0 %v69
    %v1103 = vpop.f32.mrb[0].mxu0
    %v1104 = vadd.f32 %v62, %v1103
    %v1105 = vpop.f32.mrb[0].mxu0
    %1106 = vdwg.mxu0
    %v1107 = vmax.f32 %v1099, 0.0
    %v1108 = vmax.f32 %v1104, 0.0
    %s1109 = scalar_lea.vmem %s3, 160
    %v1110 = vld [vmem:[%s1109] sm:$0xff]
    %v1111 = vld [vmem:[%s1109 + $0x8] sm:$0xff]
    %v1112 = vld [vmem:[%s1109 + $0x10] sm:$0xff]
    %v1113 = vld [vmem:[%s1109 + $0x18] sm:$0xff]
    %v1115 = vsel %vm248, %v1110, 0
    %v1118 = vsel %vm248, %v1111, 0
    %v1121 = vsel %vm248, %v1112, 0
    %v1124 = vsel %vm248, %v1113, 0
    %1126 = vmatprep.subr.mxu0 0.0
    %1127 = vmatpush1.msra.mxu0 %v1107
    %1128 = vmatprep.subr.mxu0 0.0
    %1129 = vmatpush1.msra.mxu0 %v1108
    %1130 = vmatprep.subr.mxu0 0.0
    %1131 = vmatpush1.msra.mxu0 0.0
    %1132 = vmatprep.subr.mxu0 0.0
    %1133 = vmatpush1.msra.mxu0 0.0
    %1134 = vmatprep.subr.mxu0 0.0
    %1135 = vmatpush1.msra.mxu0 0.0
    %1136 = vmatprep.subr.mxu0 0.0
    %1137 = vmatpush1.msra.mxu0 0.0
    %1138 = vmatprep.subr.mxu0 0.0
    %1139 = vmatpush1.msra.mxu0 0.0
    %1140 = vmatprep.subr.mxu0 0.0
    %1141 = vmatpush1.msra.mxu0 0.0
    %1142 = vmatprep.subr.mxu0 0.0
    %1143 = vmatpush1.msra.mxu0 0.0
    %1144 = vmatprep.subr.mxu0 0.0
    %1145 = vmatpush1.msra.mxu0 0.0
    %1146 = vmatprep.subr.mxu0 0.0
    %1147 = vmatpush1.msra.mxu0 0.0
    %1148 = vmatprep.subr.mxu0 0.0
    %1149 = vmatpush1.msra.mxu0 0.0
    %1150 = vmatprep.subr.mxu0 0.0
    %1151 = vmatpush1.msra.mxu0 0.0
    %1152 = vmatprep.subr.mxu0 0.0
    %1153 = vmatpush1.msra.mxu0 0.0
    %1154 = vmatprep.subr.mxu0 0.0
    %1155 = vmatpush1.msra.mxu0 0.0
    %1156 = vmatprep.subr.mxu0 0.0
    %1157 = vmatpush1.msra.mxu0 0.0
    %1158 = vmatprep.subr.mxu0 0.0
    %1159 = vmatpush1.msra.mxu0 0.0
    %1160 = vmatprep.subr.mxu0 0.0
    %1161 = vmatpush1.msra.mxu0 0.0
    %1162 = vmatprep.subr.mxu0 0.0
    %1163 = vmatpush1.msra.mxu0 0.0
    %1164 = vmatprep.subr.mxu0 0.0
    %1165 = vmatpush1.msra.mxu0 0.0
    %1166 = vmatprep.subr.mxu0 0.0
    %1167 = vmatpush1.msra.mxu0 0.0
    %1168 = vmatprep.subr.mxu0 0.0
    %1169 = vmatpush1.msra.mxu0 0.0
    %1170 = vmatprep.subr.mxu0 0.0
    %1171 = vmatpush1.msra.mxu0 0.0
    %1172 = vmatprep.subr.mxu0 0.0
    %1173 = vmatpush1.msra.mxu0 0.0
    %1174 = vmatprep.subr.mxu0 0.0
    %1175 = vmatpush1.msra.mxu0 0.0
    %1176 = vmatprep.subr.mxu0 0.0
    %1177 = vmatpush1.msra.mxu0 0.0
    %1178 = vmatprep.subr.mxu0 0.0
    %1179 = vmatpush1.msra.mxu0 0.0
    %1180 = vmatprep.subr.mxu0 0.0
    %1181 = vmatpush1.msra.mxu0 0.0
    %1182 = vmatprep.subr.mxu0 0.0
    %1183 = vmatpush1.msra.mxu0 0.0
    %1184 = vmatprep.subr.mxu0 0.0
    %1185 = vmatpush1.msra.mxu0 0.0
    %1186 = vmatprep.subr.mxu0 0.0
    %1187 = vmatpush1.msra.mxu0 0.0
    %1188 = vmatprep.subr.mxu0 0.0
    %1189 = vmatpush1.msra.mxu0 0.0
    %1190 = vmatprep.mubr.f32.mxu0 0.0
    %1191 = vmatmul.mubr.f32.gmra.mrb[0].mxu0 %v1115
    %v1192 = vpop.f32.mrb[0].mxu0
    %v1193 = vadd.f32 0.0, %v1192
    %v1194 = vpop.f32.mrb[0].mxu0
    %1195 = vmatprep.mubr.f32.mxu0 0.0
    %1196 = vmatmul.mubr.f32.gmra.mrb[0].mxu0 %v1118
    %v1197 = vpop.f32.mrb[0].mxu0
    %v1198 = vadd.f32 0.0, %v1197
    %v1199 = vpop.f32.mrb[0].mxu0
    %1200 = vmatprep.mubr.f32.mxu0 0.0
    %1201 = vmatmul.mubr.f32.gmra.mrb[0].mxu0 %v1121
    %v1202 = vpop.f32.mrb[0].mxu0
    %v1203 = vadd.f32 0.0, %v1202
    %v1204 = vpop.f32.mrb[0].mxu0
    %1205 = vmatprep.mubr.f32.mxu0 0.0
    %1206 = vmatmul.mubr.f32.gmra.mrb[0].mxu0 %v1124
    %v1207 = vpop.f32.mrb[0].mxu0
    %v1208 = vadd.f32 0.0, %v1207
    %v1209 = vpop.f32.mrb[0].mxu0
    %1210 = vdwg.mxu0
    %v1211 = vadd.f32 %v1018, %v1193
    %v1212 = vadd.f32 %v1019, %v1198
    %v1213 = vadd.f32 %v1020, %v1203
    %v1214 = vadd.f32 %v1021, %v1208
    %v1215 = vld [vmem:[%s0 + $0x30] sm:$0xff]
    %v1216 = vld [vmem:[%s0 + $0x108] sm:$0xff]
    %v1217 = vld [vmem:[%s0 + $0x1e0] sm:$0xff]
    %v1218 = vld [vmem:[%s0 + $0x2b8] sm:$0xff]
    %v1219 = vld [vmem:[%s0 + $0x390] sm:$0xff]
    %v1220 = vld [vmem:[%s0 + $0x468] sm:$0xff]
    %v1221 = vld [vmem:[%s0 + $0x540] sm:$0x3f]
    %v1223 = vsel %vm71, %v1221, 0
    %1225 = vmatprep.subr.mxu0 0.0
    %1226 = vmatpush1.msra.mxu0 %v1215
    %1227 = vmatprep.subr.mxu0 0.0
    %1228 = vmatpush1.msra.mxu0 %v1216
    %1229 = vmatprep.subr.mxu0 0.0
    %1230 = vmatpush1.msra.mxu0 %v1217
    %1231 = vmatprep.subr.mxu0 0.0
    %1232 = vmatpush1.msra.mxu0 %v1218
    %1233 = vmatprep.subr.mxu0 0.0
    %1234 = vmatpush1.msra.mxu0 %v1219
    %1235 = vmatprep.subr.mxu0 0.0
    %1236 = vmatpush1.msra.mxu0 %v1220
    %1237 = vmatprep.subr.mxu0 0.0
    %1238 = vmatpush1.msra.mxu0 %v1223
    %1239 = vmatprep.subr.mxu0 0.0
    %1240 = vmatpush1.msra.mxu0 0.0
    %1241 = vmatprep.subr.mxu0 0.0
    %1242 = vmatpush1.msra.mxu0 0.0
    %1243 = vmatprep.subr.mxu0 0.0
    %1244 = vmatpush1.msra.mxu0 0.0
    %1245 = vmatprep.subr.mxu0 0.0
    %1246 = vmatpush1.msra.mxu0 0.0
    %1247 = vmatprep.subr.mxu0 0.0
    %1248 = vmatpush1.msra.mxu0 0.0
    %1249 = vmatprep.subr.mxu0 0.0
    %1250 = vmatpush1.msra.mxu0 0.0
    %1251 = vmatprep.subr.mxu0 0.0
    %1252 = vmatpush1.msra.mxu0 0.0
    %1253 = vmatprep.subr.mxu0 0.0
    %1254 = vmatpush1.msra.mxu0 0.0
    %1255 = vmatprep.subr.mxu0 0.0
    %1256 = vmatpush1.msra.mxu0 0.0
    %1257 = vmatprep.subr.mxu0 0.0
    %1258 = vmatpush1.msra.mxu0 0.0
    %1259 = vmatprep.subr.mxu0 0.0
    %1260 = vmatpush1.msra.mxu0 0.0
    %1261 = vmatprep.subr.mxu0 0.0
    %1262 = vmatpush1.msra.mxu0 0.0
    %1263 = vmatprep.subr.mxu0 0.0
    %1264 = vmatpush1.msra.mxu0 0.0
    %1265 = vmatprep.subr.mxu0 0.0
    %1266 = vmatpush1.msra.mxu0 0.0
    %1267 = vmatprep.subr.mxu0 0.0
    %1268 = vmatpush1.msra.mxu0 0.0
    %1269 = vmatprep.subr.mxu0 0.0
    %1270 = vmatpush1.msra.mxu0 0.0
    %1271 = vmatprep.subr.mxu0 0.0
    %1272 = vmatpush1.msra.mxu0 0.0
    %1273 = vmatprep.subr.mxu0 0.0
    %1274 = vmatpush1.msra.mxu0 0.0
    %1275 = vmatprep.subr.mxu0 0.0
    %1276 = vmatpush1.msra.mxu0 0.0
    %1277 = vmatprep.subr.mxu0 0.0
    %1278 = vmatpush1.msra.mxu0 0.0
    %1279 = vmatprep.subr.mxu0 0.0
    %1280 = vmatpush1.msra.mxu0 0.0
    %1281 = vmatprep.subr.mxu0 0.0
    %1282 = vmatpush1.msra.mxu0 0.0
    %1283 = vmatprep.subr.mxu0 0.0
    %1284 = vmatpush1.msra.mxu0 0.0
    %1285 = vmatprep.subr.mxu0 0.0
    %1286 = vmatpush1.msra.mxu0 0.0
    %1287 = vmatprep.subr.mxu0 0.0
    %1288 = vmatpush1.msra.mxu0 0.0
    %1289 = vmatprep.mubr.f32.mxu0 0.0
    %1290 = vmatmul.mubr.f32.gmra.mrb[0].mxu0 %v66
    %v1291 = vpop.f32.mrb[0].mxu0
    %v1292 = vadd.f32 %v57, %v1291
    %v1293 = vpop.f32.mrb[0].mxu0
    %1294 = vmatprep.mubr.f32.mxu0 0.0
    %1295 = vmatmul.mubr.f32.gmra.mrb[0].mxu0 %v69
    %v1296 = vpop.f32.mrb[0].mxu0
    %v1297 = vadd.f32 %v62, %v1296
    %v1298 = vpop.f32.mrb[0].mxu0
    %1299 = vdwg.mxu0
    %v1300 = vmax.f32 %v1292, 0.0
    %v1301 = vmax.f32 %v1297, 0.0
    %s1302 = scalar_lea.vmem %s3, 192
    %v1303 = vld [vmem:[%s1302] sm:$0xff]
    %v1304 = vld [vmem:[%s1302 + $0x8] sm:$0xff]
    %v1305 = vld [vmem:[%s1302 + $0x10] sm:$0xff]
    %v1306 = vld [vmem:[%s1302 + $0x18] sm:$0xff]
    %v1308 = vsel %vm248, %v1303, 0
    %v1311 = vsel %vm248, %v1304, 0
    %v1314 = vsel %vm248, %v1305, 0
    %v1317 = vsel %vm248, %v1306, 0
    %1319 = vmatprep.subr.mxu0 0.0
    %1320 = vmatpush1.msra.mxu0 %v1300
    %1321 = vmatprep.subr.mxu0 0.0
    %1322 = vmatpush1.msra.mxu0 %v1301
    %1323 = vmatprep.subr.mxu0 0.0
    %1324 = vmatpush1.msra.mxu0 0.0
    %1325 = vmatprep.subr.mxu0 0.0
    %1326 = vmatpush1.msra.mxu0 0.0
    %1327 = vmatprep.subr.mxu0 0.0
    %1328 = vmatpush1.msra.mxu0 0.0
    %1329 = vmatprep.subr.mxu0 0.0
    %1330 = vmatpush1.msra.mxu0 0.0
    %1331 = vmatprep.subr.mxu0 0.0
    %1332 = vmatpush1.msra.mxu0 0.0
    %1333 = vmatprep.subr.mxu0 0.0
    %1334 = vmatpush1.msra.mxu0 0.0
    %1335 = vmatprep.subr.mxu0 0.0
    %1336 = vmatpush1.msra.mxu0 0.0
    %1337 = vmatprep.subr.mxu0 0.0
    %1338 = vmatpush1.msra.mxu0 0.0
    %1339 = vmatprep.subr.mxu0 0.0
    %1340 = vmatpush1.msra.mxu0 0.0
    %1341 = vmatprep.subr.mxu0 0.0
    %1342 = vmatpush1.msra.mxu0 0.0
    %1343 = vmatprep.subr.mxu0 0.0
    %1344 = vmatpush1.msra.mxu0 0.0
    %1345 = vmatprep.subr.mxu0 0.0
    %1346 = vmatpush1.msra.mxu0 0.0
    %1347 = vmatprep.subr.mxu0 0.0
    %1348 = vmatpush1.msra.mxu0 0.0
    %1349 = vmatprep.subr.mxu0 0.0
    %1350 = vmatpush1.msra.mxu0 0.0
    %1351 = vmatprep.subr.mxu0 0.0
    %1352 = vmatpush1.msra.mxu0 0.0
    %1353 = vmatprep.subr.mxu0 0.0
    %1354 = vmatpush1.msra.mxu0 0.0
    %1355 = vmatprep.subr.mxu0 0.0
    %1356 = vmatpush1.msra.mxu0 0.0
    %1357 = vmatprep.subr.mxu0 0.0
    %1358 = vmatpush1.msra.mxu0 0.0
    %1359 = vmatprep.subr.mxu0 0.0
    %1360 = vmatpush1.msra.mxu0 0.0
    %1361 = vmatprep.subr.mxu0 0.0
    %1362 = vmatpush1.msra.mxu0 0.0
    %1363 = vmatprep.subr.mxu0 0.0
    %1364 = vmatpush1.msra.mxu0 0.0
    %1365 = vmatprep.subr.mxu0 0.0
    %1366 = vmatpush1.msra.mxu0 0.0
    %1367 = vmatprep.subr.mxu0 0.0
    %1368 = vmatpush1.msra.mxu0 0.0
    %1369 = vmatprep.subr.mxu0 0.0
    %1370 = vmatpush1.msra.mxu0 0.0
    %1371 = vmatprep.subr.mxu0 0.0
    %1372 = vmatpush1.msra.mxu0 0.0
    %1373 = vmatprep.subr.mxu0 0.0
    %1374 = vmatpush1.msra.mxu0 0.0
    %1375 = vmatprep.subr.mxu0 0.0
    %1376 = vmatpush1.msra.mxu0 0.0
    %1377 = vmatprep.subr.mxu0 0.0
    %1378 = vmatpush1.msra.mxu0 0.0
    %1379 = vmatprep.subr.mxu0 0.0
    %1380 = vmatpush1.msra.mxu0 0.0
    %1381 = vmatprep.subr.mxu0 0.0
    %1382 = vmatpush1.msra.mxu0 0.0
    %1383 = vmatprep.mubr.f32.mxu0 0.0
    %1384 = vmatmul.mubr.f32.gmra.mrb[0].mxu0 %v1308
    %v1385 = vpop.f32.mrb[0].mxu0
    %v1386 = vadd.f32 0.0, %v1385
    %v1387 = vpop.f32.mrb[0].mxu0
    %1388 = vmatprep.mubr.f32.mxu0 0.0
    %1389 = vmatmul.mubr.f32.gmra.mrb[0].mxu0 %v1311
    %v1390 = vpop.f32.mrb[0].mxu0
    %v1391 = vadd.f32 0.0, %v1390
    %v1392 = vpop.f32.mrb[0].mxu0
    %1393 = vmatprep.mubr.f32.mxu0 0.0
    %1394 = vmatmul.mubr.f32.gmra.mrb[0].mxu0 %v1314
    %v1395 = vpop.f32.mrb[0].mxu0
    %v1396 = vadd.f32 0.0, %v1395
    %v1397 = vpop.f32.mrb[0].mxu0
    %1398 = vmatprep.mubr.f32.mxu0 0.0
    %1399 = vmatmul.mubr.f32.gmra.mrb[0].mxu0 %v1317
    %v1400 = vpop.f32.mrb[0].mxu0
    %v1401 = vadd.f32 0.0, %v1400
    %v1402 = vpop.f32.mrb[0].mxu0
    %1403 = vdwg.mxu0
    %v1404 = vadd.f32 %v1211, %v1386
    %v1405 = vadd.f32 %v1212, %v1391
    %v1406 = vadd.f32 %v1213, %v1396
    %v1407 = vadd.f32 %v1214, %v1401
    %v1408 = vld [vmem:[%s0 + $0x38] sm:$0xff]
    %v1409 = vld [vmem:[%s0 + $0x110] sm:$0xff]
    %v1410 = vld [vmem:[%s0 + $0x1e8] sm:$0xff]
    %v1411 = vld [vmem:[%s0 + $0x2c0] sm:$0xff]
    %v1412 = vld [vmem:[%s0 + $0x398] sm:$0xff]
    %v1413 = vld [vmem:[%s0 + $0x470] sm:$0xff]
    %v1414 = vld [vmem:[%s0 + $0x548] sm:$0x3f]
    %v1416 = vsel %vm71, %v1414, 0
    %1418 = vmatprep.subr.mxu0 0.0
    %1419 = vmatpush1.msra.mxu0 %v1408
    %1420 = vmatprep.subr.mxu0 0.0
    %1421 = vmatpush1.msra.mxu0 %v1409
    %1422 = vmatprep.subr.mxu0 0.0
    %1423 = vmatpush1.msra.mxu0 %v1410
    %1424 = vmatprep.subr.mxu0 0.0
    %1425 = vmatpush1.msra.mxu0 %v1411
    %1426 = vmatprep.subr.mxu0 0.0
    %1427 = vmatpush1.msra.mxu0 %v1412
    %1428 = vmatprep.subr.mxu0 0.0
    %1429 = vmatpush1.msra.mxu0 %v1413
    %1430 = vmatprep.subr.mxu0 0.0
    %1431 = vmatpush1.msra.mxu0 %v1416
    %1432 = vmatprep.subr.mxu0 0.0
    %1433 = vmatpush1.msra.mxu0 0.0
    %1434 = vmatprep.subr.mxu0 0.0
    %1435 = vmatpush1.msra.mxu0 0.0
    %1436 = vmatprep.subr.mxu0 0.0
    %1437 = vmatpush1.msra.mxu0 0.0
    %1438 = vmatprep.subr.mxu0 0.0
    %1439 = vmatpush1.msra.mxu0 0.0
    %1440 = vmatprep.subr.mxu0 0.0
    %1441 = vmatpush1.msra.mxu0 0.0
    %1442 = vmatprep.subr.mxu0 0.0
    %1443 = vmatpush1.msra.mxu0 0.0
    %1444 = vmatprep.subr.mxu0 0.0
    %1445 = vmatpush1.msra.mxu0 0.0
    %1446 = vmatprep.subr.mxu0 0.0
    %1447 = vmatpush1.msra.mxu0 0.0
    %1448 = vmatprep.subr.mxu0 0.0
    %1449 = vmatpush1.msra.mxu0 0.0
    %1450 = vmatprep.subr.mxu0 0.0
    %1451 = vmatpush1.msra.mxu0 0.0
    %1452 = vmatprep.subr.mxu0 0.0
    %1453 = vmatpush1.msra.mxu0 0.0
    %1454 = vmatprep.subr.mxu0 0.0
    %1455 = vmatpush1.msra.mxu0 0.0
    %1456 = vmatprep.subr.mxu0 0.0
    %1457 = vmatpush1.msra.mxu0 0.0
    %1458 = vmatprep.subr.mxu0 0.0
    %1459 = vmatpush1.msra.mxu0 0.0
    %1460 = vmatprep.subr.mxu0 0.0
    %1461 = vmatpush1.msra.mxu0 0.0
    %1462 = vmatprep.subr.mxu0 0.0
    %1463 = vmatpush1.msra.mxu0 0.0
    %1464 = vmatprep.subr.mxu0 0.0
    %1465 = vmatpush1.msra.mxu0 0.0
    %1466 = vmatprep.subr.mxu0 0.0
    %1467 = vmatpush1.msra.mxu0 0.0
    %1468 = vmatprep.subr.mxu0 0.0
    %1469 = vmatpush1.msra.mxu0 0.0
    %1470 = vmatprep.subr.mxu0 0.0
    %1471 = vmatpush1.msra.mxu0 0.0
    %1472 = vmatprep.subr.mxu0 0.0
    %1473 = vmatpush1.msra.mxu0 0.0
    %1474 = vmatprep.subr.mxu0 0.0
    %1475 = vmatpush1.msra.mxu0 0.0
    %1476 = vmatprep.subr.mxu0 0.0
    %1477 = vmatpush1.msra.mxu0 0.0
    %1478 = vmatprep.subr.mxu0 0.0
    %1479 = vmatpush1.msra.mxu0 0.0
    %1480 = vmatprep.subr.mxu0 0.0
    %1481 = vmatpush1.msra.mxu0 0.0
    %1482 = vmatprep.mubr.f32.mxu0 0.0
    %1483 = vmatmul.mubr.f32.gmra.mrb[0].mxu0 %v66
    %v1484 = vpop.f32.mrb[0].mxu0
    %v1485 = vadd.f32 %v57, %v1484
    %v1486 = vpop.f32.mrb[0].mxu0
    %1487 = vmatprep.mubr.f32.mxu0 0.0
    %1488 = vmatmul.mubr.f32.gmra.mrb[0].mxu0 %v69
    %v1489 = vpop.f32.mrb[0].mxu0
    %v1490 = vadd.f32 %v62, %v1489
    %v1491 = vpop.f32.mrb[0].mxu0
    %1492 = vdwg.mxu0
    %v1493 = vmax.f32 %v1485, 0.0
    %v1494 = vmax.f32 %v1490, 0.0
    %s1495 = scalar_lea.vmem %s3, 224
    %v1496 = vld [vmem:[%s1495] sm:$0xff]
    %v1497 = vld [vmem:[%s1495 + $0x8] sm:$0xff]
    %v1498 = vld [vmem:[%s1495 + $0x10] sm:$0xff]
    %v1499 = vld [vmem:[%s1495 + $0x18] sm:$0xff]
    %v1501 = vsel %vm248, %v1496, 0
    %v1504 = vsel %vm248, %v1497, 0
    %v1507 = vsel %vm248, %v1498, 0
    %v1510 = vsel %vm248, %v1499, 0
    %1512 = vmatprep.subr.mxu0 0.0
    %1513 = vmatpush1.msra.mxu0 %v1493
    %1514 = vmatprep.subr.mxu0 0.0
    %1515 = vmatpush1.msra.mxu0 %v1494
    %1516 = vmatprep.subr.mxu0 0.0
    %1517 = vmatpush1.msra.mxu0 0.0
    %1518 = vmatprep.subr.mxu0 0.0
    %1519 = vmatpush1.msra.mxu0 0.0
    %1520 = vmatprep.subr.mxu0 0.0
    %1521 = vmatpush1.msra.mxu0 0.0
    %1522 = vmatprep.subr.mxu0 0.0
    %1523 = vmatpush1.msra.mxu0 0.0
    %1524 = vmatprep.subr.mxu0 0.0
    %1525 = vmatpush1.msra.mxu0 0.0
    %1526 = vmatprep.subr.mxu0 0.0
    %1527 = vmatpush1.msra.mxu0 0.0
    %1528 = vmatprep.subr.mxu0 0.0
    %1529 = vmatpush1.msra.mxu0 0.0
    %1530 = vmatprep.subr.mxu0 0.0
    %1531 = vmatpush1.msra.mxu0 0.0
    %1532 = vmatprep.subr.mxu0 0.0
    %1533 = vmatpush1.msra.mxu0 0.0
    %1534 = vmatprep.subr.mxu0 0.0
    %1535 = vmatpush1.msra.mxu0 0.0
    %1536 = vmatprep.subr.mxu0 0.0
    %1537 = vmatpush1.msra.mxu0 0.0
    %1538 = vmatprep.subr.mxu0 0.0
    %1539 = vmatpush1.msra.mxu0 0.0
    %1540 = vmatprep.subr.mxu0 0.0
    %1541 = vmatpush1.msra.mxu0 0.0
    %1542 = vmatprep.subr.mxu0 0.0
    %1543 = vmatpush1.msra.mxu0 0.0
    %1544 = vmatprep.subr.mxu0 0.0
    %1545 = vmatpush1.msra.mxu0 0.0
    %1546 = vmatprep.subr.mxu0 0.0
    %1547 = vmatpush1.msra.mxu0 0.0
    %1548 = vmatprep.subr.mxu0 0.0
    %1549 = vmatpush1.msra.mxu0 0.0
    %1550 = vmatprep.subr.mxu0 0.0
    %1551 = vmatpush1.msra.mxu0 0.0
    %1552 = vmatprep.subr.mxu0 0.0
    %1553 = vmatpush1.msra.mxu0 0.0
    %1554 = vmatprep.subr.mxu0 0.0
    %1555 = vmatpush1.msra.mxu0 0.0
    %1556 = vmatprep.subr.mxu0 0.0
    %1557 = vmatpush1.msra.mxu0 0.0
    %1558 = vmatprep.subr.mxu0 0.0
    %1559 = vmatpush1.msra.mxu0 0.0
    %1560 = vmatprep.subr.mxu0 0.0
    %1561 = vmatpush1.msra.mxu0 0.0
    %1562 = vmatprep.subr.mxu0 0.0
    %1563 = vmatpush1.msra.mxu0 0.0
    %1564 = vmatprep.subr.mxu0 0.0
    %1565 = vmatpush1.msra.mxu0 0.0
    %1566 = vmatprep.subr.mxu0 0.0
    %1567 = vmatpush1.msra.mxu0 0.0
    %1568 = vmatprep.subr.mxu0 0.0
    %1569 = vmatpush1.msra.mxu0 0.0
    %1570 = vmatprep.subr.mxu0 0.0
    %1571 = vmatpush1.msra.mxu0 0.0
    %1572 = vmatprep.subr.mxu0 0.0
    %1573 = vmatpush1.msra.mxu0 0.0
    %1574 = vmatprep.subr.mxu0 0.0
    %1575 = vmatpush1.msra.mxu0 0.0
    %1576 = vmatprep.mubr.f32.mxu0 0.0
    %1577 = vmatmul.mubr.f32.gmra.mrb[0].mxu0 %v1501
    %v1578 = vpop.f32.mrb[0].mxu0
    %v1579 = vadd.f32 0.0, %v1578
    %v1580 = vpop.f32.mrb[0].mxu0
    %1581 = vmatprep.mubr.f32.mxu0 0.0
    %1582 = vmatmul.mubr.f32.gmra.mrb[0].mxu0 %v1504
    %v1583 = vpop.f32.mrb[0].mxu0
    %v1584 = vadd.f32 0.0, %v1583
    %v1585 = vpop.f32.mrb[0].mxu0
    %1586 = vmatprep.mubr.f32.mxu0 0.0
    %1587 = vmatmul.mubr.f32.gmra.mrb[0].mxu0 %v1507
    %v1588 = vpop.f32.mrb[0].mxu0
    %v1589 = vadd.f32 0.0, %v1588
    %v1590 = vpop.f32.mrb[0].mxu0
    %1591 = vmatprep.mubr.f32.mxu0 0.0
    %1592 = vmatmul.mubr.f32.gmra.mrb[0].mxu0 %v1510
    %v1593 = vpop.f32.mrb[0].mxu0
    %v1594 = vadd.f32 0.0, %v1593
    %v1595 = vpop.f32.mrb[0].mxu0
    %1596 = vdwg.mxu0
    %v1597 = vadd.f32 %v1404, %v1579
    %v1598 = vadd.f32 %v1405, %v1584
    %v1599 = vadd.f32 %v1406, %v1589
    %v1600 = vadd.f32 %v1407, %v1594
    %v1601 = vld [vmem:[%s0 + $0x40] sm:$0xff]
    %v1602 = vld [vmem:[%s0 + $0x118] sm:$0xff]
    %v1603 = vld [vmem:[%s0 + $0x1f0] sm:$0xff]
    %v1604 = vld [vmem:[%s0 + $0x2c8] sm:$0xff]
    %v1605 = vld [vmem:[%s0 + $0x3a0] sm:$0xff]
    %v1606 = vld [vmem:[%s0 + $0x478] sm:$0xff]
    %v1607 = vld [vmem:[%s0 + $0x550] sm:$0x3f]
    %v1609 = vsel %vm71, %v1607, 0
    %1611 = vmatprep.subr.mxu0 0.0
    %1612 = vmatpush1.msra.mxu0 %v1601
    %1613 = vmatprep.subr.mxu0 0.0
    %1614 = vmatpush1.msra.mxu0 %v1602
    %1615 = vmatprep.subr.mxu0 0.0
    %1616 = vmatpush1.msra.mxu0 %v1603
    %1617 = vmatprep.subr.mxu0 0.0
    %1618 = vmatpush1.msra.mxu0 %v1604
    %1619 = vmatprep.subr.mxu0 0.0
    %1620 = vmatpush1.msra.mxu0 %v1605
    %1621 = vmatprep.subr.mxu0 0.0
    %1622 = vmatpush1.msra.mxu0 %v1606
    %1623 = vmatprep.subr.mxu0 0.0
    %1624 = vmatpush1.msra.mxu0 %v1609
    %1625 = vmatprep.subr.mxu0 0.0
    %1626 = vmatpush1.msra.mxu0 0.0
    %1627 = vmatprep.subr.mxu0 0.0
    %1628 = vmatpush1.msra.mxu0 0.0
    %1629 = vmatprep.subr.mxu0 0.0
    %1630 = vmatpush1.msra.mxu0 0.0
    %1631 = vmatprep.subr.mxu0 0.0
    %1632 = vmatpush1.msra.mxu0 0.0
    %1633 = vmatprep.subr.mxu0 0.0
    %1634 = vmatpush1.msra.mxu0 0.0
    %1635 = vmatprep.subr.mxu0 0.0
    %1636 = vmatpush1.msra.mxu0 0.0
    %1637 = vmatprep.subr.mxu0 0.0
    %1638 = vmatpush1.msra.mxu0 0.0
    %1639 = vmatprep.subr.mxu0 0.0
    %1640 = vmatpush1.msra.mxu0 0.0
    %1641 = vmatprep.subr.mxu0 0.0
    %1642 = vmatpush1.msra.mxu0 0.0
    %1643 = vmatprep.subr.mxu0 0.0
    %1644 = vmatpush1.msra.mxu0 0.0
    %1645 = vmatprep.subr.mxu0 0.0
    %1646 = vmatpush1.msra.mxu0 0.0
    %1647 = vmatprep.subr.mxu0 0.0
    %1648 = vmatpush1.msra.mxu0 0.0
    %1649 = vmatprep.subr.mxu0 0.0
    %1650 = vmatpush1.msra.mxu0 0.0
    %1651 = vmatprep.subr.mxu0 0.0
    %1652 = vmatpush1.msra.mxu0 0.0
    %1653 = vmatprep.subr.mxu0 0.0
    %1654 = vmatpush1.msra.mxu0 0.0
    %1655 = vmatprep.subr.mxu0 0.0
    %1656 = vmatpush1.msra.mxu0 0.0
    %1657 = vmatprep.subr.mxu0 0.0
    %1658 = vmatpush1.msra.mxu0 0.0
    %1659 = vmatprep.subr.mxu0 0.0
    %1660 = vmatpush1.msra.mxu0 0.0
    %1661 = vmatprep.subr.mxu0 0.0
    %1662 = vmatpush1.msra.mxu0 0.0
    %1663 = vmatprep.subr.mxu0 0.0
    %1664 = vmatpush1.msra.mxu0 0.0
    %1665 = vmatprep.subr.mxu0 0.0
    %1666 = vmatpush1.msra.mxu0 0.0
    %1667 = vmatprep.subr.mxu0 0.0
    %1668 = vmatpush1.msra.mxu0 0.0
    %1669 = vmatprep.subr.mxu0 0.0
    %1670 = vmatpush1.msra.mxu0 0.0
    %1671 = vmatprep.subr.mxu0 0.0
    %1672 = vmatpush1.msra.mxu0 0.0
    %1673 = vmatprep.subr.mxu0 0.0
    %1674 = vmatpush1.msra.mxu0 0.0
    %1675 = vmatprep.mubr.f32.mxu0 0.0
    %1676 = vmatmul.mubr.f32.gmra.mrb[0].mxu0 %v66
    %v1677 = vpop.f32.mrb[0].mxu0
    %v1678 = vadd.f32 %v57, %v1677
    %v1679 = vpop.f32.mrb[0].mxu0
    %1680 = vmatprep.mubr.f32.mxu0 0.0
    %1681 = vmatmul.mubr.f32.gmra.mrb[0].mxu0 %v69
    %v1682 = vpop.f32.mrb[0].mxu0
    %v1683 = vadd.f32 %v62, %v1682
    %v1684 = vpop.f32.mrb[0].mxu0
    %1685 = vdwg.mxu0
    %v1686 = vmax.f32 %v1678, 0.0
    %v1687 = vmax.f32 %v1683, 0.0
    %s1688 = scalar_lea.vmem %s3, 256
    %v1689 = vld [vmem:[%s1688] sm:$0xff]
    %v1690 = vld [vmem:[%s1688 + $0x8] sm:$0xff]
    %v1691 = vld [vmem:[%s1688 + $0x10] sm:$0xff]
    %v1692 = vld [vmem:[%s1688 + $0x18] sm:$0xff]
    %v1694 = vsel %vm248, %v1689, 0
    %v1697 = vsel %vm248, %v1690, 0
    %v1700 = vsel %vm248, %v1691, 0
    %v1703 = vsel %vm248, %v1692, 0
    %1705 = vmatprep.subr.mxu0 0.0
    %1706 = vmatpush1.msra.mxu0 %v1686
    %1707 = vmatprep.subr.mxu0 0.0
    %1708 = vmatpush1.msra.mxu0 %v1687
    %1709 = vmatprep.subr.mxu0 0.0
    %1710 = vmatpush1.msra.mxu0 0.0
    %1711 = vmatprep.subr.mxu0 0.0
    %1712 = vmatpush1.msra.mxu0 0.0
    %1713 = vmatprep.subr.mxu0 0.0
    %1714 = vmatpush1.msra.mxu0 0.0
    %1715 = vmatprep.subr.mxu0 0.0
    %1716 = vmatpush1.msra.mxu0 0.0
    %1717 = vmatprep.subr.mxu0 0.0
    %1718 = vmatpush1.msra.mxu0 0.0
    %1719 = vmatprep.subr.mxu0 0.0
    %1720 = vmatpush1.msra.mxu0 0.0
    %1721 = vmatprep.subr.mxu0 0.0
    %1722 = vmatpush1.msra.mxu0 0.0
    %1723 = vmatprep.subr.mxu0 0.0
    %1724 = vmatpush1.msra.mxu0 0.0
    %1725 = vmatprep.subr.mxu0 0.0
    %1726 = vmatpush1.msra.mxu0 0.0
    %1727 = vmatprep.subr.mxu0 0.0
    %1728 = vmatpush1.msra.mxu0 0.0
    %1729 = vmatprep.subr.mxu0 0.0
    %1730 = vmatpush1.msra.mxu0 0.0
    %1731 = vmatprep.subr.mxu0 0.0
    %1732 = vmatpush1.msra.mxu0 0.0
    %1733 = vmatprep.subr.mxu0 0.0
    %1734 = vmatpush1.msra.mxu0 0.0
    %1735 = vmatprep.subr.mxu0 0.0
    %1736 = vmatpush1.msra.mxu0 0.0
    %1737 = vmatprep.subr.mxu0 0.0
    %1738 = vmatpush1.msra.mxu0 0.0
    %1739 = vmatprep.subr.mxu0 0.0
    %1740 = vmatpush1.msra.mxu0 0.0
    %1741 = vmatprep.subr.mxu0 0.0
    %1742 = vmatpush1.msra.mxu0 0.0
    %1743 = vmatprep.subr.mxu0 0.0
    %1744 = vmatpush1.msra.mxu0 0.0
    %1745 = vmatprep.subr.mxu0 0.0
    %1746 = vmatpush1.msra.mxu0 0.0
    %1747 = vmatprep.subr.mxu0 0.0
    %1748 = vmatpush1.msra.mxu0 0.0
    %1749 = vmatprep.subr.mxu0 0.0
    %1750 = vmatpush1.msra.mxu0 0.0
    %1751 = vmatprep.subr.mxu0 0.0
    %1752 = vmatpush1.msra.mxu0 0.0
    %1753 = vmatprep.subr.mxu0 0.0
    %1754 = vmatpush1.msra.mxu0 0.0
    %1755 = vmatprep.subr.mxu0 0.0
    %1756 = vmatpush1.msra.mxu0 0.0
    %1757 = vmatprep.subr.mxu0 0.0
    %1758 = vmatpush1.msra.mxu0 0.0
    %1759 = vmatprep.subr.mxu0 0.0
    %1760 = vmatpush1.msra.mxu0 0.0
    %1761 = vmatprep.subr.mxu0 0.0
    %1762 = vmatpush1.msra.mxu0 0.0
    %1763 = vmatprep.subr.mxu0 0.0
    %1764 = vmatpush1.msra.mxu0 0.0
    %1765 = vmatprep.subr.mxu0 0.0
    %1766 = vmatpush1.msra.mxu0 0.0
    %1767 = vmatprep.subr.mxu0 0.0
    %1768 = vmatpush1.msra.mxu0 0.0
    %1769 = vmatprep.mubr.f32.mxu0 0.0
    %1770 = vmatmul.mubr.f32.gmra.mrb[0].mxu0 %v1694
    %v1771 = vpop.f32.mrb[0].mxu0
    %v1772 = vadd.f32 0.0, %v1771
    %v1773 = vpop.f32.mrb[0].mxu0
    %1774 = vmatprep.mubr.f32.mxu0 0.0
    %1775 = vmatmul.mubr.f32.gmra.mrb[0].mxu0 %v1697
    %v1776 = vpop.f32.mrb[0].mxu0
    %v1777 = vadd.f32 0.0, %v1776
    %v1778 = vpop.f32.mrb[0].mxu0
    %1779 = vmatprep.mubr.f32.mxu0 0.0
    %1780 = vmatmul.mubr.f32.gmra.mrb[0].mxu0 %v1700
    %v1781 = vpop.f32.mrb[0].mxu0
    %v1782 = vadd.f32 0.0, %v1781
    %v1783 = vpop.f32.mrb[0].mxu0
    %1784 = vmatprep.mubr.f32.mxu0 0.0
    %1785 = vmatmul.mubr.f32.gmra.mrb[0].mxu0 %v1703
    %v1786 = vpop.f32.mrb[0].mxu0
    %v1787 = vadd.f32 0.0, %v1786
    %v1788 = vpop.f32.mrb[0].mxu0
    %1789 = vdwg.mxu0
    %v1790 = vadd.f32 %v1597, %v1772
    %v1791 = vadd.f32 %v1598, %v1777
    %v1792 = vadd.f32 %v1599, %v1782
    %v1793 = vadd.f32 %v1600, %v1787
    %v1794 = vld [vmem:[%s0 + $0x48] sm:$0xff]
    %v1795 = vld [vmem:[%s0 + $0x120] sm:$0xff]
    %v1796 = vld [vmem:[%s0 + $0x1f8] sm:$0xff]
    %v1797 = vld [vmem:[%s0 + $0x2d0] sm:$0xff]
    %v1798 = vld [vmem:[%s0 + $0x3a8] sm:$0xff]
    %v1799 = vld [vmem:[%s0 + $0x480] sm:$0xff]
    %v1800 = vld [vmem:[%s0 + $0x558] sm:$0x3f]
    %v1802 = vsel %vm71, %v1800, 0
    %1804 = vmatprep.subr.mxu0 0.0
    %1805 = vmatpush1.msra.mxu0 %v1794
    %1806 = vmatprep.subr.mxu0 0.0
    %1807 = vmatpush1.msra.mxu0 %v1795
    %1808 = vmatprep.subr.mxu0 0.0
    %1809 = vmatpush1.msra.mxu0 %v1796
    %1810 = vmatprep.subr.mxu0 0.0
    %1811 = vmatpush1.msra.mxu0 %v1797
    %1812 = vmatprep.subr.mxu0 0.0
    %1813 = vmatpush1.msra.mxu0 %v1798
    %1814 = vmatprep.subr.mxu0 0.0
    %1815 = vmatpush1.msra.mxu0 %v1799
    %1816 = vmatprep.subr.mxu0 0.0
    %1817 = vmatpush1.msra.mxu0 %v1802
    %1818 = vmatprep.subr.mxu0 0.0
    %1819 = vmatpush1.msra.mxu0 0.0
    %1820 = vmatprep.subr.mxu0 0.0
    %1821 = vmatpush1.msra.mxu0 0.0
    %1822 = vmatprep.subr.mxu0 0.0
    %1823 = vmatpush1.msra.mxu0 0.0
    %1824 = vmatprep.subr.mxu0 0.0
    %1825 = vmatpush1.msra.mxu0 0.0
    %1826 = vmatprep.subr.mxu0 0.0
    %1827 = vmatpush1.msra.mxu0 0.0
    %1828 = vmatprep.subr.mxu0 0.0
    %1829 = vmatpush1.msra.mxu0 0.0
    %1830 = vmatprep.subr.mxu0 0.0
    %1831 = vmatpush1.msra.mxu0 0.0
    %1832 = vmatprep.subr.mxu0 0.0
    %1833 = vmatpush1.msra.mxu0 0.0
    %1834 = vmatprep.subr.mxu0 0.0
    %1835 = vmatpush1.msra.mxu0 0.0
    %1836 = vmatprep.subr.mxu0 0.0
    %1837 = vmatpush1.msra.mxu0 0.0
    %1838 = vmatprep.subr.mxu0 0.0
    %1839 = vmatpush1.msra.mxu0 0.0
    %1840 = vmatprep.subr.mxu0 0.0
    %1841 = vmatpush1.msra.mxu0 0.0
    %1842 = vmatprep.subr.mxu0 0.0
    %1843 = vmatpush1.msra.mxu0 0.0
    %1844 = vmatprep.subr.mxu0 0.0
    %1845 = vmatpush1.msra.mxu0 0.0
    %1846 = vmatprep.subr.mxu0 0.0
    %1847 = vmatpush1.msra.mxu0 0.0
    %1848 = vmatprep.subr.mxu0 0.0
    %1849 = vmatpush1.msra.mxu0 0.0
    %1850 = vmatprep.subr.mxu0 0.0
    %1851 = vmatpush1.msra.mxu0 0.0
    %1852 = vmatprep.subr.mxu0 0.0
    %1853 = vmatpush1.msra.mxu0 0.0
    %1854 = vmatprep.subr.mxu0 0.0
    %1855 = vmatpush1.msra.mxu0 0.0
    %1856 = vmatprep.subr.mxu0 0.0
    %1857 = vmatpush1.msra.mxu0 0.0
    %1858 = vmatprep.subr.mxu0 0.0
    %1859 = vmatpush1.msra.mxu0 0.0
    %1860 = vmatprep.subr.mxu0 0.0
    %1861 = vmatpush1.msra.mxu0 0.0
    %1862 = vmatprep.subr.mxu0 0.0
    %1863 = vmatpush1.msra.mxu0 0.0
    %1864 = vmatprep.subr.mxu0 0.0
    %1865 = vmatpush1.msra.mxu0 0.0
    %1866 = vmatprep.subr.mxu0 0.0
    %1867 = vmatpush1.msra.mxu0 0.0
    %1868 = vmatprep.mubr.f32.mxu0 0.0
    %1869 = vmatmul.mubr.f32.gmra.mrb[0].mxu0 %v66
    %v1870 = vpop.f32.mrb[0].mxu0
    %v1871 = vadd.f32 %v57, %v1870
    %v1872 = vpop.f32.mrb[0].mxu0
    %1873 = vmatprep.mubr.f32.mxu0 0.0
    %1874 = vmatmul.mubr.f32.gmra.mrb[0].mxu0 %v69
    %v1875 = vpop.f32.mrb[0].mxu0
    %v1876 = vadd.f32 %v62, %v1875
    %v1877 = vpop.f32.mrb[0].mxu0
    %1878 = vdwg.mxu0
    %v1879 = vmax.f32 %v1871, 0.0
    %v1880 = vmax.f32 %v1876, 0.0
    %s1881 = scalar_lea.vmem %s3, 288
    %v1882 = vld [vmem:[%s1881] sm:$0xff]
    %v1883 = vld [vmem:[%s1881 + $0x8] sm:$0xff]
    %v1884 = vld [vmem:[%s1881 + $0x10] sm:$0xff]
    %v1885 = vld [vmem:[%s1881 + $0x18] sm:$0xff]
    %v1887 = vsel %vm248, %v1882, 0
    %v1890 = vsel %vm248, %v1883, 0
    %v1893 = vsel %vm248, %v1884, 0
    %v1896 = vsel %vm248, %v1885, 0
    %1898 = vmatprep.subr.mxu0 0.0
    %1899 = vmatpush1.msra.mxu0 %v1879
    %1900 = vmatprep.subr.mxu0 0.0
    %1901 = vmatpush1.msra.mxu0 %v1880
    %1902 = vmatprep.subr.mxu0 0.0
    %1903 = vmatpush1.msra.mxu0 0.0
    %1904 = vmatprep.subr.mxu0 0.0
    %1905 = vmatpush1.msra.mxu0 0.0
    %1906 = vmatprep.subr.mxu0 0.0
    %1907 = vmatpush1.msra.mxu0 0.0
    %1908 = vmatprep.subr.mxu0 0.0
    %1909 = vmatpush1.msra.mxu0 0.0
    %1910 = vmatprep.subr.mxu0 0.0
    %1911 = vmatpush1.msra.mxu0 0.0
    %1912 = vmatprep.subr.mxu0 0.0
    %1913 = vmatpush1.msra.mxu0 0.0
    %1914 = vmatprep.subr.mxu0 0.0
    %1915 = vmatpush1.msra.mxu0 0.0
    %1916 = vmatprep.subr.mxu0 0.0
    %1917 = vmatpush1.msra.mxu0 0.0
    %1918 = vmatprep.subr.mxu0 0.0
    %1919 = vmatpush1.msra.mxu0 0.0
    %1920 = vmatprep.subr.mxu0 0.0
    %1921 = vmatpush1.msra.mxu0 0.0
    %1922 = vmatprep.subr.mxu0 0.0
    %1923 = vmatpush1.msra.mxu0 0.0
    %1924 = vmatprep.subr.mxu0 0.0
    %1925 = vmatpush1.msra.mxu0 0.0
    %1926 = vmatprep.subr.mxu0 0.0
    %1927 = vmatpush1.msra.mxu0 0.0
    %1928 = vmatprep.subr.mxu0 0.0
    %1929 = vmatpush1.msra.mxu0 0.0
    %1930 = vmatprep.subr.mxu0 0.0
    %1931 = vmatpush1.msra.mxu0 0.0
    %1932 = vmatprep.subr.mxu0 0.0
    %1933 = vmatpush1.msra.mxu0 0.0
    %1934 = vmatprep.subr.mxu0 0.0
    %1935 = vmatpush1.msra.mxu0 0.0
    %1936 = vmatprep.subr.mxu0 0.0
    %1937 = vmatpush1.msra.mxu0 0.0
    %1938 = vmatprep.subr.mxu0 0.0
    %1939 = vmatpush1.msra.mxu0 0.0
    %1940 = vmatprep.subr.mxu0 0.0
    %1941 = vmatpush1.msra.mxu0 0.0
    %1942 = vmatprep.subr.mxu0 0.0
    %1943 = vmatpush1.msra.mxu0 0.0
    %1944 = vmatprep.subr.mxu0 0.0
    %1945 = vmatpush1.msra.mxu0 0.0
    %1946 = vmatprep.subr.mxu0 0.0
    %1947 = vmatpush1.msra.mxu0 0.0
    %1948 = vmatprep.subr.mxu0 0.0
    %1949 = vmatpush1.msra.mxu0 0.0
    %1950 = vmatprep.subr.mxu0 0.0
    %1951 = vmatpush1.msra.mxu0 0.0
    %1952 = vmatprep.subr.mxu0 0.0
    %1953 = vmatpush1.msra.mxu0 0.0
    %1954 = vmatprep.subr.mxu0 0.0
    %1955 = vmatpush1.msra.mxu0 0.0
    %1956 = vmatprep.subr.mxu0 0.0
    %1957 = vmatpush1.msra.mxu0 0.0
    %1958 = vmatprep.subr.mxu0 0.0
    %1959 = vmatpush1.msra.mxu0 0.0
    %1960 = vmatprep.subr.mxu0 0.0
    %1961 = vmatpush1.msra.mxu0 0.0
    %1962 = vmatprep.mubr.f32.mxu0 0.0
    %1963 = vmatmul.mubr.f32.gmra.mrb[0].mxu0 %v1887
    %v1964 = vpop.f32.mrb[0].mxu0
    %v1965 = vadd.f32 0.0, %v1964
    %v1966 = vpop.f32.mrb[0].mxu0
    %1967 = vmatprep.mubr.f32.mxu0 0.0
    %1968 = vmatmul.mubr.f32.gmra.mrb[0].mxu0 %v1890
    %v1969 = vpop.f32.mrb[0].mxu0
    %v1970 = vadd.f32 0.0, %v1969
    %v1971 = vpop.f32.mrb[0].mxu0
    %1972 = vmatprep.mubr.f32.mxu0 0.0
    %1973 = vmatmul.mubr.f32.gmra.mrb[0].mxu0 %v1893
    %v1974 = vpop.f32.mrb[0].mxu0
    %v1975 = vadd.f32 0.0, %v1974
    %v1976 = vpop.f32.mrb[0].mxu0
    %1977 = vmatprep.mubr.f32.mxu0 0.0
    %1978 = vmatmul.mubr.f32.gmra.mrb[0].mxu0 %v1896
    %v1979 = vpop.f32.mrb[0].mxu0
    %v1980 = vadd.f32 0.0, %v1979
    %v1981 = vpop.f32.mrb[0].mxu0
    %1982 = vdwg.mxu0
    %v1983 = vadd.f32 %v1790, %v1965
    %v1984 = vadd.f32 %v1791, %v1970
    %v1985 = vadd.f32 %v1792, %v1975
    %v1986 = vadd.f32 %v1793, %v1980
    %v1987 = vld [vmem:[%s0 + $0x50] sm:$0xff]
    %v1988 = vld [vmem:[%s0 + $0x128] sm:$0xff]
    %v1989 = vld [vmem:[%s0 + $0x200] sm:$0xff]
    %v1990 = vld [vmem:[%s0 + $0x2d8] sm:$0xff]
    %v1991 = vld [vmem:[%s0 + $0x3b0] sm:$0xff]
    %v1992 = vld [vmem:[%s0 + $0x488] sm:$0xff]
    %v1993 = vld [vmem:[%s0 + $0x560] sm:$0x3f]
    %v1995 = vsel %vm71, %v1993, 0
    %1997 = vmatprep.subr.mxu0 0.0
    %1998 = vmatpush1.msra.mxu0 %v1987
    %1999 = vmatprep.subr.mxu0 0.0
    %2000 = vmatpush1.msra.mxu0 %v1988
    %2001 = vmatprep.subr.mxu0 0.0
    %2002 = vmatpush1.msra.mxu0 %v1989
    %2003 = vmatprep.subr.mxu0 0.0
    %2004 = vmatpush1.msra.mxu0 %v1990
    %2005 = vmatprep.subr.mxu0 0.0
    %2006 = vmatpush1.msra.mxu0 %v1991
    %2007 = vmatprep.subr.mxu0 0.0
    %2008 = vmatpush1.msra.mxu0 %v1992
    %2009 = vmatprep.subr.mxu0 0.0
    %2010 = vmatpush1.msra.mxu0 %v1995
    %2011 = vmatprep.subr.mxu0 0.0
    %2012 = vmatpush1.msra.mxu0 0.0
    %2013 = vmatprep.subr.mxu0 0.0
    %2014 = vmatpush1.msra.mxu0 0.0
    %2015 = vmatprep.subr.mxu0 0.0
    %2016 = vmatpush1.msra.mxu0 0.0
    %2017 = vmatprep.subr.mxu0 0.0
    %2018 = vmatpush1.msra.mxu0 0.0
    %2019 = vmatprep.subr.mxu0 0.0
    %2020 = vmatpush1.msra.mxu0 0.0
    %2021 = vmatprep.subr.mxu0 0.0
    %2022 = vmatpush1.msra.mxu0 0.0
    %2023 = vmatprep.subr.mxu0 0.0
    %2024 = vmatpush1.msra.mxu0 0.0
    %2025 = vmatprep.subr.mxu0 0.0
    %2026 = vmatpush1.msra.mxu0 0.0
    %2027 = vmatprep.subr.mxu0 0.0
    %2028 = vmatpush1.msra.mxu0 0.0
    %2029 = vmatprep.subr.mxu0 0.0
    %2030 = vmatpush1.msra.mxu0 0.0
    %2031 = vmatprep.subr.mxu0 0.0
    %2032 = vmatpush1.msra.mxu0 0.0
    %2033 = vmatprep.subr.mxu0 0.0
    %2034 = vmatpush1.msra.mxu0 0.0
    %2035 = vmatprep.subr.mxu0 0.0
    %2036 = vmatpush1.msra.mxu0 0.0
    %2037 = vmatprep.subr.mxu0 0.0
    %2038 = vmatpush1.msra.mxu0 0.0
    %2039 = vmatprep.subr.mxu0 0.0
    %2040 = vmatpush1.msra.mxu0 0.0
    %2041 = vmatprep.subr.mxu0 0.0
    %2042 = vmatpush1.msra.mxu0 0.0
    %2043 = vmatprep.subr.mxu0 0.0
    %2044 = vmatpush1.msra.mxu0 0.0
    %2045 = vmatprep.subr.mxu0 0.0
    %2046 = vmatpush1.msra.mxu0 0.0
    %2047 = vmatprep.subr.mxu0 0.0
    %2048 = vmatpush1.msra.mxu0 0.0
    %2049 = vmatprep.subr.mxu0 0.0
    %2050 = vmatpush1.msra.mxu0 0.0
    %2051 = vmatprep.subr.mxu0 0.0
    %2052 = vmatpush1.msra.mxu0 0.0
    %2053 = vmatprep.subr.mxu0 0.0
    %2054 = vmatpush1.msra.mxu0 0.0
    %2055 = vmatprep.subr.mxu0 0.0
    %2056 = vmatpush1.msra.mxu0 0.0
    %2057 = vmatprep.subr.mxu0 0.0
    %2058 = vmatpush1.msra.mxu0 0.0
    %2059 = vmatprep.subr.mxu0 0.0
    %2060 = vmatpush1.msra.mxu0 0.0
    %2061 = vmatprep.mubr.f32.mxu0 0.0
    %2062 = vmatmul.mubr.f32.gmra.mrb[0].mxu0 %v66
    %v2063 = vpop.f32.mrb[0].mxu0
    %v2064 = vadd.f32 %v57, %v2063
    %v2065 = vpop.f32.mrb[0].mxu0
    %2066 = vmatprep.mubr.f32.mxu0 0.0
    %2067 = vmatmul.mubr.f32.gmra.mrb[0].mxu0 %v69
    %v2068 = vpop.f32.mrb[0].mxu0
    %v2069 = vadd.f32 %v62, %v2068
    %v2070 = vpop.f32.mrb[0].mxu0
    %2071 = vdwg.mxu0
    %v2072 = vmax.f32 %v2064, 0.0
    %v2073 = vmax.f32 %v2069, 0.0
    %s2074 = scalar_lea.vmem %s3, 320
    %v2075 = vld [vmem:[%s2074] sm:$0xff]
    %v2076 = vld [vmem:[%s2074 + $0x8] sm:$0xff]
    %v2077 = vld [vmem:[%s2074 + $0x10] sm:$0xff]
    %v2078 = vld [vmem:[%s2074 + $0x18] sm:$0xff]
    %v2080 = vsel %vm248, %v2075, 0
    %v2083 = vsel %vm248, %v2076, 0
    %v2086 = vsel %vm248, %v2077, 0
    %v2089 = vsel %vm248, %v2078, 0
    %2091 = vmatprep.subr.mxu0 0.0
    %2092 = vmatpush1.msra.mxu0 %v2072
    %2093 = vmatprep.subr.mxu0 0.0
    %2094 = vmatpush1.msra.mxu0 %v2073
    %2095 = vmatprep.subr.mxu0 0.0
    %2096 = vmatpush1.msra.mxu0 0.0
    %2097 = vmatprep.subr.mxu0 0.0
    %2098 = vmatpush1.msra.mxu0 0.0
    %2099 = vmatprep.subr.mxu0 0.0
    %2100 = vmatpush1.msra.mxu0 0.0
    %2101 = vmatprep.subr.mxu0 0.0
    %2102 = vmatpush1.msra.mxu0 0.0
    %2103 = vmatprep.subr.mxu0 0.0
    %2104 = vmatpush1.msra.mxu0 0.0
    %2105 = vmatprep.subr.mxu0 0.0
    %2106 = vmatpush1.msra.mxu0 0.0
    %2107 = vmatprep.subr.mxu0 0.0
    %2108 = vmatpush1.msra.mxu0 0.0
    %2109 = vmatprep.subr.mxu0 0.0
    %2110 = vmatpush1.msra.mxu0 0.0
    %2111 = vmatprep.subr.mxu0 0.0
    %2112 = vmatpush1.msra.mxu0 0.0
    %2113 = vmatprep.subr.mxu0 0.0
    %2114 = vmatpush1.msra.mxu0 0.0
    %2115 = vmatprep.subr.mxu0 0.0
    %2116 = vmatpush1.msra.mxu0 0.0
    %2117 = vmatprep.subr.mxu0 0.0
    %2118 = vmatpush1.msra.mxu0 0.0
    %2119 = vmatprep.subr.mxu0 0.0
    %2120 = vmatpush1.msra.mxu0 0.0
    %2121 = vmatprep.subr.mxu0 0.0
    %2122 = vmatpush1.msra.mxu0 0.0
    %2123 = vmatprep.subr.mxu0 0.0
    %2124 = vmatpush1.msra.mxu0 0.0
    %2125 = vmatprep.subr.mxu0 0.0
    %2126 = vmatpush1.msra.mxu0 0.0
    %2127 = vmatprep.subr.mxu0 0.0
    %2128 = vmatpush1.msra.mxu0 0.0
    %2129 = vmatprep.subr.mxu0 0.0
    %2130 = vmatpush1.msra.mxu0 0.0
    %2131 = vmatprep.subr.mxu0 0.0
    %2132 = vmatpush1.msra.mxu0 0.0
    %2133 = vmatprep.subr.mxu0 0.0
    %2134 = vmatpush1.msra.mxu0 0.0
    %2135 = vmatprep.subr.mxu0 0.0
    %2136 = vmatpush1.msra.mxu0 0.0
    %2137 = vmatprep.subr.mxu0 0.0
    %2138 = vmatpush1.msra.mxu0 0.0
    %2139 = vmatprep.subr.mxu0 0.0
    %2140 = vmatpush1.msra.mxu0 0.0
    %2141 = vmatprep.subr.mxu0 0.0
    %2142 = vmatpush1.msra.mxu0 0.0
    %2143 = vmatprep.subr.mxu0 0.0
    %2144 = vmatpush1.msra.mxu0 0.0
    %2145 = vmatprep.subr.mxu0 0.0
    %2146 = vmatpush1.msra.mxu0 0.0
    %2147 = vmatprep.subr.mxu0 0.0
    %2148 = vmatpush1.msra.mxu0 0.0
    %2149 = vmatprep.subr.mxu0 0.0
    %2150 = vmatpush1.msra.mxu0 0.0
    %2151 = vmatprep.subr.mxu0 0.0
    %2152 = vmatpush1.msra.mxu0 0.0
    %2153 = vmatprep.subr.mxu0 0.0
    %2154 = vmatpush1.msra.mxu0 0.0
    %2155 = vmatprep.mubr.f32.mxu0 0.0
    %2156 = vmatmul.mubr.f32.gmra.mrb[0].mxu0 %v2080
    %v2157 = vpop.f32.mrb[0].mxu0
    %v2158 = vadd.f32 0.0, %v2157
    %v2159 = vpop.f32.mrb[0].mxu0
    %2160 = vmatprep.mubr.f32.mxu0 0.0
    %2161 = vmatmul.mubr.f32.gmra.mrb[0].mxu0 %v2083
    %v2162 = vpop.f32.mrb[0].mxu0
    %v2163 = vadd.f32 0.0, %v2162
    %v2164 = vpop.f32.mrb[0].mxu0
    %2165 = vmatprep.mubr.f32.mxu0 0.0
    %2166 = vmatmul.mubr.f32.gmra.mrb[0].mxu0 %v2086
    %v2167 = vpop.f32.mrb[0].mxu0
    %v2168 = vadd.f32 0.0, %v2167
    %v2169 = vpop.f32.mrb[0].mxu0
    %2170 = vmatprep.mubr.f32.mxu0 0.0
    %2171 = vmatmul.mubr.f32.gmra.mrb[0].mxu0 %v2089
    %v2172 = vpop.f32.mrb[0].mxu0
    %v2173 = vadd.f32 0.0, %v2172
    %v2174 = vpop.f32.mrb[0].mxu0
    %2175 = vdwg.mxu0
    %v2176 = vadd.f32 %v1983, %v2158
    %v2177 = vadd.f32 %v1984, %v2163
    %v2178 = vadd.f32 %v1985, %v2168
    %v2179 = vadd.f32 %v1986, %v2173
    %v2180 = vld [vmem:[%s0 + $0x58] sm:$0xff]
    %v2181 = vld [vmem:[%s0 + $0x130] sm:$0xff]
    %v2182 = vld [vmem:[%s0 + $0x208] sm:$0xff]
    %v2183 = vld [vmem:[%s0 + $0x2e0] sm:$0xff]
    %v2184 = vld [vmem:[%s0 + $0x3b8] sm:$0xff]
    %v2185 = vld [vmem:[%s0 + $0x490] sm:$0xff]
    %v2186 = vld [vmem:[%s0 + $0x568] sm:$0x3f]
    %v2188 = vsel %vm71, %v2186, 0
    %2190 = vmatprep.subr.mxu0 0.0
    %2191 = vmatpush1.msra.mxu0 %v2180
    %2192 = vmatprep.subr.mxu0 0.0
    %2193 = vmatpush1.msra.mxu0 %v2181
    %2194 = vmatprep.subr.mxu0 0.0
    %2195 = vmatpush1.msra.mxu0 %v2182
    %2196 = vmatprep.subr.mxu0 0.0
    %2197 = vmatpush1.msra.mxu0 %v2183
    %2198 = vmatprep.subr.mxu0 0.0
    %2199 = vmatpush1.msra.mxu0 %v2184
    %2200 = vmatprep.subr.mxu0 0.0
    %2201 = vmatpush1.msra.mxu0 %v2185
    %2202 = vmatprep.subr.mxu0 0.0
    %2203 = vmatpush1.msra.mxu0 %v2188
    %2204 = vmatprep.subr.mxu0 0.0
    %2205 = vmatpush1.msra.mxu0 0.0
    %2206 = vmatprep.subr.mxu0 0.0
    %2207 = vmatpush1.msra.mxu0 0.0
    %2208 = vmatprep.subr.mxu0 0.0
    %2209 = vmatpush1.msra.mxu0 0.0
    %2210 = vmatprep.subr.mxu0 0.0
    %2211 = vmatpush1.msra.mxu0 0.0
    %2212 = vmatprep.subr.mxu0 0.0
    %2213 = vmatpush1.msra.mxu0 0.0
    %2214 = vmatprep.subr.mxu0 0.0
    %2215 = vmatpush1.msra.mxu0 0.0
    %2216 = vmatprep.subr.mxu0 0.0
    %2217 = vmatpush1.msra.mxu0 0.0
    %2218 = vmatprep.subr.mxu0 0.0
    %2219 = vmatpush1.msra.mxu0 0.0
    %2220 = vmatprep.subr.mxu0 0.0
    %2221 = vmatpush1.msra.mxu0 0.0
    %2222 = vmatprep.subr.mxu0 0.0
    %2223 = vmatpush1.msra.mxu0 0.0
    %2224 = vmatprep.subr.mxu0 0.0
    %2225 = vmatpush1.msra.mxu0 0.0
    %2226 = vmatprep.subr.mxu0 0.0
    %2227 = vmatpush1.msra.mxu0 0.0
    %2228 = vmatprep.subr.mxu0 0.0
    %2229 = vmatpush1.msra.mxu0 0.0
    %2230 = vmatprep.subr.mxu0 0.0
    %2231 = vmatpush1.msra.mxu0 0.0
    %2232 = vmatprep.subr.mxu0 0.0
    %2233 = vmatpush1.msra.mxu0 0.0
    %2234 = vmatprep.subr.mxu0 0.0
    %2235 = vmatpush1.msra.mxu0 0.0
    %2236 = vmatprep.subr.mxu0 0.0
    %2237 = vmatpush1.msra.mxu0 0.0
    %2238 = vmatprep.subr.mxu0 0.0
    %2239 = vmatpush1.msra.mxu0 0.0
    %2240 = vmatprep.subr.mxu0 0.0
    %2241 = vmatpush1.msra.mxu0 0.0
    %2242 = vmatprep.subr.mxu0 0.0
    %2243 = vmatpush1.msra.mxu0 0.0
    %2244 = vmatprep.subr.mxu0 0.0
    %2245 = vmatpush1.msra.mxu0 0.0
    %2246 = vmatprep.subr.mxu0 0.0
    %2247 = vmatpush1.msra.mxu0 0.0
    %2248 = vmatprep.subr.mxu0 0.0
    %2249 = vmatpush1.msra.mxu0 0.0
    %2250 = vmatprep.subr.mxu0 0.0
    %2251 = vmatpush1.msra.mxu0 0.0
    %2252 = vmatprep.subr.mxu0 0.0
    %2253 = vmatpush1.msra.mxu0 0.0
    %2254 = vmatprep.mubr.f32.mxu0 0.0
    %2255 = vmatmul.mubr.f32.gmra.mrb[0].mxu0 %v66
    %v2256 = vpop.f32.mrb[0].mxu0
    %v2257 = vadd.f32 %v57, %v2256
    %v2258 = vpop.f32.mrb[0].mxu0
    %2259 = vmatprep.mubr.f32.mxu0 0.0
    %2260 = vmatmul.mubr.f32.gmra.mrb[0].mxu0 %v69
    %v2261 = vpop.f32.mrb[0].mxu0
    %v2262 = vadd.f32 %v62, %v2261
    %v2263 = vpop.f32.mrb[0].mxu0
    %2264 = vdwg.mxu0
    %v2265 = vmax.f32 %v2257, 0.0
    %v2266 = vmax.f32 %v2262, 0.0
    %s2267 = scalar_lea.vmem %s3, 352
    %v2268 = vld [vmem:[%s2267] sm:$0xff]
    %v2269 = vld [vmem:[%s2267 + $0x8] sm:$0xff]
    %v2270 = vld [vmem:[%s2267 + $0x10] sm:$0xff]
    %v2271 = vld [vmem:[%s2267 + $0x18] sm:$0xff]
    %v2273 = vsel %vm248, %v2268, 0
    %v2276 = vsel %vm248, %v2269, 0
    %v2279 = vsel %vm248, %v2270, 0
    %v2282 = vsel %vm248, %v2271, 0
    %2284 = vmatprep.subr.mxu0 0.0
    %2285 = vmatpush1.msra.mxu0 %v2265
    %2286 = vmatprep.subr.mxu0 0.0
    %2287 = vmatpush1.msra.mxu0 %v2266
    %2288 = vmatprep.subr.mxu0 0.0
    %2289 = vmatpush1.msra.mxu0 0.0
    %2290 = vmatprep.subr.mxu0 0.0
    %2291 = vmatpush1.msra.mxu0 0.0
    %2292 = vmatprep.subr.mxu0 0.0
    %2293 = vmatpush1.msra.mxu0 0.0
    %2294 = vmatprep.subr.mxu0 0.0
    %2295 = vmatpush1.msra.mxu0 0.0
    %2296 = vmatprep.subr.mxu0 0.0
    %2297 = vmatpush1.msra.mxu0 0.0
    %2298 = vmatprep.subr.mxu0 0.0
    %2299 = vmatpush1.msra.mxu0 0.0
    %2300 = vmatprep.subr.mxu0 0.0
    %2301 = vmatpush1.msra.mxu0 0.0
    %2302 = vmatprep.subr.mxu0 0.0
    %2303 = vmatpush1.msra.mxu0 0.0
    %2304 = vmatprep.subr.mxu0 0.0
    %2305 = vmatpush1.msra.mxu0 0.0
    %2306 = vmatprep.subr.mxu0 0.0
    %2307 = vmatpush1.msra.mxu0 0.0
    %2308 = vmatprep.subr.mxu0 0.0
    %2309 = vmatpush1.msra.mxu0 0.0
    %2310 = vmatprep.subr.mxu0 0.0
    %2311 = vmatpush1.msra.mxu0 0.0
    %2312 = vmatprep.subr.mxu0 0.0
    %2313 = vmatpush1.msra.mxu0 0.0
    %2314 = vmatprep.subr.mxu0 0.0
    %2315 = vmatpush1.msra.mxu0 0.0
    %2316 = vmatprep.subr.mxu0 0.0
    %2317 = vmatpush1.msra.mxu0 0.0
    %2318 = vmatprep.subr.mxu0 0.0
    %2319 = vmatpush1.msra.mxu0 0.0
    %2320 = vmatprep.subr.mxu0 0.0
    %2321 = vmatpush1.msra.mxu0 0.0
    %2322 = vmatprep.subr.mxu0 0.0
    %2323 = vmatpush1.msra.mxu0 0.0
    %2324 = vmatprep.subr.mxu0 0.0
    %2325 = vmatpush1.msra.mxu0 0.0
    %2326 = vmatprep.subr.mxu0 0.0
    %2327 = vmatpush1.msra.mxu0 0.0
    %2328 = vmatprep.subr.mxu0 0.0
    %2329 = vmatpush1.msra.mxu0 0.0
    %2330 = vmatprep.subr.mxu0 0.0
    %2331 = vmatpush1.msra.mxu0 0.0
    %2332 = vmatprep.subr.mxu0 0.0
    %2333 = vmatpush1.msra.mxu0 0.0
    %2334 = vmatprep.subr.mxu0 0.0
    %2335 = vmatpush1.msra.mxu0 0.0
    %2336 = vmatprep.subr.mxu0 0.0
    %2337 = vmatpush1.msra.mxu0 0.0
    %2338 = vmatprep.subr.mxu0 0.0
    %2339 = vmatpush1.msra.mxu0 0.0
    %2340 = vmatprep.subr.mxu0 0.0
    %2341 = vmatpush1.msra.mxu0 0.0
    %2342 = vmatprep.subr.mxu0 0.0
    %2343 = vmatpush1.msra.mxu0 0.0
    %2344 = vmatprep.subr.mxu0 0.0
    %2345 = vmatpush1.msra.mxu0 0.0
    %2346 = vmatprep.subr.mxu0 0.0
    %2347 = vmatpush1.msra.mxu0 0.0
    %2348 = vmatprep.mubr.f32.mxu0 0.0
    %2349 = vmatmul.mubr.f32.gmra.mrb[0].mxu0 %v2273
    %v2350 = vpop.f32.mrb[0].mxu0
    %v2351 = vadd.f32 0.0, %v2350
    %v2352 = vpop.f32.mrb[0].mxu0
    %2353 = vmatprep.mubr.f32.mxu0 0.0
    %2354 = vmatmul.mubr.f32.gmra.mrb[0].mxu0 %v2276
    %v2355 = vpop.f32.mrb[0].mxu0
    %v2356 = vadd.f32 0.0, %v2355
    %v2357 = vpop.f32.mrb[0].mxu0
    %2358 = vmatprep.mubr.f32.mxu0 0.0
    %2359 = vmatmul.mubr.f32.gmra.mrb[0].mxu0 %v2279
    %v2360 = vpop.f32.mrb[0].mxu0
    %v2361 = vadd.f32 0.0, %v2360
    %v2362 = vpop.f32.mrb[0].mxu0
    %2363 = vmatprep.mubr.f32.mxu0 0.0
    %2364 = vmatmul.mubr.f32.gmra.mrb[0].mxu0 %v2282
    %v2365 = vpop.f32.mrb[0].mxu0
    %v2366 = vadd.f32 0.0, %v2365
    %v2367 = vpop.f32.mrb[0].mxu0
    %2368 = vdwg.mxu0
    %v2369 = vadd.f32 %v2176, %v2351
    %v2370 = vadd.f32 %v2177, %v2356
    %v2371 = vadd.f32 %v2178, %v2361
    %v2372 = vadd.f32 %v2179, %v2366
    %v2373 = vld [vmem:[%s0 + $0x60] sm:$0xff]
    %v2374 = vld [vmem:[%s0 + $0x138] sm:$0xff]
    %v2375 = vld [vmem:[%s0 + $0x210] sm:$0xff]
    %v2376 = vld [vmem:[%s0 + $0x2e8] sm:$0xff]
    %v2377 = vld [vmem:[%s0 + $0x3c0] sm:$0xff]
    %v2378 = vld [vmem:[%s0 + $0x498] sm:$0xff]
    %v2379 = vld [vmem:[%s0 + $0x570] sm:$0x3f]
    %v2381 = vsel %vm71, %v2379, 0
    %2383 = vmatprep.subr.mxu0 0.0
    %2384 = vmatpush1.msra.mxu0 %v2373
    %2385 = vmatprep.subr.mxu0 0.0
    %2386 = vmatpush1.msra.mxu0 %v2374
    %2387 = vmatprep.subr.mxu0 0.0
    %2388 = vmatpush1.msra.mxu0 %v2375
    %2389 = vmatprep.subr.mxu0 0.0
    %2390 = vmatpush1.msra.mxu0 %v2376
    %2391 = vmatprep.subr.mxu0 0.0
    %2392 = vmatpush1.msra.mxu0 %v2377
    %2393 = vmatprep.subr.mxu0 0.0
    %2394 = vmatpush1.msra.mxu0 %v2378
    %2395 = vmatprep.subr.mxu0 0.0
    %2396 = vmatpush1.msra.mxu0 %v2381
    %2397 = vmatprep.subr.mxu0 0.0
    %2398 = vmatpush1.msra.mxu0 0.0
    %2399 = vmatprep.subr.mxu0 0.0
    %2400 = vmatpush1.msra.mxu0 0.0
    %2401 = vmatprep.subr.mxu0 0.0
    %2402 = vmatpush1.msra.mxu0 0.0
    %2403 = vmatprep.subr.mxu0 0.0
    %2404 = vmatpush1.msra.mxu0 0.0
    %2405 = vmatprep.subr.mxu0 0.0
    %2406 = vmatpush1.msra.mxu0 0.0
    %2407 = vmatprep.subr.mxu0 0.0
    %2408 = vmatpush1.msra.mxu0 0.0
    %2409 = vmatprep.subr.mxu0 0.0
    %2410 = vmatpush1.msra.mxu0 0.0
    %2411 = vmatprep.subr.mxu0 0.0
    %2412 = vmatpush1.msra.mxu0 0.0
    %2413 = vmatprep.subr.mxu0 0.0
    %2414 = vmatpush1.msra.mxu0 0.0
    %2415 = vmatprep.subr.mxu0 0.0
    %2416 = vmatpush1.msra.mxu0 0.0
    %2417 = vmatprep.subr.mxu0 0.0
    %2418 = vmatpush1.msra.mxu0 0.0
    %2419 = vmatprep.subr.mxu0 0.0
    %2420 = vmatpush1.msra.mxu0 0.0
    %2421 = vmatprep.subr.mxu0 0.0
    %2422 = vmatpush1.msra.mxu0 0.0
    %2423 = vmatprep.subr.mxu0 0.0
    %2424 = vmatpush1.msra.mxu0 0.0
    %2425 = vmatprep.subr.mxu0 0.0
    %2426 = vmatpush1.msra.mxu0 0.0
    %2427 = vmatprep.subr.mxu0 0.0
    %2428 = vmatpush1.msra.mxu0 0.0
    %2429 = vmatprep.subr.mxu0 0.0
    %2430 = vmatpush1.msra.mxu0 0.0
    %2431 = vmatprep.subr.mxu0 0.0
    %2432 = vmatpush1.msra.mxu0 0.0
    %2433 = vmatprep.subr.mxu0 0.0
    %2434 = vmatpush1.msra.mxu0 0.0
    %2435 = vmatprep.subr.mxu0 0.0
    %2436 = vmatpush1.msra.mxu0 0.0
    %2437 = vmatprep.subr.mxu0 0.0
    %2438 = vmatpush1.msra.mxu0 0.0
    %2439 = vmatprep.subr.mxu0 0.0
    %2440 = vmatpush1.msra.mxu0 0.0
    %2441 = vmatprep.subr.mxu0 0.0
    %2442 = vmatpush1.msra.mxu0 0.0
    %2443 = vmatprep.subr.mxu0 0.0
    %2444 = vmatpush1.msra.mxu0 0.0
    %2445 = vmatprep.subr.mxu0 0.0
    %2446 = vmatpush1.msra.mxu0 0.0
    %2447 = vmatprep.mubr.f32.mxu0 0.0
    %2448 = vmatmul.mubr.f32.gmra.mrb[0].mxu0 %v66
    %v2449 = vpop.f32.mrb[0].mxu0
    %v2450 = vadd.f32 %v57, %v2449
    %v2451 = vpop.f32.mrb[0].mxu0
    %2452 = vmatprep.mubr.f32.mxu0 0.0
    %2453 = vmatmul.mubr.f32.gmra.mrb[0].mxu0 %v69
    %v2454 = vpop.f32.mrb[0].mxu0
    %v2455 = vadd.f32 %v62, %v2454
    %v2456 = vpop.f32.mrb[0].mxu0
    %2457 = vdwg.mxu0
    %v2458 = vmax.f32 %v2450, 0.0
    %v2459 = vmax.f32 %v2455, 0.0
    %s2460 = scalar_lea.vmem %s3, 384
    %v2461 = vld [vmem:[%s2460] sm:$0xff]
    %v2462 = vld [vmem:[%s2460 + $0x8] sm:$0xff]
    %v2463 = vld [vmem:[%s2460 + $0x10] sm:$0xff]
    %v2464 = vld [vmem:[%s2460 + $0x18] sm:$0xff]
    %v2466 = vsel %vm248, %v2461, 0
    %v2469 = vsel %vm248, %v2462, 0
    %v2472 = vsel %vm248, %v2463, 0
    %v2475 = vsel %vm248, %v2464, 0
    %2477 = vmatprep.subr.mxu0 0.0
    %2478 = vmatpush1.msra.mxu0 %v2458
    %2479 = vmatprep.subr.mxu0 0.0
    %2480 = vmatpush1.msra.mxu0 %v2459
    %2481 = vmatprep.subr.mxu0 0.0
    %2482 = vmatpush1.msra.mxu0 0.0
    %2483 = vmatprep.subr.mxu0 0.0
    %2484 = vmatpush1.msra.mxu0 0.0
    %2485 = vmatprep.subr.mxu0 0.0
    %2486 = vmatpush1.msra.mxu0 0.0
    %2487 = vmatprep.subr.mxu0 0.0
    %2488 = vmatpush1.msra.mxu0 0.0
    %2489 = vmatprep.subr.mxu0 0.0
    %2490 = vmatpush1.msra.mxu0 0.0
    %2491 = vmatprep.subr.mxu0 0.0
    %2492 = vmatpush1.msra.mxu0 0.0
    %2493 = vmatprep.subr.mxu0 0.0
    %2494 = vmatpush1.msra.mxu0 0.0
    %2495 = vmatprep.subr.mxu0 0.0
    %2496 = vmatpush1.msra.mxu0 0.0
    %2497 = vmatprep.subr.mxu0 0.0
    %2498 = vmatpush1.msra.mxu0 0.0
    %2499 = vmatprep.subr.mxu0 0.0
    %2500 = vmatpush1.msra.mxu0 0.0
    %2501 = vmatprep.subr.mxu0 0.0
    %2502 = vmatpush1.msra.mxu0 0.0
    %2503 = vmatprep.subr.mxu0 0.0
    %2504 = vmatpush1.msra.mxu0 0.0
    %2505 = vmatprep.subr.mxu0 0.0
    %2506 = vmatpush1.msra.mxu0 0.0
    %2507 = vmatprep.subr.mxu0 0.0
    %2508 = vmatpush1.msra.mxu0 0.0
    %2509 = vmatprep.subr.mxu0 0.0
    %2510 = vmatpush1.msra.mxu0 0.0
    %2511 = vmatprep.subr.mxu0 0.0
    %2512 = vmatpush1.msra.mxu0 0.0
    %2513 = vmatprep.subr.mxu0 0.0
    %2514 = vmatpush1.msra.mxu0 0.0
    %2515 = vmatprep.subr.mxu0 0.0
    %2516 = vmatpush1.msra.mxu0 0.0
    %2517 = vmatprep.subr.mxu0 0.0
    %2518 = vmatpush1.msra.mxu0 0.0
    %2519 = vmatprep.subr.mxu0 0.0
    %2520 = vmatpush1.msra.mxu0 0.0
    %2521 = vmatprep.subr.mxu0 0.0
    %2522 = vmatpush1.msra.mxu0 0.0
    %2523 = vmatprep.subr.mxu0 0.0
    %2524 = vmatpush1.msra.mxu0 0.0
    %2525 = vmatprep.subr.mxu0 0.0
    %2526 = vmatpush1.msra.mxu0 0.0
    %2527 = vmatprep.subr.mxu0 0.0
    %2528 = vmatpush1.msra.mxu0 0.0
    %2529 = vmatprep.subr.mxu0 0.0
    %2530 = vmatpush1.msra.mxu0 0.0
    %2531 = vmatprep.subr.mxu0 0.0
    %2532 = vmatpush1.msra.mxu0 0.0
    %2533 = vmatprep.subr.mxu0 0.0
    %2534 = vmatpush1.msra.mxu0 0.0
    %2535 = vmatprep.subr.mxu0 0.0
    %2536 = vmatpush1.msra.mxu0 0.0
    %2537 = vmatprep.subr.mxu0 0.0
    %2538 = vmatpush1.msra.mxu0 0.0
    %2539 = vmatprep.subr.mxu0 0.0
    %2540 = vmatpush1.msra.mxu0 0.0
    %2541 = vmatprep.mubr.f32.mxu0 0.0
    %2542 = vmatmul.mubr.f32.gmra.mrb[0].mxu0 %v2466
    %v2543 = vpop.f32.mrb[0].mxu0
    %v2544 = vadd.f32 0.0, %v2543
    %v2545 = vpop.f32.mrb[0].mxu0
    %2546 = vmatprep.mubr.f32.mxu0 0.0
    %2547 = vmatmul.mubr.f32.gmra.mrb[0].mxu0 %v2469
    %v2548 = vpop.f32.mrb[0].mxu0
    %v2549 = vadd.f32 0.0, %v2548
    %v2550 = vpop.f32.mrb[0].mxu0
    %2551 = vmatprep.mubr.f32.mxu0 0.0
    %2552 = vmatmul.mubr.f32.gmra.mrb[0].mxu0 %v2472
    %v2553 = vpop.f32.mrb[0].mxu0
    %v2554 = vadd.f32 0.0, %v2553
    %v2555 = vpop.f32.mrb[0].mxu0
    %2556 = vmatprep.mubr.f32.mxu0 0.0
    %2557 = vmatmul.mubr.f32.gmra.mrb[0].mxu0 %v2475
    %v2558 = vpop.f32.mrb[0].mxu0
    %v2559 = vadd.f32 0.0, %v2558
    %v2560 = vpop.f32.mrb[0].mxu0
    %2561 = vdwg.mxu0
    %v2562 = vadd.f32 %v2369, %v2544
    %v2563 = vadd.f32 %v2370, %v2549
    %v2564 = vadd.f32 %v2371, %v2554
    %v2565 = vadd.f32 %v2372, %v2559
    %v2566 = vld [vmem:[%s0 + $0x68] sm:$0xff]
    %v2567 = vld [vmem:[%s0 + $0x140] sm:$0xff]
    %v2568 = vld [vmem:[%s0 + $0x218] sm:$0xff]
    %v2569 = vld [vmem:[%s0 + $0x2f0] sm:$0xff]
    %v2570 = vld [vmem:[%s0 + $0x3c8] sm:$0xff]
    %v2571 = vld [vmem:[%s0 + $0x4a0] sm:$0xff]
    %v2572 = vld [vmem:[%s0 + $0x578] sm:$0x3f]
    %v2574 = vsel %vm71, %v2572, 0
    %2576 = vmatprep.subr.mxu0 0.0
    %2577 = vmatpush1.msra.mxu0 %v2566
    %2578 = vmatprep.subr.mxu0 0.0
    %2579 = vmatpush1.msra.mxu0 %v2567
    %2580 = vmatprep.subr.mxu0 0.0
    %2581 = vmatpush1.msra.mxu0 %v2568
    %2582 = vmatprep.subr.mxu0 0.0
    %2583 = vmatpush1.msra.mxu0 %v2569
    %2584 = vmatprep.subr.mxu0 0.0
    %2585 = vmatpush1.msra.mxu0 %v2570
    %2586 = vmatprep.subr.mxu0 0.0
    %2587 = vmatpush1.msra.mxu0 %v2571
    %2588 = vmatprep.subr.mxu0 0.0
    %2589 = vmatpush1.msra.mxu0 %v2574
    %2590 = vmatprep.subr.mxu0 0.0
    %2591 = vmatpush1.msra.mxu0 0.0
    %2592 = vmatprep.subr.mxu0 0.0
    %2593 = vmatpush1.msra.mxu0 0.0
    %2594 = vmatprep.subr.mxu0 0.0
    %2595 = vmatpush1.msra.mxu0 0.0
    %2596 = vmatprep.subr.mxu0 0.0
    %2597 = vmatpush1.msra.mxu0 0.0
    %2598 = vmatprep.subr.mxu0 0.0
    %2599 = vmatpush1.msra.mxu0 0.0
    %2600 = vmatprep.subr.mxu0 0.0
    %2601 = vmatpush1.msra.mxu0 0.0
    %2602 = vmatprep.subr.mxu0 0.0
    %2603 = vmatpush1.msra.mxu0 0.0
    %2604 = vmatprep.subr.mxu0 0.0
    %2605 = vmatpush1.msra.mxu0 0.0
    %2606 = vmatprep.subr.mxu0 0.0
    %2607 = vmatpush1.msra.mxu0 0.0
    %2608 = vmatprep.subr.mxu0 0.0
    %2609 = vmatpush1.msra.mxu0 0.0
    %2610 = vmatprep.subr.mxu0 0.0
    %2611 = vmatpush1.msra.mxu0 0.0
    %2612 = vmatprep.subr.mxu0 0.0
    %2613 = vmatpush1.msra.mxu0 0.0
    %2614 = vmatprep.subr.mxu0 0.0
    %2615 = vmatpush1.msra.mxu0 0.0
    %2616 = vmatprep.subr.mxu0 0.0
    %2617 = vmatpush1.msra.mxu0 0.0
    %2618 = vmatprep.subr.mxu0 0.0
    %2619 = vmatpush1.msra.mxu0 0.0
    %2620 = vmatprep.subr.mxu0 0.0
    %2621 = vmatpush1.msra.mxu0 0.0
    %2622 = vmatprep.subr.mxu0 0.0
    %2623 = vmatpush1.msra.mxu0 0.0
    %2624 = vmatprep.subr.mxu0 0.0
    %2625 = vmatpush1.msra.mxu0 0.0
    %2626 = vmatprep.subr.mxu0 0.0
    %2627 = vmatpush1.msra.mxu0 0.0
    %2628 = vmatprep.subr.mxu0 0.0
    %2629 = vmatpush1.msra.mxu0 0.0
    %2630 = vmatprep.subr.mxu0 0.0
    %2631 = vmatpush1.msra.mxu0 0.0
    %2632 = vmatprep.subr.mxu0 0.0
    %2633 = vmatpush1.msra.mxu0 0.0
    %2634 = vmatprep.subr.mxu0 0.0
    %2635 = vmatpush1.msra.mxu0 0.0
    %2636 = vmatprep.subr.mxu0 0.0
    %2637 = vmatpush1.msra.mxu0 0.0
    %2638 = vmatprep.subr.mxu0 0.0
    %2639 = vmatpush1.msra.mxu0 0.0
    %2640 = vmatprep.mubr.f32.mxu0 0.0
    %2641 = vmatmul.mubr.f32.gmra.mrb[0].mxu0 %v66
    %v2642 = vpop.f32.mrb[0].mxu0
    %v2643 = vadd.f32 %v57, %v2642
    %v2644 = vpop.f32.mrb[0].mxu0
    %2645 = vmatprep.mubr.f32.mxu0 0.0
    %2646 = vmatmul.mubr.f32.gmra.mrb[0].mxu0 %v69
    %v2647 = vpop.f32.mrb[0].mxu0
    %v2648 = vadd.f32 %v62, %v2647
    %v2649 = vpop.f32.mrb[0].mxu0
    %2650 = vdwg.mxu0
    %v2651 = vmax.f32 %v2643, 0.0
    %v2652 = vmax.f32 %v2648, 0.0
    %s2653 = scalar_lea.vmem %s3, 416
    %v2654 = vld [vmem:[%s2653] sm:$0xff]
    %v2655 = vld [vmem:[%s2653 + $0x8] sm:$0xff]
    %v2656 = vld [vmem:[%s2653 + $0x10] sm:$0xff]
    %v2657 = vld [vmem:[%s2653 + $0x18] sm:$0xff]
    %v2659 = vsel %vm248, %v2654, 0
    %v2662 = vsel %vm248, %v2655, 0
    %v2665 = vsel %vm248, %v2656, 0
    %v2668 = vsel %vm248, %v2657, 0
    %2670 = vmatprep.subr.mxu0 0.0
    %2671 = vmatpush1.msra.mxu0 %v2651
    %2672 = vmatprep.subr.mxu0 0.0
    %2673 = vmatpush1.msra.mxu0 %v2652
    %2674 = vmatprep.subr.mxu0 0.0
    %2675 = vmatpush1.msra.mxu0 0.0
    %2676 = vmatprep.subr.mxu0 0.0
    %2677 = vmatpush1.msra.mxu0 0.0
    %2678 = vmatprep.subr.mxu0 0.0
    %2679 = vmatpush1.msra.mxu0 0.0
    %2680 = vmatprep.subr.mxu0 0.0
    %2681 = vmatpush1.msra.mxu0 0.0
    %2682 = vmatprep.subr.mxu0 0.0
    %2683 = vmatpush1.msra.mxu0 0.0
    %2684 = vmatprep.subr.mxu0 0.0
    %2685 = vmatpush1.msra.mxu0 0.0
    %2686 = vmatprep.subr.mxu0 0.0
    %2687 = vmatpush1.msra.mxu0 0.0
    %2688 = vmatprep.subr.mxu0 0.0
    %2689 = vmatpush1.msra.mxu0 0.0
    %2690 = vmatprep.subr.mxu0 0.0
    %2691 = vmatpush1.msra.mxu0 0.0
    %2692 = vmatprep.subr.mxu0 0.0
    %2693 = vmatpush1.msra.mxu0 0.0
    %2694 = vmatprep.subr.mxu0 0.0
    %2695 = vmatpush1.msra.mxu0 0.0
    %2696 = vmatprep.subr.mxu0 0.0
    %2697 = vmatpush1.msra.mxu0 0.0
    %2698 = vmatprep.subr.mxu0 0.0
    %2699 = vmatpush1.msra.mxu0 0.0
    %2700 = vmatprep.subr.mxu0 0.0
    %2701 = vmatpush1.msra.mxu0 0.0
    %2702 = vmatprep.subr.mxu0 0.0
    %2703 = vmatpush1.msra.mxu0 0.0
    %2704 = vmatprep.subr.mxu0 0.0
    %2705 = vmatpush1.msra.mxu0 0.0
    %2706 = vmatprep.subr.mxu0 0.0
    %2707 = vmatpush1.msra.mxu0 0.0
    %2708 = vmatprep.subr.mxu0 0.0
    %2709 = vmatpush1.msra.mxu0 0.0
    %2710 = vmatprep.subr.mxu0 0.0
    %2711 = vmatpush1.msra.mxu0 0.0
    %2712 = vmatprep.subr.mxu0 0.0
    %2713 = vmatpush1.msra.mxu0 0.0
    %2714 = vmatprep.subr.mxu0 0.0
    %2715 = vmatpush1.msra.mxu0 0.0
    %2716 = vmatprep.subr.mxu0 0.0
    %2717 = vmatpush1.msra.mxu0 0.0
    %2718 = vmatprep.subr.mxu0 0.0
    %2719 = vmatpush1.msra.mxu0 0.0
    %2720 = vmatprep.subr.mxu0 0.0
    %2721 = vmatpush1.msra.mxu0 0.0
    %2722 = vmatprep.subr.mxu0 0.0
    %2723 = vmatpush1.msra.mxu0 0.0
    %2724 = vmatprep.subr.mxu0 0.0
    %2725 = vmatpush1.msra.mxu0 0.0
    %2726 = vmatprep.subr.mxu0 0.0
    %2727 = vmatpush1.msra.mxu0 0.0
    %2728 = vmatprep.subr.mxu0 0.0
    %2729 = vmatpush1.msra.mxu0 0.0
    %2730 = vmatprep.subr.mxu0 0.0
    %2731 = vmatpush1.msra.mxu0 0.0
    %2732 = vmatprep.subr.mxu0 0.0
    %2733 = vmatpush1.msra.mxu0 0.0
    %2734 = vmatprep.mubr.f32.mxu0 0.0
    %2735 = vmatmul.mubr.f32.gmra.mrb[0].mxu0 %v2659
    %v2736 = vpop.f32.mrb[0].mxu0
    %v2737 = vadd.f32 0.0, %v2736
    %v2738 = vpop.f32.mrb[0].mxu0
    %2739 = vmatprep.mubr.f32.mxu0 0.0
    %2740 = vmatmul.mubr.f32.gmra.mrb[0].mxu0 %v2662
    %v2741 = vpop.f32.mrb[0].mxu0
    %v2742 = vadd.f32 0.0, %v2741
    %v2743 = vpop.f32.mrb[0].mxu0
    %2744 = vmatprep.mubr.f32.mxu0 0.0
    %2745 = vmatmul.mubr.f32.gmra.mrb[0].mxu0 %v2665
    %v2746 = vpop.f32.mrb[0].mxu0
    %v2747 = vadd.f32 0.0, %v2746
    %v2748 = vpop.f32.mrb[0].mxu0
    %2749 = vmatprep.mubr.f32.mxu0 0.0
    %2750 = vmatmul.mubr.f32.gmra.mrb[0].mxu0 %v2668
    %v2751 = vpop.f32.mrb[0].mxu0
    %v2752 = vadd.f32 0.0, %v2751
    %v2753 = vpop.f32.mrb[0].mxu0
    %2754 = vdwg.mxu0
    %v2755 = vadd.f32 %v2562, %v2737
    %v2756 = vadd.f32 %v2563, %v2742
    %v2757 = vadd.f32 %v2564, %v2747
    %v2758 = vadd.f32 %v2565, %v2752
    %v2759 = vld [vmem:[%s0 + $0x70] sm:$0xff]
    %v2760 = vld [vmem:[%s0 + $0x148] sm:$0xff]
    %v2761 = vld [vmem:[%s0 + $0x220] sm:$0xff]
    %v2762 = vld [vmem:[%s0 + $0x2f8] sm:$0xff]
    %v2763 = vld [vmem:[%s0 + $0x3d0] sm:$0xff]
    %v2764 = vld [vmem:[%s0 + $0x4a8] sm:$0xff]
    %v2765 = vld [vmem:[%s0 + $0x580] sm:$0x3f]
    %v2767 = vsel %vm71, %v2765, 0
    %2769 = vmatprep.subr.mxu0 0.0
    %2770 = vmatpush1.msra.mxu0 %v2759
    %2771 = vmatprep.subr.mxu0 0.0
    %2772 = vmatpush1.msra.mxu0 %v2760
    %2773 = vmatprep.subr.mxu0 0.0
    %2774 = vmatpush1.msra.mxu0 %v2761
    %2775 = vmatprep.subr.mxu0 0.0
    %2776 = vmatpush1.msra.mxu0 %v2762
    %2777 = vmatprep.subr.mxu0 0.0
    %2778 = vmatpush1.msra.mxu0 %v2763
    %2779 = vmatprep.subr.mxu0 0.0
    %2780 = vmatpush1.msra.mxu0 %v2764
    %2781 = vmatprep.subr.mxu0 0.0
    %2782 = vmatpush1.msra.mxu0 %v2767
    %2783 = vmatprep.subr.mxu0 0.0
    %2784 = vmatpush1.msra.mxu0 0.0
    %2785 = vmatprep.subr.mxu0 0.0
    %2786 = vmatpush1.msra.mxu0 0.0
    %2787 = vmatprep.subr.mxu0 0.0
    %2788 = vmatpush1.msra.mxu0 0.0
    %2789 = vmatprep.subr.mxu0 0.0
    %2790 = vmatpush1.msra.mxu0 0.0
    %2791 = vmatprep.subr.mxu0 0.0
    %2792 = vmatpush1.msra.mxu0 0.0
    %2793 = vmatprep.subr.mxu0 0.0
    %2794 = vmatpush1.msra.mxu0 0.0
    %2795 = vmatprep.subr.mxu0 0.0
    %2796 = vmatpush1.msra.mxu0 0.0
    %2797 = vmatprep.subr.mxu0 0.0
    %2798 = vmatpush1.msra.mxu0 0.0
    %2799 = vmatprep.subr.mxu0 0.0
    %2800 = vmatpush1.msra.mxu0 0.0
    %2801 = vmatprep.subr.mxu0 0.0
    %2802 = vmatpush1.msra.mxu0 0.0
    %2803 = vmatprep.subr.mxu0 0.0
    %2804 = vmatpush1.msra.mxu0 0.0
    %2805 = vmatprep.subr.mxu0 0.0
    %2806 = vmatpush1.msra.mxu0 0.0
    %2807 = vmatprep.subr.mxu0 0.0
    %2808 = vmatpush1.msra.mxu0 0.0
    %2809 = vmatprep.subr.mxu0 0.0
    %2810 = vmatpush1.msra.mxu0 0.0
    %2811 = vmatprep.subr.mxu0 0.0
    %2812 = vmatpush1.msra.mxu0 0.0
    %2813 = vmatprep.subr.mxu0 0.0
    %2814 = vmatpush1.msra.mxu0 0.0
    %2815 = vmatprep.subr.mxu0 0.0
    %2816 = vmatpush1.msra.mxu0 0.0
    %2817 = vmatprep.subr.mxu0 0.0
    %2818 = vmatpush1.msra.mxu0 0.0
    %2819 = vmatprep.subr.mxu0 0.0
    %2820 = vmatpush1.msra.mxu0 0.0
    %2821 = vmatprep.subr.mxu0 0.0
    %2822 = vmatpush1.msra.mxu0 0.0
    %2823 = vmatprep.subr.mxu0 0.0
    %2824 = vmatpush1.msra.mxu0 0.0
    %2825 = vmatprep.subr.mxu0 0.0
    %2826 = vmatpush1.msra.mxu0 0.0
    %2827 = vmatprep.subr.mxu0 0.0
    %2828 = vmatpush1.msra.mxu0 0.0
    %2829 = vmatprep.subr.mxu0 0.0
    %2830 = vmatpush1.msra.mxu0 0.0
    %2831 = vmatprep.subr.mxu0 0.0
    %2832 = vmatpush1.msra.mxu0 0.0
    %2833 = vmatprep.mubr.f32.mxu0 0.0
    %2834 = vmatmul.mubr.f32.gmra.mrb[0].mxu0 %v66
    %v2835 = vpop.f32.mrb[0].mxu0
    %v2836 = vadd.f32 %v57, %v2835
    %v2837 = vpop.f32.mrb[0].mxu0
    %2838 = vmatprep.mubr.f32.mxu0 0.0
    %2839 = vmatmul.mubr.f32.gmra.mrb[0].mxu0 %v69
    %v2840 = vpop.f32.mrb[0].mxu0
    %v2841 = vadd.f32 %v62, %v2840
    %v2842 = vpop.f32.mrb[0].mxu0
    %2843 = vdwg.mxu0
    %v2844 = vmax.f32 %v2836, 0.0
    %v2845 = vmax.f32 %v2841, 0.0
    %s2846 = scalar_lea.vmem %s3, 448
    %v2847 = vld [vmem:[%s2846] sm:$0xff]
    %v2848 = vld [vmem:[%s2846 + $0x8] sm:$0xff]
    %v2849 = vld [vmem:[%s2846 + $0x10] sm:$0xff]
    %v2850 = vld [vmem:[%s2846 + $0x18] sm:$0xff]
    %v2852 = vsel %vm248, %v2847, 0
    %v2855 = vsel %vm248, %v2848, 0
    %v2858 = vsel %vm248, %v2849, 0
    %v2861 = vsel %vm248, %v2850, 0
    %2863 = vmatprep.subr.mxu0 0.0
    %2864 = vmatpush1.msra.mxu0 %v2844
    %2865 = vmatprep.subr.mxu0 0.0
    %2866 = vmatpush1.msra.mxu0 %v2845
    %2867 = vmatprep.subr.mxu0 0.0
    %2868 = vmatpush1.msra.mxu0 0.0
    %2869 = vmatprep.subr.mxu0 0.0
    %2870 = vmatpush1.msra.mxu0 0.0
    %2871 = vmatprep.subr.mxu0 0.0
    %2872 = vmatpush1.msra.mxu0 0.0
    %2873 = vmatprep.subr.mxu0 0.0
    %2874 = vmatpush1.msra.mxu0 0.0
    %2875 = vmatprep.subr.mxu0 0.0
    %2876 = vmatpush1.msra.mxu0 0.0
    %2877 = vmatprep.subr.mxu0 0.0
    %2878 = vmatpush1.msra.mxu0 0.0
    %2879 = vmatprep.subr.mxu0 0.0
    %2880 = vmatpush1.msra.mxu0 0.0
    %2881 = vmatprep.subr.mxu0 0.0
    %2882 = vmatpush1.msra.mxu0 0.0
    %2883 = vmatprep.subr.mxu0 0.0
    %2884 = vmatpush1.msra.mxu0 0.0
    %2885 = vmatprep.subr.mxu0 0.0
    %2886 = vmatpush1.msra.mxu0 0.0
    %2887 = vmatprep.subr.mxu0 0.0
    %2888 = vmatpush1.msra.mxu0 0.0
    %2889 = vmatprep.subr.mxu0 0.0
    %2890 = vmatpush1.msra.mxu0 0.0
    %2891 = vmatprep.subr.mxu0 0.0
    %2892 = vmatpush1.msra.mxu0 0.0
    %2893 = vmatprep.subr.mxu0 0.0
    %2894 = vmatpush1.msra.mxu0 0.0
    %2895 = vmatprep.subr.mxu0 0.0
    %2896 = vmatpush1.msra.mxu0 0.0
    %2897 = vmatprep.subr.mxu0 0.0
    %2898 = vmatpush1.msra.mxu0 0.0
    %2899 = vmatprep.subr.mxu0 0.0
    %2900 = vmatpush1.msra.mxu0 0.0
    %2901 = vmatprep.subr.mxu0 0.0
    %2902 = vmatpush1.msra.mxu0 0.0
    %2903 = vmatprep.subr.mxu0 0.0
    %2904 = vmatpush1.msra.mxu0 0.0
    %2905 = vmatprep.subr.mxu0 0.0
    %2906 = vmatpush1.msra.mxu0 0.0
    %2907 = vmatprep.subr.mxu0 0.0
    %2908 = vmatpush1.msra.mxu0 0.0
    %2909 = vmatprep.subr.mxu0 0.0
    %2910 = vmatpush1.msra.mxu0 0.0
    %2911 = vmatprep.subr.mxu0 0.0
    %2912 = vmatpush1.msra.mxu0 0.0
    %2913 = vmatprep.subr.mxu0 0.0
    %2914 = vmatpush1.msra.mxu0 0.0
    %2915 = vmatprep.subr.mxu0 0.0
    %2916 = vmatpush1.msra.mxu0 0.0
    %2917 = vmatprep.subr.mxu0 0.0
    %2918 = vmatpush1.msra.mxu0 0.0
    %2919 = vmatprep.subr.mxu0 0.0
    %2920 = vmatpush1.msra.mxu0 0.0
    %2921 = vmatprep.subr.mxu0 0.0
    %2922 = vmatpush1.msra.mxu0 0.0
    %2923 = vmatprep.subr.mxu0 0.0
    %2924 = vmatpush1.msra.mxu0 0.0
    %2925 = vmatprep.subr.mxu0 0.0
    %2926 = vmatpush1.msra.mxu0 0.0
    %2927 = vmatprep.mubr.f32.mxu0 0.0
    %2928 = vmatmul.mubr.f32.gmra.mrb[0].mxu0 %v2852
    %v2929 = vpop.f32.mrb[0].mxu0
    %v2930 = vadd.f32 0.0, %v2929
    %v2931 = vpop.f32.mrb[0].mxu0
    %2932 = vmatprep.mubr.f32.mxu0 0.0
    %2933 = vmatmul.mubr.f32.gmra.mrb[0].mxu0 %v2855
    %v2934 = vpop.f32.mrb[0].mxu0
    %v2935 = vadd.f32 0.0, %v2934
    %v2936 = vpop.f32.mrb[0].mxu0
    %2937 = vmatprep.mubr.f32.mxu0 0.0
    %2938 = vmatmul.mubr.f32.gmra.mrb[0].mxu0 %v2858
    %v2939 = vpop.f32.mrb[0].mxu0
    %v2940 = vadd.f32 0.0, %v2939
    %v2941 = vpop.f32.mrb[0].mxu0
    %2942 = vmatprep.mubr.f32.mxu0 0.0
    %2943 = vmatmul.mubr.f32.gmra.mrb[0].mxu0 %v2861
    %v2944 = vpop.f32.mrb[0].mxu0
    %v2945 = vadd.f32 0.0, %v2944
    %v2946 = vpop.f32.mrb[0].mxu0
    %2947 = vdwg.mxu0
    %v2948 = vadd.f32 %v2755, %v2930
    %v2949 = vadd.f32 %v2756, %v2935
    %v2950 = vadd.f32 %v2757, %v2940
    %v2951 = vadd.f32 %v2758, %v2945
    %v2952 = vld [vmem:[%s0 + $0x78] sm:$0xff]
    %v2953 = vld [vmem:[%s0 + $0x150] sm:$0xff]
    %v2954 = vld [vmem:[%s0 + $0x228] sm:$0xff]
    %v2955 = vld [vmem:[%s0 + $0x300] sm:$0xff]
    %v2956 = vld [vmem:[%s0 + $0x3d8] sm:$0xff]
    %v2957 = vld [vmem:[%s0 + $0x4b0] sm:$0xff]
    %v2958 = vld [vmem:[%s0 + $0x588] sm:$0x3f]
    %v2960 = vsel %vm71, %v2958, 0
    %2962 = vmatprep.subr.mxu0 0.0
    %2963 = vmatpush1.msra.mxu0 %v2952
    %2964 = vmatprep.subr.mxu0 0.0
    %2965 = vmatpush1.msra.mxu0 %v2953
    %2966 = vmatprep.subr.mxu0 0.0
    %2967 = vmatpush1.msra.mxu0 %v2954
    %2968 = vmatprep.subr.mxu0 0.0
    %2969 = vmatpush1.msra.mxu0 %v2955
    %2970 = vmatprep.subr.mxu0 0.0
    %2971 = vmatpush1.msra.mxu0 %v2956
    %2972 = vmatprep.subr.mxu0 0.0
    %2973 = vmatpush1.msra.mxu0 %v2957
    %2974 = vmatprep.subr.mxu0 0.0
    %2975 = vmatpush1.msra.mxu0 %v2960
    %2976 = vmatprep.subr.mxu0 0.0
    %2977 = vmatpush1.msra.mxu0 0.0
    %2978 = vmatprep.subr.mxu0 0.0
    %2979 = vmatpush1.msra.mxu0 0.0
    %2980 = vmatprep.subr.mxu0 0.0
    %2981 = vmatpush1.msra.mxu0 0.0
    %2982 = vmatprep.subr.mxu0 0.0
    %2983 = vmatpush1.msra.mxu0 0.0
    %2984 = vmatprep.subr.mxu0 0.0
    %2985 = vmatpush1.msra.mxu0 0.0
    %2986 = vmatprep.subr.mxu0 0.0
    %2987 = vmatpush1.msra.mxu0 0.0
    %2988 = vmatprep.subr.mxu0 0.0
    %2989 = vmatpush1.msra.mxu0 0.0
    %2990 = vmatprep.subr.mxu0 0.0
    %2991 = vmatpush1.msra.mxu0 0.0
    %2992 = vmatprep.subr.mxu0 0.0
    %2993 = vmatpush1.msra.mxu0 0.0
    %2994 = vmatprep.subr.mxu0 0.0
    %2995 = vmatpush1.msra.mxu0 0.0
    %2996 = vmatprep.subr.mxu0 0.0
    %2997 = vmatpush1.msra.mxu0 0.0
    %2998 = vmatprep.subr.mxu0 0.0
    %2999 = vmatpush1.msra.mxu0 0.0
    %3000 = vmatprep.subr.mxu0 0.0
    %3001 = vmatpush1.msra.mxu0 0.0
    %3002 = vmatprep.subr.mxu0 0.0
    %3003 = vmatpush1.msra.mxu0 0.0
    %3004 = vmatprep.subr.mxu0 0.0
    %3005 = vmatpush1.msra.mxu0 0.0
    %3006 = vmatprep.subr.mxu0 0.0
    %3007 = vmatpush1.msra.mxu0 0.0
    %3008 = vmatprep.subr.mxu0 0.0
    %3009 = vmatpush1.msra.mxu0 0.0
    %3010 = vmatprep.subr.mxu0 0.0
    %3011 = vmatpush1.msra.mxu0 0.0
    %3012 = vmatprep.subr.mxu0 0.0
    %3013 = vmatpush1.msra.mxu0 0.0
    %3014 = vmatprep.subr.mxu0 0.0
    %3015 = vmatpush1.msra.mxu0 0.0
    %3016 = vmatprep.subr.mxu0 0.0
    %3017 = vmatpush1.msra.mxu0 0.0
    %3018 = vmatprep.subr.mxu0 0.0
    %3019 = vmatpush1.msra.mxu0 0.0
    %3020 = vmatprep.subr.mxu0 0.0
    %3021 = vmatpush1.msra.mxu0 0.0
    %3022 = vmatprep.subr.mxu0 0.0
    %3023 = vmatpush1.msra.mxu0 0.0
    %3024 = vmatprep.subr.mxu0 0.0
    %3025 = vmatpush1.msra.mxu0 0.0
    %3026 = vmatprep.mubr.f32.mxu0 0.0
    %3027 = vmatmul.mubr.f32.gmra.mrb[0].mxu0 %v66
    %v3028 = vpop.f32.mrb[0].mxu0
    %v3029 = vadd.f32 %v57, %v3028
    %v3030 = vpop.f32.mrb[0].mxu0
    %3031 = vmatprep.mubr.f32.mxu0 0.0
    %3032 = vmatmul.mubr.f32.gmra.mrb[0].mxu0 %v69
    %v3033 = vpop.f32.mrb[0].mxu0
    %v3034 = vadd.f32 %v62, %v3033
    %v3035 = vpop.f32.mrb[0].mxu0
    %3036 = vdwg.mxu0
    %v3037 = vmax.f32 %v3029, 0.0
    %v3038 = vmax.f32 %v3034, 0.0
    %s3039 = scalar_lea.vmem %s3, 480
    %v3040 = vld [vmem:[%s3039] sm:$0xff]
    %v3041 = vld [vmem:[%s3039 + $0x8] sm:$0xff]
    %v3042 = vld [vmem:[%s3039 + $0x10] sm:$0xff]
    %v3043 = vld [vmem:[%s3039 + $0x18] sm:$0xff]
    %v3045 = vsel %vm248, %v3040, 0
    %v3048 = vsel %vm248, %v3041, 0
    %v3051 = vsel %vm248, %v3042, 0
    %v3054 = vsel %vm248, %v3043, 0
    %3056 = vmatprep.subr.mxu0 0.0
    %3057 = vmatpush1.msra.mxu0 %v3037
    %3058 = vmatprep.subr.mxu0 0.0
    %3059 = vmatpush1.msra.mxu0 %v3038
    %3060 = vmatprep.subr.mxu0 0.0
    %3061 = vmatpush1.msra.mxu0 0.0
    %3062 = vmatprep.subr.mxu0 0.0
    %3063 = vmatpush1.msra.mxu0 0.0
    %3064 = vmatprep.subr.mxu0 0.0
    %3065 = vmatpush1.msra.mxu0 0.0
    %3066 = vmatprep.subr.mxu0 0.0
    %3067 = vmatpush1.msra.mxu0 0.0
    %3068 = vmatprep.subr.mxu0 0.0
    %3069 = vmatpush1.msra.mxu0 0.0
    %3070 = vmatprep.subr.mxu0 0.0
    %3071 = vmatpush1.msra.mxu0 0.0
    %3072 = vmatprep.subr.mxu0 0.0
    %3073 = vmatpush1.msra.mxu0 0.0
    %3074 = vmatprep.subr.mxu0 0.0
    %3075 = vmatpush1.msra.mxu0 0.0
    %3076 = vmatprep.subr.mxu0 0.0
    %3077 = vmatpush1.msra.mxu0 0.0
    %3078 = vmatprep.subr.mxu0 0.0
    %3079 = vmatpush1.msra.mxu0 0.0
    %3080 = vmatprep.subr.mxu0 0.0
    %3081 = vmatpush1.msra.mxu0 0.0
    %3082 = vmatprep.subr.mxu0 0.0
    %3083 = vmatpush1.msra.mxu0 0.0
    %3084 = vmatprep.subr.mxu0 0.0
    %3085 = vmatpush1.msra.mxu0 0.0
    %3086 = vmatprep.subr.mxu0 0.0
    %3087 = vmatpush1.msra.mxu0 0.0
    %3088 = vmatprep.subr.mxu0 0.0
    %3089 = vmatpush1.msra.mxu0 0.0
    %3090 = vmatprep.subr.mxu0 0.0
    %3091 = vmatpush1.msra.mxu0 0.0
    %3092 = vmatprep.subr.mxu0 0.0
    %3093 = vmatpush1.msra.mxu0 0.0
    %3094 = vmatprep.subr.mxu0 0.0
    %3095 = vmatpush1.msra.mxu0 0.0
    %3096 = vmatprep.subr.mxu0 0.0
    %3097 = vmatpush1.msra.mxu0 0.0
    %3098 = vmatprep.subr.mxu0 0.0
    %3099 = vmatpush1.msra.mxu0 0.0
    %3100 = vmatprep.subr.mxu0 0.0
    %3101 = vmatpush1.msra.mxu0 0.0
    %3102 = vmatprep.subr.mxu0 0.0
    %3103 = vmatpush1.msra.mxu0 0.0
    %3104 = vmatprep.subr.mxu0 0.0
    %3105 = vmatpush1.msra.mxu0 0.0
    %3106 = vmatprep.subr.mxu0 0.0
    %3107 = vmatpush1.msra.mxu0 0.0
    %3108 = vmatprep.subr.mxu0 0.0
    %3109 = vmatpush1.msra.mxu0 0.0
    %3110 = vmatprep.subr.mxu0 0.0
    %3111 = vmatpush1.msra.mxu0 0.0
    %3112 = vmatprep.subr.mxu0 0.0
    %3113 = vmatpush1.msra.mxu0 0.0
    %3114 = vmatprep.subr.mxu0 0.0
    %3115 = vmatpush1.msra.mxu0 0.0
    %3116 = vmatprep.subr.mxu0 0.0
    %3117 = vmatpush1.msra.mxu0 0.0
    %3118 = vmatprep.subr.mxu0 0.0
    %3119 = vmatpush1.msra.mxu0 0.0
    %3120 = vmatprep.mubr.f32.mxu0 0.0
    %3121 = vmatmul.mubr.f32.gmra.mrb[0].mxu0 %v3045
    %v3122 = vpop.f32.mrb[0].mxu0
    %v3123 = vadd.f32 0.0, %v3122
    %v3124 = vpop.f32.mrb[0].mxu0
    %3125 = vmatprep.mubr.f32.mxu0 0.0
    %3126 = vmatmul.mubr.f32.gmra.mrb[0].mxu0 %v3048
    %v3127 = vpop.f32.mrb[0].mxu0
    %v3128 = vadd.f32 0.0, %v3127
    %v3129 = vpop.f32.mrb[0].mxu0
    %3130 = vmatprep.mubr.f32.mxu0 0.0
    %3131 = vmatmul.mubr.f32.gmra.mrb[0].mxu0 %v3051
    %v3132 = vpop.f32.mrb[0].mxu0
    %v3133 = vadd.f32 0.0, %v3132
    %v3134 = vpop.f32.mrb[0].mxu0
    %3135 = vmatprep.mubr.f32.mxu0 0.0
    %3136 = vmatmul.mubr.f32.gmra.mrb[0].mxu0 %v3054
    %v3137 = vpop.f32.mrb[0].mxu0
    %v3138 = vadd.f32 0.0, %v3137
    %v3139 = vpop.f32.mrb[0].mxu0
    %3140 = vdwg.mxu0
    %v3141 = vadd.f32 %v2948, %v3123
    %v3142 = vadd.f32 %v2949, %v3128
    %v3143 = vadd.f32 %v2950, %v3133
    %v3144 = vadd.f32 %v2951, %v3138
    %v3145 = vld [vmem:[%s0 + $0x80] sm:$0xff]
    %v3146 = vld [vmem:[%s0 + $0x158] sm:$0xff]
    %v3147 = vld [vmem:[%s0 + $0x230] sm:$0xff]
    %v3148 = vld [vmem:[%s0 + $0x308] sm:$0xff]
    %v3149 = vld [vmem:[%s0 + $0x3e0] sm:$0xff]
    %v3150 = vld [vmem:[%s0 + $0x4b8] sm:$0xff]
    %v3151 = vld [vmem:[%s0 + $0x590] sm:$0x3f]
    %v3153 = vsel %vm71, %v3151, 0
    %3155 = vmatprep.subr.mxu0 0.0
    %3156 = vmatpush1.msra.mxu0 %v3145
    %3157 = vmatprep.subr.mxu0 0.0
    %3158 = vmatpush1.msra.mxu0 %v3146
    %3159 = vmatprep.subr.mxu0 0.0
    %3160 = vmatpush1.msra.mxu0 %v3147
    %3161 = vmatprep.subr.mxu0 0.0
    %3162 = vmatpush1.msra.mxu0 %v3148
    %3163 = vmatprep.subr.mxu0 0.0
    %3164 = vmatpush1.msra.mxu0 %v3149
    %3165 = vmatprep.subr.mxu0 0.0
    %3166 = vmatpush1.msra.mxu0 %v3150
    %3167 = vmatprep.subr.mxu0 0.0
    %3168 = vmatpush1.msra.mxu0 %v3153
    %3169 = vmatprep.subr.mxu0 0.0
    %3170 = vmatpush1.msra.mxu0 0.0
    %3171 = vmatprep.subr.mxu0 0.0
    %3172 = vmatpush1.msra.mxu0 0.0
    %3173 = vmatprep.subr.mxu0 0.0
    %3174 = vmatpush1.msra.mxu0 0.0
    %3175 = vmatprep.subr.mxu0 0.0
    %3176 = vmatpush1.msra.mxu0 0.0
    %3177 = vmatprep.subr.mxu0 0.0
    %3178 = vmatpush1.msra.mxu0 0.0
    %3179 = vmatprep.subr.mxu0 0.0
    %3180 = vmatpush1.msra.mxu0 0.0
    %3181 = vmatprep.subr.mxu0 0.0
    %3182 = vmatpush1.msra.mxu0 0.0
    %3183 = vmatprep.subr.mxu0 0.0
    %3184 = vmatpush1.msra.mxu0 0.0
    %3185 = vmatprep.subr.mxu0 0.0
    %3186 = vmatpush1.msra.mxu0 0.0
    %3187 = vmatprep.subr.mxu0 0.0
    %3188 = vmatpush1.msra.mxu0 0.0
    %3189 = vmatprep.subr.mxu0 0.0
    %3190 = vmatpush1.msra.mxu0 0.0
    %3191 = vmatprep.subr.mxu0 0.0
    %3192 = vmatpush1.msra.mxu0 0.0
    %3193 = vmatprep.subr.mxu0 0.0
    %3194 = vmatpush1.msra.mxu0 0.0
    %3195 = vmatprep.subr.mxu0 0.0
    %3196 = vmatpush1.msra.mxu0 0.0
    %3197 = vmatprep.subr.mxu0 0.0
    %3198 = vmatpush1.msra.mxu0 0.0
    %3199 = vmatprep.subr.mxu0 0.0
    %3200 = vmatpush1.msra.mxu0 0.0
    %3201 = vmatprep.subr.mxu0 0.0
    %3202 = vmatpush1.msra.mxu0 0.0
    %3203 = vmatprep.subr.mxu0 0.0
    %3204 = vmatpush1.msra.mxu0 0.0
    %3205 = vmatprep.subr.mxu0 0.0
    %3206 = vmatpush1.msra.mxu0 0.0
    %3207 = vmatprep.subr.mxu0 0.0
    %3208 = vmatpush1.msra.mxu0 0.0
    %3209 = vmatprep.subr.mxu0 0.0
    %3210 = vmatpush1.msra.mxu0 0.0
    %3211 = vmatprep.subr.mxu0 0.0
    %3212 = vmatpush1.msra.mxu0 0.0
    %3213 = vmatprep.subr.mxu0 0.0
    %3214 = vmatpush1.msra.mxu0 0.0
    %3215 = vmatprep.subr.mxu0 0.0
    %3216 = vmatpush1.msra.mxu0 0.0
    %3217 = vmatprep.subr.mxu0 0.0
    %3218 = vmatpush1.msra.mxu0 0.0
    %3219 = vmatprep.mubr.f32.mxu0 0.0
    %3220 = vmatmul.mubr.f32.gmra.mrb[0].mxu0 %v66
    %v3221 = vpop.f32.mrb[0].mxu0
    %v3222 = vadd.f32 %v57, %v3221
    %v3223 = vpop.f32.mrb[0].mxu0
    %3224 = vmatprep.mubr.f32.mxu0 0.0
    %3225 = vmatmul.mubr.f32.gmra.mrb[0].mxu0 %v69
    %v3226 = vpop.f32.mrb[0].mxu0
    %v3227 = vadd.f32 %v62, %v3226
    %v3228 = vpop.f32.mrb[0].mxu0
    %3229 = vdwg.mxu0
    %v3230 = vmax.f32 %v3222, 0.0
    %v3231 = vmax.f32 %v3227, 0.0
    %s3232 = scalar_lea.vmem %s3, 512
    %v3233 = vld [vmem:[%s3232] sm:$0xff]
    %v3234 = vld [vmem:[%s3232 + $0x8] sm:$0xff]
    %v3235 = vld [vmem:[%s3232 + $0x10] sm:$0xff]
    %v3236 = vld [vmem:[%s3232 + $0x18] sm:$0xff]
    %v3238 = vsel %vm248, %v3233, 0
    %v3241 = vsel %vm248, %v3234, 0
    %v3244 = vsel %vm248, %v3235, 0
    %v3247 = vsel %vm248, %v3236, 0
    %3249 = vmatprep.subr.mxu0 0.0
    %3250 = vmatpush1.msra.mxu0 %v3230
    %3251 = vmatprep.subr.mxu0 0.0
    %3252 = vmatpush1.msra.mxu0 %v3231
    %3253 = vmatprep.subr.mxu0 0.0
    %3254 = vmatpush1.msra.mxu0 0.0
    %3255 = vmatprep.subr.mxu0 0.0
    %3256 = vmatpush1.msra.mxu0 0.0
    %3257 = vmatprep.subr.mxu0 0.0
    %3258 = vmatpush1.msra.mxu0 0.0
    %3259 = vmatprep.subr.mxu0 0.0
    %3260 = vmatpush1.msra.mxu0 0.0
    %3261 = vmatprep.subr.mxu0 0.0
    %3262 = vmatpush1.msra.mxu0 0.0
    %3263 = vmatprep.subr.mxu0 0.0
    %3264 = vmatpush1.msra.mxu0 0.0
    %3265 = vmatprep.subr.mxu0 0.0
    %3266 = vmatpush1.msra.mxu0 0.0
    %3267 = vmatprep.subr.mxu0 0.0
    %3268 = vmatpush1.msra.mxu0 0.0
    %3269 = vmatprep.subr.mxu0 0.0
    %3270 = vmatpush1.msra.mxu0 0.0
    %3271 = vmatprep.subr.mxu0 0.0
    %3272 = vmatpush1.msra.mxu0 0.0
    %3273 = vmatprep.subr.mxu0 0.0
    %3274 = vmatpush1.msra.mxu0 0.0
    %3275 = vmatprep.subr.mxu0 0.0
    %3276 = vmatpush1.msra.mxu0 0.0
    %3277 = vmatprep.subr.mxu0 0.0
    %3278 = vmatpush1.msra.mxu0 0.0
    %3279 = vmatprep.subr.mxu0 0.0
    %3280 = vmatpush1.msra.mxu0 0.0
    %3281 = vmatprep.subr.mxu0 0.0
    %3282 = vmatpush1.msra.mxu0 0.0
    %3283 = vmatprep.subr.mxu0 0.0
    %3284 = vmatpush1.msra.mxu0 0.0
    %3285 = vmatprep.subr.mxu0 0.0
    %3286 = vmatpush1.msra.mxu0 0.0
    %3287 = vmatprep.subr.mxu0 0.0
    %3288 = vmatpush1.msra.mxu0 0.0
    %3289 = vmatprep.subr.mxu0 0.0
    %3290 = vmatpush1.msra.mxu0 0.0
    %3291 = vmatprep.subr.mxu0 0.0
    %3292 = vmatpush1.msra.mxu0 0.0
    %3293 = vmatprep.subr.mxu0 0.0
    %3294 = vmatpush1.msra.mxu0 0.0
    %3295 = vmatprep.subr.mxu0 0.0
    %3296 = vmatpush1.msra.mxu0 0.0
    %3297 = vmatprep.subr.mxu0 0.0
    %3298 = vmatpush1.msra.mxu0 0.0
    %3299 = vmatprep.subr.mxu0 0.0
    %3300 = vmatpush1.msra.mxu0 0.0
    %3301 = vmatprep.subr.mxu0 0.0
    %3302 = vmatpush1.msra.mxu0 0.0
    %3303 = vmatprep.subr.mxu0 0.0
    %3304 = vmatpush1.msra.mxu0 0.0
    %3305 = vmatprep.subr.mxu0 0.0
    %3306 = vmatpush1.msra.mxu0 0.0
    %3307 = vmatprep.subr.mxu0 0.0
    %3308 = vmatpush1.msra.mxu0 0.0
    %3309 = vmatprep.subr.mxu0 0.0
    %3310 = vmatpush1.msra.mxu0 0.0
    %3311 = vmatprep.subr.mxu0 0.0
    %3312 = vmatpush1.msra.mxu0 0.0
    %3313 = vmatprep.mubr.f32.mxu0 0.0
    %3314 = vmatmul.mubr.f32.gmra.mrb[0].mxu0 %v3238
    %v3315 = vpop.f32.mrb[0].mxu0
    %v3316 = vadd.f32 0.0, %v3315
    %v3317 = vpop.f32.mrb[0].mxu0
    %3318 = vmatprep.mubr.f32.mxu0 0.0
    %3319 = vmatmul.mubr.f32.gmra.mrb[0].mxu0 %v3241
    %v3320 = vpop.f32.mrb[0].mxu0
    %v3321 = vadd.f32 0.0, %v3320
    %v3322 = vpop.f32.mrb[0].mxu0
    %3323 = vmatprep.mubr.f32.mxu0 0.0
    %3324 = vmatmul.mubr.f32.gmra.mrb[0].mxu0 %v3244
    %v3325 = vpop.f32.mrb[0].mxu0
    %v3326 = vadd.f32 0.0, %v3325
    %v3327 = vpop.f32.mrb[0].mxu0
    %3328 = vmatprep.mubr.f32.mxu0 0.0
    %3329 = vmatmul.mubr.f32.gmra.mrb[0].mxu0 %v3247
    %v3330 = vpop.f32.mrb[0].mxu0
    %v3331 = vadd.f32 0.0, %v3330
    %v3332 = vpop.f32.mrb[0].mxu0
    %3333 = vdwg.mxu0
    %v3334 = vadd.f32 %v3141, %v3316
    %v3335 = vadd.f32 %v3142, %v3321
    %v3336 = vadd.f32 %v3143, %v3326
    %v3337 = vadd.f32 %v3144, %v3331
    %v3338 = vld [vmem:[%s0 + $0x88] sm:$0xff]
    %v3339 = vld [vmem:[%s0 + $0x160] sm:$0xff]
    %v3340 = vld [vmem:[%s0 + $0x238] sm:$0xff]
    %v3341 = vld [vmem:[%s0 + $0x310] sm:$0xff]
    %v3342 = vld [vmem:[%s0 + $0x3e8] sm:$0xff]
    %v3343 = vld [vmem:[%s0 + $0x4c0] sm:$0xff]
    %v3344 = vld [vmem:[%s0 + $0x598] sm:$0x3f]
    %v3346 = vsel %vm71, %v3344, 0
    %3348 = vmatprep.subr.mxu0 0.0
    %3349 = vmatpush1.msra.mxu0 %v3338
    %3350 = vmatprep.subr.mxu0 0.0
    %3351 = vmatpush1.msra.mxu0 %v3339
    %3352 = vmatprep.subr.mxu0 0.0
    %3353 = vmatpush1.msra.mxu0 %v3340
    %3354 = vmatprep.subr.mxu0 0.0
    %3355 = vmatpush1.msra.mxu0 %v3341
    %3356 = vmatprep.subr.mxu0 0.0
    %3357 = vmatpush1.msra.mxu0 %v3342
    %3358 = vmatprep.subr.mxu0 0.0
    %3359 = vmatpush1.msra.mxu0 %v3343
    %3360 = vmatprep.subr.mxu0 0.0
    %3361 = vmatpush1.msra.mxu0 %v3346
    %3362 = vmatprep.subr.mxu0 0.0
    %3363 = vmatpush1.msra.mxu0 0.0
    %3364 = vmatprep.subr.mxu0 0.0
    %3365 = vmatpush1.msra.mxu0 0.0
    %3366 = vmatprep.subr.mxu0 0.0
    %3367 = vmatpush1.msra.mxu0 0.0
    %3368 = vmatprep.subr.mxu0 0.0
    %3369 = vmatpush1.msra.mxu0 0.0
    %3370 = vmatprep.subr.mxu0 0.0
    %3371 = vmatpush1.msra.mxu0 0.0
    %3372 = vmatprep.subr.mxu0 0.0
    %3373 = vmatpush1.msra.mxu0 0.0
    %3374 = vmatprep.subr.mxu0 0.0
    %3375 = vmatpush1.msra.mxu0 0.0
    %3376 = vmatprep.subr.mxu0 0.0
    %3377 = vmatpush1.msra.mxu0 0.0
    %3378 = vmatprep.subr.mxu0 0.0
    %3379 = vmatpush1.msra.mxu0 0.0
    %3380 = vmatprep.subr.mxu0 0.0
    %3381 = vmatpush1.msra.mxu0 0.0
    %3382 = vmatprep.subr.mxu0 0.0
    %3383 = vmatpush1.msra.mxu0 0.0
    %3384 = vmatprep.subr.mxu0 0.0
    %3385 = vmatpush1.msra.mxu0 0.0
    %3386 = vmatprep.subr.mxu0 0.0
    %3387 = vmatpush1.msra.mxu0 0.0
    %3388 = vmatprep.subr.mxu0 0.0
    %3389 = vmatpush1.msra.mxu0 0.0
    %3390 = vmatprep.subr.mxu0 0.0
    %3391 = vmatpush1.msra.mxu0 0.0
    %3392 = vmatprep.subr.mxu0 0.0
    %3393 = vmatpush1.msra.mxu0 0.0
    %3394 = vmatprep.subr.mxu0 0.0
    %3395 = vmatpush1.msra.mxu0 0.0
    %3396 = vmatprep.subr.mxu0 0.0
    %3397 = vmatpush1.msra.mxu0 0.0
    %3398 = vmatprep.subr.mxu0 0.0
    %3399 = vmatpush1.msra.mxu0 0.0
    %3400 = vmatprep.subr.mxu0 0.0
    %3401 = vmatpush1.msra.mxu0 0.0
    %3402 = vmatprep.subr.mxu0 0.0
    %3403 = vmatpush1.msra.mxu0 0.0
    %3404 = vmatprep.subr.mxu0 0.0
    %3405 = vmatpush1.msra.mxu0 0.0
    %3406 = vmatprep.subr.mxu0 0.0
    %3407 = vmatpush1.msra.mxu0 0.0
    %3408 = vmatprep.subr.mxu0 0.0
    %3409 = vmatpush1.msra.mxu0 0.0
    %3410 = vmatprep.subr.mxu0 0.0
    %3411 = vmatpush1.msra.mxu0 0.0
    %3412 = vmatprep.mubr.f32.mxu0 0.0
    %3413 = vmatmul.mubr.f32.gmra.mrb[0].mxu0 %v66
    %v3414 = vpop.f32.mrb[0].mxu0
    %v3415 = vadd.f32 %v57, %v3414
    %v3416 = vpop.f32.mrb[0].mxu0
    %3417 = vmatprep.mubr.f32.mxu0 0.0
    %3418 = vmatmul.mubr.f32.gmra.mrb[0].mxu0 %v69
    %v3419 = vpop.f32.mrb[0].mxu0
    %v3420 = vadd.f32 %v62, %v3419
    %v3421 = vpop.f32.mrb[0].mxu0
    %3422 = vdwg.mxu0
    %v3423 = vmax.f32 %v3415, 0.0
    %v3424 = vmax.f32 %v3420, 0.0
    %s3425 = scalar_lea.vmem %s3, 544
    %v3426 = vld [vmem:[%s3425] sm:$0xff]
    %v3427 = vld [vmem:[%s3425 + $0x8] sm:$0xff]
    %v3428 = vld [vmem:[%s3425 + $0x10] sm:$0xff]
    %v3429 = vld [vmem:[%s3425 + $0x18] sm:$0xff]
    %v3431 = vsel %vm248, %v3426, 0
    %v3434 = vsel %vm248, %v3427, 0
    %v3437 = vsel %vm248, %v3428, 0
    %v3440 = vsel %vm248, %v3429, 0
    %3442 = vmatprep.subr.mxu0 0.0
    %3443 = vmatpush1.msra.mxu0 %v3423
    %3444 = vmatprep.subr.mxu0 0.0
    %3445 = vmatpush1.msra.mxu0 %v3424
    %3446 = vmatprep.subr.mxu0 0.0
    %3447 = vmatpush1.msra.mxu0 0.0
    %3448 = vmatprep.subr.mxu0 0.0
    %3449 = vmatpush1.msra.mxu0 0.0
    %3450 = vmatprep.subr.mxu0 0.0
    %3451 = vmatpush1.msra.mxu0 0.0
    %3452 = vmatprep.subr.mxu0 0.0
    %3453 = vmatpush1.msra.mxu0 0.0
    %3454 = vmatprep.subr.mxu0 0.0
    %3455 = vmatpush1.msra.mxu0 0.0
    %3456 = vmatprep.subr.mxu0 0.0
    %3457 = vmatpush1.msra.mxu0 0.0
    %3458 = vmatprep.subr.mxu0 0.0
    %3459 = vmatpush1.msra.mxu0 0.0
    %3460 = vmatprep.subr.mxu0 0.0
    %3461 = vmatpush1.msra.mxu0 0.0
    %3462 = vmatprep.subr.mxu0 0.0
    %3463 = vmatpush1.msra.mxu0 0.0
    %3464 = vmatprep.subr.mxu0 0.0
    %3465 = vmatpush1.msra.mxu0 0.0
    %3466 = vmatprep.subr.mxu0 0.0
    %3467 = vmatpush1.msra.mxu0 0.0
    %3468 = vmatprep.subr.mxu0 0.0
    %3469 = vmatpush1.msra.mxu0 0.0
    %3470 = vmatprep.subr.mxu0 0.0
    %3471 = vmatpush1.msra.mxu0 0.0
    %3472 = vmatprep.subr.mxu0 0.0
    %3473 = vmatpush1.msra.mxu0 0.0
    %3474 = vmatprep.subr.mxu0 0.0
    %3475 = vmatpush1.msra.mxu0 0.0
    %3476 = vmatprep.subr.mxu0 0.0
    %3477 = vmatpush1.msra.mxu0 0.0
    %3478 = vmatprep.subr.mxu0 0.0
    %3479 = vmatpush1.msra.mxu0 0.0
    %3480 = vmatprep.subr.mxu0 0.0
    %3481 = vmatpush1.msra.mxu0 0.0
    %3482 = vmatprep.subr.mxu0 0.0
    %3483 = vmatpush1.msra.mxu0 0.0
    %3484 = vmatprep.subr.mxu0 0.0
    %3485 = vmatpush1.msra.mxu0 0.0
    %3486 = vmatprep.subr.mxu0 0.0
    %3487 = vmatpush1.msra.mxu0 0.0
    %3488 = vmatprep.subr.mxu0 0.0
    %3489 = vmatpush1.msra.mxu0 0.0
    %3490 = vmatprep.subr.mxu0 0.0
    %3491 = vmatpush1.msra.mxu0 0.0
    %3492 = vmatprep.subr.mxu0 0.0
    %3493 = vmatpush1.msra.mxu0 0.0
    %3494 = vmatprep.subr.mxu0 0.0
    %3495 = vmatpush1.msra.mxu0 0.0
    %3496 = vmatprep.subr.mxu0 0.0
    %3497 = vmatpush1.msra.mxu0 0.0
    %3498 = vmatprep.subr.mxu0 0.0
    %3499 = vmatpush1.msra.mxu0 0.0
    %3500 = vmatprep.subr.mxu0 0.0
    %3501 = vmatpush1.msra.mxu0 0.0
    %3502 = vmatprep.subr.mxu0 0.0
    %3503 = vmatpush1.msra.mxu0 0.0
    %3504 = vmatprep.subr.mxu0 0.0
    %3505 = vmatpush1.msra.mxu0 0.0
    %3506 = vmatprep.mubr.f32.mxu0 0.0
    %3507 = vmatmul.mubr.f32.gmra.mrb[0].mxu0 %v3431
    %v3508 = vpop.f32.mrb[0].mxu0
    %v3509 = vadd.f32 0.0, %v3508
    %v3510 = vpop.f32.mrb[0].mxu0
    %3511 = vmatprep.mubr.f32.mxu0 0.0
    %3512 = vmatmul.mubr.f32.gmra.mrb[0].mxu0 %v3434
    %v3513 = vpop.f32.mrb[0].mxu0
    %v3514 = vadd.f32 0.0, %v3513
    %v3515 = vpop.f32.mrb[0].mxu0
    %3516 = vmatprep.mubr.f32.mxu0 0.0
    %3517 = vmatmul.mubr.f32.gmra.mrb[0].mxu0 %v3437
    %v3518 = vpop.f32.mrb[0].mxu0
    %v3519 = vadd.f32 0.0, %v3518
    %v3520 = vpop.f32.mrb[0].mxu0
    %3521 = vmatprep.mubr.f32.mxu0 0.0
    %3522 = vmatmul.mubr.f32.gmra.mrb[0].mxu0 %v3440
    %v3523 = vpop.f32.mrb[0].mxu0
    %v3524 = vadd.f32 0.0, %v3523
    %v3525 = vpop.f32.mrb[0].mxu0
    %3526 = vdwg.mxu0
    %v3527 = vadd.f32 %v3334, %v3509
    %v3528 = vadd.f32 %v3335, %v3514
    %v3529 = vadd.f32 %v3336, %v3519
    %v3530 = vadd.f32 %v3337, %v3524
    %v3531 = vld [vmem:[%s0 + $0x90] sm:$0xff]
    %v3532 = vld [vmem:[%s0 + $0x168] sm:$0xff]
    %v3533 = vld [vmem:[%s0 + $0x240] sm:$0xff]
    %v3534 = vld [vmem:[%s0 + $0x318] sm:$0xff]
    %v3535 = vld [vmem:[%s0 + $0x3f0] sm:$0xff]
    %v3536 = vld [vmem:[%s0 + $0x4c8] sm:$0xff]
    %v3537 = vld [vmem:[%s0 + $0x5a0] sm:$0x3f]
    %v3539 = vsel %vm71, %v3537, 0
    %3541 = vmatprep.subr.mxu0 0.0
    %3542 = vmatpush1.msra.mxu0 %v3531
    %3543 = vmatprep.subr.mxu0 0.0
    %3544 = vmatpush1.msra.mxu0 %v3532
    %3545 = vmatprep.subr.mxu0 0.0
    %3546 = vmatpush1.msra.mxu0 %v3533
    %3547 = vmatprep.subr.mxu0 0.0
    %3548 = vmatpush1.msra.mxu0 %v3534
    %3549 = vmatprep.subr.mxu0 0.0
    %3550 = vmatpush1.msra.mxu0 %v3535
    %3551 = vmatprep.subr.mxu0 0.0
    %3552 = vmatpush1.msra.mxu0 %v3536
    %3553 = vmatprep.subr.mxu0 0.0
    %3554 = vmatpush1.msra.mxu0 %v3539
    %3555 = vmatprep.subr.mxu0 0.0
    %3556 = vmatpush1.msra.mxu0 0.0
    %3557 = vmatprep.subr.mxu0 0.0
    %3558 = vmatpush1.msra.mxu0 0.0
    %3559 = vmatprep.subr.mxu0 0.0
    %3560 = vmatpush1.msra.mxu0 0.0
    %3561 = vmatprep.subr.mxu0 0.0
    %3562 = vmatpush1.msra.mxu0 0.0
    %3563 = vmatprep.subr.mxu0 0.0
    %3564 = vmatpush1.msra.mxu0 0.0
    %3565 = vmatprep.subr.mxu0 0.0
    %3566 = vmatpush1.msra.mxu0 0.0
    %3567 = vmatprep.subr.mxu0 0.0
    %3568 = vmatpush1.msra.mxu0 0.0
    %3569 = vmatprep.subr.mxu0 0.0
    %3570 = vmatpush1.msra.mxu0 0.0
    %3571 = vmatprep.subr.mxu0 0.0
    %3572 = vmatpush1.msra.mxu0 0.0
    %3573 = vmatprep.subr.mxu0 0.0
    %3574 = vmatpush1.msra.mxu0 0.0
    %3575 = vmatprep.subr.mxu0 0.0
    %3576 = vmatpush1.msra.mxu0 0.0
    %3577 = vmatprep.subr.mxu0 0.0
    %3578 = vmatpush1.msra.mxu0 0.0
    %3579 = vmatprep.subr.mxu0 0.0
    %3580 = vmatpush1.msra.mxu0 0.0
    %3581 = vmatprep.subr.mxu0 0.0
    %3582 = vmatpush1.msra.mxu0 0.0
    %3583 = vmatprep.subr.mxu0 0.0
    %3584 = vmatpush1.msra.mxu0 0.0
    %3585 = vmatprep.subr.mxu0 0.0
    %3586 = vmatpush1.msra.mxu0 0.0
    %3587 = vmatprep.subr.mxu0 0.0
    %3588 = vmatpush1.msra.mxu0 0.0
    %3589 = vmatprep.subr.mxu0 0.0
    %3590 = vmatpush1.msra.mxu0 0.0
    %3591 = vmatprep.subr.mxu0 0.0
    %3592 = vmatpush1.msra.mxu0 0.0
    %3593 = vmatprep.subr.mxu0 0.0
    %3594 = vmatpush1.msra.mxu0 0.0
    %3595 = vmatprep.subr.mxu0 0.0
    %3596 = vmatpush1.msra.mxu0 0.0
    %3597 = vmatprep.subr.mxu0 0.0
    %3598 = vmatpush1.msra.mxu0 0.0
    %3599 = vmatprep.subr.mxu0 0.0
    %3600 = vmatpush1.msra.mxu0 0.0
    %3601 = vmatprep.subr.mxu0 0.0
    %3602 = vmatpush1.msra.mxu0 0.0
    %3603 = vmatprep.subr.mxu0 0.0
    %3604 = vmatpush1.msra.mxu0 0.0
    %3605 = vmatprep.mubr.f32.mxu0 0.0
    %3606 = vmatmul.mubr.f32.gmra.mrb[0].mxu0 %v66
    %v3607 = vpop.f32.mrb[0].mxu0
    %v3608 = vadd.f32 %v57, %v3607
    %v3609 = vpop.f32.mrb[0].mxu0
    %3610 = vmatprep.mubr.f32.mxu0 0.0
    %3611 = vmatmul.mubr.f32.gmra.mrb[0].mxu0 %v69
    %v3612 = vpop.f32.mrb[0].mxu0
    %v3613 = vadd.f32 %v62, %v3612
    %v3614 = vpop.f32.mrb[0].mxu0
    %3615 = vdwg.mxu0
    %v3616 = vmax.f32 %v3608, 0.0
    %v3617 = vmax.f32 %v3613, 0.0
    %s3618 = scalar_lea.vmem %s3, 576
    %v3619 = vld [vmem:[%s3618] sm:$0xff]
    %v3620 = vld [vmem:[%s3618 + $0x8] sm:$0xff]
    %v3621 = vld [vmem:[%s3618 + $0x10] sm:$0xff]
    %v3622 = vld [vmem:[%s3618 + $0x18] sm:$0xff]
    %v3624 = vsel %vm248, %v3619, 0
    %v3627 = vsel %vm248, %v3620, 0
    %v3630 = vsel %vm248, %v3621, 0
    %v3633 = vsel %vm248, %v3622, 0
    %3635 = vmatprep.subr.mxu0 0.0
    %3636 = vmatpush1.msra.mxu0 %v3616
    %3637 = vmatprep.subr.mxu0 0.0
    %3638 = vmatpush1.msra.mxu0 %v3617
    %3639 = vmatprep.subr.mxu0 0.0
    %3640 = vmatpush1.msra.mxu0 0.0
    %3641 = vmatprep.subr.mxu0 0.0
    %3642 = vmatpush1.msra.mxu0 0.0
    %3643 = vmatprep.subr.mxu0 0.0
    %3644 = vmatpush1.msra.mxu0 0.0
    %3645 = vmatprep.subr.mxu0 0.0
    %3646 = vmatpush1.msra.mxu0 0.0
    %3647 = vmatprep.subr.mxu0 0.0
    %3648 = vmatpush1.msra.mxu0 0.0
    %3649 = vmatprep.subr.mxu0 0.0
    %3650 = vmatpush1.msra.mxu0 0.0
    %3651 = vmatprep.subr.mxu0 0.0
    %3652 = vmatpush1.msra.mxu0 0.0
    %3653 = vmatprep.subr.mxu0 0.0
    %3654 = vmatpush1.msra.mxu0 0.0
    %3655 = vmatprep.subr.mxu0 0.0
    %3656 = vmatpush1.msra.mxu0 0.0
    %3657 = vmatprep.subr.mxu0 0.0
    %3658 = vmatpush1.msra.mxu0 0.0
    %3659 = vmatprep.subr.mxu0 0.0
    %3660 = vmatpush1.msra.mxu0 0.0
    %3661 = vmatprep.subr.mxu0 0.0
    %3662 = vmatpush1.msra.mxu0 0.0
    %3663 = vmatprep.subr.mxu0 0.0
    %3664 = vmatpush1.msra.mxu0 0.0
    %3665 = vmatprep.subr.mxu0 0.0
    %3666 = vmatpush1.msra.mxu0 0.0
    %3667 = vmatprep.subr.mxu0 0.0
    %3668 = vmatpush1.msra.mxu0 0.0
    %3669 = vmatprep.subr.mxu0 0.0
    %3670 = vmatpush1.msra.mxu0 0.0
    %3671 = vmatprep.subr.mxu0 0.0
    %3672 = vmatpush1.msra.mxu0 0.0
    %3673 = vmatprep.subr.mxu0 0.0
    %3674 = vmatpush1.msra.mxu0 0.0
    %3675 = vmatprep.subr.mxu0 0.0
    %3676 = vmatpush1.msra.mxu0 0.0
    %3677 = vmatprep.subr.mxu0 0.0
    %3678 = vmatpush1.msra.mxu0 0.0
    %3679 = vmatprep.subr.mxu0 0.0
    %3680 = vmatpush1.msra.mxu0 0.0
    %3681 = vmatprep.subr.mxu0 0.0
    %3682 = vmatpush1.msra.mxu0 0.0
    %3683 = vmatprep.subr.mxu0 0.0
    %3684 = vmatpush1.msra.mxu0 0.0
    %3685 = vmatprep.subr.mxu0 0.0
    %3686 = vmatpush1.msra.mxu0 0.0
    %3687 = vmatprep.subr.mxu0 0.0
    %3688 = vmatpush1.msra.mxu0 0.0
    %3689 = vmatprep.subr.mxu0 0.0
    %3690 = vmatpush1.msra.mxu0 0.0
    %3691 = vmatprep.subr.mxu0 0.0
    %3692 = vmatpush1.msra.mxu0 0.0
    %3693 = vmatprep.subr.mxu0 0.0
    %3694 = vmatpush1.msra.mxu0 0.0
    %3695 = vmatprep.subr.mxu0 0.0
    %3696 = vmatpush1.msra.mxu0 0.0
    %3697 = vmatprep.subr.mxu0 0.0
    %3698 = vmatpush1.msra.mxu0 0.0
    %3699 = vmatprep.mubr.f32.mxu0 0.0
    %3700 = vmatmul.mubr.f32.gmra.mrb[0].mxu0 %v3624
    %v3701 = vpop.f32.mrb[0].mxu0
    %v3702 = vadd.f32 0.0, %v3701
    %v3703 = vpop.f32.mrb[0].mxu0
    %3704 = vmatprep.mubr.f32.mxu0 0.0
    %3705 = vmatmul.mubr.f32.gmra.mrb[0].mxu0 %v3627
    %v3706 = vpop.f32.mrb[0].mxu0
    %v3707 = vadd.f32 0.0, %v3706
    %v3708 = vpop.f32.mrb[0].mxu0
    %3709 = vmatprep.mubr.f32.mxu0 0.0
    %3710 = vmatmul.mubr.f32.gmra.mrb[0].mxu0 %v3630
    %v3711 = vpop.f32.mrb[0].mxu0
    %v3712 = vadd.f32 0.0, %v3711
    %v3713 = vpop.f32.mrb[0].mxu0
    %3714 = vmatprep.mubr.f32.mxu0 0.0
    %3715 = vmatmul.mubr.f32.gmra.mrb[0].mxu0 %v3633
    %v3716 = vpop.f32.mrb[0].mxu0
    %v3717 = vadd.f32 0.0, %v3716
    %v3718 = vpop.f32.mrb[0].mxu0
    %3719 = vdwg.mxu0
    %v3720 = vadd.f32 %v3527, %v3702
    %v3721 = vadd.f32 %v3528, %v3707
    %v3722 = vadd.f32 %v3529, %v3712
    %v3723 = vadd.f32 %v3530, %v3717
    %v3724 = vld [vmem:[%s0 + $0x98] sm:$0xff]
    %v3725 = vld [vmem:[%s0 + $0x170] sm:$0xff]
    %v3726 = vld [vmem:[%s0 + $0x248] sm:$0xff]
    %v3727 = vld [vmem:[%s0 + $0x320] sm:$0xff]
    %v3728 = vld [vmem:[%s0 + $0x3f8] sm:$0xff]
    %v3729 = vld [vmem:[%s0 + $0x4d0] sm:$0xff]
    %v3730 = vld [vmem:[%s0 + $0x5a8] sm:$0x3f]
    %v3732 = vsel %vm71, %v3730, 0
    %3734 = vmatprep.subr.mxu0 0.0
    %3735 = vmatpush1.msra.mxu0 %v3724
    %3736 = vmatprep.subr.mxu0 0.0
    %3737 = vmatpush1.msra.mxu0 %v3725
    %3738 = vmatprep.subr.mxu0 0.0
    %3739 = vmatpush1.msra.mxu0 %v3726
    %3740 = vmatprep.subr.mxu0 0.0
    %3741 = vmatpush1.msra.mxu0 %v3727
    %3742 = vmatprep.subr.mxu0 0.0
    %3743 = vmatpush1.msra.mxu0 %v3728
    %3744 = vmatprep.subr.mxu0 0.0
    %3745 = vmatpush1.msra.mxu0 %v3729
    %3746 = vmatprep.subr.mxu0 0.0
    %3747 = vmatpush1.msra.mxu0 %v3732
    %3748 = vmatprep.subr.mxu0 0.0
    %3749 = vmatpush1.msra.mxu0 0.0
    %3750 = vmatprep.subr.mxu0 0.0
    %3751 = vmatpush1.msra.mxu0 0.0
    %3752 = vmatprep.subr.mxu0 0.0
    %3753 = vmatpush1.msra.mxu0 0.0
    %3754 = vmatprep.subr.mxu0 0.0
    %3755 = vmatpush1.msra.mxu0 0.0
    %3756 = vmatprep.subr.mxu0 0.0
    %3757 = vmatpush1.msra.mxu0 0.0
    %3758 = vmatprep.subr.mxu0 0.0
    %3759 = vmatpush1.msra.mxu0 0.0
    %3760 = vmatprep.subr.mxu0 0.0
    %3761 = vmatpush1.msra.mxu0 0.0
    %3762 = vmatprep.subr.mxu0 0.0
    %3763 = vmatpush1.msra.mxu0 0.0
    %3764 = vmatprep.subr.mxu0 0.0
    %3765 = vmatpush1.msra.mxu0 0.0
    %3766 = vmatprep.subr.mxu0 0.0
    %3767 = vmatpush1.msra.mxu0 0.0
    %3768 = vmatprep.subr.mxu0 0.0
    %3769 = vmatpush1.msra.mxu0 0.0
    %3770 = vmatprep.subr.mxu0 0.0
    %3771 = vmatpush1.msra.mxu0 0.0
    %3772 = vmatprep.subr.mxu0 0.0
    %3773 = vmatpush1.msra.mxu0 0.0
    %3774 = vmatprep.subr.mxu0 0.0
    %3775 = vmatpush1.msra.mxu0 0.0
    %3776 = vmatprep.subr.mxu0 0.0
    %3777 = vmatpush1.msra.mxu0 0.0
    %3778 = vmatprep.subr.mxu0 0.0
    %3779 = vmatpush1.msra.mxu0 0.0
    %3780 = vmatprep.subr.mxu0 0.0
    %3781 = vmatpush1.msra.mxu0 0.0
    %3782 = vmatprep.subr.mxu0 0.0
    %3783 = vmatpush1.msra.mxu0 0.0
    %3784 = vmatprep.subr.mxu0 0.0
    %3785 = vmatpush1.msra.mxu0 0.0
    %3786 = vmatprep.subr.mxu0 0.0
    %3787 = vmatpush1.msra.mxu0 0.0
    %3788 = vmatprep.subr.mxu0 0.0
    %3789 = vmatpush1.msra.mxu0 0.0
    %3790 = vmatprep.subr.mxu0 0.0
    %3791 = vmatpush1.msra.mxu0 0.0
    %3792 = vmatprep.subr.mxu0 0.0
    %3793 = vmatpush1.msra.mxu0 0.0
    %3794 = vmatprep.subr.mxu0 0.0
    %3795 = vmatpush1.msra.mxu0 0.0
    %3796 = vmatprep.subr.mxu0 0.0
    %3797 = vmatpush1.msra.mxu0 0.0
    %3798 = vmatprep.mubr.f32.mxu0 0.0
    %3799 = vmatmul.mubr.f32.gmra.mrb[0].mxu0 %v66
    %v3800 = vpop.f32.mrb[0].mxu0
    %v3801 = vadd.f32 %v57, %v3800
    %v3802 = vpop.f32.mrb[0].mxu0
    %3803 = vmatprep.mubr.f32.mxu0 0.0
    %3804 = vmatmul.mubr.f32.gmra.mrb[0].mxu0 %v69
    %v3805 = vpop.f32.mrb[0].mxu0
    %v3806 = vadd.f32 %v62, %v3805
    %v3807 = vpop.f32.mrb[0].mxu0
    %3808 = vdwg.mxu0
    %v3809 = vmax.f32 %v3801, 0.0
    %v3810 = vmax.f32 %v3806, 0.0
    %s3811 = scalar_lea.vmem %s3, 608
    %v3812 = vld [vmem:[%s3811] sm:$0xff]
    %v3813 = vld [vmem:[%s3811 + $0x8] sm:$0xff]
    %v3814 = vld [vmem:[%s3811 + $0x10] sm:$0xff]
    %v3815 = vld [vmem:[%s3811 + $0x18] sm:$0xff]
    %v3817 = vsel %vm248, %v3812, 0
    %v3820 = vsel %vm248, %v3813, 0
    %v3823 = vsel %vm248, %v3814, 0
    %v3826 = vsel %vm248, %v3815, 0
    %3828 = vmatprep.subr.mxu0 0.0
    %3829 = vmatpush1.msra.mxu0 %v3809
    %3830 = vmatprep.subr.mxu0 0.0
    %3831 = vmatpush1.msra.mxu0 %v3810
    %3832 = vmatprep.subr.mxu0 0.0
    %3833 = vmatpush1.msra.mxu0 0.0
    %3834 = vmatprep.subr.mxu0 0.0
    %3835 = vmatpush1.msra.mxu0 0.0
    %3836 = vmatprep.subr.mxu0 0.0
    %3837 = vmatpush1.msra.mxu0 0.0
    %3838 = vmatprep.subr.mxu0 0.0
    %3839 = vmatpush1.msra.mxu0 0.0
    %3840 = vmatprep.subr.mxu0 0.0
    %3841 = vmatpush1.msra.mxu0 0.0
    %3842 = vmatprep.subr.mxu0 0.0
    %3843 = vmatpush1.msra.mxu0 0.0
    %3844 = vmatprep.subr.mxu0 0.0
    %3845 = vmatpush1.msra.mxu0 0.0
    %3846 = vmatprep.subr.mxu0 0.0
    %3847 = vmatpush1.msra.mxu0 0.0
    %3848 = vmatprep.subr.mxu0 0.0
    %3849 = vmatpush1.msra.mxu0 0.0
    %3850 = vmatprep.subr.mxu0 0.0
    %3851 = vmatpush1.msra.mxu0 0.0
    %3852 = vmatprep.subr.mxu0 0.0
    %3853 = vmatpush1.msra.mxu0 0.0
    %3854 = vmatprep.subr.mxu0 0.0
    %3855 = vmatpush1.msra.mxu0 0.0
    %3856 = vmatprep.subr.mxu0 0.0
    %3857 = vmatpush1.msra.mxu0 0.0
    %3858 = vmatprep.subr.mxu0 0.0
    %3859 = vmatpush1.msra.mxu0 0.0
    %3860 = vmatprep.subr.mxu0 0.0
    %3861 = vmatpush1.msra.mxu0 0.0
    %3862 = vmatprep.subr.mxu0 0.0
    %3863 = vmatpush1.msra.mxu0 0.0
    %3864 = vmatprep.subr.mxu0 0.0
    %3865 = vmatpush1.msra.mxu0 0.0
    %3866 = vmatprep.subr.mxu0 0.0
    %3867 = vmatpush1.msra.mxu0 0.0
    %3868 = vmatprep.subr.mxu0 0.0
    %3869 = vmatpush1.msra.mxu0 0.0
    %3870 = vmatprep.subr.mxu0 0.0
    %3871 = vmatpush1.msra.mxu0 0.0
    %3872 = vmatprep.subr.mxu0 0.0
    %3873 = vmatpush1.msra.mxu0 0.0
    %3874 = vmatprep.subr.mxu0 0.0
    %3875 = vmatpush1.msra.mxu0 0.0
    %3876 = vmatprep.subr.mxu0 0.0
    %3877 = vmatpush1.msra.mxu0 0.0
    %3878 = vmatprep.subr.mxu0 0.0
    %3879 = vmatpush1.msra.mxu0 0.0
    %3880 = vmatprep.subr.mxu0 0.0
    %3881 = vmatpush1.msra.mxu0 0.0
    %3882 = vmatprep.subr.mxu0 0.0
    %3883 = vmatpush1.msra.mxu0 0.0
    %3884 = vmatprep.subr.mxu0 0.0
    %3885 = vmatpush1.msra.mxu0 0.0
    %3886 = vmatprep.subr.mxu0 0.0
    %3887 = vmatpush1.msra.mxu0 0.0
    %3888 = vmatprep.subr.mxu0 0.0
    %3889 = vmatpush1.msra.mxu0 0.0
    %3890 = vmatprep.subr.mxu0 0.0
    %3891 = vmatpush1.msra.mxu0 0.0
    %3892 = vmatprep.mubr.f32.mxu0 0.0
    %3893 = vmatmul.mubr.f32.gmra.mrb[0].mxu0 %v3817
    %v3894 = vpop.f32.mrb[0].mxu0
    %v3895 = vadd.f32 0.0, %v3894
    %v3896 = vpop.f32.mrb[0].mxu0
    %3897 = vmatprep.mubr.f32.mxu0 0.0
    %3898 = vmatmul.mubr.f32.gmra.mrb[0].mxu0 %v3820
    %v3899 = vpop.f32.mrb[0].mxu0
    %v3900 = vadd.f32 0.0, %v3899
    %v3901 = vpop.f32.mrb[0].mxu0
    %3902 = vmatprep.mubr.f32.mxu0 0.0
    %3903 = vmatmul.mubr.f32.gmra.mrb[0].mxu0 %v3823
    %v3904 = vpop.f32.mrb[0].mxu0
    %v3905 = vadd.f32 0.0, %v3904
    %v3906 = vpop.f32.mrb[0].mxu0
    %3907 = vmatprep.mubr.f32.mxu0 0.0
    %3908 = vmatmul.mubr.f32.gmra.mrb[0].mxu0 %v3826
    %v3909 = vpop.f32.mrb[0].mxu0
    %v3910 = vadd.f32 0.0, %v3909
    %v3911 = vpop.f32.mrb[0].mxu0
    %3912 = vdwg.mxu0
    %v3913 = vadd.f32 %v3720, %v3895
    %v3914 = vadd.f32 %v3721, %v3900
    %v3915 = vadd.f32 %v3722, %v3905
    %v3916 = vadd.f32 %v3723, %v3910
    %v3917 = vld [vmem:[%s0 + $0xa0] sm:$0xff]
    %v3918 = vld [vmem:[%s0 + $0x178] sm:$0xff]
    %v3919 = vld [vmem:[%s0 + $0x250] sm:$0xff]
    %v3920 = vld [vmem:[%s0 + $0x328] sm:$0xff]
    %v3921 = vld [vmem:[%s0 + $0x400] sm:$0xff]
    %v3922 = vld [vmem:[%s0 + $0x4d8] sm:$0xff]
    %v3923 = vld [vmem:[%s0 + $0x5b0] sm:$0x3f]
    %v3925 = vsel %vm71, %v3923, 0
    %3927 = vmatprep.subr.mxu0 0.0
    %3928 = vmatpush1.msra.mxu0 %v3917
    %3929 = vmatprep.subr.mxu0 0.0
    %3930 = vmatpush1.msra.mxu0 %v3918
    %3931 = vmatprep.subr.mxu0 0.0
    %3932 = vmatpush1.msra.mxu0 %v3919
    %3933 = vmatprep.subr.mxu0 0.0
    %3934 = vmatpush1.msra.mxu0 %v3920
    %3935 = vmatprep.subr.mxu0 0.0
    %3936 = vmatpush1.msra.mxu0 %v3921
    %3937 = vmatprep.subr.mxu0 0.0
    %3938 = vmatpush1.msra.mxu0 %v3922
    %3939 = vmatprep.subr.mxu0 0.0
    %3940 = vmatpush1.msra.mxu0 %v3925
    %3941 = vmatprep.subr.mxu0 0.0
    %3942 = vmatpush1.msra.mxu0 0.0
    %3943 = vmatprep.subr.mxu0 0.0
    %3944 = vmatpush1.msra.mxu0 0.0
    %3945 = vmatprep.subr.mxu0 0.0
    %3946 = vmatpush1.msra.mxu0 0.0
    %3947 = vmatprep.subr.mxu0 0.0
    %3948 = vmatpush1.msra.mxu0 0.0
    %3949 = vmatprep.subr.mxu0 0.0
    %3950 = vmatpush1.msra.mxu0 0.0
    %3951 = vmatprep.subr.mxu0 0.0
    %3952 = vmatpush1.msra.mxu0 0.0
    %3953 = vmatprep.subr.mxu0 0.0
    %3954 = vmatpush1.msra.mxu0 0.0
    %3955 = vmatprep.subr.mxu0 0.0
    %3956 = vmatpush1.msra.mxu0 0.0
    %3957 = vmatprep.subr.mxu0 0.0
    %3958 = vmatpush1.msra.mxu0 0.0
    %3959 = vmatprep.subr.mxu0 0.0
    %3960 = vmatpush1.msra.mxu0 0.0
    %3961 = vmatprep.subr.mxu0 0.0
    %3962 = vmatpush1.msra.mxu0 0.0
    %3963 = vmatprep.subr.mxu0 0.0
    %3964 = vmatpush1.msra.mxu0 0.0
    %3965 = vmatprep.subr.mxu0 0.0
    %3966 = vmatpush1.msra.mxu0 0.0
    %3967 = vmatprep.subr.mxu0 0.0
    %3968 = vmatpush1.msra.mxu0 0.0
    %3969 = vmatprep.subr.mxu0 0.0
    %3970 = vmatpush1.msra.mxu0 0.0
    %3971 = vmatprep.subr.mxu0 0.0
    %3972 = vmatpush1.msra.mxu0 0.0
    %3973 = vmatprep.subr.mxu0 0.0
    %3974 = vmatpush1.msra.mxu0 0.0
    %3975 = vmatprep.subr.mxu0 0.0
    %3976 = vmatpush1.msra.mxu0 0.0
    %3977 = vmatprep.subr.mxu0 0.0
    %3978 = vmatpush1.msra.mxu0 0.0
    %3979 = vmatprep.subr.mxu0 0.0
    %3980 = vmatpush1.msra.mxu0 0.0
    %3981 = vmatprep.subr.mxu0 0.0
    %3982 = vmatpush1.msra.mxu0 0.0
    %3983 = vmatprep.subr.mxu0 0.0
    %3984 = vmatpush1.msra.mxu0 0.0
    %3985 = vmatprep.subr.mxu0 0.0
    %3986 = vmatpush1.msra.mxu0 0.0
    %3987 = vmatprep.subr.mxu0 0.0
    %3988 = vmatpush1.msra.mxu0 0.0
    %3989 = vmatprep.subr.mxu0 0.0
    %3990 = vmatpush1.msra.mxu0 0.0
    %3991 = vmatprep.mubr.f32.mxu0 0.0
    %3992 = vmatmul.mubr.f32.gmra.mrb[0].mxu0 %v66
    %v3993 = vpop.f32.mrb[0].mxu0
    %v3994 = vadd.f32 %v57, %v3993
    %v3995 = vpop.f32.mrb[0].mxu0
    %3996 = vmatprep.mubr.f32.mxu0 0.0
    %3997 = vmatmul.mubr.f32.gmra.mrb[0].mxu0 %v69
    %v3998 = vpop.f32.mrb[0].mxu0
    %v3999 = vadd.f32 %v62, %v3998
    %v4000 = vpop.f32.mrb[0].mxu0
    %4001 = vdwg.mxu0
    %v4002 = vmax.f32 %v3994, 0.0
    %v4003 = vmax.f32 %v3999, 0.0
    %s4004 = scalar_lea.vmem %s3, 640
    %v4005 = vld [vmem:[%s4004] sm:$0xff]
    %v4006 = vld [vmem:[%s4004 + $0x8] sm:$0xff]
    %v4007 = vld [vmem:[%s4004 + $0x10] sm:$0xff]
    %v4008 = vld [vmem:[%s4004 + $0x18] sm:$0xff]
    %v4010 = vsel %vm248, %v4005, 0
    %v4013 = vsel %vm248, %v4006, 0
    %v4016 = vsel %vm248, %v4007, 0
    %v4019 = vsel %vm248, %v4008, 0
    %4021 = vmatprep.subr.mxu0 0.0
    %4022 = vmatpush1.msra.mxu0 %v4002
    %4023 = vmatprep.subr.mxu0 0.0
    %4024 = vmatpush1.msra.mxu0 %v4003
    %4025 = vmatprep.subr.mxu0 0.0
    %4026 = vmatpush1.msra.mxu0 0.0
    %4027 = vmatprep.subr.mxu0 0.0
    %4028 = vmatpush1.msra.mxu0 0.0
    %4029 = vmatprep.subr.mxu0 0.0
    %4030 = vmatpush1.msra.mxu0 0.0
    %4031 = vmatprep.subr.mxu0 0.0
    %4032 = vmatpush1.msra.mxu0 0.0
    %4033 = vmatprep.subr.mxu0 0.0
    %4034 = vmatpush1.msra.mxu0 0.0
    %4035 = vmatprep.subr.mxu0 0.0
    %4036 = vmatpush1.msra.mxu0 0.0
    %4037 = vmatprep.subr.mxu0 0.0
    %4038 = vmatpush1.msra.mxu0 0.0
    %4039 = vmatprep.subr.mxu0 0.0
    %4040 = vmatpush1.msra.mxu0 0.0
    %4041 = vmatprep.subr.mxu0 0.0
    %4042 = vmatpush1.msra.mxu0 0.0
    %4043 = vmatprep.subr.mxu0 0.0
    %4044 = vmatpush1.msra.mxu0 0.0
    %4045 = vmatprep.subr.mxu0 0.0
    %4046 = vmatpush1.msra.mxu0 0.0
    %4047 = vmatprep.subr.mxu0 0.0
    %4048 = vmatpush1.msra.mxu0 0.0
    %4049 = vmatprep.subr.mxu0 0.0
    %4050 = vmatpush1.msra.mxu0 0.0
    %4051 = vmatprep.subr.mxu0 0.0
    %4052 = vmatpush1.msra.mxu0 0.0
    %4053 = vmatprep.subr.mxu0 0.0
    %4054 = vmatpush1.msra.mxu0 0.0
    %4055 = vmatprep.subr.mxu0 0.0
    %4056 = vmatpush1.msra.mxu0 0.0
    %4057 = vmatprep.subr.mxu0 0.0
    %4058 = vmatpush1.msra.mxu0 0.0
    %4059 = vmatprep.subr.mxu0 0.0
    %4060 = vmatpush1.msra.mxu0 0.0
    %4061 = vmatprep.subr.mxu0 0.0
    %4062 = vmatpush1.msra.mxu0 0.0
    %4063 = vmatprep.subr.mxu0 0.0
    %4064 = vmatpush1.msra.mxu0 0.0
    %4065 = vmatprep.subr.mxu0 0.0
    %4066 = vmatpush1.msra.mxu0 0.0
    %4067 = vmatprep.subr.mxu0 0.0
    %4068 = vmatpush1.msra.mxu0 0.0
    %4069 = vmatprep.subr.mxu0 0.0
    %4070 = vmatpush1.msra.mxu0 0.0
    %4071 = vmatprep.subr.mxu0 0.0
    %4072 = vmatpush1.msra.mxu0 0.0
    %4073 = vmatprep.subr.mxu0 0.0
    %4074 = vmatpush1.msra.mxu0 0.0
    %4075 = vmatprep.subr.mxu0 0.0
    %4076 = vmatpush1.msra.mxu0 0.0
    %4077 = vmatprep.subr.mxu0 0.0
    %4078 = vmatpush1.msra.mxu0 0.0
    %4079 = vmatprep.subr.mxu0 0.0
    %4080 = vmatpush1.msra.mxu0 0.0
    %4081 = vmatprep.subr.mxu0 0.0
    %4082 = vmatpush1.msra.mxu0 0.0
    %4083 = vmatprep.subr.mxu0 0.0
    %4084 = vmatpush1.msra.mxu0 0.0
    %4085 = vmatprep.mubr.f32.mxu0 0.0
    %4086 = vmatmul.mubr.f32.gmra.mrb[0].mxu0 %v4010
    %v4087 = vpop.f32.mrb[0].mxu0
    %v4088 = vadd.f32 0.0, %v4087
    %v4089 = vpop.f32.mrb[0].mxu0
    %4090 = vmatprep.mubr.f32.mxu0 0.0
    %4091 = vmatmul.mubr.f32.gmra.mrb[0].mxu0 %v4013
    %v4092 = vpop.f32.mrb[0].mxu0
    %v4093 = vadd.f32 0.0, %v4092
    %v4094 = vpop.f32.mrb[0].mxu0
    %4095 = vmatprep.mubr.f32.mxu0 0.0
    %4096 = vmatmul.mubr.f32.gmra.mrb[0].mxu0 %v4016
    %v4097 = vpop.f32.mrb[0].mxu0
    %v4098 = vadd.f32 0.0, %v4097
    %v4099 = vpop.f32.mrb[0].mxu0
    %4100 = vmatprep.mubr.f32.mxu0 0.0
    %4101 = vmatmul.mubr.f32.gmra.mrb[0].mxu0 %v4019
    %v4102 = vpop.f32.mrb[0].mxu0
    %v4103 = vadd.f32 0.0, %v4102
    %v4104 = vpop.f32.mrb[0].mxu0
    %4105 = vdwg.mxu0
    %v4106 = vadd.f32 %v3913, %v4088
    %v4107 = vadd.f32 %v3914, %v4093
    %v4108 = vadd.f32 %v3915, %v4098
    %v4109 = vadd.f32 %v3916, %v4103
    %v4110 = vld [vmem:[%s0 + $0xa8] sm:$0xff]
    %v4111 = vld [vmem:[%s0 + $0x180] sm:$0xff]
    %v4112 = vld [vmem:[%s0 + $0x258] sm:$0xff]
    %v4113 = vld [vmem:[%s0 + $0x330] sm:$0xff]
    %v4114 = vld [vmem:[%s0 + $0x408] sm:$0xff]
    %v4115 = vld [vmem:[%s0 + $0x4e0] sm:$0xff]
    %v4116 = vld [vmem:[%s0 + $0x5b8] sm:$0x3f]
    %v4118 = vsel %vm71, %v4116, 0
    %4120 = vmatprep.subr.mxu0 0.0
    %4121 = vmatpush1.msra.mxu0 %v4110
    %4122 = vmatprep.subr.mxu0 0.0
    %4123 = vmatpush1.msra.mxu0 %v4111
    %4124 = vmatprep.subr.mxu0 0.0
    %4125 = vmatpush1.msra.mxu0 %v4112
    %4126 = vmatprep.subr.mxu0 0.0
    %4127 = vmatpush1.msra.mxu0 %v4113
    %4128 = vmatprep.subr.mxu0 0.0
    %4129 = vmatpush1.msra.mxu0 %v4114
    %4130 = vmatprep.subr.mxu0 0.0
    %4131 = vmatpush1.msra.mxu0 %v4115
    %4132 = vmatprep.subr.mxu0 0.0
    %4133 = vmatpush1.msra.mxu0 %v4118
    %4134 = vmatprep.subr.mxu0 0.0
    %4135 = vmatpush1.msra.mxu0 0.0
    %4136 = vmatprep.subr.mxu0 0.0
    %4137 = vmatpush1.msra.mxu0 0.0
    %4138 = vmatprep.subr.mxu0 0.0
    %4139 = vmatpush1.msra.mxu0 0.0
    %4140 = vmatprep.subr.mxu0 0.0
    %4141 = vmatpush1.msra.mxu0 0.0
    %4142 = vmatprep.subr.mxu0 0.0
    %4143 = vmatpush1.msra.mxu0 0.0
    %4144 = vmatprep.subr.mxu0 0.0
    %4145 = vmatpush1.msra.mxu0 0.0
    %4146 = vmatprep.subr.mxu0 0.0
    %4147 = vmatpush1.msra.mxu0 0.0
    %4148 = vmatprep.subr.mxu0 0.0
    %4149 = vmatpush1.msra.mxu0 0.0
    %4150 = vmatprep.subr.mxu0 0.0
    %4151 = vmatpush1.msra.mxu0 0.0
    %4152 = vmatprep.subr.mxu0 0.0
    %4153 = vmatpush1.msra.mxu0 0.0
    %4154 = vmatprep.subr.mxu0 0.0
    %4155 = vmatpush1.msra.mxu0 0.0
    %4156 = vmatprep.subr.mxu0 0.0
    %4157 = vmatpush1.msra.mxu0 0.0
    %4158 = vmatprep.subr.mxu0 0.0
    %4159 = vmatpush1.msra.mxu0 0.0
    %4160 = vmatprep.subr.mxu0 0.0
    %4161 = vmatpush1.msra.mxu0 0.0
    %4162 = vmatprep.subr.mxu0 0.0
    %4163 = vmatpush1.msra.mxu0 0.0
    %4164 = vmatprep.subr.mxu0 0.0
    %4165 = vmatpush1.msra.mxu0 0.0
    %4166 = vmatprep.subr.mxu0 0.0
    %4167 = vmatpush1.msra.mxu0 0.0
    %4168 = vmatprep.subr.mxu0 0.0
    %4169 = vmatpush1.msra.mxu0 0.0
    %4170 = vmatprep.subr.mxu0 0.0
    %4171 = vmatpush1.msra.mxu0 0.0
    %4172 = vmatprep.subr.mxu0 0.0
    %4173 = vmatpush1.msra.mxu0 0.0
    %4174 = vmatprep.subr.mxu0 0.0
    %4175 = vmatpush1.msra.mxu0 0.0
    %4176 = vmatprep.subr.mxu0 0.0
    %4177 = vmatpush1.msra.mxu0 0.0
    %4178 = vmatprep.subr.mxu0 0.0
    %4179 = vmatpush1.msra.mxu0 0.0
    %4180 = vmatprep.subr.mxu0 0.0
    %4181 = vmatpush1.msra.mxu0 0.0
    %4182 = vmatprep.subr.mxu0 0.0
    %4183 = vmatpush1.msra.mxu0 0.0
    %4184 = vmatprep.mubr.f32.mxu0 0.0
    %4185 = vmatmul.mubr.f32.gmra.mrb[0].mxu0 %v66
    %v4186 = vpop.f32.mrb[0].mxu0
    %v4187 = vadd.f32 %v57, %v4186
    %v4188 = vpop.f32.mrb[0].mxu0
    %4189 = vmatprep.mubr.f32.mxu0 0.0
    %4190 = vmatmul.mubr.f32.gmra.mrb[0].mxu0 %v69
    %v4191 = vpop.f32.mrb[0].mxu0
    %v4192 = vadd.f32 %v62, %v4191
    %v4193 = vpop.f32.mrb[0].mxu0
    %4194 = vdwg.mxu0
    %v4195 = vmax.f32 %v4187, 0.0
    %v4196 = vmax.f32 %v4192, 0.0
    %s4197 = scalar_lea.vmem %s3, 672
    %v4198 = vld [vmem:[%s4197] sm:$0xff]
    %v4199 = vld [vmem:[%s4197 + $0x8] sm:$0xff]
    %v4200 = vld [vmem:[%s4197 + $0x10] sm:$0xff]
    %v4201 = vld [vmem:[%s4197 + $0x18] sm:$0xff]
    %v4203 = vsel %vm248, %v4198, 0
    %v4206 = vsel %vm248, %v4199, 0
    %v4209 = vsel %vm248, %v4200, 0
    %v4212 = vsel %vm248, %v4201, 0
    %4214 = vmatprep.subr.mxu0 0.0
    %4215 = vmatpush1.msra.mxu0 %v4195
    %4216 = vmatprep.subr.mxu0 0.0
    %4217 = vmatpush1.msra.mxu0 %v4196
    %4218 = vmatprep.subr.mxu0 0.0
    %4219 = vmatpush1.msra.mxu0 0.0
    %4220 = vmatprep.subr.mxu0 0.0
    %4221 = vmatpush1.msra.mxu0 0.0
    %4222 = vmatprep.subr.mxu0 0.0
    %4223 = vmatpush1.msra.mxu0 0.0
    %4224 = vmatprep.subr.mxu0 0.0
    %4225 = vmatpush1.msra.mxu0 0.0
    %4226 = vmatprep.subr.mxu0 0.0
    %4227 = vmatpush1.msra.mxu0 0.0
    %4228 = vmatprep.subr.mxu0 0.0
    %4229 = vmatpush1.msra.mxu0 0.0
    %4230 = vmatprep.subr.mxu0 0.0
    %4231 = vmatpush1.msra.mxu0 0.0
    %4232 = vmatprep.subr.mxu0 0.0
    %4233 = vmatpush1.msra.mxu0 0.0
    %4234 = vmatprep.subr.mxu0 0.0
    %4235 = vmatpush1.msra.mxu0 0.0
    %4236 = vmatprep.subr.mxu0 0.0
    %4237 = vmatpush1.msra.mxu0 0.0
    %4238 = vmatprep.subr.mxu0 0.0
    %4239 = vmatpush1.msra.mxu0 0.0
    %4240 = vmatprep.subr.mxu0 0.0
    %4241 = vmatpush1.msra.mxu0 0.0
    %4242 = vmatprep.subr.mxu0 0.0
    %4243 = vmatpush1.msra.mxu0 0.0
    %4244 = vmatprep.subr.mxu0 0.0
    %4245 = vmatpush1.msra.mxu0 0.0
    %4246 = vmatprep.subr.mxu0 0.0
    %4247 = vmatpush1.msra.mxu0 0.0
    %4248 = vmatprep.subr.mxu0 0.0
    %4249 = vmatpush1.msra.mxu0 0.0
    %4250 = vmatprep.subr.mxu0 0.0
    %4251 = vmatpush1.msra.mxu0 0.0
    %4252 = vmatprep.subr.mxu0 0.0
    %4253 = vmatpush1.msra.mxu0 0.0
    %4254 = vmatprep.subr.mxu0 0.0
    %4255 = vmatpush1.msra.mxu0 0.0
    %4256 = vmatprep.subr.mxu0 0.0
    %4257 = vmatpush1.msra.mxu0 0.0
    %4258 = vmatprep.subr.mxu0 0.0
    %4259 = vmatpush1.msra.mxu0 0.0
    %4260 = vmatprep.subr.mxu0 0.0
    %4261 = vmatpush1.msra.mxu0 0.0
    %4262 = vmatprep.subr.mxu0 0.0
    %4263 = vmatpush1.msra.mxu0 0.0
    %4264 = vmatprep.subr.mxu0 0.0
    %4265 = vmatpush1.msra.mxu0 0.0
    %4266 = vmatprep.subr.mxu0 0.0
    %4267 = vmatpush1.msra.mxu0 0.0
    %4268 = vmatprep.subr.mxu0 0.0
    %4269 = vmatpush1.msra.mxu0 0.0
    %4270 = vmatprep.subr.mxu0 0.0
    %4271 = vmatpush1.msra.mxu0 0.0
    %4272 = vmatprep.subr.mxu0 0.0
    %4273 = vmatpush1.msra.mxu0 0.0
    %4274 = vmatprep.subr.mxu0 0.0
    %4275 = vmatpush1.msra.mxu0 0.0
    %4276 = vmatprep.subr.mxu0 0.0
    %4277 = vmatpush1.msra.mxu0 0.0
    %4278 = vmatprep.mubr.f32.mxu0 0.0
    %4279 = vmatmul.mubr.f32.gmra.mrb[0].mxu0 %v4203
    %v4280 = vpop.f32.mrb[0].mxu0
    %v4281 = vadd.f32 0.0, %v4280
    %v4282 = vpop.f32.mrb[0].mxu0
    %4283 = vmatprep.mubr.f32.mxu0 0.0
    %4284 = vmatmul.mubr.f32.gmra.mrb[0].mxu0 %v4206
    %v4285 = vpop.f32.mrb[0].mxu0
    %v4286 = vadd.f32 0.0, %v4285
    %v4287 = vpop.f32.mrb[0].mxu0
    %4288 = vmatprep.mubr.f32.mxu0 0.0
    %4289 = vmatmul.mubr.f32.gmra.mrb[0].mxu0 %v4209
    %v4290 = vpop.f32.mrb[0].mxu0
    %v4291 = vadd.f32 0.0, %v4290
    %v4292 = vpop.f32.mrb[0].mxu0
    %4293 = vmatprep.mubr.f32.mxu0 0.0
    %4294 = vmatmul.mubr.f32.gmra.mrb[0].mxu0 %v4212
    %v4295 = vpop.f32.mrb[0].mxu0
    %v4296 = vadd.f32 0.0, %v4295
    %v4297 = vpop.f32.mrb[0].mxu0
    %4298 = vdwg.mxu0
    %v4299 = vadd.f32 %v4106, %v4281
    %v4300 = vadd.f32 %v4107, %v4286
    %v4301 = vadd.f32 %v4108, %v4291
    %v4302 = vadd.f32 %v4109, %v4296
    %v4303 = vld [vmem:[%s0 + $0xb0] sm:$0xff]
    %v4304 = vld [vmem:[%s0 + $0x188] sm:$0xff]
    %v4305 = vld [vmem:[%s0 + $0x260] sm:$0xff]
    %v4306 = vld [vmem:[%s0 + $0x338] sm:$0xff]
    %v4307 = vld [vmem:[%s0 + $0x410] sm:$0xff]
    %v4308 = vld [vmem:[%s0 + $0x4e8] sm:$0xff]
    %v4309 = vld [vmem:[%s0 + $0x5c0] sm:$0x3f]
    %v4311 = vsel %vm71, %v4309, 0
    %4313 = vmatprep.subr.mxu0 0.0
    %4314 = vmatpush1.msra.mxu0 %v4303
    %4315 = vmatprep.subr.mxu0 0.0
    %4316 = vmatpush1.msra.mxu0 %v4304
    %4317 = vmatprep.subr.mxu0 0.0
    %4318 = vmatpush1.msra.mxu0 %v4305
    %4319 = vmatprep.subr.mxu0 0.0
    %4320 = vmatpush1.msra.mxu0 %v4306
    %4321 = vmatprep.subr.mxu0 0.0
    %4322 = vmatpush1.msra.mxu0 %v4307
    %4323 = vmatprep.subr.mxu0 0.0
    %4324 = vmatpush1.msra.mxu0 %v4308
    %4325 = vmatprep.subr.mxu0 0.0
    %4326 = vmatpush1.msra.mxu0 %v4311
    %4327 = vmatprep.subr.mxu0 0.0
    %4328 = vmatpush1.msra.mxu0 0.0
    %4329 = vmatprep.subr.mxu0 0.0
    %4330 = vmatpush1.msra.mxu0 0.0
    %4331 = vmatprep.subr.mxu0 0.0
    %4332 = vmatpush1.msra.mxu0 0.0
    %4333 = vmatprep.subr.mxu0 0.0
    %4334 = vmatpush1.msra.mxu0 0.0
    %4335 = vmatprep.subr.mxu0 0.0
    %4336 = vmatpush1.msra.mxu0 0.0
    %4337 = vmatprep.subr.mxu0 0.0
    %4338 = vmatpush1.msra.mxu0 0.0
    %4339 = vmatprep.subr.mxu0 0.0
    %4340 = vmatpush1.msra.mxu0 0.0
    %4341 = vmatprep.subr.mxu0 0.0
    %4342 = vmatpush1.msra.mxu0 0.0
    %4343 = vmatprep.subr.mxu0 0.0
    %4344 = vmatpush1.msra.mxu0 0.0
    %4345 = vmatprep.subr.mxu0 0.0
    %4346 = vmatpush1.msra.mxu0 0.0
    %4347 = vmatprep.subr.mxu0 0.0
    %4348 = vmatpush1.msra.mxu0 0.0
    %4349 = vmatprep.subr.mxu0 0.0
    %4350 = vmatpush1.msra.mxu0 0.0
    %4351 = vmatprep.subr.mxu0 0.0
    %4352 = vmatpush1.msra.mxu0 0.0
    %4353 = vmatprep.subr.mxu0 0.0
    %4354 = vmatpush1.msra.mxu0 0.0
    %4355 = vmatprep.subr.mxu0 0.0
    %4356 = vmatpush1.msra.mxu0 0.0
    %4357 = vmatprep.subr.mxu0 0.0
    %4358 = vmatpush1.msra.mxu0 0.0
    %4359 = vmatprep.subr.mxu0 0.0
    %4360 = vmatpush1.msra.mxu0 0.0
    %4361 = vmatprep.subr.mxu0 0.0
    %4362 = vmatpush1.msra.mxu0 0.0
    %4363 = vmatprep.subr.mxu0 0.0
    %4364 = vmatpush1.msra.mxu0 0.0
    %4365 = vmatprep.subr.mxu0 0.0
    %4366 = vmatpush1.msra.mxu0 0.0
    %4367 = vmatprep.subr.mxu0 0.0
    %4368 = vmatpush1.msra.mxu0 0.0
    %4369 = vmatprep.subr.mxu0 0.0
    %4370 = vmatpush1.msra.mxu0 0.0
    %4371 = vmatprep.subr.mxu0 0.0
    %4372 = vmatpush1.msra.mxu0 0.0
    %4373 = vmatprep.subr.mxu0 0.0
    %4374 = vmatpush1.msra.mxu0 0.0
    %4375 = vmatprep.subr.mxu0 0.0
    %4376 = vmatpush1.msra.mxu0 0.0
    %4377 = vmatprep.mubr.f32.mxu0 0.0
    %4378 = vmatmul.mubr.f32.gmra.mrb[0].mxu0 %v66
    %v4379 = vpop.f32.mrb[0].mxu0
    %v4380 = vadd.f32 %v57, %v4379
    %v4381 = vpop.f32.mrb[0].mxu0
    %4382 = vmatprep.mubr.f32.mxu0 0.0
    %4383 = vmatmul.mubr.f32.gmra.mrb[0].mxu0 %v69
    %v4384 = vpop.f32.mrb[0].mxu0
    %v4385 = vadd.f32 %v62, %v4384
    %v4386 = vpop.f32.mrb[0].mxu0
    %4387 = vdwg.mxu0
    %v4388 = vmax.f32 %v4380, 0.0
    %v4389 = vmax.f32 %v4385, 0.0
    %s4390 = scalar_lea.vmem %s3, 704
    %v4391 = vld [vmem:[%s4390] sm:$0xff]
    %v4392 = vld [vmem:[%s4390 + $0x8] sm:$0xff]
    %v4393 = vld [vmem:[%s4390 + $0x10] sm:$0xff]
    %v4394 = vld [vmem:[%s4390 + $0x18] sm:$0xff]
    %v4396 = vsel %vm248, %v4391, 0
    %v4399 = vsel %vm248, %v4392, 0
    %v4402 = vsel %vm248, %v4393, 0
    %v4405 = vsel %vm248, %v4394, 0
    %4407 = vmatprep.subr.mxu0 0.0
    %4408 = vmatpush1.msra.mxu0 %v4388
    %4409 = vmatprep.subr.mxu0 0.0
    %4410 = vmatpush1.msra.mxu0 %v4389
    %4411 = vmatprep.subr.mxu0 0.0
    %4412 = vmatpush1.msra.mxu0 0.0
    %4413 = vmatprep.subr.mxu0 0.0
    %4414 = vmatpush1.msra.mxu0 0.0
    %4415 = vmatprep.subr.mxu0 0.0
    %4416 = vmatpush1.msra.mxu0 0.0
    %4417 = vmatprep.subr.mxu0 0.0
    %4418 = vmatpush1.msra.mxu0 0.0
    %4419 = vmatprep.subr.mxu0 0.0
    %4420 = vmatpush1.msra.mxu0 0.0
    %4421 = vmatprep.subr.mxu0 0.0
    %4422 = vmatpush1.msra.mxu0 0.0
    %4423 = vmatprep.subr.mxu0 0.0
    %4424 = vmatpush1.msra.mxu0 0.0
    %4425 = vmatprep.subr.mxu0 0.0
    %4426 = vmatpush1.msra.mxu0 0.0
    %4427 = vmatprep.subr.mxu0 0.0
    %4428 = vmatpush1.msra.mxu0 0.0
    %4429 = vmatprep.subr.mxu0 0.0
    %4430 = vmatpush1.msra.mxu0 0.0
    %4431 = vmatprep.subr.mxu0 0.0
    %4432 = vmatpush1.msra.mxu0 0.0
    %4433 = vmatprep.subr.mxu0 0.0
    %4434 = vmatpush1.msra.mxu0 0.0
    %4435 = vmatprep.subr.mxu0 0.0
    %4436 = vmatpush1.msra.mxu0 0.0
    %4437 = vmatprep.subr.mxu0 0.0
    %4438 = vmatpush1.msra.mxu0 0.0
    %4439 = vmatprep.subr.mxu0 0.0
    %4440 = vmatpush1.msra.mxu0 0.0
    %4441 = vmatprep.subr.mxu0 0.0
    %4442 = vmatpush1.msra.mxu0 0.0
    %4443 = vmatprep.subr.mxu0 0.0
    %4444 = vmatpush1.msra.mxu0 0.0
    %4445 = vmatprep.subr.mxu0 0.0
    %4446 = vmatpush1.msra.mxu0 0.0
    %4447 = vmatprep.subr.mxu0 0.0
    %4448 = vmatpush1.msra.mxu0 0.0
    %4449 = vmatprep.subr.mxu0 0.0
    %4450 = vmatpush1.msra.mxu0 0.0
    %4451 = vmatprep.subr.mxu0 0.0
    %4452 = vmatpush1.msra.mxu0 0.0
    %4453 = vmatprep.subr.mxu0 0.0
    %4454 = vmatpush1.msra.mxu0 0.0
    %4455 = vmatprep.subr.mxu0 0.0
    %4456 = vmatpush1.msra.mxu0 0.0
    %4457 = vmatprep.subr.mxu0 0.0
    %4458 = vmatpush1.msra.mxu0 0.0
    %4459 = vmatprep.subr.mxu0 0.0
    %4460 = vmatpush1.msra.mxu0 0.0
    %4461 = vmatprep.subr.mxu0 0.0
    %4462 = vmatpush1.msra.mxu0 0.0
    %4463 = vmatprep.subr.mxu0 0.0
    %4464 = vmatpush1.msra.mxu0 0.0
    %4465 = vmatprep.subr.mxu0 0.0
    %4466 = vmatpush1.msra.mxu0 0.0
    %4467 = vmatprep.subr.mxu0 0.0
    %4468 = vmatpush1.msra.mxu0 0.0
    %4469 = vmatprep.subr.mxu0 0.0
    %4470 = vmatpush1.msra.mxu0 0.0
    %4471 = vmatprep.mubr.f32.mxu0 0.0
    %4472 = vmatmul.mubr.f32.gmra.mrb[0].mxu0 %v4396
    %v4473 = vpop.f32.mrb[0].mxu0
    %v4474 = vadd.f32 0.0, %v4473
    %v4475 = vpop.f32.mrb[0].mxu0
    %4476 = vmatprep.mubr.f32.mxu0 0.0
    %4477 = vmatmul.mubr.f32.gmra.mrb[0].mxu0 %v4399
    %v4478 = vpop.f32.mrb[0].mxu0
    %v4479 = vadd.f32 0.0, %v4478
    %v4480 = vpop.f32.mrb[0].mxu0
    %4481 = vmatprep.mubr.f32.mxu0 0.0
    %4482 = vmatmul.mubr.f32.gmra.mrb[0].mxu0 %v4402
    %v4483 = vpop.f32.mrb[0].mxu0
    %v4484 = vadd.f32 0.0, %v4483
    %v4485 = vpop.f32.mrb[0].mxu0
    %4486 = vmatprep.mubr.f32.mxu0 0.0
    %4487 = vmatmul.mubr.f32.gmra.mrb[0].mxu0 %v4405
    %v4488 = vpop.f32.mrb[0].mxu0
    %v4489 = vadd.f32 0.0, %v4488
    %v4490 = vpop.f32.mrb[0].mxu0
    %4491 = vdwg.mxu0
    %v4492 = vadd.f32 %v4299, %v4474
    %v4493 = vadd.f32 %v4300, %v4479
    %v4494 = vadd.f32 %v4301, %v4484
    %v4495 = vadd.f32 %v4302, %v4489
    %v4496 = vld [vmem:[%s0 + $0xb8] sm:$0xff]
    %v4497 = vld [vmem:[%s0 + $0x190] sm:$0xff]
    %v4498 = vld [vmem:[%s0 + $0x268] sm:$0xff]
    %v4499 = vld [vmem:[%s0 + $0x340] sm:$0xff]
    %v4500 = vld [vmem:[%s0 + $0x418] sm:$0xff]
    %v4501 = vld [vmem:[%s0 + $0x4f0] sm:$0xff]
    %v4502 = vld [vmem:[%s0 + $0x5c8] sm:$0x3f]
    %v4504 = vsel %vm71, %v4502, 0
    %4506 = vmatprep.subr.mxu0 0.0
    %4507 = vmatpush1.msra.mxu0 %v4496
    %4508 = vmatprep.subr.mxu0 0.0
    %4509 = vmatpush1.msra.mxu0 %v4497
    %4510 = vmatprep.subr.mxu0 0.0
    %4511 = vmatpush1.msra.mxu0 %v4498
    %4512 = vmatprep.subr.mxu0 0.0
    %4513 = vmatpush1.msra.mxu0 %v4499
    %4514 = vmatprep.subr.mxu0 0.0
    %4515 = vmatpush1.msra.mxu0 %v4500
    %4516 = vmatprep.subr.mxu0 0.0
    %4517 = vmatpush1.msra.mxu0 %v4501
    %4518 = vmatprep.subr.mxu0 0.0
    %4519 = vmatpush1.msra.mxu0 %v4504
    %4520 = vmatprep.subr.mxu0 0.0
    %4521 = vmatpush1.msra.mxu0 0.0
    %4522 = vmatprep.subr.mxu0 0.0
    %4523 = vmatpush1.msra.mxu0 0.0
    %4524 = vmatprep.subr.mxu0 0.0
    %4525 = vmatpush1.msra.mxu0 0.0
    %4526 = vmatprep.subr.mxu0 0.0
    %4527 = vmatpush1.msra.mxu0 0.0
    %4528 = vmatprep.subr.mxu0 0.0
    %4529 = vmatpush1.msra.mxu0 0.0
    %4530 = vmatprep.subr.mxu0 0.0
    %4531 = vmatpush1.msra.mxu0 0.0
    %4532 = vmatprep.subr.mxu0 0.0
    %4533 = vmatpush1.msra.mxu0 0.0
    %4534 = vmatprep.subr.mxu0 0.0
    %4535 = vmatpush1.msra.mxu0 0.0
    %4536 = vmatprep.subr.mxu0 0.0
    %4537 = vmatpush1.msra.mxu0 0.0
    %4538 = vmatprep.subr.mxu0 0.0
    %4539 = vmatpush1.msra.mxu0 0.0
    %4540 = vmatprep.subr.mxu0 0.0
    %4541 = vmatpush1.msra.mxu0 0.0
    %4542 = vmatprep.subr.mxu0 0.0
    %4543 = vmatpush1.msra.mxu0 0.0
    %4544 = vmatprep.subr.mxu0 0.0
    %4545 = vmatpush1.msra.mxu0 0.0
    %4546 = vmatprep.subr.mxu0 0.0
    %4547 = vmatpush1.msra.mxu0 0.0
    %4548 = vmatprep.subr.mxu0 0.0
    %4549 = vmatpush1.msra.mxu0 0.0
    %4550 = vmatprep.subr.mxu0 0.0
    %4551 = vmatpush1.msra.mxu0 0.0
    %4552 = vmatprep.subr.mxu0 0.0
    %4553 = vmatpush1.msra.mxu0 0.0
    %4554 = vmatprep.subr.mxu0 0.0
    %4555 = vmatpush1.msra.mxu0 0.0
    %4556 = vmatprep.subr.mxu0 0.0
    %4557 = vmatpush1.msra.mxu0 0.0
    %4558 = vmatprep.subr.mxu0 0.0
    %4559 = vmatpush1.msra.mxu0 0.0
    %4560 = vmatprep.subr.mxu0 0.0
    %4561 = vmatpush1.msra.mxu0 0.0
    %4562 = vmatprep.subr.mxu0 0.0
    %4563 = vmatpush1.msra.mxu0 0.0
    %4564 = vmatprep.subr.mxu0 0.0
    %4565 = vmatpush1.msra.mxu0 0.0
    %4566 = vmatprep.subr.mxu0 0.0
    %4567 = vmatpush1.msra.mxu0 0.0
    %4568 = vmatprep.subr.mxu0 0.0
    %4569 = vmatpush1.msra.mxu0 0.0
    %4570 = vmatprep.mubr.f32.mxu0 0.0
    %4571 = vmatmul.mubr.f32.gmra.mrb[0].mxu0 %v66
    %v4572 = vpop.f32.mrb[0].mxu0
    %v4573 = vadd.f32 %v57, %v4572
    %v4574 = vpop.f32.mrb[0].mxu0
    %4575 = vmatprep.mubr.f32.mxu0 0.0
    %4576 = vmatmul.mubr.f32.gmra.mrb[0].mxu0 %v69
    %v4577 = vpop.f32.mrb[0].mxu0
    %v4578 = vadd.f32 %v62, %v4577
    %v4579 = vpop.f32.mrb[0].mxu0
    %4580 = vdwg.mxu0
    %v4581 = vmax.f32 %v4573, 0.0
    %v4582 = vmax.f32 %v4578, 0.0
    %s4583 = scalar_lea.vmem %s3, 736
    %v4584 = vld [vmem:[%s4583] sm:$0xff]
    %v4585 = vld [vmem:[%s4583 + $0x8] sm:$0xff]
    %v4586 = vld [vmem:[%s4583 + $0x10] sm:$0xff]
    %v4587 = vld [vmem:[%s4583 + $0x18] sm:$0xff]
    %v4589 = vsel %vm248, %v4584, 0
    %v4592 = vsel %vm248, %v4585, 0
    %v4595 = vsel %vm248, %v4586, 0
    %v4598 = vsel %vm248, %v4587, 0
    %4600 = vmatprep.subr.mxu0 0.0
    %4601 = vmatpush1.msra.mxu0 %v4581
    %4602 = vmatprep.subr.mxu0 0.0
    %4603 = vmatpush1.msra.mxu0 %v4582
    %4604 = vmatprep.subr.mxu0 0.0
    %4605 = vmatpush1.msra.mxu0 0.0
    %4606 = vmatprep.subr.mxu0 0.0
    %4607 = vmatpush1.msra.mxu0 0.0
    %4608 = vmatprep.subr.mxu0 0.0
    %4609 = vmatpush1.msra.mxu0 0.0
    %4610 = vmatprep.subr.mxu0 0.0
    %4611 = vmatpush1.msra.mxu0 0.0
    %4612 = vmatprep.subr.mxu0 0.0
    %4613 = vmatpush1.msra.mxu0 0.0
    %4614 = vmatprep.subr.mxu0 0.0
    %4615 = vmatpush1.msra.mxu0 0.0
    %4616 = vmatprep.subr.mxu0 0.0
    %4617 = vmatpush1.msra.mxu0 0.0
    %4618 = vmatprep.subr.mxu0 0.0
    %4619 = vmatpush1.msra.mxu0 0.0
    %4620 = vmatprep.subr.mxu0 0.0
    %4621 = vmatpush1.msra.mxu0 0.0
    %4622 = vmatprep.subr.mxu0 0.0
    %4623 = vmatpush1.msra.mxu0 0.0
    %4624 = vmatprep.subr.mxu0 0.0
    %4625 = vmatpush1.msra.mxu0 0.0
    %4626 = vmatprep.subr.mxu0 0.0
    %4627 = vmatpush1.msra.mxu0 0.0
    %4628 = vmatprep.subr.mxu0 0.0
    %4629 = vmatpush1.msra.mxu0 0.0
    %4630 = vmatprep.subr.mxu0 0.0
    %4631 = vmatpush1.msra.mxu0 0.0
    %4632 = vmatprep.subr.mxu0 0.0
    %4633 = vmatpush1.msra.mxu0 0.0
    %4634 = vmatprep.subr.mxu0 0.0
    %4635 = vmatpush1.msra.mxu0 0.0
    %4636 = vmatprep.subr.mxu0 0.0
    %4637 = vmatpush1.msra.mxu0 0.0
    %4638 = vmatprep.subr.mxu0 0.0
    %4639 = vmatpush1.msra.mxu0 0.0
    %4640 = vmatprep.subr.mxu0 0.0
    %4641 = vmatpush1.msra.mxu0 0.0
    %4642 = vmatprep.subr.mxu0 0.0
    %4643 = vmatpush1.msra.mxu0 0.0
    %4644 = vmatprep.subr.mxu0 0.0
    %4645 = vmatpush1.msra.mxu0 0.0
    %4646 = vmatprep.subr.mxu0 0.0
    %4647 = vmatpush1.msra.mxu0 0.0
    %4648 = vmatprep.subr.mxu0 0.0
    %4649 = vmatpush1.msra.mxu0 0.0
    %4650 = vmatprep.subr.mxu0 0.0
    %4651 = vmatpush1.msra.mxu0 0.0
    %4652 = vmatprep.subr.mxu0 0.0
    %4653 = vmatpush1.msra.mxu0 0.0
    %4654 = vmatprep.subr.mxu0 0.0
    %4655 = vmatpush1.msra.mxu0 0.0
    %4656 = vmatprep.subr.mxu0 0.0
    %4657 = vmatpush1.msra.mxu0 0.0
    %4658 = vmatprep.subr.mxu0 0.0
    %4659 = vmatpush1.msra.mxu0 0.0
    %4660 = vmatprep.subr.mxu0 0.0
    %4661 = vmatpush1.msra.mxu0 0.0
    %4662 = vmatprep.subr.mxu0 0.0
    %4663 = vmatpush1.msra.mxu0 0.0
    %4664 = vmatprep.mubr.f32.mxu0 0.0
    %4665 = vmatmul.mubr.f32.gmra.mrb[0].mxu0 %v4589
    %v4666 = vpop.f32.mrb[0].mxu0
    %v4667 = vadd.f32 0.0, %v4666
    %v4668 = vpop.f32.mrb[0].mxu0
    %4669 = vmatprep.mubr.f32.mxu0 0.0
    %4670 = vmatmul.mubr.f32.gmra.mrb[0].mxu0 %v4592
    %v4671 = vpop.f32.mrb[0].mxu0
    %v4672 = vadd.f32 0.0, %v4671
    %v4673 = vpop.f32.mrb[0].mxu0
    %4674 = vmatprep.mubr.f32.mxu0 0.0
    %4675 = vmatmul.mubr.f32.gmra.mrb[0].mxu0 %v4595
    %v4676 = vpop.f32.mrb[0].mxu0
    %v4677 = vadd.f32 0.0, %v4676
    %v4678 = vpop.f32.mrb[0].mxu0
    %4679 = vmatprep.mubr.f32.mxu0 0.0
    %4680 = vmatmul.mubr.f32.gmra.mrb[0].mxu0 %v4598
    %v4681 = vpop.f32.mrb[0].mxu0
    %v4682 = vadd.f32 0.0, %v4681
    %v4683 = vpop.f32.mrb[0].mxu0
    %4684 = vdwg.mxu0
    %v4685 = vadd.f32 %v4492, %v4667
    %v4686 = vadd.f32 %v4493, %v4672
    %v4687 = vadd.f32 %v4494, %v4677
    %v4688 = vadd.f32 %v4495, %v4682
    %v4689 = vld [vmem:[%s0 + $0xc0] sm:$0xff]
    %v4690 = vld [vmem:[%s0 + $0x198] sm:$0xff]
    %v4691 = vld [vmem:[%s0 + $0x270] sm:$0xff]
    %v4692 = vld [vmem:[%s0 + $0x348] sm:$0xff]
    %v4693 = vld [vmem:[%s0 + $0x420] sm:$0xff]
    %v4694 = vld [vmem:[%s0 + $0x4f8] sm:$0xff]
    %v4695 = vld [vmem:[%s0 + $0x5d0] sm:$0x3f]
    %v4697 = vsel %vm71, %v4695, 0
    %4699 = vmatprep.subr.mxu0 0.0
    %4700 = vmatpush1.msra.mxu0 %v4689
    %4701 = vmatprep.subr.mxu0 0.0
    %4702 = vmatpush1.msra.mxu0 %v4690
    %4703 = vmatprep.subr.mxu0 0.0
    %4704 = vmatpush1.msra.mxu0 %v4691
    %4705 = vmatprep.subr.mxu0 0.0
    %4706 = vmatpush1.msra.mxu0 %v4692
    %4707 = vmatprep.subr.mxu0 0.0
    %4708 = vmatpush1.msra.mxu0 %v4693
    %4709 = vmatprep.subr.mxu0 0.0
    %4710 = vmatpush1.msra.mxu0 %v4694
    %4711 = vmatprep.subr.mxu0 0.0
    %4712 = vmatpush1.msra.mxu0 %v4697
    %4713 = vmatprep.subr.mxu0 0.0
    %4714 = vmatpush1.msra.mxu0 0.0
    %4715 = vmatprep.subr.mxu0 0.0
    %4716 = vmatpush1.msra.mxu0 0.0
    %4717 = vmatprep.subr.mxu0 0.0
    %4718 = vmatpush1.msra.mxu0 0.0
    %4719 = vmatprep.subr.mxu0 0.0
    %4720 = vmatpush1.msra.mxu0 0.0
    %4721 = vmatprep.subr.mxu0 0.0
    %4722 = vmatpush1.msra.mxu0 0.0
    %4723 = vmatprep.subr.mxu0 0.0
    %4724 = vmatpush1.msra.mxu0 0.0
    %4725 = vmatprep.subr.mxu0 0.0
    %4726 = vmatpush1.msra.mxu0 0.0
    %4727 = vmatprep.subr.mxu0 0.0
    %4728 = vmatpush1.msra.mxu0 0.0
    %4729 = vmatprep.subr.mxu0 0.0
    %4730 = vmatpush1.msra.mxu0 0.0
    %4731 = vmatprep.subr.mxu0 0.0
    %4732 = vmatpush1.msra.mxu0 0.0
    %4733 = vmatprep.subr.mxu0 0.0
    %4734 = vmatpush1.msra.mxu0 0.0
    %4735 = vmatprep.subr.mxu0 0.0
    %4736 = vmatpush1.msra.mxu0 0.0
    %4737 = vmatprep.subr.mxu0 0.0
    %4738 = vmatpush1.msra.mxu0 0.0
    %4739 = vmatprep.subr.mxu0 0.0
    %4740 = vmatpush1.msra.mxu0 0.0
    %4741 = vmatprep.subr.mxu0 0.0
    %4742 = vmatpush1.msra.mxu0 0.0
    %4743 = vmatprep.subr.mxu0 0.0
    %4744 = vmatpush1.msra.mxu0 0.0
    %4745 = vmatprep.subr.mxu0 0.0
    %4746 = vmatpush1.msra.mxu0 0.0
    %4747 = vmatprep.subr.mxu0 0.0
    %4748 = vmatpush1.msra.mxu0 0.0
    %4749 = vmatprep.subr.mxu0 0.0
    %4750 = vmatpush1.msra.mxu0 0.0
    %4751 = vmatprep.subr.mxu0 0.0
    %4752 = vmatpush1.msra.mxu0 0.0
    %4753 = vmatprep.subr.mxu0 0.0
    %4754 = vmatpush1.msra.mxu0 0.0
    %4755 = vmatprep.subr.mxu0 0.0
    %4756 = vmatpush1.msra.mxu0 0.0
    %4757 = vmatprep.subr.mxu0 0.0
    %4758 = vmatpush1.msra.mxu0 0.0
    %4759 = vmatprep.subr.mxu0 0.0
    %4760 = vmatpush1.msra.mxu0 0.0
    %4761 = vmatprep.subr.mxu0 0.0
    %4762 = vmatpush1.msra.mxu0 0.0
    %4763 = vmatprep.mubr.f32.mxu0 0.0
    %4764 = vmatmul.mubr.f32.gmra.mrb[0].mxu0 %v66
    %v4765 = vpop.f32.mrb[0].mxu0
    %v4766 = vadd.f32 %v57, %v4765
    %v4767 = vpop.f32.mrb[0].mxu0
    %4768 = vmatprep.mubr.f32.mxu0 0.0
    %4769 = vmatmul.mubr.f32.gmra.mrb[0].mxu0 %v69
    %v4770 = vpop.f32.mrb[0].mxu0
    %v4771 = vadd.f32 %v62, %v4770
    %v4772 = vpop.f32.mrb[0].mxu0
    %4773 = vdwg.mxu0
    %v4774 = vmax.f32 %v4766, 0.0
    %v4775 = vmax.f32 %v4771, 0.0
    %s4776 = scalar_lea.vmem %s3, 768
    %v4777 = vld [vmem:[%s4776] sm:$0xff]
    %v4778 = vld [vmem:[%s4776 + $0x8] sm:$0xff]
    %v4779 = vld [vmem:[%s4776 + $0x10] sm:$0xff]
    %v4780 = vld [vmem:[%s4776 + $0x18] sm:$0xff]
    %v4782 = vsel %vm248, %v4777, 0
    %v4785 = vsel %vm248, %v4778, 0
    %v4788 = vsel %vm248, %v4779, 0
    %v4791 = vsel %vm248, %v4780, 0
    %4793 = vmatprep.subr.mxu0 0.0
    %4794 = vmatpush1.msra.mxu0 %v4774
    %4795 = vmatprep.subr.mxu0 0.0
    %4796 = vmatpush1.msra.mxu0 %v4775
    %4797 = vmatprep.subr.mxu0 0.0
    %4798 = vmatpush1.msra.mxu0 0.0
    %4799 = vmatprep.subr.mxu0 0.0
    %4800 = vmatpush1.msra.mxu0 0.0
    %4801 = vmatprep.subr.mxu0 0.0
    %4802 = vmatpush1.msra.mxu0 0.0
    %4803 = vmatprep.subr.mxu0 0.0
    %4804 = vmatpush1.msra.mxu0 0.0
    %4805 = vmatprep.subr.mxu0 0.0
    %4806 = vmatpush1.msra.mxu0 0.0
    %4807 = vmatprep.subr.mxu0 0.0
    %4808 = vmatpush1.msra.mxu0 0.0
    %4809 = vmatprep.subr.mxu0 0.0
    %4810 = vmatpush1.msra.mxu0 0.0
    %4811 = vmatprep.subr.mxu0 0.0
    %4812 = vmatpush1.msra.mxu0 0.0
    %4813 = vmatprep.subr.mxu0 0.0
    %4814 = vmatpush1.msra.mxu0 0.0
    %4815 = vmatprep.subr.mxu0 0.0
    %4816 = vmatpush1.msra.mxu0 0.0
    %4817 = vmatprep.subr.mxu0 0.0
    %4818 = vmatpush1.msra.mxu0 0.0
    %4819 = vmatprep.subr.mxu0 0.0
    %4820 = vmatpush1.msra.mxu0 0.0
    %4821 = vmatprep.subr.mxu0 0.0
    %4822 = vmatpush1.msra.mxu0 0.0
    %4823 = vmatprep.subr.mxu0 0.0
    %4824 = vmatpush1.msra.mxu0 0.0
    %4825 = vmatprep.subr.mxu0 0.0
    %4826 = vmatpush1.msra.mxu0 0.0
    %4827 = vmatprep.subr.mxu0 0.0
    %4828 = vmatpush1.msra.mxu0 0.0
    %4829 = vmatprep.subr.mxu0 0.0
    %4830 = vmatpush1.msra.mxu0 0.0
    %4831 = vmatprep.subr.mxu0 0.0
    %4832 = vmatpush1.msra.mxu0 0.0
    %4833 = vmatprep.subr.mxu0 0.0
    %4834 = vmatpush1.msra.mxu0 0.0
    %4835 = vmatprep.subr.mxu0 0.0
    %4836 = vmatpush1.msra.mxu0 0.0
    %4837 = vmatprep.subr.mxu0 0.0
    %4838 = vmatpush1.msra.mxu0 0.0
    %4839 = vmatprep.subr.mxu0 0.0
    %4840 = vmatpush1.msra.mxu0 0.0
    %4841 = vmatprep.subr.mxu0 0.0
    %4842 = vmatpush1.msra.mxu0 0.0
    %4843 = vmatprep.subr.mxu0 0.0
    %4844 = vmatpush1.msra.mxu0 0.0
    %4845 = vmatprep.subr.mxu0 0.0
    %4846 = vmatpush1.msra.mxu0 0.0
    %4847 = vmatprep.subr.mxu0 0.0
    %4848 = vmatpush1.msra.mxu0 0.0
    %4849 = vmatprep.subr.mxu0 0.0
    %4850 = vmatpush1.msra.mxu0 0.0
    %4851 = vmatprep.subr.mxu0 0.0
    %4852 = vmatpush1.msra.mxu0 0.0
    %4853 = vmatprep.subr.mxu0 0.0
    %4854 = vmatpush1.msra.mxu0 0.0
    %4855 = vmatprep.subr.mxu0 0.0
    %4856 = vmatpush1.msra.mxu0 0.0
    %4857 = vmatprep.mubr.f32.mxu0 0.0
    %4858 = vmatmul.mubr.f32.gmra.mrb[0].mxu0 %v4782
    %v4859 = vpop.f32.mrb[0].mxu0
    %v4860 = vadd.f32 0.0, %v4859
    %v4861 = vpop.f32.mrb[0].mxu0
    %4862 = vmatprep.mubr.f32.mxu0 0.0
    %4863 = vmatmul.mubr.f32.gmra.mrb[0].mxu0 %v4785
    %v4864 = vpop.f32.mrb[0].mxu0
    %v4865 = vadd.f32 0.0, %v4864
    %v4866 = vpop.f32.mrb[0].mxu0
    %4867 = vmatprep.mubr.f32.mxu0 0.0
    %4868 = vmatmul.mubr.f32.gmra.mrb[0].mxu0 %v4788
    %v4869 = vpop.f32.mrb[0].mxu0
    %v4870 = vadd.f32 0.0, %v4869
    %v4871 = vpop.f32.mrb[0].mxu0
    %4872 = vmatprep.mubr.f32.mxu0 0.0
    %4873 = vmatmul.mubr.f32.gmra.mrb[0].mxu0 %v4791
    %v4874 = vpop.f32.mrb[0].mxu0
    %v4875 = vadd.f32 0.0, %v4874
    %v4876 = vpop.f32.mrb[0].mxu0
    %4877 = vdwg.mxu0
    %v4878 = vadd.f32 %v4685, %v4860
    %v4879 = vadd.f32 %v4686, %v4865
    %v4880 = vadd.f32 %v4687, %v4870
    %v4881 = vadd.f32 %v4688, %v4875
    %v4882 = vld [vmem:[%s0 + $0xc8] sm:$0xff]
    %v4883 = vld [vmem:[%s0 + $0x1a0] sm:$0xff]
    %v4884 = vld [vmem:[%s0 + $0x278] sm:$0xff]
    %v4885 = vld [vmem:[%s0 + $0x350] sm:$0xff]
    %v4886 = vld [vmem:[%s0 + $0x428] sm:$0xff]
    %v4887 = vld [vmem:[%s0 + $0x500] sm:$0xff]
    %v4888 = vld [vmem:[%s0 + $0x5d8] sm:$0x3f]
    %v4890 = vsel %vm71, %v4888, 0
    %4892 = vmatprep.subr.mxu0 0.0
    %4893 = vmatpush1.msra.mxu0 %v4882
    %4894 = vmatprep.subr.mxu0 0.0
    %4895 = vmatpush1.msra.mxu0 %v4883
    %4896 = vmatprep.subr.mxu0 0.0
    %4897 = vmatpush1.msra.mxu0 %v4884
    %4898 = vmatprep.subr.mxu0 0.0
    %4899 = vmatpush1.msra.mxu0 %v4885
    %4900 = vmatprep.subr.mxu0 0.0
    %4901 = vmatpush1.msra.mxu0 %v4886
    %4902 = vmatprep.subr.mxu0 0.0
    %4903 = vmatpush1.msra.mxu0 %v4887
    %4904 = vmatprep.subr.mxu0 0.0
    %4905 = vmatpush1.msra.mxu0 %v4890
    %4906 = vmatprep.subr.mxu0 0.0
    %4907 = vmatpush1.msra.mxu0 0.0
    %4908 = vmatprep.subr.mxu0 0.0
    %4909 = vmatpush1.msra.mxu0 0.0
    %4910 = vmatprep.subr.mxu0 0.0
    %4911 = vmatpush1.msra.mxu0 0.0
    %4912 = vmatprep.subr.mxu0 0.0
    %4913 = vmatpush1.msra.mxu0 0.0
    %4914 = vmatprep.subr.mxu0 0.0
    %4915 = vmatpush1.msra.mxu0 0.0
    %4916 = vmatprep.subr.mxu0 0.0
    %4917 = vmatpush1.msra.mxu0 0.0
    %4918 = vmatprep.subr.mxu0 0.0
    %4919 = vmatpush1.msra.mxu0 0.0
    %4920 = vmatprep.subr.mxu0 0.0
    %4921 = vmatpush1.msra.mxu0 0.0
    %4922 = vmatprep.subr.mxu0 0.0
    %4923 = vmatpush1.msra.mxu0 0.0
    %4924 = vmatprep.subr.mxu0 0.0
    %4925 = vmatpush1.msra.mxu0 0.0
    %4926 = vmatprep.subr.mxu0 0.0
    %4927 = vmatpush1.msra.mxu0 0.0
    %4928 = vmatprep.subr.mxu0 0.0
    %4929 = vmatpush1.msra.mxu0 0.0
    %4930 = vmatprep.subr.mxu0 0.0
    %4931 = vmatpush1.msra.mxu0 0.0
    %4932 = vmatprep.subr.mxu0 0.0
    %4933 = vmatpush1.msra.mxu0 0.0
    %4934 = vmatprep.subr.mxu0 0.0
    %4935 = vmatpush1.msra.mxu0 0.0
    %4936 = vmatprep.subr.mxu0 0.0
    %4937 = vmatpush1.msra.mxu0 0.0
    %4938 = vmatprep.subr.mxu0 0.0
    %4939 = vmatpush1.msra.mxu0 0.0
    %4940 = vmatprep.subr.mxu0 0.0
    %4941 = vmatpush1.msra.mxu0 0.0
    %4942 = vmatprep.subr.mxu0 0.0
    %4943 = vmatpush1.msra.mxu0 0.0
    %4944 = vmatprep.subr.mxu0 0.0
    %4945 = vmatpush1.msra.mxu0 0.0
    %4946 = vmatprep.subr.mxu0 0.0
    %4947 = vmatpush1.msra.mxu0 0.0
    %4948 = vmatprep.subr.mxu0 0.0
    %4949 = vmatpush1.msra.mxu0 0.0
    %4950 = vmatprep.subr.mxu0 0.0
    %4951 = vmatpush1.msra.mxu0 0.0
    %4952 = vmatprep.subr.mxu0 0.0
    %4953 = vmatpush1.msra.mxu0 0.0
    %4954 = vmatprep.subr.mxu0 0.0
    %4955 = vmatpush1.msra.mxu0 0.0
    %4956 = vmatprep.mubr.f32.mxu0 0.0
    %4957 = vmatmul.mubr.f32.gmra.mrb[0].mxu0 %v66
    %v4958 = vpop.f32.mrb[0].mxu0
    %v4959 = vadd.f32 %v57, %v4958
    %v4960 = vpop.f32.mrb[0].mxu0
    %4961 = vmatprep.mubr.f32.mxu0 0.0
    %4962 = vmatmul.mubr.f32.gmra.mrb[0].mxu0 %v69
    %v4963 = vpop.f32.mrb[0].mxu0
    %v4964 = vadd.f32 %v62, %v4963
    %v4965 = vpop.f32.mrb[0].mxu0
    %4966 = vdwg.mxu0
    %v4967 = vmax.f32 %v4959, 0.0
    %v4968 = vmax.f32 %v4964, 0.0
    %s4969 = scalar_lea.vmem %s3, 800
    %v4970 = vld [vmem:[%s4969] sm:$0xff]
    %v4971 = vld [vmem:[%s4969 + $0x8] sm:$0xff]
    %v4972 = vld [vmem:[%s4969 + $0x10] sm:$0xff]
    %v4973 = vld [vmem:[%s4969 + $0x18] sm:$0xff]
    %v4975 = vsel %vm248, %v4970, 0
    %v4978 = vsel %vm248, %v4971, 0
    %v4981 = vsel %vm248, %v4972, 0
    %v4984 = vsel %vm248, %v4973, 0
    %4986 = vmatprep.subr.mxu0 0.0
    %4987 = vmatpush1.msra.mxu0 %v4967
    %4988 = vmatprep.subr.mxu0 0.0
    %4989 = vmatpush1.msra.mxu0 %v4968
    %4990 = vmatprep.subr.mxu0 0.0
    %4991 = vmatpush1.msra.mxu0 0.0
    %4992 = vmatprep.subr.mxu0 0.0
    %4993 = vmatpush1.msra.mxu0 0.0
    %4994 = vmatprep.subr.mxu0 0.0
    %4995 = vmatpush1.msra.mxu0 0.0
    %4996 = vmatprep.subr.mxu0 0.0
    %4997 = vmatpush1.msra.mxu0 0.0
    %4998 = vmatprep.subr.mxu0 0.0
    %4999 = vmatpush1.msra.mxu0 0.0
    %5000 = vmatprep.subr.mxu0 0.0
    %5001 = vmatpush1.msra.mxu0 0.0
    %5002 = vmatprep.subr.mxu0 0.0
    %5003 = vmatpush1.msra.mxu0 0.0
    %5004 = vmatprep.subr.mxu0 0.0
    %5005 = vmatpush1.msra.mxu0 0.0
    %5006 = vmatprep.subr.mxu0 0.0
    %5007 = vmatpush1.msra.mxu0 0.0
    %5008 = vmatprep.subr.mxu0 0.0
    %5009 = vmatpush1.msra.mxu0 0.0
    %5010 = vmatprep.subr.mxu0 0.0
    %5011 = vmatpush1.msra.mxu0 0.0
    %5012 = vmatprep.subr.mxu0 0.0
    %5013 = vmatpush1.msra.mxu0 0.0
    %5014 = vmatprep.subr.mxu0 0.0
    %5015 = vmatpush1.msra.mxu0 0.0
    %5016 = vmatprep.subr.mxu0 0.0
    %5017 = vmatpush1.msra.mxu0 0.0
    %5018 = vmatprep.subr.mxu0 0.0
    %5019 = vmatpush1.msra.mxu0 0.0
    %5020 = vmatprep.subr.mxu0 0.0
    %5021 = vmatpush1.msra.mxu0 0.0
    %5022 = vmatprep.subr.mxu0 0.0
    %5023 = vmatpush1.msra.mxu0 0.0
    %5024 = vmatprep.subr.mxu0 0.0
    %5025 = vmatpush1.msra.mxu0 0.0
    %5026 = vmatprep.subr.mxu0 0.0
    %5027 = vmatpush1.msra.mxu0 0.0
    %5028 = vmatprep.subr.mxu0 0.0
    %5029 = vmatpush1.msra.mxu0 0.0
    %5030 = vmatprep.subr.mxu0 0.0
    %5031 = vmatpush1.msra.mxu0 0.0
    %5032 = vmatprep.subr.mxu0 0.0
    %5033 = vmatpush1.msra.mxu0 0.0
    %5034 = vmatprep.subr.mxu0 0.0
    %5035 = vmatpush1.msra.mxu0 0.0
    %5036 = vmatprep.subr.mxu0 0.0
    %5037 = vmatpush1.msra.mxu0 0.0
    %5038 = vmatprep.subr.mxu0 0.0
    %5039 = vmatpush1.msra.mxu0 0.0
    %5040 = vmatprep.subr.mxu0 0.0
    %5041 = vmatpush1.msra.mxu0 0.0
    %5042 = vmatprep.subr.mxu0 0.0
    %5043 = vmatpush1.msra.mxu0 0.0
    %5044 = vmatprep.subr.mxu0 0.0
    %5045 = vmatpush1.msra.mxu0 0.0
    %5046 = vmatprep.subr.mxu0 0.0
    %5047 = vmatpush1.msra.mxu0 0.0
    %5048 = vmatprep.subr.mxu0 0.0
    %5049 = vmatpush1.msra.mxu0 0.0
    %5050 = vmatprep.mubr.f32.mxu0 0.0
    %5051 = vmatmul.mubr.f32.gmra.mrb[0].mxu0 %v4975
    %v5052 = vpop.f32.mrb[0].mxu0
    %v5053 = vadd.f32 0.0, %v5052
    %v5054 = vpop.f32.mrb[0].mxu0
    %5055 = vmatprep.mubr.f32.mxu0 0.0
    %5056 = vmatmul.mubr.f32.gmra.mrb[0].mxu0 %v4978
    %v5057 = vpop.f32.mrb[0].mxu0
    %v5058 = vadd.f32 0.0, %v5057
    %v5059 = vpop.f32.mrb[0].mxu0
    %5060 = vmatprep.mubr.f32.mxu0 0.0
    %5061 = vmatmul.mubr.f32.gmra.mrb[0].mxu0 %v4981
    %v5062 = vpop.f32.mrb[0].mxu0
    %v5063 = vadd.f32 0.0, %v5062
    %v5064 = vpop.f32.mrb[0].mxu0
    %5065 = vmatprep.mubr.f32.mxu0 0.0
    %5066 = vmatmul.mubr.f32.gmra.mrb[0].mxu0 %v4984
    %v5067 = vpop.f32.mrb[0].mxu0
    %v5068 = vadd.f32 0.0, %v5067
    %v5069 = vpop.f32.mrb[0].mxu0
    %5070 = vdwg.mxu0
    %v5071 = vadd.f32 %v4878, %v5053
    %v5072 = vadd.f32 %v4879, %v5058
    %v5073 = vadd.f32 %v4880, %v5063
    %v5074 = vadd.f32 %v4881, %v5068
    %v5075 = vld [vmem:[%s0 + $0xd0] sm:$0xff]
    %v5076 = vld [vmem:[%s0 + $0x1a8] sm:$0xff]
    %v5077 = vld [vmem:[%s0 + $0x280] sm:$0xff]
    %v5078 = vld [vmem:[%s0 + $0x358] sm:$0xff]
    %v5079 = vld [vmem:[%s0 + $0x430] sm:$0xff]
    %v5080 = vld [vmem:[%s0 + $0x508] sm:$0xff]
    %v5081 = vld [vmem:[%s0 + $0x5e0] sm:$0x3f]
    %v5083 = vsel %vm71, %v5081, 0
    %5085 = vmatprep.subr.mxu0 0.0
    %5086 = vmatpush1.msra.mxu0 %v5075
    %5087 = vmatprep.subr.mxu0 0.0
    %5088 = vmatpush1.msra.mxu0 %v5076
    %5089 = vmatprep.subr.mxu0 0.0
    %5090 = vmatpush1.msra.mxu0 %v5077
    %5091 = vmatprep.subr.mxu0 0.0
    %5092 = vmatpush1.msra.mxu0 %v5078
    %5093 = vmatprep.subr.mxu0 0.0
    %5094 = vmatpush1.msra.mxu0 %v5079
    %5095 = vmatprep.subr.mxu0 0.0
    %5096 = vmatpush1.msra.mxu0 %v5080
    %5097 = vmatprep.subr.mxu0 0.0
    %5098 = vmatpush1.msra.mxu0 %v5083
    %5099 = vmatprep.subr.mxu0 0.0
    %5100 = vmatpush1.msra.mxu0 0.0
    %5101 = vmatprep.subr.mxu0 0.0
    %5102 = vmatpush1.msra.mxu0 0.0
    %5103 = vmatprep.subr.mxu0 0.0
    %5104 = vmatpush1.msra.mxu0 0.0
    %5105 = vmatprep.subr.mxu0 0.0
    %5106 = vmatpush1.msra.mxu0 0.0
    %5107 = vmatprep.subr.mxu0 0.0
    %5108 = vmatpush1.msra.mxu0 0.0
    %5109 = vmatprep.subr.mxu0 0.0
    %5110 = vmatpush1.msra.mxu0 0.0
    %5111 = vmatprep.subr.mxu0 0.0
    %5112 = vmatpush1.msra.mxu0 0.0
    %5113 = vmatprep.subr.mxu0 0.0
    %5114 = vmatpush1.msra.mxu0 0.0
    %5115 = vmatprep.subr.mxu0 0.0
    %5116 = vmatpush1.msra.mxu0 0.0
    %5117 = vmatprep.subr.mxu0 0.0
    %5118 = vmatpush1.msra.mxu0 0.0
    %5119 = vmatprep.subr.mxu0 0.0
    %5120 = vmatpush1.msra.mxu0 0.0
    %5121 = vmatprep.subr.mxu0 0.0
    %5122 = vmatpush1.msra.mxu0 0.0
    %5123 = vmatprep.subr.mxu0 0.0
    %5124 = vmatpush1.msra.mxu0 0.0
    %5125 = vmatprep.subr.mxu0 0.0
    %5126 = vmatpush1.msra.mxu0 0.0
    %5127 = vmatprep.subr.mxu0 0.0
    %5128 = vmatpush1.msra.mxu0 0.0
    %5129 = vmatprep.subr.mxu0 0.0
    %5130 = vmatpush1.msra.mxu0 0.0
    %5131 = vmatprep.subr.mxu0 0.0
    %5132 = vmatpush1.msra.mxu0 0.0
    %5133 = vmatprep.subr.mxu0 0.0
    %5134 = vmatpush1.msra.mxu0 0.0
    %5135 = vmatprep.subr.mxu0 0.0
    %5136 = vmatpush1.msra.mxu0 0.0
    %5137 = vmatprep.subr.mxu0 0.0
    %5138 = vmatpush1.msra.mxu0 0.0
    %5139 = vmatprep.subr.mxu0 0.0
    %5140 = vmatpush1.msra.mxu0 0.0
    %5141 = vmatprep.subr.mxu0 0.0
    %5142 = vmatpush1.msra.mxu0 0.0
    %5143 = vmatprep.subr.mxu0 0.0
    %5144 = vmatpush1.msra.mxu0 0.0
    %5145 = vmatprep.subr.mxu0 0.0
    %5146 = vmatpush1.msra.mxu0 0.0
    %5147 = vmatprep.subr.mxu0 0.0
    %5148 = vmatpush1.msra.mxu0 0.0
    %5149 = vmatprep.mubr.f32.mxu0 0.0
    %5150 = vmatmul.mubr.f32.gmra.mrb[0].mxu0 %v66
    %v5151 = vpop.f32.mrb[0].mxu0
    %v5152 = vadd.f32 %v57, %v5151
    %v5153 = vpop.f32.mrb[0].mxu0
    %5154 = vmatprep.mubr.f32.mxu0 0.0
    %5155 = vmatmul.mubr.f32.gmra.mrb[0].mxu0 %v69
    %v5156 = vpop.f32.mrb[0].mxu0
    %v5157 = vadd.f32 %v62, %v5156
    %v5158 = vpop.f32.mrb[0].mxu0
    %5159 = vdwg.mxu0
    %v5160 = vmax.f32 %v5152, 0.0
    %v5161 = vmax.f32 %v5157, 0.0
    %s5162 = scalar_lea.vmem %s3, 832
    %v5163 = vld [vmem:[%s5162] sm:$0xff]
    %v5164 = vld [vmem:[%s5162 + $0x8] sm:$0xff]
    %v5165 = vld [vmem:[%s5162 + $0x10] sm:$0xff]
    %v5166 = vld [vmem:[%s5162 + $0x18] sm:$0xff]
    %v5168 = vsel %vm248, %v5163, 0
    %v5171 = vsel %vm248, %v5164, 0
    %v5174 = vsel %vm248, %v5165, 0
    %v5177 = vsel %vm248, %v5166, 0
    %5179 = vmatprep.subr.mxu0 0.0
    %5180 = vmatpush1.msra.mxu0 %v5160
    %5181 = vmatprep.subr.mxu0 0.0
    %5182 = vmatpush1.msra.mxu0 %v5161
    %5183 = vmatprep.subr.mxu0 0.0
    %5184 = vmatpush1.msra.mxu0 0.0
    %5185 = vmatprep.subr.mxu0 0.0
    %5186 = vmatpush1.msra.mxu0 0.0
    %5187 = vmatprep.subr.mxu0 0.0
    %5188 = vmatpush1.msra.mxu0 0.0
    %5189 = vmatprep.subr.mxu0 0.0
    %5190 = vmatpush1.msra.mxu0 0.0
    %5191 = vmatprep.subr.mxu0 0.0
    %5192 = vmatpush1.msra.mxu0 0.0
    %5193 = vmatprep.subr.mxu0 0.0
    %5194 = vmatpush1.msra.mxu0 0.0
    %5195 = vmatprep.subr.mxu0 0.0
    %5196 = vmatpush1.msra.mxu0 0.0
    %5197 = vmatprep.subr.mxu0 0.0
    %5198 = vmatpush1.msra.mxu0 0.0
    %5199 = vmatprep.subr.mxu0 0.0
    %5200 = vmatpush1.msra.mxu0 0.0
    %5201 = vmatprep.subr.mxu0 0.0
    %5202 = vmatpush1.msra.mxu0 0.0
    %5203 = vmatprep.subr.mxu0 0.0
    %5204 = vmatpush1.msra.mxu0 0.0
    %5205 = vmatprep.subr.mxu0 0.0
    %5206 = vmatpush1.msra.mxu0 0.0
    %5207 = vmatprep.subr.mxu0 0.0
    %5208 = vmatpush1.msra.mxu0 0.0
    %5209 = vmatprep.subr.mxu0 0.0
    %5210 = vmatpush1.msra.mxu0 0.0
    %5211 = vmatprep.subr.mxu0 0.0
    %5212 = vmatpush1.msra.mxu0 0.0
    %5213 = vmatprep.subr.mxu0 0.0
    %5214 = vmatpush1.msra.mxu0 0.0
    %5215 = vmatprep.subr.mxu0 0.0
    %5216 = vmatpush1.msra.mxu0 0.0
    %5217 = vmatprep.subr.mxu0 0.0
    %5218 = vmatpush1.msra.mxu0 0.0
    %5219 = vmatprep.subr.mxu0 0.0
    %5220 = vmatpush1.msra.mxu0 0.0
    %5221 = vmatprep.subr.mxu0 0.0
    %5222 = vmatpush1.msra.mxu0 0.0
    %5223 = vmatprep.subr.mxu0 0.0
    %5224 = vmatpush1.msra.mxu0 0.0
    %5225 = vmatprep.subr.mxu0 0.0
    %5226 = vmatpush1.msra.mxu0 0.0
    %5227 = vmatprep.subr.mxu0 0.0
    %5228 = vmatpush1.msra.mxu0 0.0
    %5229 = vmatprep.subr.mxu0 0.0
    %5230 = vmatpush1.msra.mxu0 0.0
    %5231 = vmatprep.subr.mxu0 0.0
    %5232 = vmatpush1.msra.mxu0 0.0
    %5233 = vmatprep.subr.mxu0 0.0
    %5234 = vmatpush1.msra.mxu0 0.0
    %5235 = vmatprep.subr.mxu0 0.0
    %5236 = vmatpush1.msra.mxu0 0.0
    %5237 = vmatprep.subr.mxu0 0.0
    %5238 = vmatpush1.msra.mxu0 0.0
    %5239 = vmatprep.subr.mxu0 0.0
    %5240 = vmatpush1.msra.mxu0 0.0
    %5241 = vmatprep.subr.mxu0 0.0
    %5242 = vmatpush1.msra.mxu0 0.0
    %5243 = vmatprep.mubr.f32.mxu0 0.0
    %5244 = vmatmul.mubr.f32.gmra.mrb[0].mxu0 %v5168
    %v5245 = vpop.f32.mrb[0].mxu0
    %v5246 = vadd.f32 0.0, %v5245
    %v5247 = vpop.f32.mrb[0].mxu0
    %5248 = vmatprep.mubr.f32.mxu0 0.0
    %5249 = vmatmul.mubr.f32.gmra.mrb[0].mxu0 %v5171
    %v5250 = vpop.f32.mrb[0].mxu0
    %v5251 = vadd.f32 0.0, %v5250
    %v5252 = vpop.f32.mrb[0].mxu0
    %5253 = vmatprep.mubr.f32.mxu0 0.0
    %5254 = vmatmul.mubr.f32.gmra.mrb[0].mxu0 %v5174
    %v5255 = vpop.f32.mrb[0].mxu0
    %v5256 = vadd.f32 0.0, %v5255
    %v5257 = vpop.f32.mrb[0].mxu0
    %5258 = vmatprep.mubr.f32.mxu0 0.0
    %5259 = vmatmul.mubr.f32.gmra.mrb[0].mxu0 %v5177
    %v5260 = vpop.f32.mrb[0].mxu0
    %v5261 = vadd.f32 0.0, %v5260
    %v5262 = vpop.f32.mrb[0].mxu0
    %5263 = vdwg.mxu0
    %v5264 = vadd.f32 %v5071, %v5246
    %v5265 = vadd.f32 %v5072, %v5251
    %v5266 = vadd.f32 %v5073, %v5256
    %v5267 = vadd.f32 %v5074, %v5261
    %v5268 = vld [vmem:[%s4] sm:$0xff]
    %v5269 = vld [vmem:[%s4 + $0x8] sm:$0xff]
    %v5270 = vld [vmem:[%s4 + $0x10] sm:$0xff]
    %v5271 = vld [vmem:[%s4 + $0x18] sm:$0xff]
    %5273 = vset.pattern.permute.xlu0 0
    %5274 = vperm.xlu0 %5273, %v5268
    %v5275 = vpop.permute.xlu0 %5274
    %5278 = vset.pattern.permute.xlu0 0
    %5279 = vperm.xlu0 %5278, %v5269
    %v5280 = vpop.permute.xlu0 %5279
    %5283 = vset.pattern.permute.xlu0 0
    %5284 = vperm.xlu0 %5283, %v5270
    %v5285 = vpop.permute.xlu0 %5284
    %5288 = vset.pattern.permute.xlu0 0
    %5289 = vperm.xlu0 %5288, %v5271
    %v5290 = vpop.permute.xlu0 %5289
    %v5292 = vadd.f32 %v5264, %v5275
    %v5293 = vadd.f32 %v5265, %v5280
    %v5294 = vadd.f32 %v5266, %v5285
    %v5295 = vadd.f32 %v5267, %v5290
    %v5296 = vmax.f32 %v5292, 0.0
    %v5297 = vmax.f32 %v5293, 0.0
    %v5298 = vmax.f32 %v5294, 0.0
    %v5299 = vmax.f32 %v5295, 0.0
    %5300 = vst [vmem:[#allocation2] sm:$0xff] %v5296
    %5301 = vst [vmem:[#allocation2 + $0x8] sm:$0xff] %v5297
    %5302 = vst [vmem:[#allocation2 + $0x10] sm:$0xff] %v5298
    %5303 = vst [vmem:[#allocation2 + $0x18] sm:$0xff] %v5299
    %v5304 = vld [vmem:[%s6] sm:$0x1]
    %v5306 = vlaneseq
    %v5307 = vshrl.u32 %v5306, 7
    %v5308 = vsub.s32 0, %v5307
    %v5309 = vrot.slane %v5304, %v5308
    %v5311 = vld [vmem:[#allocation2] sm:$0x3]
    %v5312 = vld [vmem:[%s5] sm:$0xff]
    %v5313 = vld [vmem:[%s5 + $0x8] sm:$0xff]
    %v5314 = vld [vmem:[%s5 + $0x10] sm:$0xff]
    %v5315 = vld [vmem:[%s5 + $0x18] sm:$0xff]
    %v5316 = vld [vmem:[%s5 + $0x20] sm:$0xff]
    %v5317 = vld [vmem:[%s5 + $0x28] sm:$0xff]
    %v5318 = vld [vmem:[%s5 + $0x30] sm:$0xff]
    %v5319 = vld [vmem:[%s5 + $0x38] sm:$0xff]
    %v5320 = vld [vmem:[%s5 + $0x40] sm:$0xff]
    %v5321 = vld [vmem:[%s5 + $0x48] sm:$0xff]
    %v5322 = vld [vmem:[%s5 + $0x50] sm:$0xff]
    %v5323 = vld [vmem:[%s5 + $0x58] sm:$0xff]
    %v5324 = vld [vmem:[%s5 + $0x60] sm:$0xff]
    %v5325 = vld [vmem:[%s5 + $0x68] sm:$0xff]
    %v5326 = vld [vmem:[%s5 + $0x70] sm:$0xff]
    %v5327 = vld [vmem:[%s5 + $0x78] sm:$0xff]
    %5328 = vmatprep.subr.mxu0 0.0
    %5329 = vmatpush1.msra.mxu0 %v5312
    %5330 = vmatprep.subr.mxu0 0.0
    %5331 = vmatpush1.msra.mxu0 %v5313
    %5332 = vmatprep.subr.mxu0 0.0
    %5333 = vmatpush1.msra.mxu0 %v5314
    %5334 = vmatprep.subr.mxu0 0.0
    %5335 = vmatpush1.msra.mxu0 %v5315
    %5336 = vmatprep.subr.mxu0 0.0
    %5337 = vmatpush1.msra.mxu0 %v5316
    %5338 = vmatprep.subr.mxu0 0.0
    %5339 = vmatpush1.msra.mxu0 %v5317
    %5340 = vmatprep.subr.mxu0 0.0
    %5341 = vmatpush1.msra.mxu0 %v5318
    %5342 = vmatprep.subr.mxu0 0.0
    %5343 = vmatpush1.msra.mxu0 %v5319
    %5344 = vmatprep.subr.mxu0 0.0
    %5345 = vmatpush1.msra.mxu0 %v5320
    %5346 = vmatprep.subr.mxu0 0.0
    %5347 = vmatpush1.msra.mxu0 %v5321
    %5348 = vmatprep.subr.mxu0 0.0
    %5349 = vmatpush1.msra.mxu0 %v5322
    %5350 = vmatprep.subr.mxu0 0.0
    %5351 = vmatpush1.msra.mxu0 %v5323
    %5352 = vmatprep.subr.mxu0 0.0
    %5353 = vmatpush1.msra.mxu0 %v5324
    %5354 = vmatprep.subr.mxu0 0.0
    %5355 = vmatpush1.msra.mxu0 %v5325
    %5356 = vmatprep.subr.mxu0 0.0
    %5357 = vmatpush1.msra.mxu0 %v5326
    %5358 = vmatprep.subr.mxu0 0.0
    %5359 = vmatpush1.msra.mxu0 %v5327
    %5360 = vmatprep.subr.mxu0 0.0
    %5361 = vmatpush1.msra.mxu0 0.0
    %5362 = vmatprep.subr.mxu0 0.0
    %5363 = vmatpush1.msra.mxu0 0.0
    %5364 = vmatprep.subr.mxu0 0.0
    %5365 = vmatpush1.msra.mxu0 0.0
    %5366 = vmatprep.subr.mxu0 0.0
    %5367 = vmatpush1.msra.mxu0 0.0
    %5368 = vmatprep.subr.mxu0 0.0
    %5369 = vmatpush1.msra.mxu0 0.0
    %5370 = vmatprep.subr.mxu0 0.0
    %5371 = vmatpush1.msra.mxu0 0.0
    %5372 = vmatprep.subr.mxu0 0.0
    %5373 = vmatpush1.msra.mxu0 0.0
    %5374 = vmatprep.subr.mxu0 0.0
    %5375 = vmatpush1.msra.mxu0 0.0
    %5376 = vmatprep.subr.mxu0 0.0
    %5377 = vmatpush1.msra.mxu0 0.0
    %5378 = vmatprep.subr.mxu0 0.0
    %5379 = vmatpush1.msra.mxu0 0.0
    %5380 = vmatprep.subr.mxu0 0.0
    %5381 = vmatpush1.msra.mxu0 0.0
    %5382 = vmatprep.subr.mxu0 0.0
    %5383 = vmatpush1.msra.mxu0 0.0
    %5384 = vmatprep.subr.mxu0 0.0
    %5385 = vmatpush1.msra.mxu0 0.0
    %5386 = vmatprep.subr.mxu0 0.0
    %5387 = vmatpush1.msra.mxu0 0.0
    %5388 = vmatprep.subr.mxu0 0.0
    %5389 = vmatpush1.msra.mxu0 0.0
    %5390 = vmatprep.subr.mxu0 0.0
    %5391 = vmatpush1.msra.mxu0 0.0
    %5392 = vmatprep.mubr.f32.mxu0 0.0
    %5393 = vmatmul.mubr.f32.gmra.mrb[0].mxu0 %v5311
    %v5394 = vpop.f32.mrb[0].mxu0
    %v5395 = vadd.f32 0.0, %v5394
    %v5396 = vpop.f32.mrb[0].mxu0
    %5397 = vdwg.mxu0
    %v5398 = vadd.f32 %v5309, %v5395
    %v5399 = vld [vmem:[#allocation2 + $0x2] sm:$0x3]
    %s5400 = scalar_lea.vmem %s5, 128
    %v5401 = vld [vmem:[%s5400] sm:$0xff]
    %v5402 = vld [vmem:[%s5400 + $0x8] sm:$0xff]
    %v5403 = vld [vmem:[%s5400 + $0x10] sm:$0xff]
    %v5404 = vld [vmem:[%s5400 + $0x18] sm:$0xff]
    %v5405 = vld [vmem:[%s5400 + $0x20] sm:$0xff]
    %v5406 = vld [vmem:[%s5400 + $0x28] sm:$0xff]
    %v5407 = vld [vmem:[%s5400 + $0x30] sm:$0xff]
    %v5408 = vld [vmem:[%s5400 + $0x38] sm:$0xff]
    %v5409 = vld [vmem:[%s5400 + $0x40] sm:$0xff]
    %v5410 = vld [vmem:[%s5400 + $0x48] sm:$0xff]
    %v5411 = vld [vmem:[%s5400 + $0x50] sm:$0xff]
    %v5412 = vld [vmem:[%s5400 + $0x58] sm:$0xff]
    %v5413 = vld [vmem:[%s5400 + $0x60] sm:$0xff]
    %v5414 = vld [vmem:[%s5400 + $0x68] sm:$0xff]
    %v5415 = vld [vmem:[%s5400 + $0x70] sm:$0xff]
    %v5416 = vld [vmem:[%s5400 + $0x78] sm:$0xff]
    %5417 = vmatprep.subr.mxu0 0.0
    %5418 = vmatpush1.msra.mxu0 %v5401
    %5419 = vmatprep.subr.mxu0 0.0
    %5420 = vmatpush1.msra.mxu0 %v5402
    %5421 = vmatprep.subr.mxu0 0.0
    %5422 = vmatpush1.msra.mxu0 %v5403
    %5423 = vmatprep.subr.mxu0 0.0
    %5424 = vmatpush1.msra.mxu0 %v5404
    %5425 = vmatprep.subr.mxu0 0.0
    %5426 = vmatpush1.msra.mxu0 %v5405
    %5427 = vmatprep.subr.mxu0 0.0
    %5428 = vmatpush1.msra.mxu0 %v5406
    %5429 = vmatprep.subr.mxu0 0.0
    %5430 = vmatpush1.msra.mxu0 %v5407
    %5431 = vmatprep.subr.mxu0 0.0
    %5432 = vmatpush1.msra.mxu0 %v5408
    %5433 = vmatprep.subr.mxu0 0.0
    %5434 = vmatpush1.msra.mxu0 %v5409
    %5435 = vmatprep.subr.mxu0 0.0
    %5436 = vmatpush1.msra.mxu0 %v5410
    %5437 = vmatprep.subr.mxu0 0.0
    %5438 = vmatpush1.msra.mxu0 %v5411
    %5439 = vmatprep.subr.mxu0 0.0
    %5440 = vmatpush1.msra.mxu0 %v5412
    %5441 = vmatprep.subr.mxu0 0.0
    %5442 = vmatpush1.msra.mxu0 %v5413
    %5443 = vmatprep.subr.mxu0 0.0
    %5444 = vmatpush1.msra.mxu0 %v5414
    %5445 = vmatprep.subr.mxu0 0.0
    %5446 = vmatpush1.msra.mxu0 %v5415
    %5447 = vmatprep.subr.mxu0 0.0
    %5448 = vmatpush1.msra.mxu0 %v5416
    %5449 = vmatprep.subr.mxu0 0.0
    %5450 = vmatpush1.msra.mxu0 0.0
    %5451 = vmatprep.subr.mxu0 0.0
    %5452 = vmatpush1.msra.mxu0 0.0
    %5453 = vmatprep.subr.mxu0 0.0
    %5454 = vmatpush1.msra.mxu0 0.0
    %5455 = vmatprep.subr.mxu0 0.0
    %5456 = vmatpush1.msra.mxu0 0.0
    %5457 = vmatprep.subr.mxu0 0.0
    %5458 = vmatpush1.msra.mxu0 0.0
    %5459 = vmatprep.subr.mxu0 0.0
    %5460 = vmatpush1.msra.mxu0 0.0
    %5461 = vmatprep.subr.mxu0 0.0
    %5462 = vmatpush1.msra.mxu0 0.0
    %5463 = vmatprep.subr.mxu0 0.0
    %5464 = vmatpush1.msra.mxu0 0.0
    %5465 = vmatprep.subr.mxu0 0.0
    %5466 = vmatpush1.msra.mxu0 0.0
    %5467 = vmatprep.subr.mxu0 0.0
    %5468 = vmatpush1.msra.mxu0 0.0
    %5469 = vmatprep.subr.mxu0 0.0
    %5470 = vmatpush1.msra.mxu0 0.0
    %5471 = vmatprep.subr.mxu0 0.0
    %5472 = vmatpush1.msra.mxu0 0.0
    %5473 = vmatprep.subr.mxu0 0.0
    %5474 = vmatpush1.msra.mxu0 0.0
    %5475 = vmatprep.subr.mxu0 0.0
    %5476 = vmatpush1.msra.mxu0 0.0
    %5477 = vmatprep.subr.mxu0 0.0
    %5478 = vmatpush1.msra.mxu0 0.0
    %5479 = vmatprep.subr.mxu0 0.0
    %5480 = vmatpush1.msra.mxu0 0.0
    %5481 = vmatprep.mubr.f32.mxu0 0.0
    %5482 = vmatmul.mubr.f32.gmra.mrb[0].mxu0 %v5399
    %v5483 = vpop.f32.mrb[0].mxu0
    %v5484 = vadd.f32 0.0, %v5483
    %v5485 = vpop.f32.mrb[0].mxu0
    %5486 = vdwg.mxu0
    %v5487 = vadd.f32 %v5398, %v5484
    %v5488 = vld [vmem:[#allocation2 + $0x4] sm:$0x3]
    %s5489 = scalar_lea.vmem %s5, 256
    %v5490 = vld [vmem:[%s5489] sm:$0xff]
    %v5491 = vld [vmem:[%s5489 + $0x8] sm:$0xff]
    %v5492 = vld [vmem:[%s5489 + $0x10] sm:$0xff]
    %v5493 = vld [vmem:[%s5489 + $0x18] sm:$0xff]
    %v5494 = vld [vmem:[%s5489 + $0x20] sm:$0xff]
    %v5495 = vld [vmem:[%s5489 + $0x28] sm:$0xff]
    %v5496 = vld [vmem:[%s5489 + $0x30] sm:$0xff]
    %v5497 = vld [vmem:[%s5489 + $0x38] sm:$0xff]
    %v5498 = vld [vmem:[%s5489 + $0x40] sm:$0xff]
    %v5499 = vld [vmem:[%s5489 + $0x48] sm:$0xff]
    %v5500 = vld [vmem:[%s5489 + $0x50] sm:$0xff]
    %v5501 = vld [vmem:[%s5489 + $0x58] sm:$0xff]
    %v5502 = vld [vmem:[%s5489 + $0x60] sm:$0xff]
    %v5503 = vld [vmem:[%s5489 + $0x68] sm:$0xff]
    %v5504 = vld [vmem:[%s5489 + $0x70] sm:$0xff]
    %v5505 = vld [vmem:[%s5489 + $0x78] sm:$0xff]
    %5506 = vmatprep.subr.mxu0 0.0
    %5507 = vmatpush1.msra.mxu0 %v5490
    %5508 = vmatprep.subr.mxu0 0.0
    %5509 = vmatpush1.msra.mxu0 %v5491
    %5510 = vmatprep.subr.mxu0 0.0
    %5511 = vmatpush1.msra.mxu0 %v5492
    %5512 = vmatprep.subr.mxu0 0.0
    %5513 = vmatpush1.msra.mxu0 %v5493
    %5514 = vmatprep.subr.mxu0 0.0
    %5515 = vmatpush1.msra.mxu0 %v5494
    %5516 = vmatprep.subr.mxu0 0.0
    %5517 = vmatpush1.msra.mxu0 %v5495
    %5518 = vmatprep.subr.mxu0 0.0
    %5519 = vmatpush1.msra.mxu0 %v5496
    %5520 = vmatprep.subr.mxu0 0.0
    %5521 = vmatpush1.msra.mxu0 %v5497
    %5522 = vmatprep.subr.mxu0 0.0
    %5523 = vmatpush1.msra.mxu0 %v5498
    %5524 = vmatprep.subr.mxu0 0.0
    %5525 = vmatpush1.msra.mxu0 %v5499
    %5526 = vmatprep.subr.mxu0 0.0
    %5527 = vmatpush1.msra.mxu0 %v5500
    %5528 = vmatprep.subr.mxu0 0.0
    %5529 = vmatpush1.msra.mxu0 %v5501
    %5530 = vmatprep.subr.mxu0 0.0
    %5531 = vmatpush1.msra.mxu0 %v5502
    %5532 = vmatprep.subr.mxu0 0.0
    %5533 = vmatpush1.msra.mxu0 %v5503
    %5534 = vmatprep.subr.mxu0 0.0
    %5535 = vmatpush1.msra.mxu0 %v5504
    %5536 = vmatprep.subr.mxu0 0.0
    %5537 = vmatpush1.msra.mxu0 %v5505
    %5538 = vmatprep.subr.mxu0 0.0
    %5539 = vmatpush1.msra.mxu0 0.0
    %5540 = vmatprep.subr.mxu0 0.0
    %5541 = vmatpush1.msra.mxu0 0.0
    %5542 = vmatprep.subr.mxu0 0.0
    %5543 = vmatpush1.msra.mxu0 0.0
    %5544 = vmatprep.subr.mxu0 0.0
    %5545 = vmatpush1.msra.mxu0 0.0
    %5546 = vmatprep.subr.mxu0 0.0
    %5547 = vmatpush1.msra.mxu0 0.0
    %5548 = vmatprep.subr.mxu0 0.0
    %5549 = vmatpush1.msra.mxu0 0.0
    %5550 = vmatprep.subr.mxu0 0.0
    %5551 = vmatpush1.msra.mxu0 0.0
    %5552 = vmatprep.subr.mxu0 0.0
    %5553 = vmatpush1.msra.mxu0 0.0
    %5554 = vmatprep.subr.mxu0 0.0
    %5555 = vmatpush1.msra.mxu0 0.0
    %5556 = vmatprep.subr.mxu0 0.0
    %5557 = vmatpush1.msra.mxu0 0.0
    %5558 = vmatprep.subr.mxu0 0.0
    %5559 = vmatpush1.msra.mxu0 0.0
    %5560 = vmatprep.subr.mxu0 0.0
    %5561 = vmatpush1.msra.mxu0 0.0
    %5562 = vmatprep.subr.mxu0 0.0
    %5563 = vmatpush1.msra.mxu0 0.0
    %5564 = vmatprep.subr.mxu0 0.0
    %5565 = vmatpush1.msra.mxu0 0.0
    %5566 = vmatprep.subr.mxu0 0.0
    %5567 = vmatpush1.msra.mxu0 0.0
    %5568 = vmatprep.subr.mxu0 0.0
    %5569 = vmatpush1.msra.mxu0 0.0
    %5570 = vmatprep.mubr.f32.mxu0 0.0
    %5571 = vmatmul.mubr.f32.gmra.mrb[0].mxu0 %v5488
    %v5572 = vpop.f32.mrb[0].mxu0
    %v5573 = vadd.f32 0.0, %v5572
    %v5574 = vpop.f32.mrb[0].mxu0
    %5575 = vdwg.mxu0
    %v5576 = vadd.f32 %v5487, %v5573
    %v5577 = vld [vmem:[#allocation2 + $0x6] sm:$0x3]
    %s5578 = scalar_lea.vmem %s5, 384
    %v5579 = vld [vmem:[%s5578] sm:$0xff]
    %v5580 = vld [vmem:[%s5578 + $0x8] sm:$0xff]
    %v5581 = vld [vmem:[%s5578 + $0x10] sm:$0xff]
    %v5582 = vld [vmem:[%s5578 + $0x18] sm:$0xff]
    %v5583 = vld [vmem:[%s5578 + $0x20] sm:$0xff]
    %v5584 = vld [vmem:[%s5578 + $0x28] sm:$0xff]
    %v5585 = vld [vmem:[%s5578 + $0x30] sm:$0xff]
    %v5586 = vld [vmem:[%s5578 + $0x38] sm:$0xff]
    %v5587 = vld [vmem:[%s5578 + $0x40] sm:$0xff]
    %v5588 = vld [vmem:[%s5578 + $0x48] sm:$0xff]
    %v5589 = vld [vmem:[%s5578 + $0x50] sm:$0xff]
    %v5590 = vld [vmem:[%s5578 + $0x58] sm:$0xff]
    %v5591 = vld [vmem:[%s5578 + $0x60] sm:$0xff]
    %v5592 = vld [vmem:[%s5578 + $0x68] sm:$0xff]
    %v5593 = vld [vmem:[%s5578 + $0x70] sm:$0xff]
    %v5594 = vld [vmem:[%s5578 + $0x78] sm:$0xff]
    %5595 = vmatprep.subr.mxu0 0.0
    %5596 = vmatpush1.msra.mxu0 %v5579
    %5597 = vmatprep.subr.mxu0 0.0
    %5598 = vmatpush1.msra.mxu0 %v5580
    %5599 = vmatprep.subr.mxu0 0.0
    %5600 = vmatpush1.msra.mxu0 %v5581
    %5601 = vmatprep.subr.mxu0 0.0
    %5602 = vmatpush1.msra.mxu0 %v5582
    %5603 = vmatprep.subr.mxu0 0.0
    %5604 = vmatpush1.msra.mxu0 %v5583
    %5605 = vmatprep.subr.mxu0 0.0
    %5606 = vmatpush1.msra.mxu0 %v5584
    %5607 = vmatprep.subr.mxu0 0.0
    %5608 = vmatpush1.msra.mxu0 %v5585
    %5609 = vmatprep.subr.mxu0 0.0
    %5610 = vmatpush1.msra.mxu0 %v5586
    %5611 = vmatprep.subr.mxu0 0.0
    %5612 = vmatpush1.msra.mxu0 %v5587
    %5613 = vmatprep.subr.mxu0 0.0
    %5614 = vmatpush1.msra.mxu0 %v5588
    %5615 = vmatprep.subr.mxu0 0.0
    %5616 = vmatpush1.msra.mxu0 %v5589
    %5617 = vmatprep.subr.mxu0 0.0
    %5618 = vmatpush1.msra.mxu0 %v5590
    %5619 = vmatprep.subr.mxu0 0.0
    %5620 = vmatpush1.msra.mxu0 %v5591
    %5621 = vmatprep.subr.mxu0 0.0
    %5622 = vmatpush1.msra.mxu0 %v5592
    %5623 = vmatprep.subr.mxu0 0.0
    %5624 = vmatpush1.msra.mxu0 %v5593
    %5625 = vmatprep.subr.mxu0 0.0
    %5626 = vmatpush1.msra.mxu0 %v5594
    %5627 = vmatprep.subr.mxu0 0.0
    %5628 = vmatpush1.msra.mxu0 0.0
    %5629 = vmatprep.subr.mxu0 0.0
    %5630 = vmatpush1.msra.mxu0 0.0
    %5631 = vmatprep.subr.mxu0 0.0
    %5632 = vmatpush1.msra.mxu0 0.0
    %5633 = vmatprep.subr.mxu0 0.0
    %5634 = vmatpush1.msra.mxu0 0.0
    %5635 = vmatprep.subr.mxu0 0.0
    %5636 = vmatpush1.msra.mxu0 0.0
    %5637 = vmatprep.subr.mxu0 0.0
    %5638 = vmatpush1.msra.mxu0 0.0
    %5639 = vmatprep.subr.mxu0 0.0
    %5640 = vmatpush1.msra.mxu0 0.0
    %5641 = vmatprep.subr.mxu0 0.0
    %5642 = vmatpush1.msra.mxu0 0.0
    %5643 = vmatprep.subr.mxu0 0.0
    %5644 = vmatpush1.msra.mxu0 0.0
    %5645 = vmatprep.subr.mxu0 0.0
    %5646 = vmatpush1.msra.mxu0 0.0
    %5647 = vmatprep.subr.mxu0 0.0
    %5648 = vmatpush1.msra.mxu0 0.0
    %5649 = vmatprep.subr.mxu0 0.0
    %5650 = vmatpush1.msra.mxu0 0.0
    %5651 = vmatprep.subr.mxu0 0.0
    %5652 = vmatpush1.msra.mxu0 0.0
    %5653 = vmatprep.subr.mxu0 0.0
    %5654 = vmatpush1.msra.mxu0 0.0
    %5655 = vmatprep.subr.mxu0 0.0
    %5656 = vmatpush1.msra.mxu0 0.0
    %5657 = vmatprep.subr.mxu0 0.0
    %5658 = vmatpush1.msra.mxu0 0.0
    %5659 = vmatprep.mubr.f32.mxu0 0.0
    %5660 = vmatmul.mubr.f32.gmra.mrb[0].mxu0 %v5577
    %v5661 = vpop.f32.mrb[0].mxu0
    %v5662 = vadd.f32 0.0, %v5661
    %v5663 = vpop.f32.mrb[0].mxu0
    %5664 = vdwg.mxu0
    %v5665 = vadd.f32 %v5576, %v5662
    %v5666 = vld [vmem:[#allocation2 + $0x8] sm:$0x3]
    %s5667 = scalar_lea.vmem %s5, 512
    %v5668 = vld [vmem:[%s5667] sm:$0xff]
    %v5669 = vld [vmem:[%s5667 + $0x8] sm:$0xff]
    %v5670 = vld [vmem:[%s5667 + $0x10] sm:$0xff]
    %v5671 = vld [vmem:[%s5667 + $0x18] sm:$0xff]
    %v5672 = vld [vmem:[%s5667 + $0x20] sm:$0xff]
    %v5673 = vld [vmem:[%s5667 + $0x28] sm:$0xff]
    %v5674 = vld [vmem:[%s5667 + $0x30] sm:$0xff]
    %v5675 = vld [vmem:[%s5667 + $0x38] sm:$0xff]
    %v5676 = vld [vmem:[%s5667 + $0x40] sm:$0xff]
    %v5677 = vld [vmem:[%s5667 + $0x48] sm:$0xff]
    %v5678 = vld [vmem:[%s5667 + $0x50] sm:$0xff]
    %v5679 = vld [vmem:[%s5667 + $0x58] sm:$0xff]
    %v5680 = vld [vmem:[%s5667 + $0x60] sm:$0xff]
    %v5681 = vld [vmem:[%s5667 + $0x68] sm:$0xff]
    %v5682 = vld [vmem:[%s5667 + $0x70] sm:$0xff]
    %v5683 = vld [vmem:[%s5667 + $0x78] sm:$0xff]
    %5684 = vmatprep.subr.mxu0 0.0
    %5685 = vmatpush1.msra.mxu0 %v5668
    %5686 = vmatprep.subr.mxu0 0.0
    %5687 = vmatpush1.msra.mxu0 %v5669
    %5688 = vmatprep.subr.mxu0 0.0
    %5689 = vmatpush1.msra.mxu0 %v5670
    %5690 = vmatprep.subr.mxu0 0.0
    %5691 = vmatpush1.msra.mxu0 %v5671
    %5692 = vmatprep.subr.mxu0 0.0
    %5693 = vmatpush1.msra.mxu0 %v5672
    %5694 = vmatprep.subr.mxu0 0.0
    %5695 = vmatpush1.msra.mxu0 %v5673
    %5696 = vmatprep.subr.mxu0 0.0
    %5697 = vmatpush1.msra.mxu0 %v5674
    %5698 = vmatprep.subr.mxu0 0.0
    %5699 = vmatpush1.msra.mxu0 %v5675
    %5700 = vmatprep.subr.mxu0 0.0
    %5701 = vmatpush1.msra.mxu0 %v5676
    %5702 = vmatprep.subr.mxu0 0.0
    %5703 = vmatpush1.msra.mxu0 %v5677
    %5704 = vmatprep.subr.mxu0 0.0
    %5705 = vmatpush1.msra.mxu0 %v5678
    %5706 = vmatprep.subr.mxu0 0.0
    %5707 = vmatpush1.msra.mxu0 %v5679
    %5708 = vmatprep.subr.mxu0 0.0
    %5709 = vmatpush1.msra.mxu0 %v5680
    %5710 = vmatprep.subr.mxu0 0.0
    %5711 = vmatpush1.msra.mxu0 %v5681
    %5712 = vmatprep.subr.mxu0 0.0
    %5713 = vmatpush1.msra.mxu0 %v5682
    %5714 = vmatprep.subr.mxu0 0.0
    %5715 = vmatpush1.msra.mxu0 %v5683
    %5716 = vmatprep.subr.mxu0 0.0
    %5717 = vmatpush1.msra.mxu0 0.0
    %5718 = vmatprep.subr.mxu0 0.0
    %5719 = vmatpush1.msra.mxu0 0.0
    %5720 = vmatprep.subr.mxu0 0.0
    %5721 = vmatpush1.msra.mxu0 0.0
    %5722 = vmatprep.subr.mxu0 0.0
    %5723 = vmatpush1.msra.mxu0 0.0
    %5724 = vmatprep.subr.mxu0 0.0
    %5725 = vmatpush1.msra.mxu0 0.0
    %5726 = vmatprep.subr.mxu0 0.0
    %5727 = vmatpush1.msra.mxu0 0.0
    %5728 = vmatprep.subr.mxu0 0.0
    %5729 = vmatpush1.msra.mxu0 0.0
    %5730 = vmatprep.subr.mxu0 0.0
    %5731 = vmatpush1.msra.mxu0 0.0
    %5732 = vmatprep.subr.mxu0 0.0
    %5733 = vmatpush1.msra.mxu0 0.0
    %5734 = vmatprep.subr.mxu0 0.0
    %5735 = vmatpush1.msra.mxu0 0.0
    %5736 = vmatprep.subr.mxu0 0.0
    %5737 = vmatpush1.msra.mxu0 0.0
    %5738 = vmatprep.subr.mxu0 0.0
    %5739 = vmatpush1.msra.mxu0 0.0
    %5740 = vmatprep.subr.mxu0 0.0
    %5741 = vmatpush1.msra.mxu0 0.0
    %5742 = vmatprep.subr.mxu0 0.0
    %5743 = vmatpush1.msra.mxu0 0.0
    %5744 = vmatprep.subr.mxu0 0.0
    %5745 = vmatpush1.msra.mxu0 0.0
    %5746 = vmatprep.subr.mxu0 0.0
    %5747 = vmatpush1.msra.mxu0 0.0
    %5748 = vmatprep.mubr.f32.mxu0 0.0
    %5749 = vmatmul.mubr.f32.gmra.mrb[0].mxu0 %v5666
    %v5750 = vpop.f32.mrb[0].mxu0
    %v5751 = vadd.f32 0.0, %v5750
    %v5752 = vpop.f32.mrb[0].mxu0
    %5753 = vdwg.mxu0
    %v5754 = vadd.f32 %v5665, %v5751
    %v5755 = vld [vmem:[#allocation2 + $0xa] sm:$0x3]
    %s5756 = scalar_lea.vmem %s5, 640
    %v5757 = vld [vmem:[%s5756] sm:$0xff]
    %v5758 = vld [vmem:[%s5756 + $0x8] sm:$0xff]
    %v5759 = vld [vmem:[%s5756 + $0x10] sm:$0xff]
    %v5760 = vld [vmem:[%s5756 + $0x18] sm:$0xff]
    %v5761 = vld [vmem:[%s5756 + $0x20] sm:$0xff]
    %v5762 = vld [vmem:[%s5756 + $0x28] sm:$0xff]
    %v5763 = vld [vmem:[%s5756 + $0x30] sm:$0xff]
    %v5764 = vld [vmem:[%s5756 + $0x38] sm:$0xff]
    %v5765 = vld [vmem:[%s5756 + $0x40] sm:$0xff]
    %v5766 = vld [vmem:[%s5756 + $0x48] sm:$0xff]
    %v5767 = vld [vmem:[%s5756 + $0x50] sm:$0xff]
    %v5768 = vld [vmem:[%s5756 + $0x58] sm:$0xff]
    %v5769 = vld [vmem:[%s5756 + $0x60] sm:$0xff]
    %v5770 = vld [vmem:[%s5756 + $0x68] sm:$0xff]
    %v5771 = vld [vmem:[%s5756 + $0x70] sm:$0xff]
    %v5772 = vld [vmem:[%s5756 + $0x78] sm:$0xff]
    %5773 = vmatprep.subr.mxu0 0.0
    %5774 = vmatpush1.msra.mxu0 %v5757
    %5775 = vmatprep.subr.mxu0 0.0
    %5776 = vmatpush1.msra.mxu0 %v5758
    %5777 = vmatprep.subr.mxu0 0.0
    %5778 = vmatpush1.msra.mxu0 %v5759
    %5779 = vmatprep.subr.mxu0 0.0
    %5780 = vmatpush1.msra.mxu0 %v5760
    %5781 = vmatprep.subr.mxu0 0.0
    %5782 = vmatpush1.msra.mxu0 %v5761
    %5783 = vmatprep.subr.mxu0 0.0
    %5784 = vmatpush1.msra.mxu0 %v5762
    %5785 = vmatprep.subr.mxu0 0.0
    %5786 = vmatpush1.msra.mxu0 %v5763
    %5787 = vmatprep.subr.mxu0 0.0
    %5788 = vmatpush1.msra.mxu0 %v5764
    %5789 = vmatprep.subr.mxu0 0.0
    %5790 = vmatpush1.msra.mxu0 %v5765
    %5791 = vmatprep.subr.mxu0 0.0
    %5792 = vmatpush1.msra.mxu0 %v5766
    %5793 = vmatprep.subr.mxu0 0.0
    %5794 = vmatpush1.msra.mxu0 %v5767
    %5795 = vmatprep.subr.mxu0 0.0
    %5796 = vmatpush1.msra.mxu0 %v5768
    %5797 = vmatprep.subr.mxu0 0.0
    %5798 = vmatpush1.msra.mxu0 %v5769
    %5799 = vmatprep.subr.mxu0 0.0
    %5800 = vmatpush1.msra.mxu0 %v5770
    %5801 = vmatprep.subr.mxu0 0.0
    %5802 = vmatpush1.msra.mxu0 %v5771
    %5803 = vmatprep.subr.mxu0 0.0
    %5804 = vmatpush1.msra.mxu0 %v5772
    %5805 = vmatprep.subr.mxu0 0.0
    %5806 = vmatpush1.msra.mxu0 0.0
    %5807 = vmatprep.subr.mxu0 0.0
    %5808 = vmatpush1.msra.mxu0 0.0
    %5809 = vmatprep.subr.mxu0 0.0
    %5810 = vmatpush1.msra.mxu0 0.0
    %5811 = vmatprep.subr.mxu0 0.0
    %5812 = vmatpush1.msra.mxu0 0.0
    %5813 = vmatprep.subr.mxu0 0.0
    %5814 = vmatpush1.msra.mxu0 0.0
    %5815 = vmatprep.subr.mxu0 0.0
    %5816 = vmatpush1.msra.mxu0 0.0
    %5817 = vmatprep.subr.mxu0 0.0
    %5818 = vmatpush1.msra.mxu0 0.0
    %5819 = vmatprep.subr.mxu0 0.0
    %5820 = vmatpush1.msra.mxu0 0.0
    %5821 = vmatprep.subr.mxu0 0.0
    %5822 = vmatpush1.msra.mxu0 0.0
    %5823 = vmatprep.subr.mxu0 0.0
    %5824 = vmatpush1.msra.mxu0 0.0
    %5825 = vmatprep.subr.mxu0 0.0
    %5826 = vmatpush1.msra.mxu0 0.0
    %5827 = vmatprep.subr.mxu0 0.0
    %5828 = vmatpush1.msra.mxu0 0.0
    %5829 = vmatprep.subr.mxu0 0.0
    %5830 = vmatpush1.msra.mxu0 0.0
    %5831 = vmatprep.subr.mxu0 0.0
    %5832 = vmatpush1.msra.mxu0 0.0
    %5833 = vmatprep.subr.mxu0 0.0
    %5834 = vmatpush1.msra.mxu0 0.0
    %5835 = vmatprep.subr.mxu0 0.0
    %5836 = vmatpush1.msra.mxu0 0.0
    %5837 = vmatprep.mubr.f32.mxu0 0.0
    %5838 = vmatmul.mubr.f32.gmra.mrb[0].mxu0 %v5755
    %v5839 = vpop.f32.mrb[0].mxu0
    %v5840 = vadd.f32 0.0, %v5839
    %v5841 = vpop.f32.mrb[0].mxu0
    %5842 = vdwg.mxu0
    %v5843 = vadd.f32 %v5754, %v5840
    %v5844 = vld [vmem:[#allocation2 + $0xc] sm:$0x3]
    %s5845 = scalar_lea.vmem %s5, 768
    %v5846 = vld [vmem:[%s5845] sm:$0xff]
    %v5847 = vld [vmem:[%s5845 + $0x8] sm:$0xff]
    %v5848 = vld [vmem:[%s5845 + $0x10] sm:$0xff]
    %v5849 = vld [vmem:[%s5845 + $0x18] sm:$0xff]
    %v5850 = vld [vmem:[%s5845 + $0x20] sm:$0xff]
    %v5851 = vld [vmem:[%s5845 + $0x28] sm:$0xff]
    %v5852 = vld [vmem:[%s5845 + $0x30] sm:$0xff]
    %v5853 = vld [vmem:[%s5845 + $0x38] sm:$0xff]
    %v5854 = vld [vmem:[%s5845 + $0x40] sm:$0xff]
    %v5855 = vld [vmem:[%s5845 + $0x48] sm:$0xff]
    %v5856 = vld [vmem:[%s5845 + $0x50] sm:$0xff]
    %v5857 = vld [vmem:[%s5845 + $0x58] sm:$0xff]
    %v5858 = vld [vmem:[%s5845 + $0x60] sm:$0xff]
    %v5859 = vld [vmem:[%s5845 + $0x68] sm:$0xff]
    %v5860 = vld [vmem:[%s5845 + $0x70] sm:$0xff]
    %v5861 = vld [vmem:[%s5845 + $0x78] sm:$0xff]
    %5862 = vmatprep.subr.mxu0 0.0
    %5863 = vmatpush1.msra.mxu0 %v5846
    %5864 = vmatprep.subr.mxu0 0.0
    %5865 = vmatpush1.msra.mxu0 %v5847
    %5866 = vmatprep.subr.mxu0 0.0
    %5867 = vmatpush1.msra.mxu0 %v5848
    %5868 = vmatprep.subr.mxu0 0.0
    %5869 = vmatpush1.msra.mxu0 %v5849
    %5870 = vmatprep.subr.mxu0 0.0
    %5871 = vmatpush1.msra.mxu0 %v5850
    %5872 = vmatprep.subr.mxu0 0.0
    %5873 = vmatpush1.msra.mxu0 %v5851
    %5874 = vmatprep.subr.mxu0 0.0
    %5875 = vmatpush1.msra.mxu0 %v5852
    %5876 = vmatprep.subr.mxu0 0.0
    %5877 = vmatpush1.msra.mxu0 %v5853
    %5878 = vmatprep.subr.mxu0 0.0
    %5879 = vmatpush1.msra.mxu0 %v5854
    %5880 = vmatprep.subr.mxu0 0.0
    %5881 = vmatpush1.msra.mxu0 %v5855
    %5882 = vmatprep.subr.mxu0 0.0
    %5883 = vmatpush1.msra.mxu0 %v5856
    %5884 = vmatprep.subr.mxu0 0.0
    %5885 = vmatpush1.msra.mxu0 %v5857
    %5886 = vmatprep.subr.mxu0 0.0
    %5887 = vmatpush1.msra.mxu0 %v5858
    %5888 = vmatprep.subr.mxu0 0.0
    %5889 = vmatpush1.msra.mxu0 %v5859
    %5890 = vmatprep.subr.mxu0 0.0
    %5891 = vmatpush1.msra.mxu0 %v5860
    %5892 = vmatprep.subr.mxu0 0.0
    %5893 = vmatpush1.msra.mxu0 %v5861
    %5894 = vmatprep.subr.mxu0 0.0
    %5895 = vmatpush1.msra.mxu0 0.0
    %5896 = vmatprep.subr.mxu0 0.0
    %5897 = vmatpush1.msra.mxu0 0.0
    %5898 = vmatprep.subr.mxu0 0.0
    %5899 = vmatpush1.msra.mxu0 0.0
    %5900 = vmatprep.subr.mxu0 0.0
    %5901 = vmatpush1.msra.mxu0 0.0
    %5902 = vmatprep.subr.mxu0 0.0
    %5903 = vmatpush1.msra.mxu0 0.0
    %5904 = vmatprep.subr.mxu0 0.0
    %5905 = vmatpush1.msra.mxu0 0.0
    %5906 = vmatprep.subr.mxu0 0.0
    %5907 = vmatpush1.msra.mxu0 0.0
    %5908 = vmatprep.subr.mxu0 0.0
    %5909 = vmatpush1.msra.mxu0 0.0
    %5910 = vmatprep.subr.mxu0 0.0
    %5911 = vmatpush1.msra.mxu0 0.0
    %5912 = vmatprep.subr.mxu0 0.0
    %5913 = vmatpush1.msra.mxu0 0.0
    %5914 = vmatprep.subr.mxu0 0.0
    %5915 = vmatpush1.msra.mxu0 0.0
    %5916 = vmatprep.subr.mxu0 0.0
    %5917 = vmatpush1.msra.mxu0 0.0
    %5918 = vmatprep.subr.mxu0 0.0
    %5919 = vmatpush1.msra.mxu0 0.0
    %5920 = vmatprep.subr.mxu0 0.0
    %5921 = vmatpush1.msra.mxu0 0.0
    %5922 = vmatprep.subr.mxu0 0.0
    %5923 = vmatpush1.msra.mxu0 0.0
    %5924 = vmatprep.subr.mxu0 0.0
    %5925 = vmatpush1.msra.mxu0 0.0
    %5926 = vmatprep.mubr.f32.mxu0 0.0
    %5927 = vmatmul.mubr.f32.gmra.mrb[0].mxu0 %v5844
    %v5928 = vpop.f32.mrb[0].mxu0
    %v5929 = vadd.f32 0.0, %v5928
    %v5930 = vpop.f32.mrb[0].mxu0
    %5931 = vdwg.mxu0
    %v5932 = vadd.f32 %v5843, %v5929
    %v5933 = vld [vmem:[#allocation2 + $0xe] sm:$0x3]
    %s5934 = scalar_lea.vmem %s5, 896
    %v5935 = vld [vmem:[%s5934] sm:$0xff]
    %v5936 = vld [vmem:[%s5934 + $0x8] sm:$0xff]
    %v5937 = vld [vmem:[%s5934 + $0x10] sm:$0xff]
    %v5938 = vld [vmem:[%s5934 + $0x18] sm:$0xff]
    %v5939 = vld [vmem:[%s5934 + $0x20] sm:$0xff]
    %v5940 = vld [vmem:[%s5934 + $0x28] sm:$0xff]
    %v5941 = vld [vmem:[%s5934 + $0x30] sm:$0xff]
    %v5942 = vld [vmem:[%s5934 + $0x38] sm:$0xff]
    %v5943 = vld [vmem:[%s5934 + $0x40] sm:$0xff]
    %v5944 = vld [vmem:[%s5934 + $0x48] sm:$0xff]
    %v5945 = vld [vmem:[%s5934 + $0x50] sm:$0xff]
    %v5946 = vld [vmem:[%s5934 + $0x58] sm:$0xff]
    %v5947 = vld [vmem:[%s5934 + $0x60] sm:$0xff]
    %v5948 = vld [vmem:[%s5934 + $0x68] sm:$0xff]
    %v5949 = vld [vmem:[%s5934 + $0x70] sm:$0xff]
    %v5950 = vld [vmem:[%s5934 + $0x78] sm:$0xff]
    %5951 = vmatprep.subr.mxu0 0.0
    %5952 = vmatpush1.msra.mxu0 %v5935
    %5953 = vmatprep.subr.mxu0 0.0
    %5954 = vmatpush1.msra.mxu0 %v5936
    %5955 = vmatprep.subr.mxu0 0.0
    %5956 = vmatpush1.msra.mxu0 %v5937
    %5957 = vmatprep.subr.mxu0 0.0
    %5958 = vmatpush1.msra.mxu0 %v5938
    %5959 = vmatprep.subr.mxu0 0.0
    %5960 = vmatpush1.msra.mxu0 %v5939
    %5961 = vmatprep.subr.mxu0 0.0
    %5962 = vmatpush1.msra.mxu0 %v5940
    %5963 = vmatprep.subr.mxu0 0.0
    %5964 = vmatpush1.msra.mxu0 %v5941
    %5965 = vmatprep.subr.mxu0 0.0
    %5966 = vmatpush1.msra.mxu0 %v5942
    %5967 = vmatprep.subr.mxu0 0.0
    %5968 = vmatpush1.msra.mxu0 %v5943
    %5969 = vmatprep.subr.mxu0 0.0
    %5970 = vmatpush1.msra.mxu0 %v5944
    %5971 = vmatprep.subr.mxu0 0.0
    %5972 = vmatpush1.msra.mxu0 %v5945
    %5973 = vmatprep.subr.mxu0 0.0
    %5974 = vmatpush1.msra.mxu0 %v5946
    %5975 = vmatprep.subr.mxu0 0.0
    %5976 = vmatpush1.msra.mxu0 %v5947
    %5977 = vmatprep.subr.mxu0 0.0
    %5978 = vmatpush1.msra.mxu0 %v5948
    %5979 = vmatprep.subr.mxu0 0.0
    %5980 = vmatpush1.msra.mxu0 %v5949
    %5981 = vmatprep.subr.mxu0 0.0
    %5982 = vmatpush1.msra.mxu0 %v5950
    %5983 = vmatprep.subr.mxu0 0.0
    %5984 = vmatpush1.msra.mxu0 0.0
    %5985 = vmatprep.subr.mxu0 0.0
    %5986 = vmatpush1.msra.mxu0 0.0
    %5987 = vmatprep.subr.mxu0 0.0
    %5988 = vmatpush1.msra.mxu0 0.0
    %5989 = vmatprep.subr.mxu0 0.0
    %5990 = vmatpush1.msra.mxu0 0.0
    %5991 = vmatprep.subr.mxu0 0.0
    %5992 = vmatpush1.msra.mxu0 0.0
    %5993 = vmatprep.subr.mxu0 0.0
    %5994 = vmatpush1.msra.mxu0 0.0
    %5995 = vmatprep.subr.mxu0 0.0
    %5996 = vmatpush1.msra.mxu0 0.0
    %5997 = vmatprep.subr.mxu0 0.0
    %5998 = vmatpush1.msra.mxu0 0.0
    %5999 = vmatprep.subr.mxu0 0.0
    %6000 = vmatpush1.msra.mxu0 0.0
    %6001 = vmatprep.subr.mxu0 0.0
    %6002 = vmatpush1.msra.mxu0 0.0
    %6003 = vmatprep.subr.mxu0 0.0
    %6004 = vmatpush1.msra.mxu0 0.0
    %6005 = vmatprep.subr.mxu0 0.0
    %6006 = vmatpush1.msra.mxu0 0.0
    %6007 = vmatprep.subr.mxu0 0.0
    %6008 = vmatpush1.msra.mxu0 0.0
    %6009 = vmatprep.subr.mxu0 0.0
    %6010 = vmatpush1.msra.mxu0 0.0
    %6011 = vmatprep.subr.mxu0 0.0
    %6012 = vmatpush1.msra.mxu0 0.0
    %6013 = vmatprep.subr.mxu0 0.0
    %6014 = vmatpush1.msra.mxu0 0.0
    %6015 = vmatprep.mubr.f32.mxu0 0.0
    %6016 = vmatmul.mubr.f32.gmra.mrb[0].mxu0 %v5933
    %v6017 = vpop.f32.mrb[0].mxu0
    %v6018 = vadd.f32 0.0, %v6017
    %v6019 = vpop.f32.mrb[0].mxu0
    %6020 = vdwg.mxu0
    %v6021 = vadd.f32 %v5932, %v6018
    %v6022 = vld [vmem:[#allocation2 + $0x10] sm:$0x3]
    %s6023 = scalar_lea.vmem %s5, 1024
    %v6024 = vld [vmem:[%s6023] sm:$0xff]
    %v6025 = vld [vmem:[%s6023 + $0x8] sm:$0xff]
    %v6026 = vld [vmem:[%s6023 + $0x10] sm:$0xff]
    %v6027 = vld [vmem:[%s6023 + $0x18] sm:$0xff]
    %v6028 = vld [vmem:[%s6023 + $0x20] sm:$0xff]
    %v6029 = vld [vmem:[%s6023 + $0x28] sm:$0xff]
    %v6030 = vld [vmem:[%s6023 + $0x30] sm:$0xff]
    %v6031 = vld [vmem:[%s6023 + $0x38] sm:$0xff]
    %v6032 = vld [vmem:[%s6023 + $0x40] sm:$0xff]
    %v6033 = vld [vmem:[%s6023 + $0x48] sm:$0xff]
    %v6034 = vld [vmem:[%s6023 + $0x50] sm:$0xff]
    %v6035 = vld [vmem:[%s6023 + $0x58] sm:$0xff]
    %v6036 = vld [vmem:[%s6023 + $0x60] sm:$0xff]
    %v6037 = vld [vmem:[%s6023 + $0x68] sm:$0xff]
    %v6038 = vld [vmem:[%s6023 + $0x70] sm:$0xff]
    %v6039 = vld [vmem:[%s6023 + $0x78] sm:$0xff]
    %6040 = vmatprep.subr.mxu0 0.0
    %6041 = vmatpush1.msra.mxu0 %v6024
    %6042 = vmatprep.subr.mxu0 0.0
    %6043 = vmatpush1.msra.mxu0 %v6025
    %6044 = vmatprep.subr.mxu0 0.0
    %6045 = vmatpush1.msra.mxu0 %v6026
    %6046 = vmatprep.subr.mxu0 0.0
    %6047 = vmatpush1.msra.mxu0 %v6027
    %6048 = vmatprep.subr.mxu0 0.0
    %6049 = vmatpush1.msra.mxu0 %v6028
    %6050 = vmatprep.subr.mxu0 0.0
    %6051 = vmatpush1.msra.mxu0 %v6029
    %6052 = vmatprep.subr.mxu0 0.0
    %6053 = vmatpush1.msra.mxu0 %v6030
    %6054 = vmatprep.subr.mxu0 0.0
    %6055 = vmatpush1.msra.mxu0 %v6031
    %6056 = vmatprep.subr.mxu0 0.0
    %6057 = vmatpush1.msra.mxu0 %v6032
    %6058 = vmatprep.subr.mxu0 0.0
    %6059 = vmatpush1.msra.mxu0 %v6033
    %6060 = vmatprep.subr.mxu0 0.0
    %6061 = vmatpush1.msra.mxu0 %v6034
    %6062 = vmatprep.subr.mxu0 0.0
    %6063 = vmatpush1.msra.mxu0 %v6035
    %6064 = vmatprep.subr.mxu0 0.0
    %6065 = vmatpush1.msra.mxu0 %v6036
    %6066 = vmatprep.subr.mxu0 0.0
    %6067 = vmatpush1.msra.mxu0 %v6037
    %6068 = vmatprep.subr.mxu0 0.0
    %6069 = vmatpush1.msra.mxu0 %v6038
    %6070 = vmatprep.subr.mxu0 0.0
    %6071 = vmatpush1.msra.mxu0 %v6039
    %6072 = vmatprep.subr.mxu0 0.0
    %6073 = vmatpush1.msra.mxu0 0.0
    %6074 = vmatprep.subr.mxu0 0.0
    %6075 = vmatpush1.msra.mxu0 0.0
    %6076 = vmatprep.subr.mxu0 0.0
    %6077 = vmatpush1.msra.mxu0 0.0
    %6078 = vmatprep.subr.mxu0 0.0
    %6079 = vmatpush1.msra.mxu0 0.0
    %6080 = vmatprep.subr.mxu0 0.0
    %6081 = vmatpush1.msra.mxu0 0.0
    %6082 = vmatprep.subr.mxu0 0.0
    %6083 = vmatpush1.msra.mxu0 0.0
    %6084 = vmatprep.subr.mxu0 0.0
    %6085 = vmatpush1.msra.mxu0 0.0
    %6086 = vmatprep.subr.mxu0 0.0
    %6087 = vmatpush1.msra.mxu0 0.0
    %6088 = vmatprep.subr.mxu0 0.0
    %6089 = vmatpush1.msra.mxu0 0.0
    %6090 = vmatprep.subr.mxu0 0.0
    %6091 = vmatpush1.msra.mxu0 0.0
    %6092 = vmatprep.subr.mxu0 0.0
    %6093 = vmatpush1.msra.mxu0 0.0
    %6094 = vmatprep.subr.mxu0 0.0
    %6095 = vmatpush1.msra.mxu0 0.0
    %6096 = vmatprep.subr.mxu0 0.0
    %6097 = vmatpush1.msra.mxu0 0.0
    %6098 = vmatprep.subr.mxu0 0.0
    %6099 = vmatpush1.msra.mxu0 0.0
    %6100 = vmatprep.subr.mxu0 0.0
    %6101 = vmatpush1.msra.mxu0 0.0
    %6102 = vmatprep.subr.mxu0 0.0
    %6103 = vmatpush1.msra.mxu0 0.0
    %6104 = vmatprep.mubr.f32.mxu0 0.0
    %6105 = vmatmul.mubr.f32.gmra.mrb[0].mxu0 %v6022
    %v6106 = vpop.f32.mrb[0].mxu0
    %v6107 = vadd.f32 0.0, %v6106
    %v6108 = vpop.f32.mrb[0].mxu0
    %6109 = vdwg.mxu0
    %v6110 = vadd.f32 %v6021, %v6107
    %v6111 = vld [vmem:[#allocation2 + $0x12] sm:$0x3]
    %s6112 = scalar_lea.vmem %s5, 1152
    %v6113 = vld [vmem:[%s6112] sm:$0xff]
    %v6114 = vld [vmem:[%s6112 + $0x8] sm:$0xff]
    %v6115 = vld [vmem:[%s6112 + $0x10] sm:$0xff]
    %v6116 = vld [vmem:[%s6112 + $0x18] sm:$0xff]
    %v6117 = vld [vmem:[%s6112 + $0x20] sm:$0xff]
    %v6118 = vld [vmem:[%s6112 + $0x28] sm:$0xff]
    %v6119 = vld [vmem:[%s6112 + $0x30] sm:$0xff]
    %v6120 = vld [vmem:[%s6112 + $0x38] sm:$0xff]
    %v6121 = vld [vmem:[%s6112 + $0x40] sm:$0xff]
    %v6122 = vld [vmem:[%s6112 + $0x48] sm:$0xff]
    %v6123 = vld [vmem:[%s6112 + $0x50] sm:$0xff]
    %v6124 = vld [vmem:[%s6112 + $0x58] sm:$0xff]
    %v6125 = vld [vmem:[%s6112 + $0x60] sm:$0xff]
    %v6126 = vld [vmem:[%s6112 + $0x68] sm:$0xff]
    %v6127 = vld [vmem:[%s6112 + $0x70] sm:$0xff]
    %v6128 = vld [vmem:[%s6112 + $0x78] sm:$0xff]
    %6129 = vmatprep.subr.mxu0 0.0
    %6130 = vmatpush1.msra.mxu0 %v6113
    %6131 = vmatprep.subr.mxu0 0.0
    %6132 = vmatpush1.msra.mxu0 %v6114
    %6133 = vmatprep.subr.mxu0 0.0
    %6134 = vmatpush1.msra.mxu0 %v6115
    %6135 = vmatprep.subr.mxu0 0.0
    %6136 = vmatpush1.msra.mxu0 %v6116
    %6137 = vmatprep.subr.mxu0 0.0
    %6138 = vmatpush1.msra.mxu0 %v6117
    %6139 = vmatprep.subr.mxu0 0.0
    %6140 = vmatpush1.msra.mxu0 %v6118
    %6141 = vmatprep.subr.mxu0 0.0
    %6142 = vmatpush1.msra.mxu0 %v6119
    %6143 = vmatprep.subr.mxu0 0.0
    %6144 = vmatpush1.msra.mxu0 %v6120
    %6145 = vmatprep.subr.mxu0 0.0
    %6146 = vmatpush1.msra.mxu0 %v6121
    %6147 = vmatprep.subr.mxu0 0.0
    %6148 = vmatpush1.msra.mxu0 %v6122
    %6149 = vmatprep.subr.mxu0 0.0
    %6150 = vmatpush1.msra.mxu0 %v6123
    %6151 = vmatprep.subr.mxu0 0.0
    %6152 = vmatpush1.msra.mxu0 %v6124
    %6153 = vmatprep.subr.mxu0 0.0
    %6154 = vmatpush1.msra.mxu0 %v6125
    %6155 = vmatprep.subr.mxu0 0.0
    %6156 = vmatpush1.msra.mxu0 %v6126
    %6157 = vmatprep.subr.mxu0 0.0
    %6158 = vmatpush1.msra.mxu0 %v6127
    %6159 = vmatprep.subr.mxu0 0.0
    %6160 = vmatpush1.msra.mxu0 %v6128
    %6161 = vmatprep.subr.mxu0 0.0
    %6162 = vmatpush1.msra.mxu0 0.0
    %6163 = vmatprep.subr.mxu0 0.0
    %6164 = vmatpush1.msra.mxu0 0.0
    %6165 = vmatprep.subr.mxu0 0.0
    %6166 = vmatpush1.msra.mxu0 0.0
    %6167 = vmatprep.subr.mxu0 0.0
    %6168 = vmatpush1.msra.mxu0 0.0
    %6169 = vmatprep.subr.mxu0 0.0
    %6170 = vmatpush1.msra.mxu0 0.0
    %6171 = vmatprep.subr.mxu0 0.0
    %6172 = vmatpush1.msra.mxu0 0.0
    %6173 = vmatprep.subr.mxu0 0.0
    %6174 = vmatpush1.msra.mxu0 0.0
    %6175 = vmatprep.subr.mxu0 0.0
    %6176 = vmatpush1.msra.mxu0 0.0
    %6177 = vmatprep.subr.mxu0 0.0
    %6178 = vmatpush1.msra.mxu0 0.0
    %6179 = vmatprep.subr.mxu0 0.0
    %6180 = vmatpush1.msra.mxu0 0.0
    %6181 = vmatprep.subr.mxu0 0.0
    %6182 = vmatpush1.msra.mxu0 0.0
    %6183 = vmatprep.subr.mxu0 0.0
    %6184 = vmatpush1.msra.mxu0 0.0
    %6185 = vmatprep.subr.mxu0 0.0
    %6186 = vmatpush1.msra.mxu0 0.0
    %6187 = vmatprep.subr.mxu0 0.0
    %6188 = vmatpush1.msra.mxu0 0.0
    %6189 = vmatprep.subr.mxu0 0.0
    %6190 = vmatpush1.msra.mxu0 0.0
    %6191 = vmatprep.subr.mxu0 0.0
    %6192 = vmatpush1.msra.mxu0 0.0
    %6193 = vmatprep.mubr.f32.mxu0 0.0
    %6194 = vmatmul.mubr.f32.gmra.mrb[0].mxu0 %v6111
    %v6195 = vpop.f32.mrb[0].mxu0
    %v6196 = vadd.f32 0.0, %v6195
    %v6197 = vpop.f32.mrb[0].mxu0
    %6198 = vdwg.mxu0
    %v6199 = vadd.f32 %v6110, %v6196
    %v6200 = vld [vmem:[#allocation2 + $0x14] sm:$0x3]
    %s6201 = scalar_lea.vmem %s5, 1280
    %v6202 = vld [vmem:[%s6201] sm:$0xff]
    %v6203 = vld [vmem:[%s6201 + $0x8] sm:$0xff]
    %v6204 = vld [vmem:[%s6201 + $0x10] sm:$0xff]
    %v6205 = vld [vmem:[%s6201 + $0x18] sm:$0xff]
    %v6206 = vld [vmem:[%s6201 + $0x20] sm:$0xff]
    %v6207 = vld [vmem:[%s6201 + $0x28] sm:$0xff]
    %v6208 = vld [vmem:[%s6201 + $0x30] sm:$0xff]
    %v6209 = vld [vmem:[%s6201 + $0x38] sm:$0xff]
    %v6210 = vld [vmem:[%s6201 + $0x40] sm:$0xff]
    %v6211 = vld [vmem:[%s6201 + $0x48] sm:$0xff]
    %v6212 = vld [vmem:[%s6201 + $0x50] sm:$0xff]
    %v6213 = vld [vmem:[%s6201 + $0x58] sm:$0xff]
    %v6214 = vld [vmem:[%s6201 + $0x60] sm:$0xff]
    %v6215 = vld [vmem:[%s6201 + $0x68] sm:$0xff]
    %v6216 = vld [vmem:[%s6201 + $0x70] sm:$0xff]
    %v6217 = vld [vmem:[%s6201 + $0x78] sm:$0xff]
    %6218 = vmatprep.subr.mxu0 0.0
    %6219 = vmatpush1.msra.mxu0 %v6202
    %6220 = vmatprep.subr.mxu0 0.0
    %6221 = vmatpush1.msra.mxu0 %v6203
    %6222 = vmatprep.subr.mxu0 0.0
    %6223 = vmatpush1.msra.mxu0 %v6204
    %6224 = vmatprep.subr.mxu0 0.0
    %6225 = vmatpush1.msra.mxu0 %v6205
    %6226 = vmatprep.subr.mxu0 0.0
    %6227 = vmatpush1.msra.mxu0 %v6206
    %6228 = vmatprep.subr.mxu0 0.0
    %6229 = vmatpush1.msra.mxu0 %v6207
    %6230 = vmatprep.subr.mxu0 0.0
    %6231 = vmatpush1.msra.mxu0 %v6208
    %6232 = vmatprep.subr.mxu0 0.0
    %6233 = vmatpush1.msra.mxu0 %v6209
    %6234 = vmatprep.subr.mxu0 0.0
    %6235 = vmatpush1.msra.mxu0 %v6210
    %6236 = vmatprep.subr.mxu0 0.0
    %6237 = vmatpush1.msra.mxu0 %v6211
    %6238 = vmatprep.subr.mxu0 0.0
    %6239 = vmatpush1.msra.mxu0 %v6212
    %6240 = vmatprep.subr.mxu0 0.0
    %6241 = vmatpush1.msra.mxu0 %v6213
    %6242 = vmatprep.subr.mxu0 0.0
    %6243 = vmatpush1.msra.mxu0 %v6214
    %6244 = vmatprep.subr.mxu0 0.0
    %6245 = vmatpush1.msra.mxu0 %v6215
    %6246 = vmatprep.subr.mxu0 0.0
    %6247 = vmatpush1.msra.mxu0 %v6216
    %6248 = vmatprep.subr.mxu0 0.0
    %6249 = vmatpush1.msra.mxu0 %v6217
    %6250 = vmatprep.subr.mxu0 0.0
    %6251 = vmatpush1.msra.mxu0 0.0
    %6252 = vmatprep.subr.mxu0 0.0
    %6253 = vmatpush1.msra.mxu0 0.0
    %6254 = vmatprep.subr.mxu0 0.0
    %6255 = vmatpush1.msra.mxu0 0.0
    %6256 = vmatprep.subr.mxu0 0.0
    %6257 = vmatpush1.msra.mxu0 0.0
    %6258 = vmatprep.subr.mxu0 0.0
    %6259 = vmatpush1.msra.mxu0 0.0
    %6260 = vmatprep.subr.mxu0 0.0
    %6261 = vmatpush1.msra.mxu0 0.0
    %6262 = vmatprep.subr.mxu0 0.0
    %6263 = vmatpush1.msra.mxu0 0.0
    %6264 = vmatprep.subr.mxu0 0.0
    %6265 = vmatpush1.msra.mxu0 0.0
    %6266 = vmatprep.subr.mxu0 0.0
    %6267 = vmatpush1.msra.mxu0 0.0
    %6268 = vmatprep.subr.mxu0 0.0
    %6269 = vmatpush1.msra.mxu0 0.0
    %6270 = vmatprep.subr.mxu0 0.0
    %6271 = vmatpush1.msra.mxu0 0.0
    %6272 = vmatprep.subr.mxu0 0.0
    %6273 = vmatpush1.msra.mxu0 0.0
    %6274 = vmatprep.subr.mxu0 0.0
    %6275 = vmatpush1.msra.mxu0 0.0
    %6276 = vmatprep.subr.mxu0 0.0
    %6277 = vmatpush1.msra.mxu0 0.0
    %6278 = vmatprep.subr.mxu0 0.0
    %6279 = vmatpush1.msra.mxu0 0.0
    %6280 = vmatprep.subr.mxu0 0.0
    %6281 = vmatpush1.msra.mxu0 0.0
    %6282 = vmatprep.mubr.f32.mxu0 0.0
    %6283 = vmatmul.mubr.f32.gmra.mrb[0].mxu0 %v6200
    %v6284 = vpop.f32.mrb[0].mxu0
    %v6285 = vadd.f32 0.0, %v6284
    %v6286 = vpop.f32.mrb[0].mxu0
    %6287 = vdwg.mxu0
    %v6288 = vadd.f32 %v6199, %v6285
    %v6289 = vld [vmem:[#allocation2 + $0x16] sm:$0x3]
    %s6290 = scalar_lea.vmem %s5, 1408
    %v6291 = vld [vmem:[%s6290] sm:$0xff]
    %v6292 = vld [vmem:[%s6290 + $0x8] sm:$0xff]
    %v6293 = vld [vmem:[%s6290 + $0x10] sm:$0xff]
    %v6294 = vld [vmem:[%s6290 + $0x18] sm:$0xff]
    %v6295 = vld [vmem:[%s6290 + $0x20] sm:$0xff]
    %v6296 = vld [vmem:[%s6290 + $0x28] sm:$0xff]
    %v6297 = vld [vmem:[%s6290 + $0x30] sm:$0xff]
    %v6298 = vld [vmem:[%s6290 + $0x38] sm:$0xff]
    %v6299 = vld [vmem:[%s6290 + $0x40] sm:$0xff]
    %v6300 = vld [vmem:[%s6290 + $0x48] sm:$0xff]
    %v6301 = vld [vmem:[%s6290 + $0x50] sm:$0xff]
    %v6302 = vld [vmem:[%s6290 + $0x58] sm:$0xff]
    %v6303 = vld [vmem:[%s6290 + $0x60] sm:$0xff]
    %v6304 = vld [vmem:[%s6290 + $0x68] sm:$0xff]
    %v6305 = vld [vmem:[%s6290 + $0x70] sm:$0xff]
    %v6306 = vld [vmem:[%s6290 + $0x78] sm:$0xff]
    %6307 = vmatprep.subr.mxu0 0.0
    %6308 = vmatpush1.msra.mxu0 %v6291
    %6309 = vmatprep.subr.mxu0 0.0
    %6310 = vmatpush1.msra.mxu0 %v6292
    %6311 = vmatprep.subr.mxu0 0.0
    %6312 = vmatpush1.msra.mxu0 %v6293
    %6313 = vmatprep.subr.mxu0 0.0
    %6314 = vmatpush1.msra.mxu0 %v6294
    %6315 = vmatprep.subr.mxu0 0.0
    %6316 = vmatpush1.msra.mxu0 %v6295
    %6317 = vmatprep.subr.mxu0 0.0
    %6318 = vmatpush1.msra.mxu0 %v6296
    %6319 = vmatprep.subr.mxu0 0.0
    %6320 = vmatpush1.msra.mxu0 %v6297
    %6321 = vmatprep.subr.mxu0 0.0
    %6322 = vmatpush1.msra.mxu0 %v6298
    %6323 = vmatprep.subr.mxu0 0.0
    %6324 = vmatpush1.msra.mxu0 %v6299
    %6325 = vmatprep.subr.mxu0 0.0
    %6326 = vmatpush1.msra.mxu0 %v6300
    %6327 = vmatprep.subr.mxu0 0.0
    %6328 = vmatpush1.msra.mxu0 %v6301
    %6329 = vmatprep.subr.mxu0 0.0
    %6330 = vmatpush1.msra.mxu0 %v6302
    %6331 = vmatprep.subr.mxu0 0.0
    %6332 = vmatpush1.msra.mxu0 %v6303
    %6333 = vmatprep.subr.mxu0 0.0
    %6334 = vmatpush1.msra.mxu0 %v6304
    %6335 = vmatprep.subr.mxu0 0.0
    %6336 = vmatpush1.msra.mxu0 %v6305
    %6337 = vmatprep.subr.mxu0 0.0
    %6338 = vmatpush1.msra.mxu0 %v6306
    %6339 = vmatprep.subr.mxu0 0.0
    %6340 = vmatpush1.msra.mxu0 0.0
    %6341 = vmatprep.subr.mxu0 0.0
    %6342 = vmatpush1.msra.mxu0 0.0
    %6343 = vmatprep.subr.mxu0 0.0
    %6344 = vmatpush1.msra.mxu0 0.0
    %6345 = vmatprep.subr.mxu0 0.0
    %6346 = vmatpush1.msra.mxu0 0.0
    %6347 = vmatprep.subr.mxu0 0.0
    %6348 = vmatpush1.msra.mxu0 0.0
    %6349 = vmatprep.subr.mxu0 0.0
    %6350 = vmatpush1.msra.mxu0 0.0
    %6351 = vmatprep.subr.mxu0 0.0
    %6352 = vmatpush1.msra.mxu0 0.0
    %6353 = vmatprep.subr.mxu0 0.0
    %6354 = vmatpush1.msra.mxu0 0.0
    %6355 = vmatprep.subr.mxu0 0.0
    %6356 = vmatpush1.msra.mxu0 0.0
    %6357 = vmatprep.subr.mxu0 0.0
    %6358 = vmatpush1.msra.mxu0 0.0
    %6359 = vmatprep.subr.mxu0 0.0
    %6360 = vmatpush1.msra.mxu0 0.0
    %6361 = vmatprep.subr.mxu0 0.0
    %6362 = vmatpush1.msra.mxu0 0.0
    %6363 = vmatprep.subr.mxu0 0.0
    %6364 = vmatpush1.msra.mxu0 0.0
    %6365 = vmatprep.subr.mxu0 0.0
    %6366 = vmatpush1.msra.mxu0 0.0
    %6367 = vmatprep.subr.mxu0 0.0
    %6368 = vmatpush1.msra.mxu0 0.0
    %6369 = vmatprep.subr.mxu0 0.0
    %6370 = vmatpush1.msra.mxu0 0.0
    %6371 = vmatprep.mubr.f32.mxu0 0.0
    %6372 = vmatmul.mubr.f32.gmra.mrb[0].mxu0 %v6289
    %v6373 = vpop.f32.mrb[0].mxu0
    %v6374 = vadd.f32 0.0, %v6373
    %v6375 = vpop.f32.mrb[0].mxu0
    %6376 = vdwg.mxu0
    %v6377 = vadd.f32 %v6288, %v6374
    %v6378 = vld [vmem:[#allocation2 + $0x18] sm:$0x3]
    %s6379 = scalar_lea.vmem %s5, 1536
    %v6380 = vld [vmem:[%s6379] sm:$0xff]
    %v6381 = vld [vmem:[%s6379 + $0x8] sm:$0xff]
    %v6382 = vld [vmem:[%s6379 + $0x10] sm:$0xff]
    %v6383 = vld [vmem:[%s6379 + $0x18] sm:$0xff]
    %v6384 = vld [vmem:[%s6379 + $0x20] sm:$0xff]
    %v6385 = vld [vmem:[%s6379 + $0x28] sm:$0xff]
    %v6386 = vld [vmem:[%s6379 + $0x30] sm:$0xff]
    %v6387 = vld [vmem:[%s6379 + $0x38] sm:$0xff]
    %v6388 = vld [vmem:[%s6379 + $0x40] sm:$0xff]
    %v6389 = vld [vmem:[%s6379 + $0x48] sm:$0xff]
    %v6390 = vld [vmem:[%s6379 + $0x50] sm:$0xff]
    %v6391 = vld [vmem:[%s6379 + $0x58] sm:$0xff]
    %v6392 = vld [vmem:[%s6379 + $0x60] sm:$0xff]
    %v6393 = vld [vmem:[%s6379 + $0x68] sm:$0xff]
    %v6394 = vld [vmem:[%s6379 + $0x70] sm:$0xff]
    %v6395 = vld [vmem:[%s6379 + $0x78] sm:$0xff]
    %6396 = vmatprep.subr.mxu0 0.0
    %6397 = vmatpush1.msra.mxu0 %v6380
    %6398 = vmatprep.subr.mxu0 0.0
    %6399 = vmatpush1.msra.mxu0 %v6381
    %6400 = vmatprep.subr.mxu0 0.0
    %6401 = vmatpush1.msra.mxu0 %v6382
    %6402 = vmatprep.subr.mxu0 0.0
    %6403 = vmatpush1.msra.mxu0 %v6383
    %6404 = vmatprep.subr.mxu0 0.0
    %6405 = vmatpush1.msra.mxu0 %v6384
    %6406 = vmatprep.subr.mxu0 0.0
    %6407 = vmatpush1.msra.mxu0 %v6385
    %6408 = vmatprep.subr.mxu0 0.0
    %6409 = vmatpush1.msra.mxu0 %v6386
    %6410 = vmatprep.subr.mxu0 0.0
    %6411 = vmatpush1.msra.mxu0 %v6387
    %6412 = vmatprep.subr.mxu0 0.0
    %6413 = vmatpush1.msra.mxu0 %v6388
    %6414 = vmatprep.subr.mxu0 0.0
    %6415 = vmatpush1.msra.mxu0 %v6389
    %6416 = vmatprep.subr.mxu0 0.0
    %6417 = vmatpush1.msra.mxu0 %v6390
    %6418 = vmatprep.subr.mxu0 0.0
    %6419 = vmatpush1.msra.mxu0 %v6391
    %6420 = vmatprep.subr.mxu0 0.0
    %6421 = vmatpush1.msra.mxu0 %v6392
    %6422 = vmatprep.subr.mxu0 0.0
    %6423 = vmatpush1.msra.mxu0 %v6393
    %6424 = vmatprep.subr.mxu0 0.0
    %6425 = vmatpush1.msra.mxu0 %v6394
    %6426 = vmatprep.subr.mxu0 0.0
    %6427 = vmatpush1.msra.mxu0 %v6395
    %6428 = vmatprep.subr.mxu0 0.0
    %6429 = vmatpush1.msra.mxu0 0.0
    %6430 = vmatprep.subr.mxu0 0.0
    %6431 = vmatpush1.msra.mxu0 0.0
    %6432 = vmatprep.subr.mxu0 0.0
    %6433 = vmatpush1.msra.mxu0 0.0
    %6434 = vmatprep.subr.mxu0 0.0
    %6435 = vmatpush1.msra.mxu0 0.0
    %6436 = vmatprep.subr.mxu0 0.0
    %6437 = vmatpush1.msra.mxu0 0.0
    %6438 = vmatprep.subr.mxu0 0.0
    %6439 = vmatpush1.msra.mxu0 0.0
    %6440 = vmatprep.subr.mxu0 0.0
    %6441 = vmatpush1.msra.mxu0 0.0
    %6442 = vmatprep.subr.mxu0 0.0
    %6443 = vmatpush1.msra.mxu0 0.0
    %6444 = vmatprep.subr.mxu0 0.0
    %6445 = vmatpush1.msra.mxu0 0.0
    %6446 = vmatprep.subr.mxu0 0.0
    %6447 = vmatpush1.msra.mxu0 0.0
    %6448 = vmatprep.subr.mxu0 0.0
    %6449 = vmatpush1.msra.mxu0 0.0
    %6450 = vmatprep.subr.mxu0 0.0
    %6451 = vmatpush1.msra.mxu0 0.0
    %6452 = vmatprep.subr.mxu0 0.0
    %6453 = vmatpush1.msra.mxu0 0.0
    %6454 = vmatprep.subr.mxu0 0.0
    %6455 = vmatpush1.msra.mxu0 0.0
    %6456 = vmatprep.subr.mxu0 0.0
    %6457 = vmatpush1.msra.mxu0 0.0
    %6458 = vmatprep.subr.mxu0 0.0
    %6459 = vmatpush1.msra.mxu0 0.0
    %6460 = vmatprep.mubr.f32.mxu0 0.0
    %6461 = vmatmul.mubr.f32.gmra.mrb[0].mxu0 %v6378
    %v6462 = vpop.f32.mrb[0].mxu0
    %v6463 = vadd.f32 0.0, %v6462
    %v6464 = vpop.f32.mrb[0].mxu0
    %6465 = vdwg.mxu0
    %v6466 = vadd.f32 %v6377, %v6463
    %v6467 = vld [vmem:[#allocation2 + $0x1a] sm:$0x3]
    %s6468 = scalar_lea.vmem %s5, 1664
    %v6469 = vld [vmem:[%s6468] sm:$0xff]
    %v6470 = vld [vmem:[%s6468 + $0x8] sm:$0xff]
    %v6471 = vld [vmem:[%s6468 + $0x10] sm:$0xff]
    %v6472 = vld [vmem:[%s6468 + $0x18] sm:$0xff]
    %v6473 = vld [vmem:[%s6468 + $0x20] sm:$0xff]
    %v6474 = vld [vmem:[%s6468 + $0x28] sm:$0xff]
    %v6475 = vld [vmem:[%s6468 + $0x30] sm:$0xff]
    %v6476 = vld [vmem:[%s6468 + $0x38] sm:$0xff]
    %v6477 = vld [vmem:[%s6468 + $0x40] sm:$0xff]
    %v6478 = vld [vmem:[%s6468 + $0x48] sm:$0xff]
    %v6479 = vld [vmem:[%s6468 + $0x50] sm:$0xff]
    %v6480 = vld [vmem:[%s6468 + $0x58] sm:$0xff]
    %v6481 = vld [vmem:[%s6468 + $0x60] sm:$0xff]
    %v6482 = vld [vmem:[%s6468 + $0x68] sm:$0xff]
    %v6483 = vld [vmem:[%s6468 + $0x70] sm:$0xff]
    %v6484 = vld [vmem:[%s6468 + $0x78] sm:$0xff]
    %6485 = vmatprep.subr.mxu0 0.0
    %6486 = vmatpush1.msra.mxu0 %v6469
    %6487 = vmatprep.subr.mxu0 0.0
    %6488 = vmatpush1.msra.mxu0 %v6470
    %6489 = vmatprep.subr.mxu0 0.0
    %6490 = vmatpush1.msra.mxu0 %v6471
    %6491 = vmatprep.subr.mxu0 0.0
    %6492 = vmatpush1.msra.mxu0 %v6472
    %6493 = vmatprep.subr.mxu0 0.0
    %6494 = vmatpush1.msra.mxu0 %v6473
    %6495 = vmatprep.subr.mxu0 0.0
    %6496 = vmatpush1.msra.mxu0 %v6474
    %6497 = vmatprep.subr.mxu0 0.0
    %6498 = vmatpush1.msra.mxu0 %v6475
    %6499 = vmatprep.subr.mxu0 0.0
    %6500 = vmatpush1.msra.mxu0 %v6476
    %6501 = vmatprep.subr.mxu0 0.0
    %6502 = vmatpush1.msra.mxu0 %v6477
    %6503 = vmatprep.subr.mxu0 0.0
    %6504 = vmatpush1.msra.mxu0 %v6478
    %6505 = vmatprep.subr.mxu0 0.0
    %6506 = vmatpush1.msra.mxu0 %v6479
    %6507 = vmatprep.subr.mxu0 0.0
    %6508 = vmatpush1.msra.mxu0 %v6480
    %6509 = vmatprep.subr.mxu0 0.0
    %6510 = vmatpush1.msra.mxu0 %v6481
    %6511 = vmatprep.subr.mxu0 0.0
    %6512 = vmatpush1.msra.mxu0 %v6482
    %6513 = vmatprep.subr.mxu0 0.0
    %6514 = vmatpush1.msra.mxu0 %v6483
    %6515 = vmatprep.subr.mxu0 0.0
    %6516 = vmatpush1.msra.mxu0 %v6484
    %6517 = vmatprep.subr.mxu0 0.0
    %6518 = vmatpush1.msra.mxu0 0.0
    %6519 = vmatprep.subr.mxu0 0.0
    %6520 = vmatpush1.msra.mxu0 0.0
    %6521 = vmatprep.subr.mxu0 0.0
    %6522 = vmatpush1.msra.mxu0 0.0
    %6523 = vmatprep.subr.mxu0 0.0
    %6524 = vmatpush1.msra.mxu0 0.0
    %6525 = vmatprep.subr.mxu0 0.0
    %6526 = vmatpush1.msra.mxu0 0.0
    %6527 = vmatprep.subr.mxu0 0.0
    %6528 = vmatpush1.msra.mxu0 0.0
    %6529 = vmatprep.subr.mxu0 0.0
    %6530 = vmatpush1.msra.mxu0 0.0
    %6531 = vmatprep.subr.mxu0 0.0
    %6532 = vmatpush1.msra.mxu0 0.0
    %6533 = vmatprep.subr.mxu0 0.0
    %6534 = vmatpush1.msra.mxu0 0.0
    %6535 = vmatprep.subr.mxu0 0.0
    %6536 = vmatpush1.msra.mxu0 0.0
    %6537 = vmatprep.subr.mxu0 0.0
    %6538 = vmatpush1.msra.mxu0 0.0
    %6539 = vmatprep.subr.mxu0 0.0
    %6540 = vmatpush1.msra.mxu0 0.0
    %6541 = vmatprep.subr.mxu0 0.0
    %6542 = vmatpush1.msra.mxu0 0.0
    %6543 = vmatprep.subr.mxu0 0.0
    %6544 = vmatpush1.msra.mxu0 0.0
    %6545 = vmatprep.subr.mxu0 0.0
    %6546 = vmatpush1.msra.mxu0 0.0
    %6547 = vmatprep.subr.mxu0 0.0
    %6548 = vmatpush1.msra.mxu0 0.0
    %6549 = vmatprep.mubr.f32.mxu0 0.0
    %6550 = vmatmul.mubr.f32.gmra.mrb[0].mxu0 %v6467
    %v6551 = vpop.f32.mrb[0].mxu0
    %v6552 = vadd.f32 0.0, %v6551
    %v6553 = vpop.f32.mrb[0].mxu0
    %6554 = vdwg.mxu0
    %v6555 = vadd.f32 %v6466, %v6552
    %v6556 = vld [vmem:[#allocation2 + $0x1c] sm:$0x3]
    %s6557 = scalar_lea.vmem %s5, 1792
    %v6558 = vld [vmem:[%s6557] sm:$0xff]
    %v6559 = vld [vmem:[%s6557 + $0x8] sm:$0xff]
    %v6560 = vld [vmem:[%s6557 + $0x10] sm:$0xff]
    %v6561 = vld [vmem:[%s6557 + $0x18] sm:$0xff]
    %v6562 = vld [vmem:[%s6557 + $0x20] sm:$0xff]
    %v6563 = vld [vmem:[%s6557 + $0x28] sm:$0xff]
    %v6564 = vld [vmem:[%s6557 + $0x30] sm:$0xff]
    %v6565 = vld [vmem:[%s6557 + $0x38] sm:$0xff]
    %v6566 = vld [vmem:[%s6557 + $0x40] sm:$0xff]
    %v6567 = vld [vmem:[%s6557 + $0x48] sm:$0xff]
    %v6568 = vld [vmem:[%s6557 + $0x50] sm:$0xff]
    %v6569 = vld [vmem:[%s6557 + $0x58] sm:$0xff]
    %v6570 = vld [vmem:[%s6557 + $0x60] sm:$0xff]
    %v6571 = vld [vmem:[%s6557 + $0x68] sm:$0xff]
    %v6572 = vld [vmem:[%s6557 + $0x70] sm:$0xff]
    %v6573 = vld [vmem:[%s6557 + $0x78] sm:$0xff]
    %6574 = vmatprep.subr.mxu0 0.0
    %6575 = vmatpush1.msra.mxu0 %v6558
    %6576 = vmatprep.subr.mxu0 0.0
    %6577 = vmatpush1.msra.mxu0 %v6559
    %6578 = vmatprep.subr.mxu0 0.0
    %6579 = vmatpush1.msra.mxu0 %v6560
    %6580 = vmatprep.subr.mxu0 0.0
    %6581 = vmatpush1.msra.mxu0 %v6561
    %6582 = vmatprep.subr.mxu0 0.0
    %6583 = vmatpush1.msra.mxu0 %v6562
    %6584 = vmatprep.subr.mxu0 0.0
    %6585 = vmatpush1.msra.mxu0 %v6563
    %6586 = vmatprep.subr.mxu0 0.0
    %6587 = vmatpush1.msra.mxu0 %v6564
    %6588 = vmatprep.subr.mxu0 0.0
    %6589 = vmatpush1.msra.mxu0 %v6565
    %6590 = vmatprep.subr.mxu0 0.0
    %6591 = vmatpush1.msra.mxu0 %v6566
    %6592 = vmatprep.subr.mxu0 0.0
    %6593 = vmatpush1.msra.mxu0 %v6567
    %6594 = vmatprep.subr.mxu0 0.0
    %6595 = vmatpush1.msra.mxu0 %v6568
    %6596 = vmatprep.subr.mxu0 0.0
    %6597 = vmatpush1.msra.mxu0 %v6569
    %6598 = vmatprep.subr.mxu0 0.0
    %6599 = vmatpush1.msra.mxu0 %v6570
    %6600 = vmatprep.subr.mxu0 0.0
    %6601 = vmatpush1.msra.mxu0 %v6571
    %6602 = vmatprep.subr.mxu0 0.0
    %6603 = vmatpush1.msra.mxu0 %v6572
    %6604 = vmatprep.subr.mxu0 0.0
    %6605 = vmatpush1.msra.mxu0 %v6573
    %6606 = vmatprep.subr.mxu0 0.0
    %6607 = vmatpush1.msra.mxu0 0.0
    %6608 = vmatprep.subr.mxu0 0.0
    %6609 = vmatpush1.msra.mxu0 0.0
    %6610 = vmatprep.subr.mxu0 0.0
    %6611 = vmatpush1.msra.mxu0 0.0
    %6612 = vmatprep.subr.mxu0 0.0
    %6613 = vmatpush1.msra.mxu0 0.0
    %6614 = vmatprep.subr.mxu0 0.0
    %6615 = vmatpush1.msra.mxu0 0.0
    %6616 = vmatprep.subr.mxu0 0.0
    %6617 = vmatpush1.msra.mxu0 0.0
    %6618 = vmatprep.subr.mxu0 0.0
    %6619 = vmatpush1.msra.mxu0 0.0
    %6620 = vmatprep.subr.mxu0 0.0
    %6621 = vmatpush1.msra.mxu0 0.0
    %6622 = vmatprep.subr.mxu0 0.0
    %6623 = vmatpush1.msra.mxu0 0.0
    %6624 = vmatprep.subr.mxu0 0.0
    %6625 = vmatpush1.msra.mxu0 0.0
    %6626 = vmatprep.subr.mxu0 0.0
    %6627 = vmatpush1.msra.mxu0 0.0
    %6628 = vmatprep.subr.mxu0 0.0
    %6629 = vmatpush1.msra.mxu0 0.0
    %6630 = vmatprep.subr.mxu0 0.0
    %6631 = vmatpush1.msra.mxu0 0.0
    %6632 = vmatprep.subr.mxu0 0.0
    %6633 = vmatpush1.msra.mxu0 0.0
    %6634 = vmatprep.subr.mxu0 0.0
    %6635 = vmatpush1.msra.mxu0 0.0
    %6636 = vmatprep.subr.mxu0 0.0
    %6637 = vmatpush1.msra.mxu0 0.0
    %6638 = vmatprep.mubr.f32.mxu0 0.0
    %6639 = vmatmul.mubr.f32.gmra.mrb[0].mxu0 %v6556
    %v6640 = vpop.f32.mrb[0].mxu0
    %v6641 = vadd.f32 0.0, %v6640
    %v6642 = vpop.f32.mrb[0].mxu0
    %6643 = vdwg.mxu0
    %v6644 = vadd.f32 %v6555, %v6641
    %v6645 = vld [vmem:[#allocation2 + $0x1e] sm:$0x3]
    %s6646 = scalar_lea.vmem %s5, 1920
    %v6647 = vld [vmem:[%s6646] sm:$0xff]
    %v6648 = vld [vmem:[%s6646 + $0x8] sm:$0xff]
    %v6649 = vld [vmem:[%s6646 + $0x10] sm:$0xff]
    %v6650 = vld [vmem:[%s6646 + $0x18] sm:$0xff]
    %v6651 = vld [vmem:[%s6646 + $0x20] sm:$0xff]
    %v6652 = vld [vmem:[%s6646 + $0x28] sm:$0xff]
    %v6653 = vld [vmem:[%s6646 + $0x30] sm:$0xff]
    %v6654 = vld [vmem:[%s6646 + $0x38] sm:$0xff]
    %v6655 = vld [vmem:[%s6646 + $0x40] sm:$0xff]
    %v6656 = vld [vmem:[%s6646 + $0x48] sm:$0xff]
    %v6657 = vld [vmem:[%s6646 + $0x50] sm:$0xff]
    %v6658 = vld [vmem:[%s6646 + $0x58] sm:$0xff]
    %v6659 = vld [vmem:[%s6646 + $0x60] sm:$0xff]
    %v6660 = vld [vmem:[%s6646 + $0x68] sm:$0xff]
    %v6661 = vld [vmem:[%s6646 + $0x70] sm:$0xff]
    %v6662 = vld [vmem:[%s6646 + $0x78] sm:$0xff]
    %6663 = vmatprep.subr.mxu0 0.0
    %6664 = vmatpush1.msra.mxu0 %v6647
    %6665 = vmatprep.subr.mxu0 0.0
    %6666 = vmatpush1.msra.mxu0 %v6648
    %6667 = vmatprep.subr.mxu0 0.0
    %6668 = vmatpush1.msra.mxu0 %v6649
    %6669 = vmatprep.subr.mxu0 0.0
    %6670 = vmatpush1.msra.mxu0 %v6650
    %6671 = vmatprep.subr.mxu0 0.0
    %6672 = vmatpush1.msra.mxu0 %v6651
    %6673 = vmatprep.subr.mxu0 0.0
    %6674 = vmatpush1.msra.mxu0 %v6652
    %6675 = vmatprep.subr.mxu0 0.0
    %6676 = vmatpush1.msra.mxu0 %v6653
    %6677 = vmatprep.subr.mxu0 0.0
    %6678 = vmatpush1.msra.mxu0 %v6654
    %6679 = vmatprep.subr.mxu0 0.0
    %6680 = vmatpush1.msra.mxu0 %v6655
    %6681 = vmatprep.subr.mxu0 0.0
    %6682 = vmatpush1.msra.mxu0 %v6656
    %6683 = vmatprep.subr.mxu0 0.0
    %6684 = vmatpush1.msra.mxu0 %v6657
    %6685 = vmatprep.subr.mxu0 0.0
    %6686 = vmatpush1.msra.mxu0 %v6658
    %6687 = vmatprep.subr.mxu0 0.0
    %6688 = vmatpush1.msra.mxu0 %v6659
    %6689 = vmatprep.subr.mxu0 0.0
    %6690 = vmatpush1.msra.mxu0 %v6660
    %6691 = vmatprep.subr.mxu0 0.0
    %6692 = vmatpush1.msra.mxu0 %v6661
    %6693 = vmatprep.subr.mxu0 0.0
    %6694 = vmatpush1.msra.mxu0 %v6662
    %6695 = vmatprep.subr.mxu0 0.0
    %6696 = vmatpush1.msra.mxu0 0.0
    %6697 = vmatprep.subr.mxu0 0.0
    %6698 = vmatpush1.msra.mxu0 0.0
    %6699 = vmatprep.subr.mxu0 0.0
    %6700 = vmatpush1.msra.mxu0 0.0
    %6701 = vmatprep.subr.mxu0 0.0
    %6702 = vmatpush1.msra.mxu0 0.0
    %6703 = vmatprep.subr.mxu0 0.0
    %6704 = vmatpush1.msra.mxu0 0.0
    %6705 = vmatprep.subr.mxu0 0.0
    %6706 = vmatpush1.msra.mxu0 0.0
    %6707 = vmatprep.subr.mxu0 0.0
    %6708 = vmatpush1.msra.mxu0 0.0
    %6709 = vmatprep.subr.mxu0 0.0
    %6710 = vmatpush1.msra.mxu0 0.0
    %6711 = vmatprep.subr.mxu0 0.0
    %6712 = vmatpush1.msra.mxu0 0.0
    %6713 = vmatprep.subr.mxu0 0.0
    %6714 = vmatpush1.msra.mxu0 0.0
    %6715 = vmatprep.subr.mxu0 0.0
    %6716 = vmatpush1.msra.mxu0 0.0
    %6717 = vmatprep.subr.mxu0 0.0
    %6718 = vmatpush1.msra.mxu0 0.0
    %6719 = vmatprep.subr.mxu0 0.0
    %6720 = vmatpush1.msra.mxu0 0.0
    %6721 = vmatprep.subr.mxu0 0.0
    %6722 = vmatpush1.msra.mxu0 0.0
    %6723 = vmatprep.subr.mxu0 0.0
    %6724 = vmatpush1.msra.mxu0 0.0
    %6725 = vmatprep.subr.mxu0 0.0
    %6726 = vmatpush1.msra.mxu0 0.0
    %6727 = vmatprep.mubr.f32.mxu0 0.0
    %6728 = vmatmul.mubr.f32.gmra.mrb[0].mxu0 %v6645
    %v6729 = vpop.f32.mrb[0].mxu0
    %v6730 = vadd.f32 0.0, %v6729
    %v6731 = vpop.f32.mrb[0].mxu0
    %6732 = vdwg.mxu0
    %v6733 = vadd.f32 %v6644, %v6730
    %vm6734 = vcmask 74752
    %6735 = vst.msk [vmem:[#allocation3] sm:$0x3] %vm6734, %v6733
    %v6736 = vmax.f32 %v6733, 0.0
    %v6737 = vpack.c.bf16 %v6736, %v6736
    %v6738 = vld [vmem:[%s7] sm:$0xff]
    %v6739 = vld [vmem:[%s7 + $0x8] sm:$0xff]
    %v6740 = vld [vmem:[%s7 + $0x10] sm:$0xff]
    %v6741 = vld [vmem:[%s7 + $0x18] sm:$0xff]
    %v6742 = vld [vmem:[%s7 + $0x20] sm:$0xff]
    %v6743 = vld [vmem:[%s7 + $0x28] sm:$0xff]
    %v6744 = vld [vmem:[%s7 + $0x30] sm:$0xff]
    %v6745 = vld [vmem:[%s7 + $0x38] sm:$0xff]
    %v6746 = vld [vmem:[%s7 + $0x40] sm:$0xff]
    %v6747 = vld [vmem:[%s7 + $0x48] sm:$0xff]
    %v6748 = vld [vmem:[%s7 + $0x50] sm:$0xff]
    %v6749 = vld [vmem:[%s7 + $0x58] sm:$0xff]
    %v6750 = vld [vmem:[%s7 + $0x60] sm:$0xff]
    %v6751 = vld [vmem:[%s7 + $0x68] sm:$0xff]
    %v6752 = vld [vmem:[%s7 + $0x70] sm:$0xff]
    %v6753 = vld [vmem:[%s7 + $0x78] sm:$0xff]
    %v6754 = vld [vmem:[%s7 + $0x80] sm:$0x11]
    %v6755 = vld [vmem:[%s7 + $0x88] sm:$0x11]
    %v6756 = vld [vmem:[%s7 + $0x90] sm:$0x11]
    %v6757 = vld [vmem:[%s7 + $0x98] sm:$0x11]
    %v6758 = vld [vmem:[%s7 + $0xa0] sm:$0x11]
    %v6759 = vld [vmem:[%s7 + $0xa8] sm:$0x11]
    %v6760 = vld [vmem:[%s7 + $0xb0] sm:$0x11]
    %v6761 = vld [vmem:[%s7 + $0xb8] sm:$0x11]
    %v6762 = vld [vmem:[%s7 + $0xc0] sm:$0x11]
    %v6763 = vld [vmem:[%s7 + $0xc8] sm:$0x11]
    %v6764 = vld [vmem:[%s7 + $0xd0] sm:$0x11]
    %v6765 = vld [vmem:[%s7 + $0xd8] sm:$0x11]
    %v6766 = vld [vmem:[%s7 + $0xe0] sm:$0x11]
    %v6767 = vld [vmem:[%s7 + $0xe8] sm:$0x11]
    %v6768 = vld [vmem:[%s7 + $0xf0] sm:$0x11]
    %v6769 = vld [vmem:[%s7 + $0xf8] sm:$0x11]
    %v6770 = vld [vmem:[%s8] sm:$0xff]
    %v6771 = vld [vmem:[%s8 + $0x8] sm:$0xff]
    %v6772 = vld [vmem:[%s8 + $0x10] sm:$0xff]
    %v6773 = vld [vmem:[%s8 + $0x18] sm:$0xff]
    %v6778 = vlaneseq
    %v6779 = vshrl.u32 %v6778, 7
    %v6780 = vsub.s32 0, %v6779
    %v6781 = vrot.slane %v6770, %v6780
    %v6782 = vlaneseq
    %v6783 = vshrl.u32 %v6782, 7
    %v6784 = vsub.s32 1, %v6783
    %v6785 = vrot.slane %v6770, %v6784
    %v6786 = vlaneseq
    %v6787 = vshrl.u32 %v6786, 7
    %v6788 = vsub.s32 2, %v6787
    %v6789 = vrot.slane %v6770, %v6788
    %v6790 = vlaneseq
    %v6791 = vshrl.u32 %v6790, 7
    %v6792 = vsub.s32 3, %v6791
    %v6793 = vrot.slane %v6770, %v6792
    %v6794 = vlaneseq
    %v6795 = vshrl.u32 %v6794, 7
    %v6796 = vsub.s32 4, %v6795
    %v6797 = vrot.slane %v6770, %v6796
    %v6798 = vlaneseq
    %v6799 = vshrl.u32 %v6798, 7
    %v6800 = vsub.s32 5, %v6799
    %v6801 = vrot.slane %v6770, %v6800
    %v6802 = vlaneseq
    %v6803 = vshrl.u32 %v6802, 7
    %v6804 = vsub.s32 6, %v6803
    %v6805 = vrot.slane %v6770, %v6804
    %v6806 = vlaneseq
    %v6807 = vshrl.u32 %v6806, 7
    %v6808 = vsub.s32 7, %v6807
    %v6809 = vrot.slane %v6770, %v6808
    %v6810 = vlaneseq
    %v6811 = vshrl.u32 %v6810, 7
    %v6812 = vsub.s32 0, %v6811
    %v6813 = vrot.slane %v6771, %v6812
    %v6814 = vlaneseq
    %v6815 = vshrl.u32 %v6814, 7
    %v6816 = vsub.s32 1, %v6815
    %v6817 = vrot.slane %v6771, %v6816
    %v6818 = vlaneseq
    %v6819 = vshrl.u32 %v6818, 7
    %v6820 = vsub.s32 2, %v6819
    %v6821 = vrot.slane %v6771, %v6820
    %v6822 = vlaneseq
    %v6823 = vshrl.u32 %v6822, 7
    %v6824 = vsub.s32 3, %v6823
    %v6825 = vrot.slane %v6771, %v6824
    %v6826 = vlaneseq
    %v6827 = vshrl.u32 %v6826, 7
    %v6828 = vsub.s32 4, %v6827
    %v6829 = vrot.slane %v6771, %v6828
    %v6830 = vlaneseq
    %v6831 = vshrl.u32 %v6830, 7
    %v6832 = vsub.s32 5, %v6831
    %v6833 = vrot.slane %v6771, %v6832
    %v6834 = vlaneseq
    %v6835 = vshrl.u32 %v6834, 7
    %v6836 = vsub.s32 6, %v6835
    %v6837 = vrot.slane %v6771, %v6836
    %v6838 = vlaneseq
    %v6839 = vshrl.u32 %v6838, 7
    %v6840 = vsub.s32 7, %v6839
    %v6841 = vrot.slane %v6771, %v6840
    %v6842 = vlaneseq
    %v6843 = vshrl.u32 %v6842, 7
    %v6844 = vsub.s32 0, %v6843
    %v6845 = vrot.slane %v6772, %v6844
    %v6846 = vlaneseq
    %v6847 = vshrl.u32 %v6846, 7
    %v6848 = vsub.s32 1, %v6847
    %v6849 = vrot.slane %v6772, %v6848
    %v6850 = vlaneseq
    %v6851 = vshrl.u32 %v6850, 7
    %v6852 = vsub.s32 2, %v6851
    %v6853 = vrot.slane %v6772, %v6852
    %v6854 = vlaneseq
    %v6855 = vshrl.u32 %v6854, 7
    %v6856 = vsub.s32 3, %v6855
    %v6857 = vrot.slane %v6772, %v6856
    %v6858 = vlaneseq
    %v6859 = vshrl.u32 %v6858, 7
    %v6860 = vsub.s32 4, %v6859
    %v6861 = vrot.slane %v6772, %v6860
    %v6862 = vlaneseq
    %v6863 = vshrl.u32 %v6862, 7
    %v6864 = vsub.s32 5, %v6863
    %v6865 = vrot.slane %v6772, %v6864
    %v6866 = vlaneseq
    %v6867 = vshrl.u32 %v6866, 7
    %v6868 = vsub.s32 6, %v6867
    %v6869 = vrot.slane %v6772, %v6868
    %v6870 = vlaneseq
    %v6871 = vshrl.u32 %v6870, 7
    %v6872 = vsub.s32 7, %v6871
    %v6873 = vrot.slane %v6772, %v6872
    %v6874 = vlaneseq
    %v6875 = vshrl.u32 %v6874, 7
    %v6876 = vsub.s32 0, %v6875
    %v6877 = vrot.slane %v6773, %v6876
    %v6878 = vlaneseq
    %v6879 = vshrl.u32 %v6878, 7
    %v6880 = vsub.s32 1, %v6879
    %v6881 = vrot.slane %v6773, %v6880
    %v6882 = vlaneseq
    %v6883 = vshrl.u32 %v6882, 7
    %v6884 = vsub.s32 2, %v6883
    %v6885 = vrot.slane %v6773, %v6884
    %v6886 = vlaneseq
    %v6887 = vshrl.u32 %v6886, 7
    %v6888 = vsub.s32 3, %v6887
    %v6889 = vrot.slane %v6773, %v6888
    %v6890 = vlaneseq
    %v6891 = vshrl.u32 %v6890, 7
    %v6892 = vsub.s32 4, %v6891
    %v6893 = vrot.slane %v6773, %v6892
    %v6894 = vlaneseq
    %v6895 = vshrl.u32 %v6894, 7
    %v6896 = vsub.s32 5, %v6895
    %v6897 = vrot.slane %v6773, %v6896
    %v6898 = vlaneseq
    %v6899 = vshrl.u32 %v6898, 7
    %v6900 = vsub.s32 6, %v6899
    %v6901 = vrot.slane %v6773, %v6900
    %v6902 = vlaneseq
    %v6903 = vshrl.u32 %v6902, 7
    %v6904 = vsub.s32 7, %v6903
    %v6905 = vrot.slane %v6773, %v6904
    %v6970 = vunpack.c.l.b16 %v6738
    %v6971 = vunpack.c.h.b16 %v6738
    %v6972 = vunpack.c.l.b16 %v6739
    %v6973 = vunpack.c.h.b16 %v6739
    %v6974 = vunpack.c.l.b16 %v6740
    %v6975 = vunpack.c.h.b16 %v6740
    %v6976 = vunpack.c.l.b16 %v6741
    %v6977 = vunpack.c.h.b16 %v6741
    %v6978 = vunpack.c.l.b16 %v6742
    %v6979 = vunpack.c.h.b16 %v6742
    %v6980 = vunpack.c.l.b16 %v6743
    %v6981 = vunpack.c.h.b16 %v6743
    %v6982 = vunpack.c.l.b16 %v6744
    %v6983 = vunpack.c.h.b16 %v6744
    %v6984 = vunpack.c.l.b16 %v6745
    %v6985 = vunpack.c.h.b16 %v6745
    %v6986 = vunpack.c.l.b16 %v6746
    %v6987 = vunpack.c.h.b16 %v6746
    %v6988 = vunpack.c.l.b16 %v6747
    %v6989 = vunpack.c.h.b16 %v6747
    %v6990 = vunpack.c.l.b16 %v6748
    %v6991 = vunpack.c.h.b16 %v6748
    %v6992 = vunpack.c.l.b16 %v6749
    %v6993 = vunpack.c.h.b16 %v6749
    %v6994 = vunpack.c.l.b16 %v6750
    %v6995 = vunpack.c.h.b16 %v6750
    %v6996 = vunpack.c.l.b16 %v6751
    %v6997 = vunpack.c.h.b16 %v6751
    %v6998 = vunpack.c.l.b16 %v6752
    %v6999 = vunpack.c.h.b16 %v6752
    %v7000 = vunpack.c.l.b16 %v6753
    %v7001 = vunpack.c.h.b16 %v6753
    %v7002 = vunpack.c.l.b16 %v6754
    %v7003 = vunpack.c.h.b16 %v6754
    %v7004 = vunpack.c.l.b16 %v6755
    %v7005 = vunpack.c.h.b16 %v6755
    %v7006 = vunpack.c.l.b16 %v6756
    %v7007 = vunpack.c.h.b16 %v6756
    %v7008 = vunpack.c.l.b16 %v6757
    %v7009 = vunpack.c.h.b16 %v6757
    %v7010 = vunpack.c.l.b16 %v6758
    %v7011 = vunpack.c.h.b16 %v6758
    %v7012 = vunpack.c.l.b16 %v6759
    %v7013 = vunpack.c.h.b16 %v6759
    %v7014 = vunpack.c.l.b16 %v6760
    %v7015 = vunpack.c.h.b16 %v6760
    %v7016 = vunpack.c.l.b16 %v6761
    %v7017 = vunpack.c.h.b16 %v6761
    %v7018 = vunpack.c.l.b16 %v6762
    %v7019 = vunpack.c.h.b16 %v6762
    %v7020 = vunpack.c.l.b16 %v6763
    %v7021 = vunpack.c.h.b16 %v6763
    %v7022 = vunpack.c.l.b16 %v6764
    %v7023 = vunpack.c.h.b16 %v6764
    %v7024 = vunpack.c.l.b16 %v6765
    %v7025 = vunpack.c.h.b16 %v6765
    %v7026 = vunpack.c.l.b16 %v6766
    %v7027 = vunpack.c.h.b16 %v6766
    %v7028 = vunpack.c.l.b16 %v6767
    %v7029 = vunpack.c.h.b16 %v6767
    %v7030 = vunpack.c.l.b16 %v6768
    %v7031 = vunpack.c.h.b16 %v6768
    %v7032 = vunpack.c.l.b16 %v6769
    %v7033 = vunpack.c.h.b16 %v6769
    %v7034 = vpack.c.b16 %v7002, %v6970
    %v7035 = vpack.c.b16 %v7003, %v6971
    %v7036 = vpack.c.b16 %v7004, %v6972
    %v7037 = vpack.c.b16 %v7005, %v6973
    %v7038 = vpack.c.b16 %v7006, %v6974
    %v7039 = vpack.c.b16 %v7007, %v6975
    %v7040 = vpack.c.b16 %v7008, %v6976
    %v7041 = vpack.c.b16 %v7009, %v6977
    %v7042 = vpack.c.b16 %v7010, %v6978
    %v7043 = vpack.c.b16 %v7011, %v6979
    %v7044 = vpack.c.b16 %v7012, %v6980
    %v7045 = vpack.c.b16 %v7013, %v6981
    %v7046 = vpack.c.b16 %v7014, %v6982
    %v7047 = vpack.c.b16 %v7015, %v6983
    %v7048 = vpack.c.b16 %v7016, %v6984
    %v7049 = vpack.c.b16 %v7017, %v6985
    %v7050 = vpack.c.b16 %v7018, %v6986
    %v7051 = vpack.c.b16 %v7019, %v6987
    %v7052 = vpack.c.b16 %v7020, %v6988
    %v7053 = vpack.c.b16 %v7021, %v6989
    %v7054 = vpack.c.b16 %v7022, %v6990
    %v7055 = vpack.c.b16 %v7023, %v6991
    %v7056 = vpack.c.b16 %v7024, %v6992
    %v7057 = vpack.c.b16 %v7025, %v6993
    %v7058 = vpack.c.b16 %v7026, %v6994
    %v7059 = vpack.c.b16 %v7027, %v6995
    %v7060 = vpack.c.b16 %v7028, %v6996
    %v7061 = vpack.c.b16 %v7029, %v6997
    %v7062 = vpack.c.b16 %v7030, %v6998
    %v7063 = vpack.c.b16 %v7031, %v6999
    %v7064 = vpack.c.b16 %v7032, %v7000
    %v7065 = vpack.c.b16 %v7033, %v7001
    %vm7066 = vcmask 80896
    %v7068 = vsel %vm7066, %v6737, 0
    %vm7070 = vcmask 1044480
    %v7072 = vsel %vm7070, %v7034, 0
    %v7075 = vsel %vm7070, %v7035, 0
    %v7078 = vsel %vm7070, %v7036, 0
    %v7081 = vsel %vm7070, %v7037, 0
    %v7084 = vsel %vm7070, %v7038, 0
    %v7087 = vsel %vm7070, %v7039, 0
    %v7090 = vsel %vm7070, %v7040, 0
    %v7093 = vsel %vm7070, %v7041, 0
    %v7096 = vsel %vm7070, %v7042, 0
    %v7099 = vsel %vm7070, %v7043, 0
    %v7102 = vsel %vm7070, %v7044, 0
    %v7105 = vsel %vm7070, %v7045, 0
    %v7108 = vsel %vm7070, %v7046, 0
    %v7111 = vsel %vm7070, %v7047, 0
    %v7114 = vsel %vm7070, %v7048, 0
    %v7117 = vsel %vm7070, %v7049, 0
    %v7120 = vsel %vm7070, %v7050, 0
    %v7123 = vsel %vm7070, %v7051, 0
    %v7126 = vsel %vm7070, %v7052, 0
    %v7129 = vsel %vm7070, %v7053, 0
    %v7132 = vsel %vm7070, %v7054, 0
    %v7135 = vsel %vm7070, %v7055, 0
    %v7138 = vsel %vm7070, %v7056, 0
    %v7141 = vsel %vm7070, %v7057, 0
    %v7144 = vsel %vm7070, %v7058, 0
    %v7147 = vsel %vm7070, %v7059, 0
    %v7150 = vsel %vm7070, %v7060, 0
    %v7153 = vsel %vm7070, %v7061, 0
    %v7156 = vsel %vm7070, %v7062, 0
    %v7159 = vsel %vm7070, %v7063, 0
    %v7162 = vsel %vm7070, %v7064, 0
    %v7165 = vsel %vm7070, %v7065, 0
    %7167 = vmatprep.subr.bf16.mxu0 %v7075
    %7168 = vmatpush1.bf16.msra.mxu0 %v7072
    %7169 = vmatprep.subr.bf16.mxu0 0
    %7170 = vmatpush1.bf16.msra.mxu0 0
    %7171 = vmatprep.subr.bf16.mxu0 0
    %7172 = vmatpush1.bf16.msra.mxu0 0
    %7173 = vmatprep.subr.bf16.mxu0 0
    %7174 = vmatpush1.bf16.msra.mxu0 0
    %7175 = vmatprep.subr.bf16.mxu0 0
    %7176 = vmatpush1.bf16.msra.mxu0 0
    %7177 = vmatprep.subr.bf16.mxu0 0
    %7178 = vmatpush1.bf16.msra.mxu0 0
    %7179 = vmatprep.subr.bf16.mxu0 0
    %7180 = vmatpush1.bf16.msra.mxu0 0
    %7181 = vmatprep.subr.bf16.mxu0 0
    %7182 = vmatpush1.bf16.msra.mxu0 0
    %7183 = vmatprep.subr.bf16.mxu0 0
    %7184 = vmatpush1.bf16.msra.mxu0 0
    %7185 = vmatprep.subr.bf16.mxu0 0
    %7186 = vmatpush1.bf16.msra.mxu0 0
    %7187 = vmatprep.subr.bf16.mxu0 0
    %7188 = vmatpush1.bf16.msra.mxu0 0
    %7189 = vmatprep.subr.bf16.mxu0 0
    %7190 = vmatpush1.bf16.msra.mxu0 0
    %7191 = vmatprep.subr.bf16.mxu0 0
    %7192 = vmatpush1.bf16.msra.mxu0 0
    %7193 = vmatprep.subr.bf16.mxu0 0
    %7194 = vmatpush1.bf16.msra.mxu0 0
    %7195 = vmatprep.subr.bf16.mxu0 0
    %7196 = vmatpush1.bf16.msra.mxu0 0
    %7197 = vmatprep.subr.bf16.mxu0 0
    %7198 = vmatpush1.bf16.msra.mxu0 0
    %7199 = vmatprep.mubr.bf16.mxu0 0
    %7200 = vmatmul.mubr.bf16.gmra.mrb[0].mxu0 %v7068
    %v7201 = vpop.f32.mrb[0].mxu0
    %v7202 = vadd.f32 %v6781, %v7201
    %v7203 = vpop.f32.mrb[0].mxu0
    %v7204 = vadd.f32 %v6785, %v7203
    %v7205 = vpop.f32.mrb[0].mxu0
    %v7206 = vpop.f32.mrb[0].mxu0
    %7207 = vdwg.mxu0
    %7208 = vmatprep.subr.bf16.mxu0 %v7081
    %7209 = vmatpush1.bf16.msra.mxu0 %v7078
    %7210 = vmatprep.subr.bf16.mxu0 0
    %7211 = vmatpush1.bf16.msra.mxu0 0
    %7212 = vmatprep.subr.bf16.mxu0 0
    %7213 = vmatpush1.bf16.msra.mxu0 0
    %7214 = vmatprep.subr.bf16.mxu0 0
    %7215 = vmatpush1.bf16.msra.mxu0 0
    %7216 = vmatprep.subr.bf16.mxu0 0
    %7217 = vmatpush1.bf16.msra.mxu0 0
    %7218 = vmatprep.subr.bf16.mxu0 0
    %7219 = vmatpush1.bf16.msra.mxu0 0
    %7220 = vmatprep.subr.bf16.mxu0 0
    %7221 = vmatpush1.bf16.msra.mxu0 0
    %7222 = vmatprep.subr.bf16.mxu0 0
    %7223 = vmatpush1.bf16.msra.mxu0 0
    %7224 = vmatprep.subr.bf16.mxu0 0
    %7225 = vmatpush1.bf16.msra.mxu0 0
    %7226 = vmatprep.subr.bf16.mxu0 0
    %7227 = vmatpush1.bf16.msra.mxu0 0
    %7228 = vmatprep.subr.bf16.mxu0 0
    %7229 = vmatpush1.bf16.msra.mxu0 0
    %7230 = vmatprep.subr.bf16.mxu0 0
    %7231 = vmatpush1.bf16.msra.mxu0 0
    %7232 = vmatprep.subr.bf16.mxu0 0
    %7233 = vmatpush1.bf16.msra.mxu0 0
    %7234 = vmatprep.subr.bf16.mxu0 0
    %7235 = vmatpush1.bf16.msra.mxu0 0
    %7236 = vmatprep.subr.bf16.mxu0 0
    %7237 = vmatpush1.bf16.msra.mxu0 0
    %7238 = vmatprep.subr.bf16.mxu0 0
    %7239 = vmatpush1.bf16.msra.mxu0 0
    %7240 = vmatprep.mubr.bf16.mxu0 0
    %7241 = vmatmul.mubr.bf16.gmra.mrb[0].mxu0 %v7068
    %v7242 = vpop.f32.mrb[0].mxu0
    %v7243 = vadd.f32 %v6789, %v7242
    %v7244 = vpop.f32.mrb[0].mxu0
    %v7245 = vadd.f32 %v6793, %v7244
    %v7246 = vpop.f32.mrb[0].mxu0
    %v7247 = vpop.f32.mrb[0].mxu0
    %7248 = vdwg.mxu0
    %7249 = vmatprep.subr.bf16.mxu0 %v7087
    %7250 = vmatpush1.bf16.msra.mxu0 %v7084
    %7251 = vmatprep.subr.bf16.mxu0 0
    %7252 = vmatpush1.bf16.msra.mxu0 0
    %7253 = vmatprep.subr.bf16.mxu0 0
    %7254 = vmatpush1.bf16.msra.mxu0 0
    %7255 = vmatprep.subr.bf16.mxu0 0
    %7256 = vmatpush1.bf16.msra.mxu0 0
    %7257 = vmatprep.subr.bf16.mxu0 0
    %7258 = vmatpush1.bf16.msra.mxu0 0
    %7259 = vmatprep.subr.bf16.mxu0 0
    %7260 = vmatpush1.bf16.msra.mxu0 0
    %7261 = vmatprep.subr.bf16.mxu0 0
    %7262 = vmatpush1.bf16.msra.mxu0 0
    %7263 = vmatprep.subr.bf16.mxu0 0
    %7264 = vmatpush1.bf16.msra.mxu0 0
    %7265 = vmatprep.subr.bf16.mxu0 0
    %7266 = vmatpush1.bf16.msra.mxu0 0
    %7267 = vmatprep.subr.bf16.mxu0 0
    %7268 = vmatpush1.bf16.msra.mxu0 0
    %7269 = vmatprep.subr.bf16.mxu0 0
    %7270 = vmatpush1.bf16.msra.mxu0 0
    %7271 = vmatprep.subr.bf16.mxu0 0
    %7272 = vmatpush1.bf16.msra.mxu0 0
    %7273 = vmatprep.subr.bf16.mxu0 0
    %7274 = vmatpush1.bf16.msra.mxu0 0
    %7275 = vmatprep.subr.bf16.mxu0 0
    %7276 = vmatpush1.bf16.msra.mxu0 0
    %7277 = vmatprep.subr.bf16.mxu0 0
    %7278 = vmatpush1.bf16.msra.mxu0 0
    %7279 = vmatprep.subr.bf16.mxu0 0
    %7280 = vmatpush1.bf16.msra.mxu0 0
    %7281 = vmatprep.mubr.bf16.mxu0 0
    %7282 = vmatmul.mubr.bf16.gmra.mrb[0].mxu0 %v7068
    %v7283 = vpop.f32.mrb[0].mxu0
    %v7284 = vadd.f32 %v6797, %v7283
    %v7285 = vpop.f32.mrb[0].mxu0
    %v7286 = vadd.f32 %v6801, %v7285
    %v7287 = vpop.f32.mrb[0].mxu0
    %v7288 = vpop.f32.mrb[0].mxu0
    %7289 = vdwg.mxu0
    %7290 = vmatprep.subr.bf16.mxu0 %v7093
    %7291 = vmatpush1.bf16.msra.mxu0 %v7090
    %7292 = vmatprep.subr.bf16.mxu0 0
    %7293 = vmatpush1.bf16.msra.mxu0 0
    %7294 = vmatprep.subr.bf16.mxu0 0
    %7295 = vmatpush1.bf16.msra.mxu0 0
    %7296 = vmatprep.subr.bf16.mxu0 0
    %7297 = vmatpush1.bf16.msra.mxu0 0
    %7298 = vmatprep.subr.bf16.mxu0 0
    %7299 = vmatpush1.bf16.msra.mxu0 0
    %7300 = vmatprep.subr.bf16.mxu0 0
    %7301 = vmatpush1.bf16.msra.mxu0 0
    %7302 = vmatprep.subr.bf16.mxu0 0
    %7303 = vmatpush1.bf16.msra.mxu0 0
    %7304 = vmatprep.subr.bf16.mxu0 0
    %7305 = vmatpush1.bf16.msra.mxu0 0
    %7306 = vmatprep.subr.bf16.mxu0 0
    %7307 = vmatpush1.bf16.msra.mxu0 0
    %7308 = vmatprep.subr.bf16.mxu0 0
    %7309 = vmatpush1.bf16.msra.mxu0 0
    %7310 = vmatprep.subr.bf16.mxu0 0
    %7311 = vmatpush1.bf16.msra.mxu0 0
    %7312 = vmatprep.subr.bf16.mxu0 0
    %7313 = vmatpush1.bf16.msra.mxu0 0
    %7314 = vmatprep.subr.bf16.mxu0 0
    %7315 = vmatpush1.bf16.msra.mxu0 0
    %7316 = vmatprep.subr.bf16.mxu0 0
    %7317 = vmatpush1.bf16.msra.mxu0 0
    %7318 = vmatprep.subr.bf16.mxu0 0
    %7319 = vmatpush1.bf16.msra.mxu0 0
    %7320 = vmatprep.subr.bf16.mxu0 0
    %7321 = vmatpush1.bf16.msra.mxu0 0
    %7322 = vmatprep.mubr.bf16.mxu0 0
    %7323 = vmatmul.mubr.bf16.gmra.mrb[0].mxu0 %v7068
    %v7324 = vpop.f32.mrb[0].mxu0
    %v7325 = vadd.f32 %v6805, %v7324
    %v7326 = vpop.f32.mrb[0].mxu0
    %v7327 = vadd.f32 %v6809, %v7326
    %v7328 = vpop.f32.mrb[0].mxu0
    %v7329 = vpop.f32.mrb[0].mxu0
    %7330 = vdwg.mxu0
    %7331 = vmatprep.subr.bf16.mxu0 %v7099
    %7332 = vmatpush1.bf16.msra.mxu0 %v7096
    %7333 = vmatprep.subr.bf16.mxu0 0
    %7334 = vmatpush1.bf16.msra.mxu0 0
    %7335 = vmatprep.subr.bf16.mxu0 0
    %7336 = vmatpush1.bf16.msra.mxu0 0
    %7337 = vmatprep.subr.bf16.mxu0 0
    %7338 = vmatpush1.bf16.msra.mxu0 0
    %7339 = vmatprep.subr.bf16.mxu0 0
    %7340 = vmatpush1.bf16.msra.mxu0 0
    %7341 = vmatprep.subr.bf16.mxu0 0
    %7342 = vmatpush1.bf16.msra.mxu0 0
    %7343 = vmatprep.subr.bf16.mxu0 0
    %7344 = vmatpush1.bf16.msra.mxu0 0
    %7345 = vmatprep.subr.bf16.mxu0 0
    %7346 = vmatpush1.bf16.msra.mxu0 0
    %7347 = vmatprep.subr.bf16.mxu0 0
    %7348 = vmatpush1.bf16.msra.mxu0 0
    %7349 = vmatprep.subr.bf16.mxu0 0
    %7350 = vmatpush1.bf16.msra.mxu0 0
    %7351 = vmatprep.subr.bf16.mxu0 0
    %7352 = vmatpush1.bf16.msra.mxu0 0
    %7353 = vmatprep.subr.bf16.mxu0 0
    %7354 = vmatpush1.bf16.msra.mxu0 0
    %7355 = vmatprep.subr.bf16.mxu0 0
    %7356 = vmatpush1.bf16.msra.mxu0 0
    %7357 = vmatprep.subr.bf16.mxu0 0
    %7358 = vmatpush1.bf16.msra.mxu0 0
    %7359 = vmatprep.subr.bf16.mxu0 0
    %7360 = vmatpush1.bf16.msra.mxu0 0
    %7361 = vmatprep.subr.bf16.mxu0 0
    %7362 = vmatpush1.bf16.msra.mxu0 0
    %7363 = vmatprep.mubr.bf16.mxu0 0
    %7364 = vmatmul.mubr.bf16.gmra.mrb[0].mxu0 %v7068
    %v7365 = vpop.f32.mrb[0].mxu0
    %v7366 = vadd.f32 %v6813, %v7365
    %v7367 = vpop.f32.mrb[0].mxu0
    %v7368 = vadd.f32 %v6817, %v7367
    %v7369 = vpop.f32.mrb[0].mxu0
    %v7370 = vpop.f32.mrb[0].mxu0
    %7371 = vdwg.mxu0
    %7372 = vmatprep.subr.bf16.mxu0 %v7105
    %7373 = vmatpush1.bf16.msra.mxu0 %v7102
    %7374 = vmatprep.subr.bf16.mxu0 0
    %7375 = vmatpush1.bf16.msra.mxu0 0
    %7376 = vmatprep.subr.bf16.mxu0 0
    %7377 = vmatpush1.bf16.msra.mxu0 0
    %7378 = vmatprep.subr.bf16.mxu0 0
    %7379 = vmatpush1.bf16.msra.mxu0 0
    %7380 = vmatprep.subr.bf16.mxu0 0
    %7381 = vmatpush1.bf16.msra.mxu0 0
    %7382 = vmatprep.subr.bf16.mxu0 0
    %7383 = vmatpush1.bf16.msra.mxu0 0
    %7384 = vmatprep.subr.bf16.mxu0 0
    %7385 = vmatpush1.bf16.msra.mxu0 0
    %7386 = vmatprep.subr.bf16.mxu0 0
    %7387 = vmatpush1.bf16.msra.mxu0 0
    %7388 = vmatprep.subr.bf16.mxu0 0
    %7389 = vmatpush1.bf16.msra.mxu0 0
    %7390 = vmatprep.subr.bf16.mxu0 0
    %7391 = vmatpush1.bf16.msra.mxu0 0
    %7392 = vmatprep.subr.bf16.mxu0 0
    %7393 = vmatpush1.bf16.msra.mxu0 0
    %7394 = vmatprep.subr.bf16.mxu0 0
    %7395 = vmatpush1.bf16.msra.mxu0 0
    %7396 = vmatprep.subr.bf16.mxu0 0
    %7397 = vmatpush1.bf16.msra.mxu0 0
    %7398 = vmatprep.subr.bf16.mxu0 0
    %7399 = vmatpush1.bf16.msra.mxu0 0
    %7400 = vmatprep.subr.bf16.mxu0 0
    %7401 = vmatpush1.bf16.msra.mxu0 0
    %7402 = vmatprep.subr.bf16.mxu0 0
    %7403 = vmatpush1.bf16.msra.mxu0 0
    %7404 = vmatprep.mubr.bf16.mxu0 0
    %7405 = vmatmul.mubr.bf16.gmra.mrb[0].mxu0 %v7068
    %v7406 = vpop.f32.mrb[0].mxu0
    %v7407 = vadd.f32 %v6821, %v7406
    %v7408 = vpop.f32.mrb[0].mxu0
    %v7409 = vadd.f32 %v6825, %v7408
    %v7410 = vpop.f32.mrb[0].mxu0
    %v7411 = vpop.f32.mrb[0].mxu0
    %7412 = vdwg.mxu0
    %7413 = vmatprep.subr.bf16.mxu0 %v7111
    %7414 = vmatpush1.bf16.msra.mxu0 %v7108
    %7415 = vmatprep.subr.bf16.mxu0 0
    %7416 = vmatpush1.bf16.msra.mxu0 0
    %7417 = vmatprep.subr.bf16.mxu0 0
    %7418 = vmatpush1.bf16.msra.mxu0 0
    %7419 = vmatprep.subr.bf16.mxu0 0
    %7420 = vmatpush1.bf16.msra.mxu0 0
    %7421 = vmatprep.subr.bf16.mxu0 0
    %7422 = vmatpush1.bf16.msra.mxu0 0
    %7423 = vmatprep.subr.bf16.mxu0 0
    %7424 = vmatpush1.bf16.msra.mxu0 0
    %7425 = vmatprep.subr.bf16.mxu0 0
    %7426 = vmatpush1.bf16.msra.mxu0 0
    %7427 = vmatprep.subr.bf16.mxu0 0
    %7428 = vmatpush1.bf16.msra.mxu0 0
    %7429 = vmatprep.subr.bf16.mxu0 0
    %7430 = vmatpush1.bf16.msra.mxu0 0
    %7431 = vmatprep.subr.bf16.mxu0 0
    %7432 = vmatpush1.bf16.msra.mxu0 0
    %7433 = vmatprep.subr.bf16.mxu0 0
    %7434 = vmatpush1.bf16.msra.mxu0 0
    %7435 = vmatprep.subr.bf16.mxu0 0
    %7436 = vmatpush1.bf16.msra.mxu0 0
    %7437 = vmatprep.subr.bf16.mxu0 0
    %7438 = vmatpush1.bf16.msra.mxu0 0
    %7439 = vmatprep.subr.bf16.mxu0 0
    %7440 = vmatpush1.bf16.msra.mxu0 0
    %7441 = vmatprep.subr.bf16.mxu0 0
    %7442 = vmatpush1.bf16.msra.mxu0 0
    %7443 = vmatprep.subr.bf16.mxu0 0
    %7444 = vmatpush1.bf16.msra.mxu0 0
    %7445 = vmatprep.mubr.bf16.mxu0 0
    %7446 = vmatmul.mubr.bf16.gmra.mrb[0].mxu0 %v7068
    %v7447 = vpop.f32.mrb[0].mxu0
    %v7448 = vadd.f32 %v6829, %v7447
    %v7449 = vpop.f32.mrb[0].mxu0
    %v7450 = vadd.f32 %v6833, %v7449
    %v7451 = vpop.f32.mrb[0].mxu0
    %v7452 = vpop.f32.mrb[0].mxu0
    %7453 = vdwg.mxu0
    %7454 = vmatprep.subr.bf16.mxu0 %v7117
    %7455 = vmatpush1.bf16.msra.mxu0 %v7114
    %7456 = vmatprep.subr.bf16.mxu0 0
    %7457 = vmatpush1.bf16.msra.mxu0 0
    %7458 = vmatprep.subr.bf16.mxu0 0
    %7459 = vmatpush1.bf16.msra.mxu0 0
    %7460 = vmatprep.subr.bf16.mxu0 0
    %7461 = vmatpush1.bf16.msra.mxu0 0
    %7462 = vmatprep.subr.bf16.mxu0 0
    %7463 = vmatpush1.bf16.msra.mxu0 0
    %7464 = vmatprep.subr.bf16.mxu0 0
    %7465 = vmatpush1.bf16.msra.mxu0 0
    %7466 = vmatprep.subr.bf16.mxu0 0
    %7467 = vmatpush1.bf16.msra.mxu0 0
    %7468 = vmatprep.subr.bf16.mxu0 0
    %7469 = vmatpush1.bf16.msra.mxu0 0
    %7470 = vmatprep.subr.bf16.mxu0 0
    %7471 = vmatpush1.bf16.msra.mxu0 0
    %7472 = vmatprep.subr.bf16.mxu0 0
    %7473 = vmatpush1.bf16.msra.mxu0 0
    %7474 = vmatprep.subr.bf16.mxu0 0
    %7475 = vmatpush1.bf16.msra.mxu0 0
    %7476 = vmatprep.subr.bf16.mxu0 0
    %7477 = vmatpush1.bf16.msra.mxu0 0
    %7478 = vmatprep.subr.bf16.mxu0 0
    %7479 = vmatpush1.bf16.msra.mxu0 0
    %7480 = vmatprep.subr.bf16.mxu0 0
    %7481 = vmatpush1.bf16.msra.mxu0 0
    %7482 = vmatprep.subr.bf16.mxu0 0
    %7483 = vmatpush1.bf16.msra.mxu0 0
    %7484 = vmatprep.subr.bf16.mxu0 0
    %7485 = vmatpush1.bf16.msra.mxu0 0
    %7486 = vmatprep.mubr.bf16.mxu0 0
    %7487 = vmatmul.mubr.bf16.gmra.mrb[0].mxu0 %v7068
    %v7488 = vpop.f32.mrb[0].mxu0
    %v7489 = vadd.f32 %v6837, %v7488
    %v7490 = vpop.f32.mrb[0].mxu0
    %v7491 = vadd.f32 %v6841, %v7490
    %v7492 = vpop.f32.mrb[0].mxu0
    %v7493 = vpop.f32.mrb[0].mxu0
    %7494 = vdwg.mxu0
    %7495 = vmatprep.subr.bf16.mxu0 %v7123
    %7496 = vmatpush1.bf16.msra.mxu0 %v7120
    %7497 = vmatprep.subr.bf16.mxu0 0
    %7498 = vmatpush1.bf16.msra.mxu0 0
    %7499 = vmatprep.subr.bf16.mxu0 0
    %7500 = vmatpush1.bf16.msra.mxu0 0
    %7501 = vmatprep.subr.bf16.mxu0 0
    %7502 = vmatpush1.bf16.msra.mxu0 0
    %7503 = vmatprep.subr.bf16.mxu0 0
    %7504 = vmatpush1.bf16.msra.mxu0 0
    %7505 = vmatprep.subr.bf16.mxu0 0
    %7506 = vmatpush1.bf16.msra.mxu0 0
    %7507 = vmatprep.subr.bf16.mxu0 0
    %7508 = vmatpush1.bf16.msra.mxu0 0
    %7509 = vmatprep.subr.bf16.mxu0 0
    %7510 = vmatpush1.bf16.msra.mxu0 0
    %7511 = vmatprep.subr.bf16.mxu0 0
    %7512 = vmatpush1.bf16.msra.mxu0 0
    %7513 = vmatprep.subr.bf16.mxu0 0
    %7514 = vmatpush1.bf16.msra.mxu0 0
    %7515 = vmatprep.subr.bf16.mxu0 0
    %7516 = vmatpush1.bf16.msra.mxu0 0
    %7517 = vmatprep.subr.bf16.mxu0 0
    %7518 = vmatpush1.bf16.msra.mxu0 0
    %7519 = vmatprep.subr.bf16.mxu0 0
    %7520 = vmatpush1.bf16.msra.mxu0 0
    %7521 = vmatprep.subr.bf16.mxu0 0
    %7522 = vmatpush1.bf16.msra.mxu0 0
    %7523 = vmatprep.subr.bf16.mxu0 0
    %7524 = vmatpush1.bf16.msra.mxu0 0
    %7525 = vmatprep.subr.bf16.mxu0 0
    %7526 = vmatpush1.bf16.msra.mxu0 0
    %7527 = vmatprep.mubr.bf16.mxu0 0
    %7528 = vmatmul.mubr.bf16.gmra.mrb[0].mxu0 %v7068
    %v7529 = vpop.f32.mrb[0].mxu0
    %v7530 = vadd.f32 %v6845, %v7529
    %v7531 = vpop.f32.mrb[0].mxu0
    %v7532 = vadd.f32 %v6849, %v7531
    %v7533 = vpop.f32.mrb[0].mxu0
    %v7534 = vpop.f32.mrb[0].mxu0
    %7535 = vdwg.mxu0
    %7536 = vmatprep.subr.bf16.mxu0 %v7129
    %7537 = vmatpush1.bf16.msra.mxu0 %v7126
    %7538 = vmatprep.subr.bf16.mxu0 0
    %7539 = vmatpush1.bf16.msra.mxu0 0
    %7540 = vmatprep.subr.bf16.mxu0 0
    %7541 = vmatpush1.bf16.msra.mxu0 0
    %7542 = vmatprep.subr.bf16.mxu0 0
    %7543 = vmatpush1.bf16.msra.mxu0 0
    %7544 = vmatprep.subr.bf16.mxu0 0
    %7545 = vmatpush1.bf16.msra.mxu0 0
    %7546 = vmatprep.subr.bf16.mxu0 0
    %7547 = vmatpush1.bf16.msra.mxu0 0
    %7548 = vmatprep.subr.bf16.mxu0 0
    %7549 = vmatpush1.bf16.msra.mxu0 0
    %7550 = vmatprep.subr.bf16.mxu0 0
    %7551 = vmatpush1.bf16.msra.mxu0 0
    %7552 = vmatprep.subr.bf16.mxu0 0
    %7553 = vmatpush1.bf16.msra.mxu0 0
    %7554 = vmatprep.subr.bf16.mxu0 0
    %7555 = vmatpush1.bf16.msra.mxu0 0
    %7556 = vmatprep.subr.bf16.mxu0 0
    %7557 = vmatpush1.bf16.msra.mxu0 0
    %7558 = vmatprep.subr.bf16.mxu0 0
    %7559 = vmatpush1.bf16.msra.mxu0 0
    %7560 = vmatprep.subr.bf16.mxu0 0
    %7561 = vmatpush1.bf16.msra.mxu0 0
    %7562 = vmatprep.subr.bf16.mxu0 0
    %7563 = vmatpush1.bf16.msra.mxu0 0
    %7564 = vmatprep.subr.bf16.mxu0 0
    %7565 = vmatpush1.bf16.msra.mxu0 0
    %7566 = vmatprep.subr.bf16.mxu0 0
    %7567 = vmatpush1.bf16.msra.mxu0 0
    %7568 = vmatprep.mubr.bf16.mxu0 0
    %7569 = vmatmul.mubr.bf16.gmra.mrb[0].mxu0 %v7068
    %v7570 = vpop.f32.mrb[0].mxu0
    %v7571 = vadd.f32 %v6853, %v7570
    %v7572 = vpop.f32.mrb[0].mxu0
    %v7573 = vadd.f32 %v6857, %v7572
    %v7574 = vpop.f32.mrb[0].mxu0
    %v7575 = vpop.f32.mrb[0].mxu0
    %7576 = vdwg.mxu0
    %7577 = vmatprep.subr.bf16.mxu0 %v7135
    %7578 = vmatpush1.bf16.msra.mxu0 %v7132
    %7579 = vmatprep.subr.bf16.mxu0 0
    %7580 = vmatpush1.bf16.msra.mxu0 0
    %7581 = vmatprep.subr.bf16.mxu0 0
    %7582 = vmatpush1.bf16.msra.mxu0 0
    %7583 = vmatprep.subr.bf16.mxu0 0
    %7584 = vmatpush1.bf16.msra.mxu0 0
    %7585 = vmatprep.subr.bf16.mxu0 0
    %7586 = vmatpush1.bf16.msra.mxu0 0
    %7587 = vmatprep.subr.bf16.mxu0 0
    %7588 = vmatpush1.bf16.msra.mxu0 0
    %7589 = vmatprep.subr.bf16.mxu0 0
    %7590 = vmatpush1.bf16.msra.mxu0 0
    %7591 = vmatprep.subr.bf16.mxu0 0
    %7592 = vmatpush1.bf16.msra.mxu0 0
    %7593 = vmatprep.subr.bf16.mxu0 0
    %7594 = vmatpush1.bf16.msra.mxu0 0
    %7595 = vmatprep.subr.bf16.mxu0 0
    %7596 = vmatpush1.bf16.msra.mxu0 0
    %7597 = vmatprep.subr.bf16.mxu0 0
    %7598 = vmatpush1.bf16.msra.mxu0 0
    %7599 = vmatprep.subr.bf16.mxu0 0
    %7600 = vmatpush1.bf16.msra.mxu0 0
    %7601 = vmatprep.subr.bf16.mxu0 0
    %7602 = vmatpush1.bf16.msra.mxu0 0
    %7603 = vmatprep.subr.bf16.mxu0 0
    %7604 = vmatpush1.bf16.msra.mxu0 0
    %7605 = vmatprep.subr.bf16.mxu0 0
    %7606 = vmatpush1.bf16.msra.mxu0 0
    %7607 = vmatprep.subr.bf16.mxu0 0
    %7608 = vmatpush1.bf16.msra.mxu0 0
    %7609 = vmatprep.mubr.bf16.mxu0 0
    %7610 = vmatmul.mubr.bf16.gmra.mrb[0].mxu0 %v7068
    %v7611 = vpop.f32.mrb[0].mxu0
    %v7612 = vadd.f32 %v6861, %v7611
    %v7613 = vpop.f32.mrb[0].mxu0
    %v7614 = vadd.f32 %v6865, %v7613
    %v7615 = vpop.f32.mrb[0].mxu0
    %v7616 = vpop.f32.mrb[0].mxu0
    %7617 = vdwg.mxu0
    %7618 = vmatprep.subr.bf16.mxu0 %v7141
    %7619 = vmatpush1.bf16.msra.mxu0 %v7138
    %7620 = vmatprep.subr.bf16.mxu0 0
    %7621 = vmatpush1.bf16.msra.mxu0 0
    %7622 = vmatprep.subr.bf16.mxu0 0
    %7623 = vmatpush1.bf16.msra.mxu0 0
    %7624 = vmatprep.subr.bf16.mxu0 0
    %7625 = vmatpush1.bf16.msra.mxu0 0
    %7626 = vmatprep.subr.bf16.mxu0 0
    %7627 = vmatpush1.bf16.msra.mxu0 0
    %7628 = vmatprep.subr.bf16.mxu0 0
    %7629 = vmatpush1.bf16.msra.mxu0 0
    %7630 = vmatprep.subr.bf16.mxu0 0
    %7631 = vmatpush1.bf16.msra.mxu0 0
    %7632 = vmatprep.subr.bf16.mxu0 0
    %7633 = vmatpush1.bf16.msra.mxu0 0
    %7634 = vmatprep.subr.bf16.mxu0 0
    %7635 = vmatpush1.bf16.msra.mxu0 0
    %7636 = vmatprep.subr.bf16.mxu0 0
    %7637 = vmatpush1.bf16.msra.mxu0 0
    %7638 = vmatprep.subr.bf16.mxu0 0
    %7639 = vmatpush1.bf16.msra.mxu0 0
    %7640 = vmatprep.subr.bf16.mxu0 0
    %7641 = vmatpush1.bf16.msra.mxu0 0
    %7642 = vmatprep.subr.bf16.mxu0 0
    %7643 = vmatpush1.bf16.msra.mxu0 0
    %7644 = vmatprep.subr.bf16.mxu0 0
    %7645 = vmatpush1.bf16.msra.mxu0 0
    %7646 = vmatprep.subr.bf16.mxu0 0
    %7647 = vmatpush1.bf16.msra.mxu0 0
    %7648 = vmatprep.subr.bf16.mxu0 0
    %7649 = vmatpush1.bf16.msra.mxu0 0
    %7650 = vmatprep.mubr.bf16.mxu0 0
    %7651 = vmatmul.mubr.bf16.gmra.mrb[0].mxu0 %v7068
    %v7652 = vpop.f32.mrb[0].mxu0
    %v7653 = vadd.f32 %v6869, %v7652
    %v7654 = vpop.f32.mrb[0].mxu0
    %v7655 = vadd.f32 %v6873, %v7654
    %v7656 = vpop.f32.mrb[0].mxu0
    %v7657 = vpop.f32.mrb[0].mxu0
    %7658 = vdwg.mxu0
    %7659 = vmatprep.subr.bf16.mxu0 %v7147
    %7660 = vmatpush1.bf16.msra.mxu0 %v7144
    %7661 = vmatprep.subr.bf16.mxu0 0
    %7662 = vmatpush1.bf16.msra.mxu0 0
    %7663 = vmatprep.subr.bf16.mxu0 0
    %7664 = vmatpush1.bf16.msra.mxu0 0
    %7665 = vmatprep.subr.bf16.mxu0 0
    %7666 = vmatpush1.bf16.msra.mxu0 0
    %7667 = vmatprep.subr.bf16.mxu0 0
    %7668 = vmatpush1.bf16.msra.mxu0 0
    %7669 = vmatprep.subr.bf16.mxu0 0
    %7670 = vmatpush1.bf16.msra.mxu0 0
    %7671 = vmatprep.subr.bf16.mxu0 0
    %7672 = vmatpush1.bf16.msra.mxu0 0
    %7673 = vmatprep.subr.bf16.mxu0 0
    %7674 = vmatpush1.bf16.msra.mxu0 0
    %7675 = vmatprep.subr.bf16.mxu0 0
    %7676 = vmatpush1.bf16.msra.mxu0 0
    %7677 = vmatprep.subr.bf16.mxu0 0
    %7678 = vmatpush1.bf16.msra.mxu0 0
    %7679 = vmatprep.subr.bf16.mxu0 0
    %7680 = vmatpush1.bf16.msra.mxu0 0
    %7681 = vmatprep.subr.bf16.mxu0 0
    %7682 = vmatpush1.bf16.msra.mxu0 0
    %7683 = vmatprep.subr.bf16.mxu0 0
    %7684 = vmatpush1.bf16.msra.mxu0 0
    %7685 = vmatprep.subr.bf16.mxu0 0
    %7686 = vmatpush1.bf16.msra.mxu0 0
    %7687 = vmatprep.subr.bf16.mxu0 0
    %7688 = vmatpush1.bf16.msra.mxu0 0
    %7689 = vmatprep.subr.bf16.mxu0 0
    %7690 = vmatpush1.bf16.msra.mxu0 0
    %7691 = vmatprep.mubr.bf16.mxu0 0
    %7692 = vmatmul.mubr.bf16.gmra.mrb[0].mxu0 %v7068
    %v7693 = vpop.f32.mrb[0].mxu0
    %v7694 = vadd.f32 %v6877, %v7693
    %v7695 = vpop.f32.mrb[0].mxu0
    %v7696 = vadd.f32 %v6881, %v7695
    %v7697 = vpop.f32.mrb[0].mxu0
    %v7698 = vpop.f32.mrb[0].mxu0
    %7699 = vdwg.mxu0
    %7700 = vmatprep.subr.bf16.mxu0 %v7153
    %7701 = vmatpush1.bf16.msra.mxu0 %v7150
    %7702 = vmatprep.subr.bf16.mxu0 0
    %7703 = vmatpush1.bf16.msra.mxu0 0
    %7704 = vmatprep.subr.bf16.mxu0 0
    %7705 = vmatpush1.bf16.msra.mxu0 0
    %7706 = vmatprep.subr.bf16.mxu0 0
    %7707 = vmatpush1.bf16.msra.mxu0 0
    %7708 = vmatprep.subr.bf16.mxu0 0
    %7709 = vmatpush1.bf16.msra.mxu0 0
    %7710 = vmatprep.subr.bf16.mxu0 0
    %7711 = vmatpush1.bf16.msra.mxu0 0
    %7712 = vmatprep.subr.bf16.mxu0 0
    %7713 = vmatpush1.bf16.msra.mxu0 0
    %7714 = vmatprep.subr.bf16.mxu0 0
    %7715 = vmatpush1.bf16.msra.mxu0 0
    %7716 = vmatprep.subr.bf16.mxu0 0
    %7717 = vmatpush1.bf16.msra.mxu0 0
    %7718 = vmatprep.subr.bf16.mxu0 0
    %7719 = vmatpush1.bf16.msra.mxu0 0
    %7720 = vmatprep.subr.bf16.mxu0 0
    %7721 = vmatpush1.bf16.msra.mxu0 0
    %7722 = vmatprep.subr.bf16.mxu0 0
    %7723 = vmatpush1.bf16.msra.mxu0 0
    %7724 = vmatprep.subr.bf16.mxu0 0
    %7725 = vmatpush1.bf16.msra.mxu0 0
    %7726 = vmatprep.subr.bf16.mxu0 0
    %7727 = vmatpush1.bf16.msra.mxu0 0
    %7728 = vmatprep.subr.bf16.mxu0 0
    %7729 = vmatpush1.bf16.msra.mxu0 0
    %7730 = vmatprep.subr.bf16.mxu0 0
    %7731 = vmatpush1.bf16.msra.mxu0 0
    %7732 = vmatprep.mubr.bf16.mxu0 0
    %7733 = vmatmul.mubr.bf16.gmra.mrb[0].mxu0 %v7068
    %v7734 = vpop.f32.mrb[0].mxu0
    %v7735 = vadd.f32 %v6885, %v7734
    %v7736 = vpop.f32.mrb[0].mxu0
    %v7737 = vadd.f32 %v6889, %v7736
    %v7738 = vpop.f32.mrb[0].mxu0
    %v7739 = vpop.f32.mrb[0].mxu0
    %7740 = vdwg.mxu0
    %7741 = vmatprep.subr.bf16.mxu0 %v7159
    %7742 = vmatpush1.bf16.msra.mxu0 %v7156
    %7743 = vmatprep.subr.bf16.mxu0 0
    %7744 = vmatpush1.bf16.msra.mxu0 0
    %7745 = vmatprep.subr.bf16.mxu0 0
    %7746 = vmatpush1.bf16.msra.mxu0 0
    %7747 = vmatprep.subr.bf16.mxu0 0
    %7748 = vmatpush1.bf16.msra.mxu0 0
    %7749 = vmatprep.subr.bf16.mxu0 0
    %7750 = vmatpush1.bf16.msra.mxu0 0
    %7751 = vmatprep.subr.bf16.mxu0 0
    %7752 = vmatpush1.bf16.msra.mxu0 0
    %7753 = vmatprep.subr.bf16.mxu0 0
    %7754 = vmatpush1.bf16.msra.mxu0 0
    %7755 = vmatprep.subr.bf16.mxu0 0
    %7756 = vmatpush1.bf16.msra.mxu0 0
    %7757 = vmatprep.subr.bf16.mxu0 0
    %7758 = vmatpush1.bf16.msra.mxu0 0
    %7759 = vmatprep.subr.bf16.mxu0 0
    %7760 = vmatpush1.bf16.msra.mxu0 0
    %7761 = vmatprep.subr.bf16.mxu0 0
    %7762 = vmatpush1.bf16.msra.mxu0 0
    %7763 = vmatprep.subr.bf16.mxu0 0
    %7764 = vmatpush1.bf16.msra.mxu0 0
    %7765 = vmatprep.subr.bf16.mxu0 0
    %7766 = vmatpush1.bf16.msra.mxu0 0
    %7767 = vmatprep.subr.bf16.mxu0 0
    %7768 = vmatpush1.bf16.msra.mxu0 0
    %7769 = vmatprep.subr.bf16.mxu0 0
    %7770 = vmatpush1.bf16.msra.mxu0 0
    %7771 = vmatprep.subr.bf16.mxu0 0
    %7772 = vmatpush1.bf16.msra.mxu0 0
    %7773 = vmatprep.mubr.bf16.mxu0 0
    %7774 = vmatmul.mubr.bf16.gmra.mrb[0].mxu0 %v7068
    %v7775 = vpop.f32.mrb[0].mxu0
    %v7776 = vadd.f32 %v6893, %v7775
    %v7777 = vpop.f32.mrb[0].mxu0
    %v7778 = vadd.f32 %v6897, %v7777
    %v7779 = vpop.f32.mrb[0].mxu0
    %v7780 = vpop.f32.mrb[0].mxu0
    %7781 = vdwg.mxu0
    %7782 = vmatprep.subr.bf16.mxu0 %v7165
    %7783 = vmatpush1.bf16.msra.mxu0 %v7162
    %7784 = vmatprep.subr.bf16.mxu0 0
    %7785 = vmatpush1.bf16.msra.mxu0 0
    %7786 = vmatprep.subr.bf16.mxu0 0
    %7787 = vmatpush1.bf16.msra.mxu0 0
    %7788 = vmatprep.subr.bf16.mxu0 0
    %7789 = vmatpush1.bf16.msra.mxu0 0
    %7790 = vmatprep.subr.bf16.mxu0 0
    %7791 = vmatpush1.bf16.msra.mxu0 0
    %7792 = vmatprep.subr.bf16.mxu0 0
    %7793 = vmatpush1.bf16.msra.mxu0 0
    %7794 = vmatprep.subr.bf16.mxu0 0
    %7795 = vmatpush1.bf16.msra.mxu0 0
    %7796 = vmatprep.subr.bf16.mxu0 0
    %7797 = vmatpush1.bf16.msra.mxu0 0
    %7798 = vmatprep.subr.bf16.mxu0 0
    %7799 = vmatpush1.bf16.msra.mxu0 0
    %7800 = vmatprep.subr.bf16.mxu0 0
    %7801 = vmatpush1.bf16.msra.mxu0 0
    %7802 = vmatprep.subr.bf16.mxu0 0
    %7803 = vmatpush1.bf16.msra.mxu0 0
    %7804 = vmatprep.subr.bf16.mxu0 0
    %7805 = vmatpush1.bf16.msra.mxu0 0
    %7806 = vmatprep.subr.bf16.mxu0 0
    %7807 = vmatpush1.bf16.msra.mxu0 0
    %7808 = vmatprep.subr.bf16.mxu0 0
    %7809 = vmatpush1.bf16.msra.mxu0 0
    %7810 = vmatprep.subr.bf16.mxu0 0
    %7811 = vmatpush1.bf16.msra.mxu0 0
    %7812 = vmatprep.subr.bf16.mxu0 0
    %7813 = vmatpush1.bf16.msra.mxu0 0
    %7814 = vmatprep.mubr.bf16.mxu0 0
    %7815 = vmatmul.mubr.bf16.gmra.mrb[0].mxu0 %v7068
    %v7816 = vpop.f32.mrb[0].mxu0
    %v7817 = vadd.f32 %v6901, %v7816
    %v7818 = vpop.f32.mrb[0].mxu0
    %v7819 = vadd.f32 %v6905, %v7818
    %v7820 = vpop.f32.mrb[0].mxu0
    %v7821 = vpop.f32.mrb[0].mxu0
    %7822 = vdwg.mxu0
    %v7823 = vmax.f32 %v7202, 0.0
    %v7824 = vmax.f32 %v7204, 0.0
    %v7825 = vmax.f32 %v7243, 0.0
    %v7826 = vmax.f32 %v7245, 0.0
    %v7827 = vmax.f32 %v7284, 0.0
    %v7828 = vmax.f32 %v7286, 0.0
    %v7829 = vmax.f32 %v7325, 0.0
    %v7830 = vmax.f32 %v7327, 0.0
    %v7831 = vmax.f32 %v7366, 0.0
    %v7832 = vmax.f32 %v7368, 0.0
    %v7833 = vmax.f32 %v7407, 0.0
    %v7834 = vmax.f32 %v7409, 0.0
    %v7835 = vmax.f32 %v7448, 0.0
    %v7836 = vmax.f32 %v7450, 0.0
    %v7837 = vmax.f32 %v7489, 0.0
    %v7838 = vmax.f32 %v7491, 0.0
    %v7839 = vmax.f32 %v7530, 0.0
    %v7840 = vmax.f32 %v7532, 0.0
    %v7841 = vmax.f32 %v7571, 0.0
    %v7842 = vmax.f32 %v7573, 0.0
    %v7843 = vmax.f32 %v7612, 0.0
    %v7844 = vmax.f32 %v7614, 0.0
    %v7845 = vmax.f32 %v7653, 0.0
    %v7846 = vmax.f32 %v7655, 0.0
    %v7847 = vmax.f32 %v7694, 0.0
    %v7848 = vmax.f32 %v7696, 0.0
    %v7849 = vmax.f32 %v7735, 0.0
    %v7850 = vmax.f32 %v7737, 0.0
    %v7851 = vmax.f32 %v7776, 0.0
    %v7852 = vmax.f32 %v7778, 0.0
    %v7853 = vmax.f32 %v7817, 0.0
    %v7854 = vmax.f32 %v7819, 0.0
    %v7855 = vpack.c.bf16 %v7823, %v7823
    %v7856 = vpack.c.bf16 %v7824, %v7824
    %v7857 = vpack.c.bf16 %v7825, %v7825
    %v7858 = vpack.c.bf16 %v7826, %v7826
    %v7859 = vpack.c.bf16 %v7827, %v7827
    %v7860 = vpack.c.bf16 %v7828, %v7828
    %v7861 = vpack.c.bf16 %v7829, %v7829
    %v7862 = vpack.c.bf16 %v7830, %v7830
    %v7863 = vpack.c.bf16 %v7831, %v7831
    %v7864 = vpack.c.bf16 %v7832, %v7832
    %v7865 = vpack.c.bf16 %v7833, %v7833
    %v7866 = vpack.c.bf16 %v7834, %v7834
    %v7867 = vpack.c.bf16 %v7835, %v7835
    %v7868 = vpack.c.bf16 %v7836, %v7836
    %v7869 = vpack.c.bf16 %v7837, %v7837
    %v7870 = vpack.c.bf16 %v7838, %v7838
    %v7871 = vpack.c.bf16 %v7839, %v7839
    %v7872 = vpack.c.bf16 %v7840, %v7840
    %v7873 = vpack.c.bf16 %v7841, %v7841
    %v7874 = vpack.c.bf16 %v7842, %v7842
    %v7875 = vpack.c.bf16 %v7843, %v7843
    %v7876 = vpack.c.bf16 %v7844, %v7844
    %v7877 = vpack.c.bf16 %v7845, %v7845
    %v7878 = vpack.c.bf16 %v7846, %v7846
    %v7879 = vpack.c.bf16 %v7847, %v7847
    %v7880 = vpack.c.bf16 %v7848, %v7848
    %v7881 = vpack.c.bf16 %v7849, %v7849
    %v7882 = vpack.c.bf16 %v7850, %v7850
    %v7883 = vpack.c.bf16 %v7851, %v7851
    %v7884 = vpack.c.bf16 %v7852, %v7852
    %v7885 = vpack.c.bf16 %v7853, %v7853
    %v7886 = vpack.c.bf16 %v7854, %v7854
    %v7887 = vld [vmem:[%s9] sm:$0xf]
    %v7888 = vld [vmem:[%s9 + $0x4] sm:$0xf]
    %v7889 = vld [vmem:[%s9 + $0x8] sm:$0xf]
    %v7890 = vld [vmem:[%s9 + $0xc] sm:$0xf]
    %v7891 = vld [vmem:[%s9 + $0x10] sm:$0xf]
    %v7892 = vld [vmem:[%s9 + $0x14] sm:$0xf]
    %v7893 = vld [vmem:[%s9 + $0x18] sm:$0xf]
    %v7894 = vld [vmem:[%s9 + $0x1c] sm:$0xf]
    %v7895 = vld [vmem:[%s9 + $0x20] sm:$0xf]
    %v7896 = vld [vmem:[%s9 + $0x24] sm:$0xf]
    %v7897 = vld [vmem:[%s9 + $0x28] sm:$0xf]
    %v7898 = vld [vmem:[%s9 + $0x2c] sm:$0xf]
    %v7899 = vld [vmem:[%s9 + $0x30] sm:$0xf]
    %v7900 = vld [vmem:[%s9 + $0x34] sm:$0xf]
    %v7901 = vld [vmem:[%s9 + $0x38] sm:$0xf]
    %v7902 = vld [vmem:[%s9 + $0x3c] sm:$0xf]
    %v7903 = vld [vmem:[%s9 + $0x40] sm:$0xf]
    %v7904 = vld [vmem:[%s9 + $0x44] sm:$0xf]
    %v7905 = vld [vmem:[%s9 + $0x48] sm:$0xf]
    %v7906 = vld [vmem:[%s9 + $0x4c] sm:$0xf]
    %v7907 = vld [vmem:[%s9 + $0x50] sm:$0xf]
    %v7908 = vld [vmem:[%s9 + $0x54] sm:$0xf]
    %v7909 = vld [vmem:[%s9 + $0x58] sm:$0xf]
    %v7910 = vld [vmem:[%s9 + $0x5c] sm:$0xf]
    %v7911 = vld [vmem:[%s9 + $0x60] sm:$0xf]
    %v7912 = vld [vmem:[%s9 + $0x64] sm:$0xf]
    %v7913 = vld [vmem:[%s9 + $0x68] sm:$0xf]
    %v7914 = vld [vmem:[%s9 + $0x6c] sm:$0xf]
    %v7915 = vld [vmem:[%s9 + $0x70] sm:$0xf]
    %v7916 = vld [vmem:[%s9 + $0x74] sm:$0xf]
    %v7917 = vld [vmem:[%s9 + $0x78] sm:$0xf]
    %v7918 = vld [vmem:[%s9 + $0x7c] sm:$0xf]
    %v7919 = vld [vmem:[%s9 + $0x80] sm:$0xf]
    %v7920 = vld [vmem:[%s9 + $0x84] sm:$0xf]
    %v7921 = vld [vmem:[%s9 + $0x88] sm:$0xf]
    %v7922 = vld [vmem:[%s9 + $0x8c] sm:$0xf]
    %v7923 = vld [vmem:[%s9 + $0x90] sm:$0xf]
    %v7924 = vld [vmem:[%s9 + $0x94] sm:$0xf]
    %v7925 = vld [vmem:[%s9 + $0x98] sm:$0xf]
    %v7926 = vld [vmem:[%s9 + $0x9c] sm:$0xf]
    %v7927 = vld [vmem:[%s9 + $0xa0] sm:$0xf]
    %v7928 = vld [vmem:[%s9 + $0xa4] sm:$0xf]
    %v7929 = vld [vmem:[%s9 + $0xa8] sm:$0xf]
    %v7930 = vld [vmem:[%s9 + $0xac] sm:$0xf]
    %v7931 = vld [vmem:[%s9 + $0xb0] sm:$0xf]
    %v7932 = vld [vmem:[%s9 + $0xb4] sm:$0xf]
    %v7933 = vld [vmem:[%s9 + $0xb8] sm:$0xf]
    %v7934 = vld [vmem:[%s9 + $0xbc] sm:$0xf]
    %v7935 = vld [vmem:[%s9 + $0xc0] sm:$0xf]
    %v7936 = vld [vmem:[%s9 + $0xc4] sm:$0xf]
    %v7937 = vld [vmem:[%s9 + $0xc8] sm:$0xf]
    %v7938 = vld [vmem:[%s9 + $0xcc] sm:$0xf]
    %v7939 = vld [vmem:[%s9 + $0xd0] sm:$0xf]
    %v7940 = vld [vmem:[%s9 + $0xd4] sm:$0xf]
    %v7941 = vld [vmem:[%s9 + $0xd8] sm:$0xf]
    %v7942 = vld [vmem:[%s9 + $0xdc] sm:$0xf]
    %v7943 = vld [vmem:[%s9 + $0xe0] sm:$0xf]
    %v7944 = vld [vmem:[%s9 + $0xe4] sm:$0xf]
    %v7945 = vld [vmem:[%s9 + $0xe8] sm:$0xf]
    %v7946 = vld [vmem:[%s9 + $0xec] sm:$0xf]
    %v7947 = vld [vmem:[%s9 + $0xf0] sm:$0xf]
    %v7948 = vld [vmem:[%s9 + $0xf4] sm:$0xf]
    %v7949 = vld [vmem:[%s9 + $0xf8] sm:$0xf]
    %v7950 = vld [vmem:[%s9 + $0xfc] sm:$0xf]
    %v7951 = vld [vmem:[%s9 + $0x100] sm:$0xf]
    %v7952 = vld [vmem:[%s9 + $0x104] sm:$0xf]
    %v7953 = vld [vmem:[%s9 + $0x108] sm:$0xf]
    %v7954 = vld [vmem:[%s9 + $0x10c] sm:$0xf]
    %v7955 = vld [vmem:[%s9 + $0x110] sm:$0xf]
    %v7956 = vld [vmem:[%s9 + $0x114] sm:$0xf]
    %v7957 = vld [vmem:[%s9 + $0x118] sm:$0xf]
    %v7958 = vld [vmem:[%s9 + $0x11c] sm:$0xf]
    %v7959 = vld [vmem:[%s9 + $0x120] sm:$0xf]
    %v7960 = vld [vmem:[%s9 + $0x124] sm:$0xf]
    %v7961 = vld [vmem:[%s9 + $0x128] sm:$0xf]
    %v7962 = vld [vmem:[%s9 + $0x12c] sm:$0xf]
    %v7963 = vld [vmem:[%s9 + $0x130] sm:$0xf]
    %v7964 = vld [vmem:[%s9 + $0x134] sm:$0xf]
    %v7965 = vld [vmem:[%s9 + $0x138] sm:$0xf]
    %v7966 = vld [vmem:[%s9 + $0x13c] sm:$0xf]
    %v7967 = vld [vmem:[%s9 + $0x140] sm:$0xf]
    %v7968 = vld [vmem:[%s9 + $0x144] sm:$0xf]
    %v7969 = vld [vmem:[%s9 + $0x148] sm:$0xf]
    %v7970 = vld [vmem:[%s9 + $0x14c] sm:$0xf]
    %v7971 = vld [vmem:[%s9 + $0x150] sm:$0xf]
    %v7972 = vld [vmem:[%s9 + $0x154] sm:$0xf]
    %v7973 = vld [vmem:[%s9 + $0x158] sm:$0xf]
    %v7974 = vld [vmem:[%s9 + $0x15c] sm:$0xf]
    %v7975 = vld [vmem:[%s9 + $0x160] sm:$0xf]
    %v7976 = vld [vmem:[%s9 + $0x164] sm:$0xf]
    %v7977 = vld [vmem:[%s9 + $0x168] sm:$0xf]
    %v7978 = vld [vmem:[%s9 + $0x16c] sm:$0xf]
    %v7979 = vld [vmem:[%s9 + $0x170] sm:$0xf]
    %v7980 = vld [vmem:[%s9 + $0x174] sm:$0xf]
    %v7981 = vld [vmem:[%s9 + $0x178] sm:$0xf]
    %v7982 = vld [vmem:[%s9 + $0x17c] sm:$0xf]
    %v7983 = vld [vmem:[%s9 + $0x180] sm:$0xf]
    %v7984 = vld [vmem:[%s9 + $0x184] sm:$0xf]
    %v7985 = vld [vmem:[%s9 + $0x188] sm:$0xf]
    %v7986 = vld [vmem:[%s9 + $0x18c] sm:$0xf]
    %v7987 = vld [vmem:[%s9 + $0x190] sm:$0xf]
    %v7988 = vld [vmem:[%s9 + $0x194] sm:$0xf]
    %v7989 = vld [vmem:[%s9 + $0x198] sm:$0xf]
    %v7990 = vld [vmem:[%s9 + $0x19c] sm:$0xf]
    %v7991 = vld [vmem:[%s9 + $0x1a0] sm:$0xf]
    %v7992 = vld [vmem:[%s9 + $0x1a4] sm:$0xf]
    %v7993 = vld [vmem:[%s9 + $0x1a8] sm:$0xf]
    %v7994 = vld [vmem:[%s9 + $0x1ac] sm:$0xf]
    %v7995 = vld [vmem:[%s9 + $0x1b0] sm:$0xf]
    %v7996 = vld [vmem:[%s9 + $0x1b4] sm:$0xf]
    %v7997 = vld [vmem:[%s9 + $0x1b8] sm:$0xf]
    %v7998 = vld [vmem:[%s9 + $0x1bc] sm:$0xf]
    %v7999 = vld [vmem:[%s9 + $0x1c0] sm:$0xf]
    %v8000 = vld [vmem:[%s9 + $0x1c4] sm:$0xf]
    %v8001 = vld [vmem:[%s9 + $0x1c8] sm:$0xf]
    %v8002 = vld [vmem:[%s9 + $0x1cc] sm:$0xf]
    %v8003 = vld [vmem:[%s9 + $0x1d0] sm:$0xf]
    %v8004 = vld [vmem:[%s9 + $0x1d4] sm:$0xf]
    %v8005 = vld [vmem:[%s9 + $0x1d8] sm:$0xf]
    %v8006 = vld [vmem:[%s9 + $0x1dc] sm:$0xf]
    %v8007 = vld [vmem:[%s9 + $0x1e0] sm:$0xf]
    %v8008 = vld [vmem:[%s9 + $0x1e4] sm:$0xf]
    %v8009 = vld [vmem:[%s9 + $0x1e8] sm:$0xf]
    %v8010 = vld [vmem:[%s9 + $0x1ec] sm:$0xf]
    %v8011 = vld [vmem:[%s9 + $0x1f0] sm:$0xf]
    %v8012 = vld [vmem:[%s9 + $0x1f4] sm:$0xf]
    %v8013 = vld [vmem:[%s9 + $0x1f8] sm:$0xf]
    %v8014 = vld [vmem:[%s9 + $0x1fc] sm:$0xf]
    %v8015 = vld [vmem:[%s9 + $0x200] sm:$0xf]
    %v8016 = vld [vmem:[%s9 + $0x204] sm:$0xf]
    %v8017 = vld [vmem:[%s9 + $0x208] sm:$0xf]
    %v8018 = vld [vmem:[%s9 + $0x20c] sm:$0xf]
    %v8019 = vld [vmem:[%s9 + $0x210] sm:$0xf]
    %v8020 = vld [vmem:[%s9 + $0x214] sm:$0xf]
    %v8021 = vld [vmem:[%s9 + $0x218] sm:$0xf]
    %v8022 = vld [vmem:[%s9 + $0x21c] sm:$0xf]
    %v8023 = vld [vmem:[%s9 + $0x220] sm:$0xf]
    %v8024 = vld [vmem:[%s9 + $0x224] sm:$0xf]
    %v8025 = vld [vmem:[%s9 + $0x228] sm:$0xf]
    %v8026 = vld [vmem:[%s9 + $0x22c] sm:$0xf]
    %v8027 = vld [vmem:[%s9 + $0x230] sm:$0xf]
    %v8028 = vld [vmem:[%s9 + $0x234] sm:$0xf]
    %v8029 = vld [vmem:[%s9 + $0x238] sm:$0xf]
    %v8030 = vld [vmem:[%s9 + $0x23c] sm:$0xf]
    %v8031 = vld [vmem:[%s9 + $0x240] sm:$0xf]
    %v8032 = vld [vmem:[%s9 + $0x244] sm:$0xf]
    %v8033 = vld [vmem:[%s9 + $0x248] sm:$0xf]
    %v8034 = vld [vmem:[%s9 + $0x24c] sm:$0xf]
    %v8035 = vld [vmem:[%s9 + $0x250] sm:$0xf]
    %v8036 = vld [vmem:[%s9 + $0x254] sm:$0xf]
    %v8037 = vld [vmem:[%s9 + $0x258] sm:$0xf]
    %v8038 = vld [vmem:[%s9 + $0x25c] sm:$0xf]
    %v8039 = vld [vmem:[%s9 + $0x260] sm:$0xf]
    %v8040 = vld [vmem:[%s9 + $0x264] sm:$0xf]
    %v8041 = vld [vmem:[%s9 + $0x268] sm:$0xf]
    %v8042 = vld [vmem:[%s9 + $0x26c] sm:$0xf]
    %v8043 = vld [vmem:[%s9 + $0x270] sm:$0xf]
    %v8044 = vld [vmem:[%s9 + $0x274] sm:$0xf]
    %v8045 = vld [vmem:[%s9 + $0x278] sm:$0xf]
    %v8046 = vld [vmem:[%s9 + $0x27c] sm:$0xf]
    %v8047 = vld [vmem:[%s9 + $0x280] sm:$0xf]
    %v8048 = vld [vmem:[%s9 + $0x284] sm:$0xf]
    %v8049 = vld [vmem:[%s9 + $0x288] sm:$0xf]
    %v8050 = vld [vmem:[%s9 + $0x28c] sm:$0xf]
    %v8051 = vld [vmem:[%s9 + $0x290] sm:$0xf]
    %v8052 = vld [vmem:[%s9 + $0x294] sm:$0xf]
    %v8053 = vld [vmem:[%s9 + $0x298] sm:$0xf]
    %v8054 = vld [vmem:[%s9 + $0x29c] sm:$0xf]
    %v8055 = vld [vmem:[%s9 + $0x2a0] sm:$0xf]
    %v8056 = vld [vmem:[%s9 + $0x2a4] sm:$0xf]
    %v8057 = vld [vmem:[%s9 + $0x2a8] sm:$0xf]
    %v8058 = vld [vmem:[%s9 + $0x2ac] sm:$0xf]
    %v8059 = vld [vmem:[%s9 + $0x2b0] sm:$0xf]
    %v8060 = vld [vmem:[%s9 + $0x2b4] sm:$0xf]
    %v8061 = vld [vmem:[%s9 + $0x2b8] sm:$0xf]
    %v8062 = vld [vmem:[%s9 + $0x2bc] sm:$0xf]
    %v8063 = vld [vmem:[%s9 + $0x2c0] sm:$0xf]
    %v8064 = vld [vmem:[%s9 + $0x2c4] sm:$0xf]
    %v8065 = vld [vmem:[%s9 + $0x2c8] sm:$0xf]
    %v8066 = vld [vmem:[%s9 + $0x2cc] sm:$0xf]
    %v8067 = vld [vmem:[%s9 + $0x2d0] sm:$0xf]
    %v8068 = vld [vmem:[%s9 + $0x2d4] sm:$0xf]
    %v8069 = vld [vmem:[%s9 + $0x2d8] sm:$0xf]
    %v8070 = vld [vmem:[%s9 + $0x2dc] sm:$0xf]
    %v8071 = vld [vmem:[%s9 + $0x2e0] sm:$0xf]
    %v8072 = vld [vmem:[%s9 + $0x2e4] sm:$0xf]
    %v8073 = vld [vmem:[%s9 + $0x2e8] sm:$0xf]
    %v8074 = vld [vmem:[%s9 + $0x2ec] sm:$0xf]
    %v8075 = vld [vmem:[%s9 + $0x2f0] sm:$0xf]
    %v8076 = vld [vmem:[%s9 + $0x2f4] sm:$0xf]
    %v8077 = vld [vmem:[%s9 + $0x2f8] sm:$0xf]
    %v8078 = vld [vmem:[%s9 + $0x2fc] sm:$0xf]
    %v8079 = vld [vmem:[%s9 + $0x300] sm:$0xf]
    %v8080 = vld [vmem:[%s9 + $0x304] sm:$0xf]
    %v8081 = vld [vmem:[%s9 + $0x308] sm:$0xf]
    %v8082 = vld [vmem:[%s9 + $0x30c] sm:$0xf]
    %v8083 = vld [vmem:[%s9 + $0x310] sm:$0xf]
    %v8084 = vld [vmem:[%s9 + $0x314] sm:$0xf]
    %v8085 = vld [vmem:[%s9 + $0x318] sm:$0xf]
    %v8086 = vld [vmem:[%s9 + $0x31c] sm:$0xf]
    %v8087 = vld [vmem:[%s9 + $0x320] sm:$0xf]
    %v8088 = vld [vmem:[%s9 + $0x324] sm:$0xf]
    %v8089 = vld [vmem:[%s9 + $0x328] sm:$0xf]
    %v8090 = vld [vmem:[%s9 + $0x32c] sm:$0xf]
    %v8091 = vld [vmem:[%s9 + $0x330] sm:$0xf]
    %v8092 = vld [vmem:[%s9 + $0x334] sm:$0xf]
    %v8093 = vld [vmem:[%s9 + $0x338] sm:$0xf]
    %v8094 = vld [vmem:[%s9 + $0x33c] sm:$0xf]
    %v8095 = vld [vmem:[%s9 + $0x340] sm:$0xf]
    %v8096 = vld [vmem:[%s9 + $0x344] sm:$0xf]
    %v8097 = vld [vmem:[%s9 + $0x348] sm:$0xf]
    %v8098 = vld [vmem:[%s9 + $0x34c] sm:$0xf]
    %v8099 = vld [vmem:[%s9 + $0x350] sm:$0xf]
    %v8100 = vld [vmem:[%s9 + $0x354] sm:$0xf]
    %v8101 = vld [vmem:[%s9 + $0x358] sm:$0xf]
    %v8102 = vld [vmem:[%s9 + $0x35c] sm:$0xf]
    %v8103 = vld [vmem:[%s9 + $0x360] sm:$0xf]
    %v8104 = vld [vmem:[%s9 + $0x364] sm:$0xf]
    %v8105 = vld [vmem:[%s9 + $0x368] sm:$0xf]
    %v8106 = vld [vmem:[%s9 + $0x36c] sm:$0xf]
    %v8107 = vld [vmem:[%s9 + $0x370] sm:$0xf]
    %v8108 = vld [vmem:[%s9 + $0x374] sm:$0xf]
    %v8109 = vld [vmem:[%s9 + $0x378] sm:$0xf]
    %v8110 = vld [vmem:[%s9 + $0x37c] sm:$0xf]
    %v8111 = vld [vmem:[%s9 + $0x380] sm:$0xf]
    %v8112 = vld [vmem:[%s9 + $0x384] sm:$0xf]
    %v8113 = vld [vmem:[%s9 + $0x388] sm:$0xf]
    %v8114 = vld [vmem:[%s9 + $0x38c] sm:$0xf]
    %v8115 = vld [vmem:[%s9 + $0x390] sm:$0xf]
    %v8116 = vld [vmem:[%s9 + $0x394] sm:$0xf]
    %v8117 = vld [vmem:[%s9 + $0x398] sm:$0xf]
    %v8118 = vld [vmem:[%s9 + $0x39c] sm:$0xf]
    %v8119 = vld [vmem:[%s9 + $0x3a0] sm:$0xf]
    %v8120 = vld [vmem:[%s9 + $0x3a4] sm:$0xf]
    %v8121 = vld [vmem:[%s9 + $0x3a8] sm:$0xf]
    %v8122 = vld [vmem:[%s9 + $0x3ac] sm:$0xf]
    %v8123 = vld [vmem:[%s9 + $0x3b0] sm:$0xf]
    %v8124 = vld [vmem:[%s9 + $0x3b4] sm:$0xf]
    %v8125 = vld [vmem:[%s9 + $0x3b8] sm:$0xf]
    %v8126 = vld [vmem:[%s9 + $0x3bc] sm:$0xf]
    %v8127 = vld [vmem:[%s9 + $0x3c0] sm:$0xf]
    %v8128 = vld [vmem:[%s9 + $0x3c4] sm:$0xf]
    %v8129 = vld [vmem:[%s9 + $0x3c8] sm:$0xf]
    %v8130 = vld [vmem:[%s9 + $0x3cc] sm:$0xf]
    %v8131 = vld [vmem:[%s9 + $0x3d0] sm:$0xf]
    %v8132 = vld [vmem:[%s9 + $0x3d4] sm:$0xf]
    %v8133 = vld [vmem:[%s9 + $0x3d8] sm:$0xf]
    %v8134 = vld [vmem:[%s9 + $0x3dc] sm:$0xf]
    %v8135 = vld [vmem:[%s9 + $0x3e0] sm:$0xf]
    %v8136 = vld [vmem:[%s9 + $0x3e4] sm:$0xf]
    %v8137 = vld [vmem:[%s9 + $0x3e8] sm:$0xf]
    %v8138 = vld [vmem:[%s9 + $0x3ec] sm:$0xf]
    %v8139 = vld [vmem:[%s9 + $0x3f0] sm:$0xf]
    %v8140 = vld [vmem:[%s9 + $0x3f4] sm:$0xf]
    %v8141 = vld [vmem:[%s9 + $0x3f8] sm:$0xf]
    %v8142 = vld [vmem:[%s9 + $0x3fc] sm:$0xf]
    %v8143 = vld [vmem:[%s9 + $0x400] sm:$0xf]
    %v8144 = vld [vmem:[%s9 + $0x404] sm:$0xf]
    %v8145 = vld [vmem:[%s9 + $0x408] sm:$0xf]
    %v8146 = vld [vmem:[%s9 + $0x40c] sm:$0xf]
    %v8147 = vld [vmem:[%s9 + $0x410] sm:$0xf]
    %v8148 = vld [vmem:[%s9 + $0x414] sm:$0xf]
    %v8149 = vld [vmem:[%s9 + $0x418] sm:$0xf]
    %v8150 = vld [vmem:[%s9 + $0x41c] sm:$0xf]
    %v8151 = vld [vmem:[%s9 + $0x420] sm:$0xf]
    %v8152 = vld [vmem:[%s9 + $0x424] sm:$0xf]
    %v8153 = vld [vmem:[%s9 + $0x428] sm:$0xf]
    %v8154 = vld [vmem:[%s9 + $0x42c] sm:$0xf]
    %v8155 = vld [vmem:[%s9 + $0x430] sm:$0xf]
    %v8156 = vld [vmem:[%s9 + $0x434] sm:$0xf]
    %v8157 = vld [vmem:[%s9 + $0x438] sm:$0xf]
    %v8158 = vld [vmem:[%s9 + $0x43c] sm:$0xf]
    %v8159 = vld [vmem:[%s9 + $0x440] sm:$0xf]
    %v8160 = vld [vmem:[%s9 + $0x444] sm:$0xf]
    %v8161 = vld [vmem:[%s9 + $0x448] sm:$0xf]
    %v8162 = vld [vmem:[%s9 + $0x44c] sm:$0xf]
    %v8163 = vld [vmem:[%s9 + $0x450] sm:$0xf]
    %v8164 = vld [vmem:[%s9 + $0x454] sm:$0xf]
    %v8165 = vld [vmem:[%s9 + $0x458] sm:$0xf]
    %v8166 = vld [vmem:[%s9 + $0x45c] sm:$0xf]
    %v8167 = vld [vmem:[%s9 + $0x460] sm:$0xf]
    %v8168 = vld [vmem:[%s9 + $0x464] sm:$0xf]
    %v8169 = vld [vmem:[%s9 + $0x468] sm:$0xf]
    %v8170 = vld [vmem:[%s9 + $0x46c] sm:$0xf]
    %v8171 = vld [vmem:[%s9 + $0x470] sm:$0xf]
    %v8172 = vld [vmem:[%s9 + $0x474] sm:$0xf]
    %v8173 = vld [vmem:[%s9 + $0x478] sm:$0xf]
    %v8174 = vld [vmem:[%s9 + $0x47c] sm:$0xf]
    %v8175 = vld [vmem:[%s9 + $0x480] sm:$0xf]
    %v8176 = vld [vmem:[%s9 + $0x484] sm:$0xf]
    %v8177 = vld [vmem:[%s9 + $0x488] sm:$0xf]
    %v8178 = vld [vmem:[%s9 + $0x48c] sm:$0xf]
    %v8179 = vld [vmem:[%s9 + $0x490] sm:$0xf]
    %v8180 = vld [vmem:[%s9 + $0x494] sm:$0xf]
    %v8181 = vld [vmem:[%s9 + $0x498] sm:$0xf]
    %v8182 = vld [vmem:[%s9 + $0x49c] sm:$0xf]
    %v8183 = vld [vmem:[%s9 + $0x4a0] sm:$0xf]
    %v8184 = vld [vmem:[%s9 + $0x4a4] sm:$0xf]
    %v8185 = vld [vmem:[%s9 + $0x4a8] sm:$0xf]
    %v8186 = vld [vmem:[%s9 + $0x4ac] sm:$0xf]
    %v8187 = vld [vmem:[%s9 + $0x4b0] sm:$0xf]
    %v8188 = vld [vmem:[%s9 + $0x4b4] sm:$0xf]
    %v8189 = vld [vmem:[%s9 + $0x4b8] sm:$0xf]
    %v8190 = vld [vmem:[%s9 + $0x4bc] sm:$0xf]
    %v8191 = vld [vmem:[%s9 + $0x4c0] sm:$0xf]
    %v8192 = vld [vmem:[%s9 + $0x4c4] sm:$0xf]
    %v8193 = vld [vmem:[%s9 + $0x4c8] sm:$0xf]
    %v8194 = vld [vmem:[%s9 + $0x4cc] sm:$0xf]
    %v8195 = vld [vmem:[%s9 + $0x4d0] sm:$0xf]
    %v8196 = vld [vmem:[%s9 + $0x4d4] sm:$0xf]
    %v8197 = vld [vmem:[%s9 + $0x4d8] sm:$0xf]
    %v8198 = vld [vmem:[%s9 + $0x4dc] sm:$0xf]
    %v8199 = vld [vmem:[%s9 + $0x4e0] sm:$0xf]
    %v8200 = vld [vmem:[%s9 + $0x4e4] sm:$0xf]
    %v8201 = vld [vmem:[%s9 + $0x4e8] sm:$0xf]
    %v8202 = vld [vmem:[%s9 + $0x4ec] sm:$0xf]
    %v8203 = vld [vmem:[%s9 + $0x4f0] sm:$0xf]
    %v8204 = vld [vmem:[%s9 + $0x4f4] sm:$0xf]
    %v8205 = vld [vmem:[%s9 + $0x4f8] sm:$0xf]
    %v8206 = vld [vmem:[%s9 + $0x4fc] sm:$0xf]
    %v8207 = vld [vmem:[%s9 + $0x500] sm:$0xf]
    %v8208 = vld [vmem:[%s9 + $0x504] sm:$0xf]
    %v8209 = vld [vmem:[%s9 + $0x508] sm:$0xf]
    %v8210 = vld [vmem:[%s9 + $0x50c] sm:$0xf]
    %v8211 = vld [vmem:[%s9 + $0x510] sm:$0xf]
    %v8212 = vld [vmem:[%s9 + $0x514] sm:$0xf]
    %v8213 = vld [vmem:[%s9 + $0x518] sm:$0xf]
    %v8214 = vld [vmem:[%s9 + $0x51c] sm:$0xf]
    %v8215 = vld [vmem:[%s9 + $0x520] sm:$0xf]
    %v8216 = vld [vmem:[%s9 + $0x524] sm:$0xf]
    %v8217 = vld [vmem:[%s9 + $0x528] sm:$0xf]
    %v8218 = vld [vmem:[%s9 + $0x52c] sm:$0xf]
    %v8219 = vld [vmem:[%s9 + $0x530] sm:$0xf]
    %v8220 = vld [vmem:[%s9 + $0x534] sm:$0xf]
    %v8221 = vld [vmem:[%s9 + $0x538] sm:$0xf]
    %v8222 = vld [vmem:[%s9 + $0x53c] sm:$0xf]
    %v8223 = vld [vmem:[%s9 + $0x540] sm:$0xf]
    %v8224 = vld [vmem:[%s9 + $0x544] sm:$0xf]
    %v8225 = vld [vmem:[%s9 + $0x548] sm:$0xf]
    %v8226 = vld [vmem:[%s9 + $0x54c] sm:$0xf]
    %v8227 = vld [vmem:[%s9 + $0x550] sm:$0xf]
    %v8228 = vld [vmem:[%s9 + $0x554] sm:$0xf]
    %v8229 = vld [vmem:[%s9 + $0x558] sm:$0xf]
    %v8230 = vld [vmem:[%s9 + $0x55c] sm:$0xf]
    %v8231 = vld [vmem:[%s9 + $0x560] sm:$0xf]
    %v8232 = vld [vmem:[%s9 + $0x564] sm:$0xf]
    %v8233 = vld [vmem:[%s9 + $0x568] sm:$0xf]
    %v8234 = vld [vmem:[%s9 + $0x56c] sm:$0xf]
    %v8235 = vld [vmem:[%s9 + $0x570] sm:$0xf]
    %v8236 = vld [vmem:[%s9 + $0x574] sm:$0xf]
    %v8237 = vld [vmem:[%s9 + $0x578] sm:$0xf]
    %v8238 = vld [vmem:[%s9 + $0x57c] sm:$0xf]
    %v8239 = vld [vmem:[%s9 + $0x580] sm:$0xf]
    %v8240 = vld [vmem:[%s9 + $0x584] sm:$0xf]
    %v8241 = vld [vmem:[%s9 + $0x588] sm:$0xf]
    %v8242 = vld [vmem:[%s9 + $0x58c] sm:$0xf]
    %v8243 = vld [vmem:[%s9 + $0x590] sm:$0xf]
    %v8244 = vld [vmem:[%s9 + $0x594] sm:$0xf]
    %v8245 = vld [vmem:[%s9 + $0x598] sm:$0xf]
    %v8246 = vld [vmem:[%s9 + $0x59c] sm:$0xf]
    %v8247 = vld [vmem:[%s9 + $0x5a0] sm:$0xf]
    %v8248 = vld [vmem:[%s9 + $0x5a4] sm:$0xf]
    %v8249 = vld [vmem:[%s9 + $0x5a8] sm:$0xf]
    %v8250 = vld [vmem:[%s9 + $0x5ac] sm:$0xf]
    %v8251 = vld [vmem:[%s9 + $0x5b0] sm:$0xf]
    %v8252 = vld [vmem:[%s9 + $0x5b4] sm:$0xf]
    %v8253 = vld [vmem:[%s9 + $0x5b8] sm:$0xf]
    %v8254 = vld [vmem:[%s9 + $0x5bc] sm:$0xf]
    %v8255 = vld [vmem:[%s9 + $0x5c0] sm:$0xf]
    %v8256 = vld [vmem:[%s9 + $0x5c4] sm:$0xf]
    %v8257 = vld [vmem:[%s9 + $0x5c8] sm:$0xf]
    %v8258 = vld [vmem:[%s9 + $0x5cc] sm:$0xf]
    %v8259 = vld [vmem:[%s9 + $0x5d0] sm:$0xf]
    %v8260 = vld [vmem:[%s9 + $0x5d4] sm:$0xf]
    %v8261 = vld [vmem:[%s9 + $0x5d8] sm:$0xf]
    %v8262 = vld [vmem:[%s9 + $0x5dc] sm:$0xf]
    %v8263 = vld [vmem:[%s9 + $0x5e0] sm:$0xf]
    %v8264 = vld [vmem:[%s9 + $0x5e4] sm:$0xf]
    %v8265 = vld [vmem:[%s9 + $0x5e8] sm:$0xf]
    %v8266 = vld [vmem:[%s9 + $0x5ec] sm:$0xf]
    %v8267 = vld [vmem:[%s9 + $0x5f0] sm:$0xf]
    %v8268 = vld [vmem:[%s9 + $0x5f4] sm:$0xf]
    %v8269 = vld [vmem:[%s9 + $0x5f8] sm:$0xf]
    %v8270 = vld [vmem:[%s9 + $0x5fc] sm:$0xf]
    %v8271 = vld [vmem:[%s9 + $0x600] sm:$0xf]
    %v8272 = vld [vmem:[%s9 + $0x604] sm:$0xf]
    %v8273 = vld [vmem:[%s9 + $0x608] sm:$0xf]
    %v8274 = vld [vmem:[%s9 + $0x60c] sm:$0xf]
    %v8275 = vld [vmem:[%s9 + $0x610] sm:$0xf]
    %v8276 = vld [vmem:[%s9 + $0x614] sm:$0xf]
    %v8277 = vld [vmem:[%s9 + $0x618] sm:$0xf]
    %v8278 = vld [vmem:[%s9 + $0x61c] sm:$0xf]
    %v8279 = vld [vmem:[%s9 + $0x620] sm:$0xf]
    %v8280 = vld [vmem:[%s9 + $0x624] sm:$0xf]
    %v8281 = vld [vmem:[%s9 + $0x628] sm:$0xf]
    %v8282 = vld [vmem:[%s9 + $0x62c] sm:$0xf]
    %v8283 = vld [vmem:[%s9 + $0x630] sm:$0xf]
    %v8284 = vld [vmem:[%s9 + $0x634] sm:$0xf]
    %v8285 = vld [vmem:[%s9 + $0x638] sm:$0xf]
    %v8286 = vld [vmem:[%s9 + $0x63c] sm:$0xf]
    %v8287 = vld [vmem:[%s9 + $0x640] sm:$0xf]
    %v8288 = vld [vmem:[%s9 + $0x644] sm:$0xf]
    %v8289 = vld [vmem:[%s9 + $0x648] sm:$0xf]
    %v8290 = vld [vmem:[%s9 + $0x64c] sm:$0xf]
    %v8291 = vld [vmem:[%s9 + $0x650] sm:$0xf]
    %v8292 = vld [vmem:[%s9 + $0x654] sm:$0xf]
    %v8293 = vld [vmem:[%s9 + $0x658] sm:$0xf]
    %v8294 = vld [vmem:[%s9 + $0x65c] sm:$0xf]
    %v8295 = vld [vmem:[%s9 + $0x660] sm:$0xf]
    %v8296 = vld [vmem:[%s9 + $0x664] sm:$0xf]
    %v8297 = vld [vmem:[%s9 + $0x668] sm:$0xf]
    %v8298 = vld [vmem:[%s9 + $0x66c] sm:$0xf]
    %v8299 = vld [vmem:[%s9 + $0x670] sm:$0xf]
    %v8300 = vld [vmem:[%s9 + $0x674] sm:$0xf]
    %v8301 = vld [vmem:[%s9 + $0x678] sm:$0xf]
    %v8302 = vld [vmem:[%s9 + $0x67c] sm:$0xf]
    %v8303 = vld [vmem:[%s9 + $0x680] sm:$0xf]
    %v8304 = vld [vmem:[%s9 + $0x684] sm:$0xf]
    %v8305 = vld [vmem:[%s9 + $0x688] sm:$0xf]
    %v8306 = vld [vmem:[%s9 + $0x68c] sm:$0xf]
    %v8307 = vld [vmem:[%s9 + $0x690] sm:$0xf]
    %v8308 = vld [vmem:[%s9 + $0x694] sm:$0xf]
    %v8309 = vld [vmem:[%s9 + $0x698] sm:$0xf]
    %v8310 = vld [vmem:[%s9 + $0x69c] sm:$0xf]
    %v8311 = vld [vmem:[%s9 + $0x6a0] sm:$0xf]
    %v8312 = vld [vmem:[%s9 + $0x6a4] sm:$0xf]
    %v8313 = vld [vmem:[%s9 + $0x6a8] sm:$0xf]
    %v8314 = vld [vmem:[%s9 + $0x6ac] sm:$0xf]
    %v8315 = vld [vmem:[%s9 + $0x6b0] sm:$0xf]
    %v8316 = vld [vmem:[%s9 + $0x6b4] sm:$0xf]
    %v8317 = vld [vmem:[%s9 + $0x6b8] sm:$0xf]
    %v8318 = vld [vmem:[%s9 + $0x6bc] sm:$0xf]
    %v8319 = vld [vmem:[%s9 + $0x6c0] sm:$0xf]
    %v8320 = vld [vmem:[%s9 + $0x6c4] sm:$0xf]
    %v8321 = vld [vmem:[%s9 + $0x6c8] sm:$0xf]
    %v8322 = vld [vmem:[%s9 + $0x6cc] sm:$0xf]
    %v8323 = vld [vmem:[%s9 + $0x6d0] sm:$0xf]
    %v8324 = vld [vmem:[%s9 + $0x6d4] sm:$0xf]
    %v8325 = vld [vmem:[%s9 + $0x6d8] sm:$0xf]
    %v8326 = vld [vmem:[%s9 + $0x6dc] sm:$0xf]
    %v8327 = vld [vmem:[%s9 + $0x6e0] sm:$0xf]
    %v8328 = vld [vmem:[%s9 + $0x6e4] sm:$0xf]
    %v8329 = vld [vmem:[%s9 + $0x6e8] sm:$0xf]
    %v8330 = vld [vmem:[%s9 + $0x6ec] sm:$0xf]
    %v8331 = vld [vmem:[%s9 + $0x6f0] sm:$0xf]
    %v8332 = vld [vmem:[%s9 + $0x6f4] sm:$0xf]
    %v8333 = vld [vmem:[%s9 + $0x6f8] sm:$0xf]
    %v8334 = vld [vmem:[%s9 + $0x6fc] sm:$0xf]
    %v8335 = vld [vmem:[%s9 + $0x700] sm:$0xf]
    %v8336 = vld [vmem:[%s9 + $0x704] sm:$0xf]
    %v8337 = vld [vmem:[%s9 + $0x708] sm:$0xf]
    %v8338 = vld [vmem:[%s9 + $0x70c] sm:$0xf]
    %v8339 = vld [vmem:[%s9 + $0x710] sm:$0xf]
    %v8340 = vld [vmem:[%s9 + $0x714] sm:$0xf]
    %v8341 = vld [vmem:[%s9 + $0x718] sm:$0xf]
    %v8342 = vld [vmem:[%s9 + $0x71c] sm:$0xf]
    %v8343 = vld [vmem:[%s9 + $0x720] sm:$0xf]
    %v8344 = vld [vmem:[%s9 + $0x724] sm:$0xf]
    %v8345 = vld [vmem:[%s9 + $0x728] sm:$0xf]
    %v8346 = vld [vmem:[%s9 + $0x72c] sm:$0xf]
    %v8347 = vld [vmem:[%s9 + $0x730] sm:$0xf]
    %v8348 = vld [vmem:[%s9 + $0x734] sm:$0xf]
    %v8349 = vld [vmem:[%s9 + $0x738] sm:$0xf]
    %v8350 = vld [vmem:[%s9 + $0x73c] sm:$0xf]
    %v8351 = vld [vmem:[%s9 + $0x740] sm:$0xf]
    %v8352 = vld [vmem:[%s9 + $0x744] sm:$0xf]
    %v8353 = vld [vmem:[%s9 + $0x748] sm:$0xf]
    %v8354 = vld [vmem:[%s9 + $0x74c] sm:$0xf]
    %v8355 = vld [vmem:[%s9 + $0x750] sm:$0xf]
    %v8356 = vld [vmem:[%s9 + $0x754] sm:$0xf]
    %v8357 = vld [vmem:[%s9 + $0x758] sm:$0xf]
    %v8358 = vld [vmem:[%s9 + $0x75c] sm:$0xf]
    %v8359 = vld [vmem:[%s9 + $0x760] sm:$0xf]
    %v8360 = vld [vmem:[%s9 + $0x764] sm:$0xf]
    %v8361 = vld [vmem:[%s9 + $0x768] sm:$0xf]
    %v8362 = vld [vmem:[%s9 + $0x76c] sm:$0xf]
    %v8363 = vld [vmem:[%s9 + $0x770] sm:$0xf]
    %v8364 = vld [vmem:[%s9 + $0x774] sm:$0xf]
    %v8365 = vld [vmem:[%s9 + $0x778] sm:$0xf]
    %v8366 = vld [vmem:[%s9 + $0x77c] sm:$0xf]
    %v8367 = vld [vmem:[%s9 + $0x780] sm:$0xf]
    %v8368 = vld [vmem:[%s9 + $0x784] sm:$0xf]
    %v8369 = vld [vmem:[%s9 + $0x788] sm:$0xf]
    %v8370 = vld [vmem:[%s9 + $0x78c] sm:$0xf]
    %v8371 = vld [vmem:[%s9 + $0x790] sm:$0xf]
    %v8372 = vld [vmem:[%s9 + $0x794] sm:$0xf]
    %v8373 = vld [vmem:[%s9 + $0x798] sm:$0xf]
    %v8374 = vld [vmem:[%s9 + $0x79c] sm:$0xf]
    %v8375 = vld [vmem:[%s9 + $0x7a0] sm:$0xf]
    %v8376 = vld [vmem:[%s9 + $0x7a4] sm:$0xf]
    %v8377 = vld [vmem:[%s9 + $0x7a8] sm:$0xf]
    %v8378 = vld [vmem:[%s9 + $0x7ac] sm:$0xf]
    %v8379 = vld [vmem:[%s9 + $0x7b0] sm:$0xf]
    %v8380 = vld [vmem:[%s9 + $0x7b4] sm:$0xf]
    %v8381 = vld [vmem:[%s9 + $0x7b8] sm:$0xf]
    %v8382 = vld [vmem:[%s9 + $0x7bc] sm:$0xf]
    %v8383 = vld [vmem:[%s9 + $0x7c0] sm:$0xf]
    %v8384 = vld [vmem:[%s9 + $0x7c4] sm:$0xf]
    %v8385 = vld [vmem:[%s9 + $0x7c8] sm:$0xf]
    %v8386 = vld [vmem:[%s9 + $0x7cc] sm:$0xf]
    %v8387 = vld [vmem:[%s9 + $0x7d0] sm:$0xf]
    %v8388 = vld [vmem:[%s9 + $0x7d4] sm:$0xf]
    %v8389 = vld [vmem:[%s9 + $0x7d8] sm:$0xf]
    %v8390 = vld [vmem:[%s9 + $0x7dc] sm:$0xf]
    %v8391 = vld [vmem:[%s9 + $0x7e0] sm:$0xf]
    %v8392 = vld [vmem:[%s9 + $0x7e4] sm:$0xf]
    %v8393 = vld [vmem:[%s9 + $0x7e8] sm:$0xf]
    %v8394 = vld [vmem:[%s9 + $0x7ec] sm:$0xf]
    %v8395 = vld [vmem:[%s9 + $0x7f0] sm:$0xf]
    %v8396 = vld [vmem:[%s9 + $0x7f4] sm:$0xf]
    %v8397 = vld [vmem:[%s9 + $0x7f8] sm:$0xf]
    %v8398 = vld [vmem:[%s9 + $0x7fc] sm:$0xf]
    %v8399 = vld [vmem:[%s10] sm:$0x1]
    %v8401 = vlaneseq
    %v8402 = vshrl.u32 %v8401, 7
    %v8403 = vsub.s32 0, %v8402
    %v8404 = vrot.slane %v8399, %v8403
    %v8918 = vunpack.c.l.b16 %v7887
    %v8919 = vunpack.c.l.b16 %v7888
    %v8920 = vunpack.c.l.b16 %v7889
    %v8921 = vunpack.c.l.b16 %v7890
    %v8922 = vunpack.c.l.b16 %v7891
    %v8923 = vunpack.c.l.b16 %v7892
    %v8924 = vunpack.c.l.b16 %v7893
    %v8925 = vunpack.c.l.b16 %v7894
    %v8926 = vunpack.c.l.b16 %v7895
    %v8927 = vunpack.c.l.b16 %v7896
    %v8928 = vunpack.c.l.b16 %v7897
    %v8929 = vunpack.c.l.b16 %v7898
    %v8930 = vunpack.c.l.b16 %v7899
    %v8931 = vunpack.c.l.b16 %v7900
    %v8932 = vunpack.c.l.b16 %v7901
    %v8933 = vunpack.c.l.b16 %v7902
    %v8934 = vunpack.c.l.b16 %v7903
    %v8935 = vunpack.c.l.b16 %v7904
    %v8936 = vunpack.c.l.b16 %v7905
    %v8937 = vunpack.c.l.b16 %v7906
    %v8938 = vunpack.c.l.b16 %v7907
    %v8939 = vunpack.c.l.b16 %v7908
    %v8940 = vunpack.c.l.b16 %v7909
    %v8941 = vunpack.c.l.b16 %v7910
    %v8942 = vunpack.c.l.b16 %v7911
    %v8943 = vunpack.c.l.b16 %v7912
    %v8944 = vunpack.c.l.b16 %v7913
    %v8945 = vunpack.c.l.b16 %v7914
    %v8946 = vunpack.c.l.b16 %v7915
    %v8947 = vunpack.c.l.b16 %v7916
    %v8948 = vunpack.c.l.b16 %v7917
    %v8949 = vunpack.c.l.b16 %v7918
    %v8950 = vunpack.c.l.b16 %v7919
    %v8951 = vunpack.c.l.b16 %v7920
    %v8952 = vunpack.c.l.b16 %v7921
    %v8953 = vunpack.c.l.b16 %v7922
    %v8954 = vunpack.c.l.b16 %v7923
    %v8955 = vunpack.c.l.b16 %v7924
    %v8956 = vunpack.c.l.b16 %v7925
    %v8957 = vunpack.c.l.b16 %v7926
    %v8958 = vunpack.c.l.b16 %v7927
    %v8959 = vunpack.c.l.b16 %v7928
    %v8960 = vunpack.c.l.b16 %v7929
    %v8961 = vunpack.c.l.b16 %v7930
    %v8962 = vunpack.c.l.b16 %v7931
    %v8963 = vunpack.c.l.b16 %v7932
    %v8964 = vunpack.c.l.b16 %v7933
    %v8965 = vunpack.c.l.b16 %v7934
    %v8966 = vunpack.c.l.b16 %v7935
    %v8967 = vunpack.c.l.b16 %v7936
    %v8968 = vunpack.c.l.b16 %v7937
    %v8969 = vunpack.c.l.b16 %v7938
    %v8970 = vunpack.c.l.b16 %v7939
    %v8971 = vunpack.c.l.b16 %v7940
    %v8972 = vunpack.c.l.b16 %v7941
    %v8973 = vunpack.c.l.b16 %v7942
    %v8974 = vunpack.c.l.b16 %v7943
    %v8975 = vunpack.c.l.b16 %v7944
    %v8976 = vunpack.c.l.b16 %v7945
    %v8977 = vunpack.c.l.b16 %v7946
    %v8978 = vunpack.c.l.b16 %v7947
    %v8979 = vunpack.c.l.b16 %v7948
    %v8980 = vunpack.c.l.b16 %v7949
    %v8981 = vunpack.c.l.b16 %v7950
    %v8982 = vunpack.c.l.b16 %v7951
    %v8983 = vunpack.c.l.b16 %v7952
    %v8984 = vunpack.c.l.b16 %v7953
    %v8985 = vunpack.c.l.b16 %v7954
    %v8986 = vunpack.c.l.b16 %v7955
    %v8987 = vunpack.c.l.b16 %v7956
    %v8988 = vunpack.c.l.b16 %v7957
    %v8989 = vunpack.c.l.b16 %v7958
    %v8990 = vunpack.c.l.b16 %v7959
    %v8991 = vunpack.c.l.b16 %v7960
    %v8992 = vunpack.c.l.b16 %v7961
    %v8993 = vunpack.c.l.b16 %v7962
    %v8994 = vunpack.c.l.b16 %v7963
    %v8995 = vunpack.c.l.b16 %v7964
    %v8996 = vunpack.c.l.b16 %v7965
    %v8997 = vunpack.c.l.b16 %v7966
    %v8998 = vunpack.c.l.b16 %v7967
    %v8999 = vunpack.c.l.b16 %v7968
    %v9000 = vunpack.c.l.b16 %v7969
    %v9001 = vunpack.c.l.b16 %v7970
    %v9002 = vunpack.c.l.b16 %v7971
    %v9003 = vunpack.c.l.b16 %v7972
    %v9004 = vunpack.c.l.b16 %v7973
    %v9005 = vunpack.c.l.b16 %v7974
    %v9006 = vunpack.c.l.b16 %v7975
    %v9007 = vunpack.c.l.b16 %v7976
    %v9008 = vunpack.c.l.b16 %v7977
    %v9009 = vunpack.c.l.b16 %v7978
    %v9010 = vunpack.c.l.b16 %v7979
    %v9011 = vunpack.c.l.b16 %v7980
    %v9012 = vunpack.c.l.b16 %v7981
    %v9013 = vunpack.c.l.b16 %v7982
    %v9014 = vunpack.c.l.b16 %v7983
    %v9015 = vunpack.c.l.b16 %v7984
    %v9016 = vunpack.c.l.b16 %v7985
    %v9017 = vunpack.c.l.b16 %v7986
    %v9018 = vunpack.c.l.b16 %v7987
    %v9019 = vunpack.c.l.b16 %v7988
    %v9020 = vunpack.c.l.b16 %v7989
    %v9021 = vunpack.c.l.b16 %v7990
    %v9022 = vunpack.c.l.b16 %v7991
    %v9023 = vunpack.c.l.b16 %v7992
    %v9024 = vunpack.c.l.b16 %v7993
    %v9025 = vunpack.c.l.b16 %v7994
    %v9026 = vunpack.c.l.b16 %v7995
    %v9027 = vunpack.c.l.b16 %v7996
    %v9028 = vunpack.c.l.b16 %v7997
    %v9029 = vunpack.c.l.b16 %v7998
    %v9030 = vunpack.c.l.b16 %v7999
    %v9031 = vunpack.c.l.b16 %v8000
    %v9032 = vunpack.c.l.b16 %v8001
    %v9033 = vunpack.c.l.b16 %v8002
    %v9034 = vunpack.c.l.b16 %v8003
    %v9035 = vunpack.c.l.b16 %v8004
    %v9036 = vunpack.c.l.b16 %v8005
    %v9037 = vunpack.c.l.b16 %v8006
    %v9038 = vunpack.c.l.b16 %v8007
    %v9039 = vunpack.c.l.b16 %v8008
    %v9040 = vunpack.c.l.b16 %v8009
    %v9041 = vunpack.c.l.b16 %v8010
    %v9042 = vunpack.c.l.b16 %v8011
    %v9043 = vunpack.c.l.b16 %v8012
    %v9044 = vunpack.c.l.b16 %v8013
    %v9045 = vunpack.c.l.b16 %v8014
    %v9046 = vunpack.c.l.b16 %v8015
    %v9047 = vunpack.c.l.b16 %v8016
    %v9048 = vunpack.c.l.b16 %v8017
    %v9049 = vunpack.c.l.b16 %v8018
    %v9050 = vunpack.c.l.b16 %v8019
    %v9051 = vunpack.c.l.b16 %v8020
    %v9052 = vunpack.c.l.b16 %v8021
    %v9053 = vunpack.c.l.b16 %v8022
    %v9054 = vunpack.c.l.b16 %v8023
    %v9055 = vunpack.c.l.b16 %v8024
    %v9056 = vunpack.c.l.b16 %v8025
    %v9057 = vunpack.c.l.b16 %v8026
    %v9058 = vunpack.c.l.b16 %v8027
    %v9059 = vunpack.c.l.b16 %v8028
    %v9060 = vunpack.c.l.b16 %v8029
    %v9061 = vunpack.c.l.b16 %v8030
    %v9062 = vunpack.c.l.b16 %v8031
    %v9063 = vunpack.c.l.b16 %v8032
    %v9064 = vunpack.c.l.b16 %v8033
    %v9065 = vunpack.c.l.b16 %v8034
    %v9066 = vunpack.c.l.b16 %v8035
    %v9067 = vunpack.c.l.b16 %v8036
    %v9068 = vunpack.c.l.b16 %v8037
    %v9069 = vunpack.c.l.b16 %v8038
    %v9070 = vunpack.c.l.b16 %v8039
    %v9071 = vunpack.c.l.b16 %v8040
    %v9072 = vunpack.c.l.b16 %v8041
    %v9073 = vunpack.c.l.b16 %v8042
    %v9074 = vunpack.c.l.b16 %v8043
    %v9075 = vunpack.c.l.b16 %v8044
    %v9076 = vunpack.c.l.b16 %v8045
    %v9077 = vunpack.c.l.b16 %v8046
    %v9078 = vunpack.c.l.b16 %v8047
    %v9079 = vunpack.c.l.b16 %v8048
    %v9080 = vunpack.c.l.b16 %v8049
    %v9081 = vunpack.c.l.b16 %v8050
    %v9082 = vunpack.c.l.b16 %v8051
    %v9083 = vunpack.c.l.b16 %v8052
    %v9084 = vunpack.c.l.b16 %v8053
    %v9085 = vunpack.c.l.b16 %v8054
    %v9086 = vunpack.c.l.b16 %v8055
    %v9087 = vunpack.c.l.b16 %v8056
    %v9088 = vunpack.c.l.b16 %v8057
    %v9089 = vunpack.c.l.b16 %v8058
    %v9090 = vunpack.c.l.b16 %v8059
    %v9091 = vunpack.c.l.b16 %v8060
    %v9092 = vunpack.c.l.b16 %v8061
    %v9093 = vunpack.c.l.b16 %v8062
    %v9094 = vunpack.c.l.b16 %v8063
    %v9095 = vunpack.c.l.b16 %v8064
    %v9096 = vunpack.c.l.b16 %v8065
    %v9097 = vunpack.c.l.b16 %v8066
    %v9098 = vunpack.c.l.b16 %v8067
    %v9099 = vunpack.c.l.b16 %v8068
    %v9100 = vunpack.c.l.b16 %v8069
    %v9101 = vunpack.c.l.b16 %v8070
    %v9102 = vunpack.c.l.b16 %v8071
    %v9103 = vunpack.c.l.b16 %v8072
    %v9104 = vunpack.c.l.b16 %v8073
    %v9105 = vunpack.c.l.b16 %v8074
    %v9106 = vunpack.c.l.b16 %v8075
    %v9107 = vunpack.c.l.b16 %v8076
    %v9108 = vunpack.c.l.b16 %v8077
    %v9109 = vunpack.c.l.b16 %v8078
    %v9110 = vunpack.c.l.b16 %v8079
    %v9111 = vunpack.c.l.b16 %v8080
    %v9112 = vunpack.c.l.b16 %v8081
    %v9113 = vunpack.c.l.b16 %v8082
    %v9114 = vunpack.c.l.b16 %v8083
    %v9115 = vunpack.c.l.b16 %v8084
    %v9116 = vunpack.c.l.b16 %v8085
    %v9117 = vunpack.c.l.b16 %v8086
    %v9118 = vunpack.c.l.b16 %v8087
    %v9119 = vunpack.c.l.b16 %v8088
    %v9120 = vunpack.c.l.b16 %v8089
    %v9121 = vunpack.c.l.b16 %v8090
    %v9122 = vunpack.c.l.b16 %v8091
    %v9123 = vunpack.c.l.b16 %v8092
    %v9124 = vunpack.c.l.b16 %v8093
    %v9125 = vunpack.c.l.b16 %v8094
    %v9126 = vunpack.c.l.b16 %v8095
    %v9127 = vunpack.c.l.b16 %v8096
    %v9128 = vunpack.c.l.b16 %v8097
    %v9129 = vunpack.c.l.b16 %v8098
    %v9130 = vunpack.c.l.b16 %v8099
    %v9131 = vunpack.c.l.b16 %v8100
    %v9132 = vunpack.c.l.b16 %v8101
    %v9133 = vunpack.c.l.b16 %v8102
    %v9134 = vunpack.c.l.b16 %v8103
    %v9135 = vunpack.c.l.b16 %v8104
    %v9136 = vunpack.c.l.b16 %v8105
    %v9137 = vunpack.c.l.b16 %v8106
    %v9138 = vunpack.c.l.b16 %v8107
    %v9139 = vunpack.c.l.b16 %v8108
    %v9140 = vunpack.c.l.b16 %v8109
    %v9141 = vunpack.c.l.b16 %v8110
    %v9142 = vunpack.c.l.b16 %v8111
    %v9143 = vunpack.c.l.b16 %v8112
    %v9144 = vunpack.c.l.b16 %v8113
    %v9145 = vunpack.c.l.b16 %v8114
    %v9146 = vunpack.c.l.b16 %v8115
    %v9147 = vunpack.c.l.b16 %v8116
    %v9148 = vunpack.c.l.b16 %v8117
    %v9149 = vunpack.c.l.b16 %v8118
    %v9150 = vunpack.c.l.b16 %v8119
    %v9151 = vunpack.c.l.b16 %v8120
    %v9152 = vunpack.c.l.b16 %v8121
    %v9153 = vunpack.c.l.b16 %v8122
    %v9154 = vunpack.c.l.b16 %v8123
    %v9155 = vunpack.c.l.b16 %v8124
    %v9156 = vunpack.c.l.b16 %v8125
    %v9157 = vunpack.c.l.b16 %v8126
    %v9158 = vunpack.c.l.b16 %v8127
    %v9159 = vunpack.c.l.b16 %v8128
    %v9160 = vunpack.c.l.b16 %v8129
    %v9161 = vunpack.c.l.b16 %v8130
    %v9162 = vunpack.c.l.b16 %v8131
    %v9163 = vunpack.c.l.b16 %v8132
    %v9164 = vunpack.c.l.b16 %v8133
    %v9165 = vunpack.c.l.b16 %v8134
    %v9166 = vunpack.c.l.b16 %v8135
    %v9167 = vunpack.c.l.b16 %v8136
    %v9168 = vunpack.c.l.b16 %v8137
    %v9169 = vunpack.c.l.b16 %v8138
    %v9170 = vunpack.c.l.b16 %v8139
    %v9171 = vunpack.c.l.b16 %v8140
    %v9172 = vunpack.c.l.b16 %v8141
    %v9173 = vunpack.c.l.b16 %v8142
    %v9174 = vunpack.c.l.b16 %v8143
    %v9175 = vunpack.c.l.b16 %v8144
    %v9176 = vunpack.c.l.b16 %v8145
    %v9177 = vunpack.c.l.b16 %v8146
    %v9178 = vunpack.c.l.b16 %v8147
    %v9179 = vunpack.c.l.b16 %v8148
    %v9180 = vunpack.c.l.b16 %v8149
    %v9181 = vunpack.c.l.b16 %v8150
    %v9182 = vunpack.c.l.b16 %v8151
    %v9183 = vunpack.c.l.b16 %v8152
    %v9184 = vunpack.c.l.b16 %v8153
    %v9185 = vunpack.c.l.b16 %v8154
    %v9186 = vunpack.c.l.b16 %v8155
    %v9187 = vunpack.c.l.b16 %v8156
    %v9188 = vunpack.c.l.b16 %v8157
    %v9189 = vunpack.c.l.b16 %v8158
    %v9190 = vunpack.c.l.b16 %v8159
    %v9191 = vunpack.c.l.b16 %v8160
    %v9192 = vunpack.c.l.b16 %v8161
    %v9193 = vunpack.c.l.b16 %v8162
    %v9194 = vunpack.c.l.b16 %v8163
    %v9195 = vunpack.c.l.b16 %v8164
    %v9196 = vunpack.c.l.b16 %v8165
    %v9197 = vunpack.c.l.b16 %v8166
    %v9198 = vunpack.c.l.b16 %v8167
    %v9199 = vunpack.c.l.b16 %v8168
    %v9200 = vunpack.c.l.b16 %v8169
    %v9201 = vunpack.c.l.b16 %v8170
    %v9202 = vunpack.c.l.b16 %v8171
    %v9203 = vunpack.c.l.b16 %v8172
    %v9204 = vunpack.c.l.b16 %v8173
    %v9205 = vunpack.c.l.b16 %v8174
    %v9206 = vunpack.c.l.b16 %v8175
    %v9207 = vunpack.c.l.b16 %v8176
    %v9208 = vunpack.c.l.b16 %v8177
    %v9209 = vunpack.c.l.b16 %v8178
    %v9210 = vunpack.c.l.b16 %v8179
    %v9211 = vunpack.c.l.b16 %v8180
    %v9212 = vunpack.c.l.b16 %v8181
    %v9213 = vunpack.c.l.b16 %v8182
    %v9214 = vunpack.c.l.b16 %v8183
    %v9215 = vunpack.c.l.b16 %v8184
    %v9216 = vunpack.c.l.b16 %v8185
    %v9217 = vunpack.c.l.b16 %v8186
    %v9218 = vunpack.c.l.b16 %v8187
    %v9219 = vunpack.c.l.b16 %v8188
    %v9220 = vunpack.c.l.b16 %v8189
    %v9221 = vunpack.c.l.b16 %v8190
    %v9222 = vunpack.c.l.b16 %v8191
    %v9223 = vunpack.c.l.b16 %v8192
    %v9224 = vunpack.c.l.b16 %v8193
    %v9225 = vunpack.c.l.b16 %v8194
    %v9226 = vunpack.c.l.b16 %v8195
    %v9227 = vunpack.c.l.b16 %v8196
    %v9228 = vunpack.c.l.b16 %v8197
    %v9229 = vunpack.c.l.b16 %v8198
    %v9230 = vunpack.c.l.b16 %v8199
    %v9231 = vunpack.c.l.b16 %v8200
    %v9232 = vunpack.c.l.b16 %v8201
    %v9233 = vunpack.c.l.b16 %v8202
    %v9234 = vunpack.c.l.b16 %v8203
    %v9235 = vunpack.c.l.b16 %v8204
    %v9236 = vunpack.c.l.b16 %v8205
    %v9237 = vunpack.c.l.b16 %v8206
    %v9238 = vunpack.c.l.b16 %v8207
    %v9239 = vunpack.c.l.b16 %v8208
    %v9240 = vunpack.c.l.b16 %v8209
    %v9241 = vunpack.c.l.b16 %v8210
    %v9242 = vunpack.c.l.b16 %v8211
    %v9243 = vunpack.c.l.b16 %v8212
    %v9244 = vunpack.c.l.b16 %v8213
    %v9245 = vunpack.c.l.b16 %v8214
    %v9246 = vunpack.c.l.b16 %v8215
    %v9247 = vunpack.c.l.b16 %v8216
    %v9248 = vunpack.c.l.b16 %v8217
    %v9249 = vunpack.c.l.b16 %v8218
    %v9250 = vunpack.c.l.b16 %v8219
    %v9251 = vunpack.c.l.b16 %v8220
    %v9252 = vunpack.c.l.b16 %v8221
    %v9253 = vunpack.c.l.b16 %v8222
    %v9254 = vunpack.c.l.b16 %v8223
    %v9255 = vunpack.c.l.b16 %v8224
    %v9256 = vunpack.c.l.b16 %v8225
    %v9257 = vunpack.c.l.b16 %v8226
    %v9258 = vunpack.c.l.b16 %v8227
    %v9259 = vunpack.c.l.b16 %v8228
    %v9260 = vunpack.c.l.b16 %v8229
    %v9261 = vunpack.c.l.b16 %v8230
    %v9262 = vunpack.c.l.b16 %v8231
    %v9263 = vunpack.c.l.b16 %v8232
    %v9264 = vunpack.c.l.b16 %v8233
    %v9265 = vunpack.c.l.b16 %v8234
    %v9266 = vunpack.c.l.b16 %v8235
    %v9267 = vunpack.c.l.b16 %v8236
    %v9268 = vunpack.c.l.b16 %v8237
    %v9269 = vunpack.c.l.b16 %v8238
    %v9270 = vunpack.c.l.b16 %v8239
    %v9271 = vunpack.c.l.b16 %v8240
    %v9272 = vunpack.c.l.b16 %v8241
    %v9273 = vunpack.c.l.b16 %v8242
    %v9274 = vunpack.c.l.b16 %v8243
    %v9275 = vunpack.c.l.b16 %v8244
    %v9276 = vunpack.c.l.b16 %v8245
    %v9277 = vunpack.c.l.b16 %v8246
    %v9278 = vunpack.c.l.b16 %v8247
    %v9279 = vunpack.c.l.b16 %v8248
    %v9280 = vunpack.c.l.b16 %v8249
    %v9281 = vunpack.c.l.b16 %v8250
    %v9282 = vunpack.c.l.b16 %v8251
    %v9283 = vunpack.c.l.b16 %v8252
    %v9284 = vunpack.c.l.b16 %v8253
    %v9285 = vunpack.c.l.b16 %v8254
    %v9286 = vunpack.c.l.b16 %v8255
    %v9287 = vunpack.c.l.b16 %v8256
    %v9288 = vunpack.c.l.b16 %v8257
    %v9289 = vunpack.c.l.b16 %v8258
    %v9290 = vunpack.c.l.b16 %v8259
    %v9291 = vunpack.c.l.b16 %v8260
    %v9292 = vunpack.c.l.b16 %v8261
    %v9293 = vunpack.c.l.b16 %v8262
    %v9294 = vunpack.c.l.b16 %v8263
    %v9295 = vunpack.c.l.b16 %v8264
    %v9296 = vunpack.c.l.b16 %v8265
    %v9297 = vunpack.c.l.b16 %v8266
    %v9298 = vunpack.c.l.b16 %v8267
    %v9299 = vunpack.c.l.b16 %v8268
    %v9300 = vunpack.c.l.b16 %v8269
    %v9301 = vunpack.c.l.b16 %v8270
    %v9302 = vunpack.c.l.b16 %v8271
    %v9303 = vunpack.c.l.b16 %v8272
    %v9304 = vunpack.c.l.b16 %v8273
    %v9305 = vunpack.c.l.b16 %v8274
    %v9306 = vunpack.c.l.b16 %v8275
    %v9307 = vunpack.c.l.b16 %v8276
    %v9308 = vunpack.c.l.b16 %v8277
    %v9309 = vunpack.c.l.b16 %v8278
    %v9310 = vunpack.c.l.b16 %v8279
    %v9311 = vunpack.c.l.b16 %v8280
    %v9312 = vunpack.c.l.b16 %v8281
    %v9313 = vunpack.c.l.b16 %v8282
    %v9314 = vunpack.c.l.b16 %v8283
    %v9315 = vunpack.c.l.b16 %v8284
    %v9316 = vunpack.c.l.b16 %v8285
    %v9317 = vunpack.c.l.b16 %v8286
    %v9318 = vunpack.c.l.b16 %v8287
    %v9319 = vunpack.c.l.b16 %v8288
    %v9320 = vunpack.c.l.b16 %v8289
    %v9321 = vunpack.c.l.b16 %v8290
    %v9322 = vunpack.c.l.b16 %v8291
    %v9323 = vunpack.c.l.b16 %v8292
    %v9324 = vunpack.c.l.b16 %v8293
    %v9325 = vunpack.c.l.b16 %v8294
    %v9326 = vunpack.c.l.b16 %v8295
    %v9327 = vunpack.c.l.b16 %v8296
    %v9328 = vunpack.c.l.b16 %v8297
    %v9329 = vunpack.c.l.b16 %v8298
    %v9330 = vunpack.c.l.b16 %v8299
    %v9331 = vunpack.c.l.b16 %v8300
    %v9332 = vunpack.c.l.b16 %v8301
    %v9333 = vunpack.c.l.b16 %v8302
    %v9334 = vunpack.c.l.b16 %v8303
    %v9335 = vunpack.c.l.b16 %v8304
    %v9336 = vunpack.c.l.b16 %v8305
    %v9337 = vunpack.c.l.b16 %v8306
    %v9338 = vunpack.c.l.b16 %v8307
    %v9339 = vunpack.c.l.b16 %v8308
    %v9340 = vunpack.c.l.b16 %v8309
    %v9341 = vunpack.c.l.b16 %v8310
    %v9342 = vunpack.c.l.b16 %v8311
    %v9343 = vunpack.c.l.b16 %v8312
    %v9344 = vunpack.c.l.b16 %v8313
    %v9345 = vunpack.c.l.b16 %v8314
    %v9346 = vunpack.c.l.b16 %v8315
    %v9347 = vunpack.c.l.b16 %v8316
    %v9348 = vunpack.c.l.b16 %v8317
    %v9349 = vunpack.c.l.b16 %v8318
    %v9350 = vunpack.c.l.b16 %v8319
    %v9351 = vunpack.c.l.b16 %v8320
    %v9352 = vunpack.c.l.b16 %v8321
    %v9353 = vunpack.c.l.b16 %v8322
    %v9354 = vunpack.c.l.b16 %v8323
    %v9355 = vunpack.c.l.b16 %v8324
    %v9356 = vunpack.c.l.b16 %v8325
    %v9357 = vunpack.c.l.b16 %v8326
    %v9358 = vunpack.c.l.b16 %v8327
    %v9359 = vunpack.c.l.b16 %v8328
    %v9360 = vunpack.c.l.b16 %v8329
    %v9361 = vunpack.c.l.b16 %v8330
    %v9362 = vunpack.c.l.b16 %v8331
    %v9363 = vunpack.c.l.b16 %v8332
    %v9364 = vunpack.c.l.b16 %v8333
    %v9365 = vunpack.c.l.b16 %v8334
    %v9366 = vunpack.c.l.b16 %v8335
    %v9367 = vunpack.c.l.b16 %v8336
    %v9368 = vunpack.c.l.b16 %v8337
    %v9369 = vunpack.c.l.b16 %v8338
    %v9370 = vunpack.c.l.b16 %v8339
    %v9371 = vunpack.c.l.b16 %v8340
    %v9372 = vunpack.c.l.b16 %v8341
    %v9373 = vunpack.c.l.b16 %v8342
    %v9374 = vunpack.c.l.b16 %v8343
    %v9375 = vunpack.c.l.b16 %v8344
    %v9376 = vunpack.c.l.b16 %v8345
    %v9377 = vunpack.c.l.b16 %v8346
    %v9378 = vunpack.c.l.b16 %v8347
    %v9379 = vunpack.c.l.b16 %v8348
    %v9380 = vunpack.c.l.b16 %v8349
    %v9381 = vunpack.c.l.b16 %v8350
    %v9382 = vunpack.c.l.b16 %v8351
    %v9383 = vunpack.c.l.b16 %v8352
    %v9384 = vunpack.c.l.b16 %v8353
    %v9385 = vunpack.c.l.b16 %v8354
    %v9386 = vunpack.c.l.b16 %v8355
    %v9387 = vunpack.c.l.b16 %v8356
    %v9388 = vunpack.c.l.b16 %v8357
    %v9389 = vunpack.c.l.b16 %v8358
    %v9390 = vunpack.c.l.b16 %v8359
    %v9391 = vunpack.c.l.b16 %v8360
    %v9392 = vunpack.c.l.b16 %v8361
    %v9393 = vunpack.c.l.b16 %v8362
    %v9394 = vunpack.c.l.b16 %v8363
    %v9395 = vunpack.c.l.b16 %v8364
    %v9396 = vunpack.c.l.b16 %v8365
    %v9397 = vunpack.c.l.b16 %v8366
    %v9398 = vunpack.c.l.b16 %v8367
    %v9399 = vunpack.c.l.b16 %v8368
    %v9400 = vunpack.c.l.b16 %v8369
    %v9401 = vunpack.c.l.b16 %v8370
    %v9402 = vunpack.c.l.b16 %v8371
    %v9403 = vunpack.c.l.b16 %v8372
    %v9404 = vunpack.c.l.b16 %v8373
    %v9405 = vunpack.c.l.b16 %v8374
    %v9406 = vunpack.c.l.b16 %v8375
    %v9407 = vunpack.c.l.b16 %v8376
    %v9408 = vunpack.c.l.b16 %v8377
    %v9409 = vunpack.c.l.b16 %v8378
    %v9410 = vunpack.c.l.b16 %v8379
    %v9411 = vunpack.c.l.b16 %v8380
    %v9412 = vunpack.c.l.b16 %v8381
    %v9413 = vunpack.c.l.b16 %v8382
    %v9414 = vunpack.c.l.b16 %v8383
    %v9415 = vunpack.c.l.b16 %v8384
    %v9416 = vunpack.c.l.b16 %v8385
    %v9417 = vunpack.c.l.b16 %v8386
    %v9418 = vunpack.c.l.b16 %v8387
    %v9419 = vunpack.c.l.b16 %v8388
    %v9420 = vunpack.c.l.b16 %v8389
    %v9421 = vunpack.c.l.b16 %v8390
    %v9422 = vunpack.c.l.b16 %v8391
    %v9423 = vunpack.c.l.b16 %v8392
    %v9424 = vunpack.c.l.b16 %v8393
    %v9425 = vunpack.c.l.b16 %v8394
    %v9426 = vunpack.c.l.b16 %v8395
    %v9427 = vunpack.c.l.b16 %v8396
    %v9428 = vunpack.c.l.b16 %v8397
    %v9429 = vunpack.c.l.b16 %v8398
    %v9430 = vpack.c.b16 %v8919, %v8918
    %v9431 = vpack.c.b16 %v8921, %v8920
    %v9432 = vpack.c.b16 %v8923, %v8922
    %v9433 = vpack.c.b16 %v8925, %v8924
    %v9434 = vpack.c.b16 %v8927, %v8926
    %v9435 = vpack.c.b16 %v8929, %v8928
    %v9436 = vpack.c.b16 %v8931, %v8930
    %v9437 = vpack.c.b16 %v8933, %v8932
    %v9438 = vpack.c.b16 %v8935, %v8934
    %v9439 = vpack.c.b16 %v8937, %v8936
    %v9440 = vpack.c.b16 %v8939, %v8938
    %v9441 = vpack.c.b16 %v8941, %v8940
    %v9442 = vpack.c.b16 %v8943, %v8942
    %v9443 = vpack.c.b16 %v8945, %v8944
    %v9444 = vpack.c.b16 %v8947, %v8946
    %v9445 = vpack.c.b16 %v8949, %v8948
    %v9446 = vpack.c.b16 %v8951, %v8950
    %v9447 = vpack.c.b16 %v8953, %v8952
    %v9448 = vpack.c.b16 %v8955, %v8954
    %v9449 = vpack.c.b16 %v8957, %v8956
    %v9450 = vpack.c.b16 %v8959, %v8958
    %v9451 = vpack.c.b16 %v8961, %v8960
    %v9452 = vpack.c.b16 %v8963, %v8962
    %v9453 = vpack.c.b16 %v8965, %v8964
    %v9454 = vpack.c.b16 %v8967, %v8966
    %v9455 = vpack.c.b16 %v8969, %v8968
    %v9456 = vpack.c.b16 %v8971, %v8970
    %v9457 = vpack.c.b16 %v8973, %v8972
    %v9458 = vpack.c.b16 %v8975, %v8974
    %v9459 = vpack.c.b16 %v8977, %v8976
    %v9460 = vpack.c.b16 %v8979, %v8978
    %v9461 = vpack.c.b16 %v8981, %v8980
    %v9462 = vpack.c.b16 %v8983, %v8982
    %v9463 = vpack.c.b16 %v8985, %v8984
    %v9464 = vpack.c.b16 %v8987, %v8986
    %v9465 = vpack.c.b16 %v8989, %v8988
    %v9466 = vpack.c.b16 %v8991, %v8990
    %v9467 = vpack.c.b16 %v8993, %v8992
    %v9468 = vpack.c.b16 %v8995, %v8994
    %v9469 = vpack.c.b16 %v8997, %v8996
    %v9470 = vpack.c.b16 %v8999, %v8998
    %v9471 = vpack.c.b16 %v9001, %v9000
    %v9472 = vpack.c.b16 %v9003, %v9002
    %v9473 = vpack.c.b16 %v9005, %v9004
    %v9474 = vpack.c.b16 %v9007, %v9006
    %v9475 = vpack.c.b16 %v9009, %v9008
    %v9476 = vpack.c.b16 %v9011, %v9010
    %v9477 = vpack.c.b16 %v9013, %v9012
    %v9478 = vpack.c.b16 %v9015, %v9014
    %v9479 = vpack.c.b16 %v9017, %v9016
    %v9480 = vpack.c.b16 %v9019, %v9018
    %v9481 = vpack.c.b16 %v9021, %v9020
    %v9482 = vpack.c.b16 %v9023, %v9022
    %v9483 = vpack.c.b16 %v9025, %v9024
    %v9484 = vpack.c.b16 %v9027, %v9026
    %v9485 = vpack.c.b16 %v9029, %v9028
    %v9486 = vpack.c.b16 %v9031, %v9030
    %v9487 = vpack.c.b16 %v9033, %v9032
    %v9488 = vpack.c.b16 %v9035, %v9034
    %v9489 = vpack.c.b16 %v9037, %v9036
    %v9490 = vpack.c.b16 %v9039, %v9038
    %v9491 = vpack.c.b16 %v9041, %v9040
    %v9492 = vpack.c.b16 %v9043, %v9042
    %v9493 = vpack.c.b16 %v9045, %v9044
    %v9494 = vpack.c.b16 %v9047, %v9046
    %v9495 = vpack.c.b16 %v9049, %v9048
    %v9496 = vpack.c.b16 %v9051, %v9050
    %v9497 = vpack.c.b16 %v9053, %v9052
    %v9498 = vpack.c.b16 %v9055, %v9054
    %v9499 = vpack.c.b16 %v9057, %v9056
    %v9500 = vpack.c.b16 %v9059, %v9058
    %v9501 = vpack.c.b16 %v9061, %v9060
    %v9502 = vpack.c.b16 %v9063, %v9062
    %v9503 = vpack.c.b16 %v9065, %v9064
    %v9504 = vpack.c.b16 %v9067, %v9066
    %v9505 = vpack.c.b16 %v9069, %v9068
    %v9506 = vpack.c.b16 %v9071, %v9070
    %v9507 = vpack.c.b16 %v9073, %v9072
    %v9508 = vpack.c.b16 %v9075, %v9074
    %v9509 = vpack.c.b16 %v9077, %v9076
    %v9510 = vpack.c.b16 %v9079, %v9078
    %v9511 = vpack.c.b16 %v9081, %v9080
    %v9512 = vpack.c.b16 %v9083, %v9082
    %v9513 = vpack.c.b16 %v9085, %v9084
    %v9514 = vpack.c.b16 %v9087, %v9086
    %v9515 = vpack.c.b16 %v9089, %v9088
    %v9516 = vpack.c.b16 %v9091, %v9090
    %v9517 = vpack.c.b16 %v9093, %v9092
    %v9518 = vpack.c.b16 %v9095, %v9094
    %v9519 = vpack.c.b16 %v9097, %v9096
    %v9520 = vpack.c.b16 %v9099, %v9098
    %v9521 = vpack.c.b16 %v9101, %v9100
    %v9522 = vpack.c.b16 %v9103, %v9102
    %v9523 = vpack.c.b16 %v9105, %v9104
    %v9524 = vpack.c.b16 %v9107, %v9106
    %v9525 = vpack.c.b16 %v9109, %v9108
    %v9526 = vpack.c.b16 %v9111, %v9110
    %v9527 = vpack.c.b16 %v9113, %v9112
    %v9528 = vpack.c.b16 %v9115, %v9114
    %v9529 = vpack.c.b16 %v9117, %v9116
    %v9530 = vpack.c.b16 %v9119, %v9118
    %v9531 = vpack.c.b16 %v9121, %v9120
    %v9532 = vpack.c.b16 %v9123, %v9122
    %v9533 = vpack.c.b16 %v9125, %v9124
    %v9534 = vpack.c.b16 %v9127, %v9126
    %v9535 = vpack.c.b16 %v9129, %v9128
    %v9536 = vpack.c.b16 %v9131, %v9130
    %v9537 = vpack.c.b16 %v9133, %v9132
    %v9538 = vpack.c.b16 %v9135, %v9134
    %v9539 = vpack.c.b16 %v9137, %v9136
    %v9540 = vpack.c.b16 %v9139, %v9138
    %v9541 = vpack.c.b16 %v9141, %v9140
    %v9542 = vpack.c.b16 %v9143, %v9142
    %v9543 = vpack.c.b16 %v9145, %v9144
    %v9544 = vpack.c.b16 %v9147, %v9146
    %v9545 = vpack.c.b16 %v9149, %v9148
    %v9546 = vpack.c.b16 %v9151, %v9150
    %v9547 = vpack.c.b16 %v9153, %v9152
    %v9548 = vpack.c.b16 %v9155, %v9154
    %v9549 = vpack.c.b16 %v9157, %v9156
    %v9550 = vpack.c.b16 %v9159, %v9158
    %v9551 = vpack.c.b16 %v9161, %v9160
    %v9552 = vpack.c.b16 %v9163, %v9162
    %v9553 = vpack.c.b16 %v9165, %v9164
    %v9554 = vpack.c.b16 %v9167, %v9166
    %v9555 = vpack.c.b16 %v9169, %v9168
    %v9556 = vpack.c.b16 %v9171, %v9170
    %v9557 = vpack.c.b16 %v9173, %v9172
    %v9558 = vpack.c.b16 %v9175, %v9174
    %v9559 = vpack.c.b16 %v9177, %v9176
    %v9560 = vpack.c.b16 %v9179, %v9178
    %v9561 = vpack.c.b16 %v9181, %v9180
    %v9562 = vpack.c.b16 %v9183, %v9182
    %v9563 = vpack.c.b16 %v9185, %v9184
    %v9564 = vpack.c.b16 %v9187, %v9186
    %v9565 = vpack.c.b16 %v9189, %v9188
    %v9566 = vpack.c.b16 %v9191, %v9190
    %v9567 = vpack.c.b16 %v9193, %v9192
    %v9568 = vpack.c.b16 %v9195, %v9194
    %v9569 = vpack.c.b16 %v9197, %v9196
    %v9570 = vpack.c.b16 %v9199, %v9198
    %v9571 = vpack.c.b16 %v9201, %v9200
    %v9572 = vpack.c.b16 %v9203, %v9202
    %v9573 = vpack.c.b16 %v9205, %v9204
    %v9574 = vpack.c.b16 %v9207, %v9206
    %v9575 = vpack.c.b16 %v9209, %v9208
    %v9576 = vpack.c.b16 %v9211, %v9210
    %v9577 = vpack.c.b16 %v9213, %v9212
    %v9578 = vpack.c.b16 %v9215, %v9214
    %v9579 = vpack.c.b16 %v9217, %v9216
    %v9580 = vpack.c.b16 %v9219, %v9218
    %v9581 = vpack.c.b16 %v9221, %v9220
    %v9582 = vpack.c.b16 %v9223, %v9222
    %v9583 = vpack.c.b16 %v9225, %v9224
    %v9584 = vpack.c.b16 %v9227, %v9226
    %v9585 = vpack.c.b16 %v9229, %v9228
    %v9586 = vpack.c.b16 %v9231, %v9230
    %v9587 = vpack.c.b16 %v9233, %v9232
    %v9588 = vpack.c.b16 %v9235, %v9234
    %v9589 = vpack.c.b16 %v9237, %v9236
    %v9590 = vpack.c.b16 %v9239, %v9238
    %v9591 = vpack.c.b16 %v9241, %v9240
    %v9592 = vpack.c.b16 %v9243, %v9242
    %v9593 = vpack.c.b16 %v9245, %v9244
    %v9594 = vpack.c.b16 %v9247, %v9246
    %v9595 = vpack.c.b16 %v9249, %v9248
    %v9596 = vpack.c.b16 %v9251, %v9250
    %v9597 = vpack.c.b16 %v9253, %v9252
    %v9598 = vpack.c.b16 %v9255, %v9254
    %v9599 = vpack.c.b16 %v9257, %v9256
    %v9600 = vpack.c.b16 %v9259, %v9258
    %v9601 = vpack.c.b16 %v9261, %v9260
    %v9602 = vpack.c.b16 %v9263, %v9262
    %v9603 = vpack.c.b16 %v9265, %v9264
    %v9604 = vpack.c.b16 %v9267, %v9266
    %v9605 = vpack.c.b16 %v9269, %v9268
    %v9606 = vpack.c.b16 %v9271, %v9270
    %v9607 = vpack.c.b16 %v9273, %v9272
    %v9608 = vpack.c.b16 %v9275, %v9274
    %v9609 = vpack.c.b16 %v9277, %v9276
    %v9610 = vpack.c.b16 %v9279, %v9278
    %v9611 = vpack.c.b16 %v9281, %v9280
    %v9612 = vpack.c.b16 %v9283, %v9282
    %v9613 = vpack.c.b16 %v9285, %v9284
    %v9614 = vpack.c.b16 %v9287, %v9286
    %v9615 = vpack.c.b16 %v9289, %v9288
    %v9616 = vpack.c.b16 %v9291, %v9290
    %v9617 = vpack.c.b16 %v9293, %v9292
    %v9618 = vpack.c.b16 %v9295, %v9294
    %v9619 = vpack.c.b16 %v9297, %v9296
    %v9620 = vpack.c.b16 %v9299, %v9298
    %v9621 = vpack.c.b16 %v9301, %v9300
    %v9622 = vpack.c.b16 %v9303, %v9302
    %v9623 = vpack.c.b16 %v9305, %v9304
    %v9624 = vpack.c.b16 %v9307, %v9306
    %v9625 = vpack.c.b16 %v9309, %v9308
    %v9626 = vpack.c.b16 %v9311, %v9310
    %v9627 = vpack.c.b16 %v9313, %v9312
    %v9628 = vpack.c.b16 %v9315, %v9314
    %v9629 = vpack.c.b16 %v9317, %v9316
    %v9630 = vpack.c.b16 %v9319, %v9318
    %v9631 = vpack.c.b16 %v9321, %v9320
    %v9632 = vpack.c.b16 %v9323, %v9322
    %v9633 = vpack.c.b16 %v9325, %v9324
    %v9634 = vpack.c.b16 %v9327, %v9326
    %v9635 = vpack.c.b16 %v9329, %v9328
    %v9636 = vpack.c.b16 %v9331, %v9330
    %v9637 = vpack.c.b16 %v9333, %v9332
    %v9638 = vpack.c.b16 %v9335, %v9334
    %v9639 = vpack.c.b16 %v9337, %v9336
    %v9640 = vpack.c.b16 %v9339, %v9338
    %v9641 = vpack.c.b16 %v9341, %v9340
    %v9642 = vpack.c.b16 %v9343, %v9342
    %v9643 = vpack.c.b16 %v9345, %v9344
    %v9644 = vpack.c.b16 %v9347, %v9346
    %v9645 = vpack.c.b16 %v9349, %v9348
    %v9646 = vpack.c.b16 %v9351, %v9350
    %v9647 = vpack.c.b16 %v9353, %v9352
    %v9648 = vpack.c.b16 %v9355, %v9354
    %v9649 = vpack.c.b16 %v9357, %v9356
    %v9650 = vpack.c.b16 %v9359, %v9358
    %v9651 = vpack.c.b16 %v9361, %v9360
    %v9652 = vpack.c.b16 %v9363, %v9362
    %v9653 = vpack.c.b16 %v9365, %v9364
    %v9654 = vpack.c.b16 %v9367, %v9366
    %v9655 = vpack.c.b16 %v9369, %v9368
    %v9656 = vpack.c.b16 %v9371, %v9370
    %v9657 = vpack.c.b16 %v9373, %v9372
    %v9658 = vpack.c.b16 %v9375, %v9374
    %v9659 = vpack.c.b16 %v9377, %v9376
    %v9660 = vpack.c.b16 %v9379, %v9378
    %v9661 = vpack.c.b16 %v9381, %v9380
    %v9662 = vpack.c.b16 %v9383, %v9382
    %v9663 = vpack.c.b16 %v9385, %v9384
    %v9664 = vpack.c.b16 %v9387, %v9386
    %v9665 = vpack.c.b16 %v9389, %v9388
    %v9666 = vpack.c.b16 %v9391, %v9390
    %v9667 = vpack.c.b16 %v9393, %v9392
    %v9668 = vpack.c.b16 %v9395, %v9394
    %v9669 = vpack.c.b16 %v9397, %v9396
    %v9670 = vpack.c.b16 %v9399, %v9398
    %v9671 = vpack.c.b16 %v9401, %v9400
    %v9672 = vpack.c.b16 %v9403, %v9402
    %v9673 = vpack.c.b16 %v9405, %v9404
    %v9674 = vpack.c.b16 %v9407, %v9406
    %v9675 = vpack.c.b16 %v9409, %v9408
    %v9676 = vpack.c.b16 %v9411, %v9410
    %v9677 = vpack.c.b16 %v9413, %v9412
    %v9678 = vpack.c.b16 %v9415, %v9414
    %v9679 = vpack.c.b16 %v9417, %v9416
    %v9680 = vpack.c.b16 %v9419, %v9418
    %v9681 = vpack.c.b16 %v9421, %v9420
    %v9682 = vpack.c.b16 %v9423, %v9422
    %v9683 = vpack.c.b16 %v9425, %v9424
    %v9684 = vpack.c.b16 %v9427, %v9426
    %v9685 = vpack.c.b16 %v9429, %v9428
    %9942 = vmatprep.subr.bf16.mxu0 0
    %9943 = vmatpush1.bf16.msra.mxu0 %v9430
    %9944 = vmatprep.subr.bf16.mxu0 0
    %9945 = vmatpush1.bf16.msra.mxu0 %v9431
    %9946 = vmatprep.subr.bf16.mxu0 0
    %9947 = vmatpush1.bf16.msra.mxu0 %v9432
    %9948 = vmatprep.subr.bf16.mxu0 0
    %9949 = vmatpush1.bf16.msra.mxu0 %v9433
    %9950 = vmatprep.subr.bf16.mxu0 0
    %9951 = vmatpush1.bf16.msra.mxu0 %v9434
    %9952 = vmatprep.subr.bf16.mxu0 0
    %9953 = vmatpush1.bf16.msra.mxu0 %v9435
    %9954 = vmatprep.subr.bf16.mxu0 0
    %9955 = vmatpush1.bf16.msra.mxu0 %v9436
    %9956 = vmatprep.subr.bf16.mxu0 0
    %9957 = vmatpush1.bf16.msra.mxu0 %v9437
    %9958 = vmatprep.subr.bf16.mxu0 0
    %9959 = vmatpush1.bf16.msra.mxu0 %v9438
    %9960 = vmatprep.subr.bf16.mxu0 0
    %9961 = vmatpush1.bf16.msra.mxu0 %v9439
    %9962 = vmatprep.subr.bf16.mxu0 0
    %9963 = vmatpush1.bf16.msra.mxu0 %v9440
    %9964 = vmatprep.subr.bf16.mxu0 0
    %9965 = vmatpush1.bf16.msra.mxu0 %v9441
    %9966 = vmatprep.subr.bf16.mxu0 0
    %9967 = vmatpush1.bf16.msra.mxu0 %v9442
    %9968 = vmatprep.subr.bf16.mxu0 0
    %9969 = vmatpush1.bf16.msra.mxu0 %v9443
    %9970 = vmatprep.subr.bf16.mxu0 0
    %9971 = vmatpush1.bf16.msra.mxu0 %v9444
    %9972 = vmatprep.subr.bf16.mxu0 0
    %9973 = vmatpush1.bf16.msra.mxu0 %v9445
    %9974 = vmatprep.mubr.bf16.mxu0 %v7856
    %9975 = vmatmul.mubr.bf16.gmra.mrb[0].mxu0 %v7855
    %v9976 = vpop.f32.mrb[0].mxu0
    %v9977 = vadd.f32 %v8404, %v9976
    %v9978 = vpop.f32.mrb[0].mxu0
    %v9979 = vpop.f32.mrb[0].mxu0
    %v9980 = vpop.f32.mrb[0].mxu0
    %9981 = vdwg.mxu0
    %9982 = vmatprep.subr.bf16.mxu0 0
    %9983 = vmatpush1.bf16.msra.mxu0 %v9446
    %9984 = vmatprep.subr.bf16.mxu0 0
    %9985 = vmatpush1.bf16.msra.mxu0 %v9447
    %9986 = vmatprep.subr.bf16.mxu0 0
    %9987 = vmatpush1.bf16.msra.mxu0 %v9448
    %9988 = vmatprep.subr.bf16.mxu0 0
    %9989 = vmatpush1.bf16.msra.mxu0 %v9449
    %9990 = vmatprep.subr.bf16.mxu0 0
    %9991 = vmatpush1.bf16.msra.mxu0 %v9450
    %9992 = vmatprep.subr.bf16.mxu0 0
    %9993 = vmatpush1.bf16.msra.mxu0 %v9451
    %9994 = vmatprep.subr.bf16.mxu0 0
    %9995 = vmatpush1.bf16.msra.mxu0 %v9452
    %9996 = vmatprep.subr.bf16.mxu0 0
    %9997 = vmatpush1.bf16.msra.mxu0 %v9453
    %9998 = vmatprep.subr.bf16.mxu0 0
    %9999 = vmatpush1.bf16.msra.mxu0 %v9454
    %10000 = vmatprep.subr.bf16.mxu0 0
    %10001 = vmatpush1.bf16.msra.mxu0 %v9455
    %10002 = vmatprep.subr.bf16.mxu0 0
    %10003 = vmatpush1.bf16.msra.mxu0 %v9456
    %10004 = vmatprep.subr.bf16.mxu0 0
    %10005 = vmatpush1.bf16.msra.mxu0 %v9457
    %10006 = vmatprep.subr.bf16.mxu0 0
    %10007 = vmatpush1.bf16.msra.mxu0 %v9458
    %10008 = vmatprep.subr.bf16.mxu0 0
    %10009 = vmatpush1.bf16.msra.mxu0 %v9459
    %10010 = vmatprep.subr.bf16.mxu0 0
    %10011 = vmatpush1.bf16.msra.mxu0 %v9460
    %10012 = vmatprep.subr.bf16.mxu0 0
    %10013 = vmatpush1.bf16.msra.mxu0 %v9461
    %10014 = vmatprep.mubr.bf16.mxu0 %v7858
    %10015 = vmatmul.mubr.bf16.gmra.mrb[0].mxu0 %v7857
    %v10016 = vpop.f32.mrb[0].mxu0
    %v10017 = vadd.f32 %v9977, %v10016
    %v10018 = vpop.f32.mrb[0].mxu0
    %v10019 = vpop.f32.mrb[0].mxu0
    %v10020 = vpop.f32.mrb[0].mxu0
    %10021 = vdwg.mxu0
    %10022 = vmatprep.subr.bf16.mxu0 0
    %10023 = vmatpush1.bf16.msra.mxu0 %v9462
    %10024 = vmatprep.subr.bf16.mxu0 0
    %10025 = vmatpush1.bf16.msra.mxu0 %v9463
    %10026 = vmatprep.subr.bf16.mxu0 0
    %10027 = vmatpush1.bf16.msra.mxu0 %v9464
    %10028 = vmatprep.subr.bf16.mxu0 0
    %10029 = vmatpush1.bf16.msra.mxu0 %v9465
    %10030 = vmatprep.subr.bf16.mxu0 0
    %10031 = vmatpush1.bf16.msra.mxu0 %v9466
    %10032 = vmatprep.subr.bf16.mxu0 0
    %10033 = vmatpush1.bf16.msra.mxu0 %v9467
    %10034 = vmatprep.subr.bf16.mxu0 0
    %10035 = vmatpush1.bf16.msra.mxu0 %v9468
    %10036 = vmatprep.subr.bf16.mxu0 0
    %10037 = vmatpush1.bf16.msra.mxu0 %v9469
    %10038 = vmatprep.subr.bf16.mxu0 0
    %10039 = vmatpush1.bf16.msra.mxu0 %v9470
    %10040 = vmatprep.subr.bf16.mxu0 0
    %10041 = vmatpush1.bf16.msra.mxu0 %v9471
    %10042 = vmatprep.subr.bf16.mxu0 0
    %10043 = vmatpush1.bf16.msra.mxu0 %v9472
    %10044 = vmatprep.subr.bf16.mxu0 0
    %10045 = vmatpush1.bf16.msra.mxu0 %v9473
    %10046 = vmatprep.subr.bf16.mxu0 0
    %10047 = vmatpush1.bf16.msra.mxu0 %v9474
    %10048 = vmatprep.subr.bf16.mxu0 0
    %10049 = vmatpush1.bf16.msra.mxu0 %v9475
    %10050 = vmatprep.subr.bf16.mxu0 0
    %10051 = vmatpush1.bf16.msra.mxu0 %v9476
    %10052 = vmatprep.subr.bf16.mxu0 0
    %10053 = vmatpush1.bf16.msra.mxu0 %v9477
    %10054 = vmatprep.mubr.bf16.mxu0 %v7860
    %10055 = vmatmul.mubr.bf16.gmra.mrb[0].mxu0 %v7859
    %v10056 = vpop.f32.mrb[0].mxu0
    %v10057 = vadd.f32 %v10017, %v10056
    %v10058 = vpop.f32.mrb[0].mxu0
    %v10059 = vpop.f32.mrb[0].mxu0
    %v10060 = vpop.f32.mrb[0].mxu0
    %10061 = vdwg.mxu0
    %10062 = vmatprep.subr.bf16.mxu0 0
    %10063 = vmatpush1.bf16.msra.mxu0 %v9478
    %10064 = vmatprep.subr.bf16.mxu0 0
    %10065 = vmatpush1.bf16.msra.mxu0 %v9479
    %10066 = vmatprep.subr.bf16.mxu0 0
    %10067 = vmatpush1.bf16.msra.mxu0 %v9480
    %10068 = vmatprep.subr.bf16.mxu0 0
    %10069 = vmatpush1.bf16.msra.mxu0 %v9481
    %10070 = vmatprep.subr.bf16.mxu0 0
    %10071 = vmatpush1.bf16.msra.mxu0 %v9482
    %10072 = vmatprep.subr.bf16.mxu0 0
    %10073 = vmatpush1.bf16.msra.mxu0 %v9483
    %10074 = vmatprep.subr.bf16.mxu0 0
    %10075 = vmatpush1.bf16.msra.mxu0 %v9484
    %10076 = vmatprep.subr.bf16.mxu0 0
    %10077 = vmatpush1.bf16.msra.mxu0 %v9485
    %10078 = vmatprep.subr.bf16.mxu0 0
    %10079 = vmatpush1.bf16.msra.mxu0 %v9486
    %10080 = vmatprep.subr.bf16.mxu0 0
    %10081 = vmatpush1.bf16.msra.mxu0 %v9487
    %10082 = vmatprep.subr.bf16.mxu0 0
    %10083 = vmatpush1.bf16.msra.mxu0 %v9488
    %10084 = vmatprep.subr.bf16.mxu0 0
    %10085 = vmatpush1.bf16.msra.mxu0 %v9489
    %10086 = vmatprep.subr.bf16.mxu0 0
    %10087 = vmatpush1.bf16.msra.mxu0 %v9490
    %10088 = vmatprep.subr.bf16.mxu0 0
    %10089 = vmatpush1.bf16.msra.mxu0 %v9491
    %10090 = vmatprep.subr.bf16.mxu0 0
    %10091 = vmatpush1.bf16.msra.mxu0 %v9492
    %10092 = vmatprep.subr.bf16.mxu0 0
    %10093 = vmatpush1.bf16.msra.mxu0 %v9493
    %10094 = vmatprep.mubr.bf16.mxu0 %v7862
    %10095 = vmatmul.mubr.bf16.gmra.mrb[0].mxu0 %v7861
    %v10096 = vpop.f32.mrb[0].mxu0
    %v10097 = vadd.f32 %v10057, %v10096
    %v10098 = vpop.f32.mrb[0].mxu0
    %v10099 = vpop.f32.mrb[0].mxu0
    %v10100 = vpop.f32.mrb[0].mxu0
    %10101 = vdwg.mxu0
    %10102 = vmatprep.subr.bf16.mxu0 0
    %10103 = vmatpush1.bf16.msra.mxu0 %v9494
    %10104 = vmatprep.subr.bf16.mxu0 0
    %10105 = vmatpush1.bf16.msra.mxu0 %v9495
    %10106 = vmatprep.subr.bf16.mxu0 0
    %10107 = vmatpush1.bf16.msra.mxu0 %v9496
    %10108 = vmatprep.subr.bf16.mxu0 0
    %10109 = vmatpush1.bf16.msra.mxu0 %v9497
    %10110 = vmatprep.subr.bf16.mxu0 0
    %10111 = vmatpush1.bf16.msra.mxu0 %v9498
    %10112 = vmatprep.subr.bf16.mxu0 0
    %10113 = vmatpush1.bf16.msra.mxu0 %v9499
    %10114 = vmatprep.subr.bf16.mxu0 0
    %10115 = vmatpush1.bf16.msra.mxu0 %v9500
    %10116 = vmatprep.subr.bf16.mxu0 0
    %10117 = vmatpush1.bf16.msra.mxu0 %v9501
    %10118 = vmatprep.subr.bf16.mxu0 0
    %10119 = vmatpush1.bf16.msra.mxu0 %v9502
    %10120 = vmatprep.subr.bf16.mxu0 0
    %10121 = vmatpush1.bf16.msra.mxu0 %v9503
    %10122 = vmatprep.subr.bf16.mxu0 0
    %10123 = vmatpush1.bf16.msra.mxu0 %v9504
    %10124 = vmatprep.subr.bf16.mxu0 0
    %10125 = vmatpush1.bf16.msra.mxu0 %v9505
    %10126 = vmatprep.subr.bf16.mxu0 0
    %10127 = vmatpush1.bf16.msra.mxu0 %v9506
    %10128 = vmatprep.subr.bf16.mxu0 0
    %10129 = vmatpush1.bf16.msra.mxu0 %v9507
    %10130 = vmatprep.subr.bf16.mxu0 0
    %10131 = vmatpush1.bf16.msra.mxu0 %v9508
    %10132 = vmatprep.subr.bf16.mxu0 0
    %10133 = vmatpush1.bf16.msra.mxu0 %v9509
    %10134 = vmatprep.mubr.bf16.mxu0 %v7864
    %10135 = vmatmul.mubr.bf16.gmra.mrb[0].mxu0 %v7863
    %v10136 = vpop.f32.mrb[0].mxu0
    %v10137 = vadd.f32 %v10097, %v10136
    %v10138 = vpop.f32.mrb[0].mxu0
    %v10139 = vpop.f32.mrb[0].mxu0
    %v10140 = vpop.f32.mrb[0].mxu0
    %10141 = vdwg.mxu0
    %10142 = vmatprep.subr.bf16.mxu0 0
    %10143 = vmatpush1.bf16.msra.mxu0 %v9510
    %10144 = vmatprep.subr.bf16.mxu0 0
    %10145 = vmatpush1.bf16.msra.mxu0 %v9511
    %10146 = vmatprep.subr.bf16.mxu0 0
    %10147 = vmatpush1.bf16.msra.mxu0 %v9512
    %10148 = vmatprep.subr.bf16.mxu0 0
    %10149 = vmatpush1.bf16.msra.mxu0 %v9513
    %10150 = vmatprep.subr.bf16.mxu0 0
    %10151 = vmatpush1.bf16.msra.mxu0 %v9514
    %10152 = vmatprep.subr.bf16.mxu0 0
    %10153 = vmatpush1.bf16.msra.mxu0 %v9515
    %10154 = vmatprep.subr.bf16.mxu0 0
    %10155 = vmatpush1.bf16.msra.mxu0 %v9516
    %10156 = vmatprep.subr.bf16.mxu0 0
    %10157 = vmatpush1.bf16.msra.mxu0 %v9517
    %10158 = vmatprep.subr.bf16.mxu0 0
    %10159 = vmatpush1.bf16.msra.mxu0 %v9518
    %10160 = vmatprep.subr.bf16.mxu0 0
    %10161 = vmatpush1.bf16.msra.mxu0 %v9519
    %10162 = vmatprep.subr.bf16.mxu0 0
    %10163 = vmatpush1.bf16.msra.mxu0 %v9520
    %10164 = vmatprep.subr.bf16.mxu0 0
    %10165 = vmatpush1.bf16.msra.mxu0 %v9521
    %10166 = vmatprep.subr.bf16.mxu0 0
    %10167 = vmatpush1.bf16.msra.mxu0 %v9522
    %10168 = vmatprep.subr.bf16.mxu0 0
    %10169 = vmatpush1.bf16.msra.mxu0 %v9523
    %10170 = vmatprep.subr.bf16.mxu0 0
    %10171 = vmatpush1.bf16.msra.mxu0 %v9524
    %10172 = vmatprep.subr.bf16.mxu0 0
    %10173 = vmatpush1.bf16.msra.mxu0 %v9525
    %10174 = vmatprep.mubr.bf16.mxu0 %v7866
    %10175 = vmatmul.mubr.bf16.gmra.mrb[0].mxu0 %v7865
    %v10176 = vpop.f32.mrb[0].mxu0
    %v10177 = vadd.f32 %v10137, %v10176
    %v10178 = vpop.f32.mrb[0].mxu0
    %v10179 = vpop.f32.mrb[0].mxu0
    %v10180 = vpop.f32.mrb[0].mxu0
    %10181 = vdwg.mxu0
    %10182 = vmatprep.subr.bf16.mxu0 0
    %10183 = vmatpush1.bf16.msra.mxu0 %v9526
    %10184 = vmatprep.subr.bf16.mxu0 0
    %10185 = vmatpush1.bf16.msra.mxu0 %v9527
    %10186 = vmatprep.subr.bf16.mxu0 0
    %10187 = vmatpush1.bf16.msra.mxu0 %v9528
    %10188 = vmatprep.subr.bf16.mxu0 0
    %10189 = vmatpush1.bf16.msra.mxu0 %v9529
    %10190 = vmatprep.subr.bf16.mxu0 0
    %10191 = vmatpush1.bf16.msra.mxu0 %v9530
    %10192 = vmatprep.subr.bf16.mxu0 0
    %10193 = vmatpush1.bf16.msra.mxu0 %v9531
    %10194 = vmatprep.subr.bf16.mxu0 0
    %10195 = vmatpush1.bf16.msra.mxu0 %v9532
    %10196 = vmatprep.subr.bf16.mxu0 0
    %10197 = vmatpush1.bf16.msra.mxu0 %v9533
    %10198 = vmatprep.subr.bf16.mxu0 0
    %10199 = vmatpush1.bf16.msra.mxu0 %v9534
    %10200 = vmatprep.subr.bf16.mxu0 0
    %10201 = vmatpush1.bf16.msra.mxu0 %v9535
    %10202 = vmatprep.subr.bf16.mxu0 0
    %10203 = vmatpush1.bf16.msra.mxu0 %v9536
    %10204 = vmatprep.subr.bf16.mxu0 0
    %10205 = vmatpush1.bf16.msra.mxu0 %v9537
    %10206 = vmatprep.subr.bf16.mxu0 0
    %10207 = vmatpush1.bf16.msra.mxu0 %v9538
    %10208 = vmatprep.subr.bf16.mxu0 0
    %10209 = vmatpush1.bf16.msra.mxu0 %v9539
    %10210 = vmatprep.subr.bf16.mxu0 0
    %10211 = vmatpush1.bf16.msra.mxu0 %v9540
    %10212 = vmatprep.subr.bf16.mxu0 0
    %10213 = vmatpush1.bf16.msra.mxu0 %v9541
    %10214 = vmatprep.mubr.bf16.mxu0 %v7868
    %10215 = vmatmul.mubr.bf16.gmra.mrb[0].mxu0 %v7867
    %v10216 = vpop.f32.mrb[0].mxu0
    %v10217 = vadd.f32 %v10177, %v10216
    %v10218 = vpop.f32.mrb[0].mxu0
    %v10219 = vpop.f32.mrb[0].mxu0
    %v10220 = vpop.f32.mrb[0].mxu0
    %10221 = vdwg.mxu0
    %10222 = vmatprep.subr.bf16.mxu0 0
    %10223 = vmatpush1.bf16.msra.mxu0 %v9542
    %10224 = vmatprep.subr.bf16.mxu0 0
    %10225 = vmatpush1.bf16.msra.mxu0 %v9543
    %10226 = vmatprep.subr.bf16.mxu0 0
    %10227 = vmatpush1.bf16.msra.mxu0 %v9544
    %10228 = vmatprep.subr.bf16.mxu0 0
    %10229 = vmatpush1.bf16.msra.mxu0 %v9545
    %10230 = vmatprep.subr.bf16.mxu0 0
    %10231 = vmatpush1.bf16.msra.mxu0 %v9546
    %10232 = vmatprep.subr.bf16.mxu0 0
    %10233 = vmatpush1.bf16.msra.mxu0 %v9547
    %10234 = vmatprep.subr.bf16.mxu0 0
    %10235 = vmatpush1.bf16.msra.mxu0 %v9548
    %10236 = vmatprep.subr.bf16.mxu0 0
    %10237 = vmatpush1.bf16.msra.mxu0 %v9549
    %10238 = vmatprep.subr.bf16.mxu0 0
    %10239 = vmatpush1.bf16.msra.mxu0 %v9550
    %10240 = vmatprep.subr.bf16.mxu0 0
    %10241 = vmatpush1.bf16.msra.mxu0 %v9551
    %10242 = vmatprep.subr.bf16.mxu0 0
    %10243 = vmatpush1.bf16.msra.mxu0 %v9552
    %10244 = vmatprep.subr.bf16.mxu0 0
    %10245 = vmatpush1.bf16.msra.mxu0 %v9553
    %10246 = vmatprep.subr.bf16.mxu0 0
    %10247 = vmatpush1.bf16.msra.mxu0 %v9554
    %10248 = vmatprep.subr.bf16.mxu0 0
    %10249 = vmatpush1.bf16.msra.mxu0 %v9555
    %10250 = vmatprep.subr.bf16.mxu0 0
    %10251 = vmatpush1.bf16.msra.mxu0 %v9556
    %10252 = vmatprep.subr.bf16.mxu0 0
    %10253 = vmatpush1.bf16.msra.mxu0 %v9557
    %10254 = vmatprep.mubr.bf16.mxu0 %v7870
    %10255 = vmatmul.mubr.bf16.gmra.mrb[0].mxu0 %v7869
    %v10256 = vpop.f32.mrb[0].mxu0
    %v10257 = vadd.f32 %v10217, %v10256
    %v10258 = vpop.f32.mrb[0].mxu0
    %v10259 = vpop.f32.mrb[0].mxu0
    %v10260 = vpop.f32.mrb[0].mxu0
    %10261 = vdwg.mxu0
    %10262 = vmatprep.subr.bf16.mxu0 0
    %10263 = vmatpush1.bf16.msra.mxu0 %v9558
    %10264 = vmatprep.subr.bf16.mxu0 0
    %10265 = vmatpush1.bf16.msra.mxu0 %v9559
    %10266 = vmatprep.subr.bf16.mxu0 0
    %10267 = vmatpush1.bf16.msra.mxu0 %v9560
    %10268 = vmatprep.subr.bf16.mxu0 0
    %10269 = vmatpush1.bf16.msra.mxu0 %v9561
    %10270 = vmatprep.subr.bf16.mxu0 0
    %10271 = vmatpush1.bf16.msra.mxu0 %v9562
    %10272 = vmatprep.subr.bf16.mxu0 0
    %10273 = vmatpush1.bf16.msra.mxu0 %v9563
    %10274 = vmatprep.subr.bf16.mxu0 0
    %10275 = vmatpush1.bf16.msra.mxu0 %v9564
    %10276 = vmatprep.subr.bf16.mxu0 0
    %10277 = vmatpush1.bf16.msra.mxu0 %v9565
    %10278 = vmatprep.subr.bf16.mxu0 0
    %10279 = vmatpush1.bf16.msra.mxu0 %v9566
    %10280 = vmatprep.subr.bf16.mxu0 0
    %10281 = vmatpush1.bf16.msra.mxu0 %v9567
    %10282 = vmatprep.subr.bf16.mxu0 0
    %10283 = vmatpush1.bf16.msra.mxu0 %v9568
    %10284 = vmatprep.subr.bf16.mxu0 0
    %10285 = vmatpush1.bf16.msra.mxu0 %v9569
    %10286 = vmatprep.subr.bf16.mxu0 0
    %10287 = vmatpush1.bf16.msra.mxu0 %v9570
    %10288 = vmatprep.subr.bf16.mxu0 0
    %10289 = vmatpush1.bf16.msra.mxu0 %v9571
    %10290 = vmatprep.subr.bf16.mxu0 0
    %10291 = vmatpush1.bf16.msra.mxu0 %v9572
    %10292 = vmatprep.subr.bf16.mxu0 0
    %10293 = vmatpush1.bf16.msra.mxu0 %v9573
    %10294 = vmatprep.mubr.bf16.mxu0 %v7872
    %10295 = vmatmul.mubr.bf16.gmra.mrb[0].mxu0 %v7871
    %v10296 = vpop.f32.mrb[0].mxu0
    %v10297 = vadd.f32 %v10257, %v10296
    %v10298 = vpop.f32.mrb[0].mxu0
    %v10299 = vpop.f32.mrb[0].mxu0
    %v10300 = vpop.f32.mrb[0].mxu0
    %10301 = vdwg.mxu0
    %10302 = vmatprep.subr.bf16.mxu0 0
    %10303 = vmatpush1.bf16.msra.mxu0 %v9574
    %10304 = vmatprep.subr.bf16.mxu0 0
    %10305 = vmatpush1.bf16.msra.mxu0 %v9575
    %10306 = vmatprep.subr.bf16.mxu0 0
    %10307 = vmatpush1.bf16.msra.mxu0 %v9576
    %10308 = vmatprep.subr.bf16.mxu0 0
    %10309 = vmatpush1.bf16.msra.mxu0 %v9577
    %10310 = vmatprep.subr.bf16.mxu0 0
    %10311 = vmatpush1.bf16.msra.mxu0 %v9578
    %10312 = vmatprep.subr.bf16.mxu0 0
    %10313 = vmatpush1.bf16.msra.mxu0 %v9579
    %10314 = vmatprep.subr.bf16.mxu0 0
    %10315 = vmatpush1.bf16.msra.mxu0 %v9580
    %10316 = vmatprep.subr.bf16.mxu0 0
    %10317 = vmatpush1.bf16.msra.mxu0 %v9581
    %10318 = vmatprep.subr.bf16.mxu0 0
    %10319 = vmatpush1.bf16.msra.mxu0 %v9582
    %10320 = vmatprep.subr.bf16.mxu0 0
    %10321 = vmatpush1.bf16.msra.mxu0 %v9583
    %10322 = vmatprep.subr.bf16.mxu0 0
    %10323 = vmatpush1.bf16.msra.mxu0 %v9584
    %10324 = vmatprep.subr.bf16.mxu0 0
    %10325 = vmatpush1.bf16.msra.mxu0 %v9585
    %10326 = vmatprep.subr.bf16.mxu0 0
    %10327 = vmatpush1.bf16.msra.mxu0 %v9586
    %10328 = vmatprep.subr.bf16.mxu0 0
    %10329 = vmatpush1.bf16.msra.mxu0 %v9587
    %10330 = vmatprep.subr.bf16.mxu0 0
    %10331 = vmatpush1.bf16.msra.mxu0 %v9588
    %10332 = vmatprep.subr.bf16.mxu0 0
    %10333 = vmatpush1.bf16.msra.mxu0 %v9589
    %10334 = vmatprep.mubr.bf16.mxu0 %v7874
    %10335 = vmatmul.mubr.bf16.gmra.mrb[0].mxu0 %v7873
    %v10336 = vpop.f32.mrb[0].mxu0
    %v10337 = vadd.f32 %v10297, %v10336
    %v10338 = vpop.f32.mrb[0].mxu0
    %v10339 = vpop.f32.mrb[0].mxu0
    %v10340 = vpop.f32.mrb[0].mxu0
    %10341 = vdwg.mxu0
    %10342 = vmatprep.subr.bf16.mxu0 0
    %10343 = vmatpush1.bf16.msra.mxu0 %v9590
    %10344 = vmatprep.subr.bf16.mxu0 0
    %10345 = vmatpush1.bf16.msra.mxu0 %v9591
    %10346 = vmatprep.subr.bf16.mxu0 0
    %10347 = vmatpush1.bf16.msra.mxu0 %v9592
    %10348 = vmatprep.subr.bf16.mxu0 0
    %10349 = vmatpush1.bf16.msra.mxu0 %v9593
    %10350 = vmatprep.subr.bf16.mxu0 0
    %10351 = vmatpush1.bf16.msra.mxu0 %v9594
    %10352 = vmatprep.subr.bf16.mxu0 0
    %10353 = vmatpush1.bf16.msra.mxu0 %v9595
    %10354 = vmatprep.subr.bf16.mxu0 0
    %10355 = vmatpush1.bf16.msra.mxu0 %v9596
    %10356 = vmatprep.subr.bf16.mxu0 0
    %10357 = vmatpush1.bf16.msra.mxu0 %v9597
    %10358 = vmatprep.subr.bf16.mxu0 0
    %10359 = vmatpush1.bf16.msra.mxu0 %v9598
    %10360 = vmatprep.subr.bf16.mxu0 0
    %10361 = vmatpush1.bf16.msra.mxu0 %v9599
    %10362 = vmatprep.subr.bf16.mxu0 0
    %10363 = vmatpush1.bf16.msra.mxu0 %v9600
    %10364 = vmatprep.subr.bf16.mxu0 0
    %10365 = vmatpush1.bf16.msra.mxu0 %v9601
    %10366 = vmatprep.subr.bf16.mxu0 0
    %10367 = vmatpush1.bf16.msra.mxu0 %v9602
    %10368 = vmatprep.subr.bf16.mxu0 0
    %10369 = vmatpush1.bf16.msra.mxu0 %v9603
    %10370 = vmatprep.subr.bf16.mxu0 0
    %10371 = vmatpush1.bf16.msra.mxu0 %v9604
    %10372 = vmatprep.subr.bf16.mxu0 0
    %10373 = vmatpush1.bf16.msra.mxu0 %v9605
    %10374 = vmatprep.mubr.bf16.mxu0 %v7876
    %10375 = vmatmul.mubr.bf16.gmra.mrb[0].mxu0 %v7875
    %v10376 = vpop.f32.mrb[0].mxu0
    %v10377 = vadd.f32 %v10337, %v10376
    %v10378 = vpop.f32.mrb[0].mxu0
    %v10379 = vpop.f32.mrb[0].mxu0
    %v10380 = vpop.f32.mrb[0].mxu0
    %10381 = vdwg.mxu0
    %10382 = vmatprep.subr.bf16.mxu0 0
    %10383 = vmatpush1.bf16.msra.mxu0 %v9606
    %10384 = vmatprep.subr.bf16.mxu0 0
    %10385 = vmatpush1.bf16.msra.mxu0 %v9607
    %10386 = vmatprep.subr.bf16.mxu0 0
    %10387 = vmatpush1.bf16.msra.mxu0 %v9608
    %10388 = vmatprep.subr.bf16.mxu0 0
    %10389 = vmatpush1.bf16.msra.mxu0 %v9609
    %10390 = vmatprep.subr.bf16.mxu0 0
    %10391 = vmatpush1.bf16.msra.mxu0 %v9610
    %10392 = vmatprep.subr.bf16.mxu0 0
    %10393 = vmatpush1.bf16.msra.mxu0 %v9611
    %10394 = vmatprep.subr.bf16.mxu0 0
    %10395 = vmatpush1.bf16.msra.mxu0 %v9612
    %10396 = vmatprep.subr.bf16.mxu0 0
    %10397 = vmatpush1.bf16.msra.mxu0 %v9613
    %10398 = vmatprep.subr.bf16.mxu0 0
    %10399 = vmatpush1.bf16.msra.mxu0 %v9614
    %10400 = vmatprep.subr.bf16.mxu0 0
    %10401 = vmatpush1.bf16.msra.mxu0 %v9615
    %10402 = vmatprep.subr.bf16.mxu0 0
    %10403 = vmatpush1.bf16.msra.mxu0 %v9616
    %10404 = vmatprep.subr.bf16.mxu0 0
    %10405 = vmatpush1.bf16.msra.mxu0 %v9617
    %10406 = vmatprep.subr.bf16.mxu0 0
    %10407 = vmatpush1.bf16.msra.mxu0 %v9618
    %10408 = vmatprep.subr.bf16.mxu0 0
    %10409 = vmatpush1.bf16.msra.mxu0 %v9619
    %10410 = vmatprep.subr.bf16.mxu0 0
    %10411 = vmatpush1.bf16.msra.mxu0 %v9620
    %10412 = vmatprep.subr.bf16.mxu0 0
    %10413 = vmatpush1.bf16.msra.mxu0 %v9621
    %10414 = vmatprep.mubr.bf16.mxu0 %v7878
    %10415 = vmatmul.mubr.bf16.gmra.mrb[0].mxu0 %v7877
    %v10416 = vpop.f32.mrb[0].mxu0
    %v10417 = vadd.f32 %v10377, %v10416
    %v10418 = vpop.f32.mrb[0].mxu0
    %v10419 = vpop.f32.mrb[0].mxu0
    %v10420 = vpop.f32.mrb[0].mxu0
    %10421 = vdwg.mxu0
    %10422 = vmatprep.subr.bf16.mxu0 0
    %10423 = vmatpush1.bf16.msra.mxu0 %v9622
    %10424 = vmatprep.subr.bf16.mxu0 0
    %10425 = vmatpush1.bf16.msra.mxu0 %v9623
    %10426 = vmatprep.subr.bf16.mxu0 0
    %10427 = vmatpush1.bf16.msra.mxu0 %v9624
    %10428 = vmatprep.subr.bf16.mxu0 0
    %10429 = vmatpush1.bf16.msra.mxu0 %v9625
    %10430 = vmatprep.subr.bf16.mxu0 0
    %10431 = vmatpush1.bf16.msra.mxu0 %v9626
    %10432 = vmatprep.subr.bf16.mxu0 0
    %10433 = vmatpush1.bf16.msra.mxu0 %v9627
    %10434 = vmatprep.subr.bf16.mxu0 0
    %10435 = vmatpush1.bf16.msra.mxu0 %v9628
    %10436 = vmatprep.subr.bf16.mxu0 0
    %10437 = vmatpush1.bf16.msra.mxu0 %v9629
    %10438 = vmatprep.subr.bf16.mxu0 0
    %10439 = vmatpush1.bf16.msra.mxu0 %v9630
    %10440 = vmatprep.subr.bf16.mxu0 0
    %10441 = vmatpush1.bf16.msra.mxu0 %v9631
    %10442 = vmatprep.subr.bf16.mxu0 0
    %10443 = vmatpush1.bf16.msra.mxu0 %v9632
    %10444 = vmatprep.subr.bf16.mxu0 0
    %10445 = vmatpush1.bf16.msra.mxu0 %v9633
    %10446 = vmatprep.subr.bf16.mxu0 0
    %10447 = vmatpush1.bf16.msra.mxu0 %v9634
    %10448 = vmatprep.subr.bf16.mxu0 0
    %10449 = vmatpush1.bf16.msra.mxu0 %v9635
    %10450 = vmatprep.subr.bf16.mxu0 0
    %10451 = vmatpush1.bf16.msra.mxu0 %v9636
    %10452 = vmatprep.subr.bf16.mxu0 0
    %10453 = vmatpush1.bf16.msra.mxu0 %v9637
    %10454 = vmatprep.mubr.bf16.mxu0 %v7880
    %10455 = vmatmul.mubr.bf16.gmra.mrb[0].mxu0 %v7879
    %v10456 = vpop.f32.mrb[0].mxu0
    %v10457 = vadd.f32 %v10417, %v10456
    %v10458 = vpop.f32.mrb[0].mxu0
    %v10459 = vpop.f32.mrb[0].mxu0
    %v10460 = vpop.f32.mrb[0].mxu0
    %10461 = vdwg.mxu0
    %10462 = vmatprep.subr.bf16.mxu0 0
    %10463 = vmatpush1.bf16.msra.mxu0 %v9638
    %10464 = vmatprep.subr.bf16.mxu0 0
    %10465 = vmatpush1.bf16.msra.mxu0 %v9639
    %10466 = vmatprep.subr.bf16.mxu0 0
    %10467 = vmatpush1.bf16.msra.mxu0 %v9640
    %10468 = vmatprep.subr.bf16.mxu0 0
    %10469 = vmatpush1.bf16.msra.mxu0 %v9641
    %10470 = vmatprep.subr.bf16.mxu0 0
    %10471 = vmatpush1.bf16.msra.mxu0 %v9642
    %10472 = vmatprep.subr.bf16.mxu0 0
    %10473 = vmatpush1.bf16.msra.mxu0 %v9643
    %10474 = vmatprep.subr.bf16.mxu0 0
    %10475 = vmatpush1.bf16.msra.mxu0 %v9644
    %10476 = vmatprep.subr.bf16.mxu0 0
    %10477 = vmatpush1.bf16.msra.mxu0 %v9645
    %10478 = vmatprep.subr.bf16.mxu0 0
    %10479 = vmatpush1.bf16.msra.mxu0 %v9646
    %10480 = vmatprep.subr.bf16.mxu0 0
    %10481 = vmatpush1.bf16.msra.mxu0 %v9647
    %10482 = vmatprep.subr.bf16.mxu0 0
    %10483 = vmatpush1.bf16.msra.mxu0 %v9648
    %10484 = vmatprep.subr.bf16.mxu0 0
    %10485 = vmatpush1.bf16.msra.mxu0 %v9649
    %10486 = vmatprep.subr.bf16.mxu0 0
    %10487 = vmatpush1.bf16.msra.mxu0 %v9650
    %10488 = vmatprep.subr.bf16.mxu0 0
    %10489 = vmatpush1.bf16.msra.mxu0 %v9651
    %10490 = vmatprep.subr.bf16.mxu0 0
    %10491 = vmatpush1.bf16.msra.mxu0 %v9652
    %10492 = vmatprep.subr.bf16.mxu0 0
    %10493 = vmatpush1.bf16.msra.mxu0 %v9653
    %10494 = vmatprep.mubr.bf16.mxu0 %v7882
    %10495 = vmatmul.mubr.bf16.gmra.mrb[0].mxu0 %v7881
    %v10496 = vpop.f32.mrb[0].mxu0
    %v10497 = vadd.f32 %v10457, %v10496
    %v10498 = vpop.f32.mrb[0].mxu0
    %v10499 = vpop.f32.mrb[0].mxu0
    %v10500 = vpop.f32.mrb[0].mxu0
    %10501 = vdwg.mxu0
    %10502 = vmatprep.subr.bf16.mxu0 0
    %10503 = vmatpush1.bf16.msra.mxu0 %v9654
    %10504 = vmatprep.subr.bf16.mxu0 0
    %10505 = vmatpush1.bf16.msra.mxu0 %v9655
    %10506 = vmatprep.subr.bf16.mxu0 0
    %10507 = vmatpush1.bf16.msra.mxu0 %v9656
    %10508 = vmatprep.subr.bf16.mxu0 0
    %10509 = vmatpush1.bf16.msra.mxu0 %v9657
    %10510 = vmatprep.subr.bf16.mxu0 0
    %10511 = vmatpush1.bf16.msra.mxu0 %v9658
    %10512 = vmatprep.subr.bf16.mxu0 0
    %10513 = vmatpush1.bf16.msra.mxu0 %v9659
    %10514 = vmatprep.subr.bf16.mxu0 0
    %10515 = vmatpush1.bf16.msra.mxu0 %v9660
    %10516 = vmatprep.subr.bf16.mxu0 0
    %10517 = vmatpush1.bf16.msra.mxu0 %v9661
    %10518 = vmatprep.subr.bf16.mxu0 0
    %10519 = vmatpush1.bf16.msra.mxu0 %v9662
    %10520 = vmatprep.subr.bf16.mxu0 0
    %10521 = vmatpush1.bf16.msra.mxu0 %v9663
    %10522 = vmatprep.subr.bf16.mxu0 0
    %10523 = vmatpush1.bf16.msra.mxu0 %v9664
    %10524 = vmatprep.subr.bf16.mxu0 0
    %10525 = vmatpush1.bf16.msra.mxu0 %v9665
    %10526 = vmatprep.subr.bf16.mxu0 0
    %10527 = vmatpush1.bf16.msra.mxu0 %v9666
    %10528 = vmatprep.subr.bf16.mxu0 0
    %10529 = vmatpush1.bf16.msra.mxu0 %v9667
    %10530 = vmatprep.subr.bf16.mxu0 0
    %10531 = vmatpush1.bf16.msra.mxu0 %v9668
    %10532 = vmatprep.subr.bf16.mxu0 0
    %10533 = vmatpush1.bf16.msra.mxu0 %v9669
    %10534 = vmatprep.mubr.bf16.mxu0 %v7884
    %10535 = vmatmul.mubr.bf16.gmra.mrb[0].mxu0 %v7883
    %v10536 = vpop.f32.mrb[0].mxu0
    %v10537 = vadd.f32 %v10497, %v10536
    %v10538 = vpop.f32.mrb[0].mxu0
    %v10539 = vpop.f32.mrb[0].mxu0
    %v10540 = vpop.f32.mrb[0].mxu0
    %10541 = vdwg.mxu0
    %10542 = vmatprep.subr.bf16.mxu0 0
    %10543 = vmatpush1.bf16.msra.mxu0 %v9670
    %10544 = vmatprep.subr.bf16.mxu0 0
    %10545 = vmatpush1.bf16.msra.mxu0 %v9671
    %10546 = vmatprep.subr.bf16.mxu0 0
    %10547 = vmatpush1.bf16.msra.mxu0 %v9672
    %10548 = vmatprep.subr.bf16.mxu0 0
    %10549 = vmatpush1.bf16.msra.mxu0 %v9673
    %10550 = vmatprep.subr.bf16.mxu0 0
    %10551 = vmatpush1.bf16.msra.mxu0 %v9674
    %10552 = vmatprep.subr.bf16.mxu0 0
    %10553 = vmatpush1.bf16.msra.mxu0 %v9675
    %10554 = vmatprep.subr.bf16.mxu0 0
    %10555 = vmatpush1.bf16.msra.mxu0 %v9676
    %10556 = vmatprep.subr.bf16.mxu0 0
    %10557 = vmatpush1.bf16.msra.mxu0 %v9677
    %10558 = vmatprep.subr.bf16.mxu0 0
    %10559 = vmatpush1.bf16.msra.mxu0 %v9678
    %10560 = vmatprep.subr.bf16.mxu0 0
    %10561 = vmatpush1.bf16.msra.mxu0 %v9679
    %10562 = vmatprep.subr.bf16.mxu0 0
    %10563 = vmatpush1.bf16.msra.mxu0 %v9680
    %10564 = vmatprep.subr.bf16.mxu0 0
    %10565 = vmatpush1.bf16.msra.mxu0 %v9681
    %10566 = vmatprep.subr.bf16.mxu0 0
    %10567 = vmatpush1.bf16.msra.mxu0 %v9682
    %10568 = vmatprep.subr.bf16.mxu0 0
    %10569 = vmatpush1.bf16.msra.mxu0 %v9683
    %10570 = vmatprep.subr.bf16.mxu0 0
    %10571 = vmatpush1.bf16.msra.mxu0 %v9684
    %10572 = vmatprep.subr.bf16.mxu0 0
    %10573 = vmatpush1.bf16.msra.mxu0 %v9685
    %10574 = vmatprep.mubr.bf16.mxu0 %v7886
    %10575 = vmatmul.mubr.bf16.gmra.mrb[0].mxu0 %v7885
    %v10576 = vpop.f32.mrb[0].mxu0
    %v10577 = vadd.f32 %v10537, %v10576
    %v10578 = vpop.f32.mrb[0].mxu0
    %v10579 = vpop.f32.mrb[0].mxu0
    %v10580 = vpop.f32.mrb[0].mxu0
    %10581 = vdwg.mxu0
    %10582 = vst [vmem:[#allocation5] sm:$0x3] %v10577
    // Predicated region
    $region46: #{f3fn_3d_forward.1} parent=1 // pred_check
      _
    $region47: #{f3fn_3d_forward.1} parent=1 // pred_check_branch
      %10584 = sbr.rel (0) target = $region49
    $region48: #{f3fn_3d_forward.1} parent=1 // pred_region
      %s10586 = ssub.s32 32, 32
      %10587 = vsyncadd [#allocation4], %s10586
      %s10589 = sshll.u32 [#allocation3], 4
      %s10590 = int_to_ptr.vmem [resolvable:$true] %s10589
      %10592 = dma.vmem_to_hbm [thread:$0]  %s10590, 32, %s11, [#allocation4]
    $region49: #{f3fn_3d_forward.1} parent=1 // pred_fallthru
      _
    // Predicated region
    $region50: #{f3fn_3d_forward.1} parent=1 // pred_check
      _
    $region51: #{f3fn_3d_forward.1} parent=1 // pred_check_branch
      %10594 = sbr.rel (0) target = $region53
    $region52: #{f3fn_3d_forward.1} parent=1 // pred_region
      %s10596 = ssub.s32 32, 32
      %10597 = vsyncadd [#allocation6], %s10596
      %s10599 = sshll.u32 [#allocation5], 4
      %s10600 = int_to_ptr.vmem [resolvable:$true] %s10599
      %10602 = dma.vmem_to_hbm [thread:$0]  %s10600, 32, %s12, [#allocation6]
    $region53: #{f3fn_3d_forward.1} parent=1 // pred_fallthru
      _
    // Predicated region
    $region54: #{f3fn_3d_forward.1} parent=1 // pred_check
      _
    $region55: #{f3fn_3d_forward.1} parent=1 // pred_check_branch
      %10604 = sbr.rel (0) target = $region57
    $region56: #{f3fn_3d_forward.1} parent=1 // pred_region
      %10605 = dma.done [#allocation4], 32
    $region57: #{f3fn_3d_forward.1} parent=1 // pred_fallthru
      _
    // Predicated region
    $region58: #{f3fn_3d_forward.1} parent=1 // pred_check
      _
    $region59: #{f3fn_3d_forward.1} parent=1 // pred_check_branch
      %10607 = sbr.rel (0) target = $region61
    $region60: #{f3fn_3d_forward.1} parent=1 // pred_region
      %10608 = dma.done [#allocation6], 32
    $region61: #{f3fn_3d_forward.1} parent=1 // pred_fallthru
      _
    %10609 = vsyncpa [#allocation4], 1
    %10610 = vsyncpa [#allocation6], 1

</llo_original>
